<compile_context>
chip_gen: v7x
topology: tpu7x:2x2x1
jax: 0.10.0
libtpu: 0.0.40
codegen_flags: <defaults>
</compile_context>

<pallas_src>
import jax
import jax.numpy as jnp
from jax import lax
from jax.experimental import pallas as pl
from jax.experimental.pallas import tpu as pltpu


def _round_up(x, m):
    return ((x + m - 1) // m) * m


# ------------------------------ fused kernel ------------------------------- #

def _cnn_qnet_kernel(xp_ref, w1_ref, b1_ref, w2_ref, b2_ref, w3_ref, b3_ref,
                     pool_ref, wl1_ref, bl1_ref, wl2_ref, bl2_ref,
                     o_ref, h1_ref, h2_ref):
    f32 = jnp.float32
    Hp, PW, _ = xp_ref.shape
    WW = PW - 8               # compute window width (multiple of 8, >= W)
    H1 = Hp - 2               # conv1 output height (== H)
    H2 = H1 - 2
    H3 = H2 - 2
    C1 = w1_ref.shape[-1]
    C2 = w2_ref.shape[-1]

    def conv3x3_relu(src_ref, w_ref, b_ref, rows):
        """3x3 'valid' conv + bias + ReLU as 9 accumulating MXU matmuls.

        Output row r = y*WW + x holds output pixel (y, x); columns past the
        true valid width are garbage and are ignored / masked downstream.
        """
        cin = src_ref.shape[-1]
        cout = w_ref.shape[-1]
        acc = jnp.zeros((rows * WW, cout), f32)
        for t in range(9):
            dy, dx = t // 3, t % 3
            win = src_ref[dy:dy + rows, dx:dx + WW, :].reshape(rows * WW, cin)
            acc = acc + jnp.dot(win, w_ref[t], preferred_element_type=f32)
        return jnp.maximum(acc + b_ref[...], 0.0)

    # conv1 + ReLU -> VMEM scratch (valid width = W <= WW; pad columns zeroed)
    h1 = conv3x3_relu(xp_ref, w1_ref, b1_ref, H1)              # (H1*WW, C1)
    h1_ref[:, 0:WW, :] = h1.reshape(H1, WW, C1)
    h1_ref[:, WW:PW, :] = jnp.zeros((H1, PW - WW, C1), f32)

    # conv2 + ReLU -> VMEM scratch
    h2 = conv3x3_relu(h1_ref, w2_ref, b2_ref, H2)              # (H2*WW, C2)
    h2_ref[:, 0:WW, :] = h2.reshape(H2, WW, C2)
    h2_ref[:, WW:PW, :] = jnp.zeros((H2, PW - WW, C2), f32)

    # conv3 + ReLU (kept as a value, never written to HBM)
    h3 = conv3x3_relu(h2_ref, w3_ref, b3_ref, H3)              # (H3*WW, 64)

    # AdaptiveAvgPool2d((1,1)) + Flatten: masked mean over the valid H3 x W3
    # region, done as an MXU matmul with the precomputed mask/scale row.
    pooled = jnp.dot(pool_ref[...], h3, preferred_element_type=f32)   # (1, 64)

    # Linear(64,128) + ReLU + Linear(128, out_pad); lane-dense (1,128) store.
    hfc = jnp.maximum(
        jnp.dot(pooled, wl1_ref[...], preferred_element_type=f32) + bl1_ref[...],
        0.0)
    o_ref[...] = (jnp.dot(hfc, wl2_ref[...], preferred_element_type=f32)
                  + bl2_ref[...])


# ------------------------------- JAX wrapper -------------------------------- #

@jax.jit
def cnn_qnet_forward(x_nchw, params):
    x = jnp.transpose(x_nchw, (0, 2, 3, 1)).astype(jnp.float32)   # NCHW -> NHWC
    B, H, W, Cin = x.shape

    C1 = params['w1'].shape[-1]
    C2 = params['w2'].shape[-1]
    C3 = params['w3'].shape[-1]
    HID = params['wl1'].shape[-1]
    out_dim = params['wl2'].shape[-1]
    OUT_PAD = _round_up(out_dim, 128)

    WW = _round_up(W, 8)        # in-kernel compute width
    PW = WW + 8                 # stored activation width (>= W+2, multiple of 8)
    H3, W3 = H - 4, W - 4       # conv3 valid output spatial size

    # conv1 padding=1, padding_mode='replicate' -> edge pad, then zero-pad the
    # width axis so the kernel can take 8-aligned WW-wide windows.
    xp = jnp.pad(x, ((0, 0), (1, 1), (1, 1), (0, 0)), mode='edge')
    xp = jnp.pad(xp, ((0, 0), (0, 0), (0, PW - (W + 2)), (0, 0)))

    # conv weights (3,3,Cin,Cout) -> (9, Cin, Cout); tap index t = dy*3 + dx.
    w1 = params['w1'].reshape(9, Cin, C1)
    w2 = params['w2'].reshape(9, C1, C2)
    w3 = params['w3'].reshape(9, C2, C3)

    # lane-dense final Linear: zero-pad out_dim up to OUT_PAD (= 128).
    wl2p = jnp.pad(params['wl2'], ((0, 0), (0, OUT_PAD - out_dim)))
    bl2p = jnp.pad(params['bl2'], ((0, 0), (0, OUT_PAD - out_dim)))

    # pooling mask/scale row: mean over the valid H3 x W3 conv3 outputs.
    cols = jnp.arange(H3 * WW, dtype=jnp.int32) % WW
    poolvec = jnp.where(cols < W3, 1.0 / (H3 * W3), 0.0)
    poolvec = poolvec.astype(jnp.float32).reshape(1, H3 * WW)

    out_pad = pl.pallas_call(
        _cnn_qnet_kernel,
        out_shape=jax.ShapeDtypeStruct((B, 1, OUT_PAD), jnp.float32),
        grid=(B,),
        in_specs=[
            pl.BlockSpec((None, H + 2, PW, Cin), lambda b: (b, 0, 0, 0)),
            pl.BlockSpec((9, Cin, C1), lambda b: (0, 0, 0)),
            pl.BlockSpec((1, C1), lambda b: (0, 0)),
            pl.BlockSpec((9, C1, C2), lambda b: (0, 0, 0)),
            pl.BlockSpec((1, C2), lambda b: (0, 0)),
            pl.BlockSpec((9, C2, C3), lambda b: (0, 0, 0)),
            pl.BlockSpec((1, C3), lambda b: (0, 0)),
            pl.BlockSpec((1, H3 * WW), lambda b: (0, 0)),
            pl.BlockSpec((C3, HID), lambda b: (0, 0)),
            pl.BlockSpec((1, HID), lambda b: (0, 0)),
            pl.BlockSpec((HID, OUT_PAD), lambda b: (0, 0)),
            pl.BlockSpec((1, OUT_PAD), lambda b: (0, 0)),
        ],
        out_specs=pl.BlockSpec((None, 1, OUT_PAD), lambda b: (b, 0, 0)),
        scratch_shapes=[
            pltpu.VMEM((H, PW, C1), jnp.float32),        # h1
            pltpu.VMEM((H - 2, PW, C2), jnp.float32),    # h2
        ],
        compiler_params=pltpu.CompilerParams(
            dimension_semantics=("parallel",)),
    )(xp, w1, params['b1'], w2, params['b2'], w3, params['b3'],
      poolvec, params['wl1'], params['bl1'], wl2p, bl2p)

    return out_pad[:, 0, :out_dim]


# ------------------------- reference & parameter init ----------------------- #

def init_params(key, input_dim, output_dim):
    """Deterministic synthetic init (PyTorch-style uniform(-1/sqrt(fan_in), .))."""
    def uni(k, shape, fan_in):
        bound = 1.0 / float(fan_in) ** 0.5
        return jax.random.uniform(k, shape, jnp.float32, -bound, bound)

    ks = jax.random.split(key, 10)
    return dict(
        w1=uni(ks[0], (3, 3, input_dim, 16), 9 * input_dim),
        b1=uni(ks[1], (1, 16), 9 * input_dim),
        w2=uni(ks[2], (3, 3, 16, 32), 9 * 16),
        b2=uni(ks[3], (1, 32), 9 * 16),
        w3=uni(ks[4], (3, 3, 32, 64), 9 * 32),
        b3=uni(ks[5], (1, 64), 9 * 32),
        wl1=uni(ks[6], (64, 128), 64),
        bl1=uni(ks[7], (1, 128), 64),
        wl2=uni(ks[8], (128, output_dim), 128),
        bl2=uni(ks[9], (1, output_dim), 128),
    )


def reference_forward(x_nchw, params):
    """Pure-JAX reference matching the PyTorch module semantics."""
    x = jnp.transpose(x_nchw, (0, 2, 3, 1)).astype(jnp.float32)
    dn = ('NHWC', 'HWIO', 'NHWC')

    xp = jnp.pad(x, ((0, 0), (1, 1), (1, 1), (0, 0)), mode='edge')
    h = jax.nn.relu(lax.conv_general_dilated(
        xp, params['w1'], (1, 1), 'VALID', dimension_numbers=dn)
        + params['b1'].reshape(1, 1, 1, -1))
    h = jax.nn.relu(lax.conv_general_dilated(
        h, params['w2'], (1, 1), 'VALID', dimension_numbers=dn)
        + params['b2'].reshape(1, 1, 1, -1))
    h = jax.nn.relu(lax.conv_general_dilated(
        h, params['w3'], (1, 1), 'VALID', dimension_numbers=dn)
        + params['b3'].reshape(1, 1, 1, -1))
    pooled = jnp.mean(h, axis=(1, 2))                             # (B, 64)
    y = jax.nn.relu(pooled @ params['wl1'] + params['bl1'])
    return y @ params['wl2'] + params['bl2']


if __name__ == "__main__":
    key = jax.random.PRNGKey(0)
    k_x, k_p = jax.random.split(key)

    batch, input_dim, H, W = 2, 4, 16, 16
    output_dim = 5

    x = jax.random.normal(k_x, (batch, input_dim, H, W), jnp.float32)  # NCHW
    params = init_params(k_p, input_dim, output_dim)

    out = jax.block_until_ready(cnn_qnet_forward(x, params))
    ref = jax.block_until_ready(reference_forward(x, params))

    assert out.shape == (batch, output_dim), out.shape
    assert jnp.allclose(out, ref, rtol=1e-3, atol=1e-3), (out, ref)

    print("KERNEL_OK")
</pallas_src>

<mosaic_0001>
module attributes {stable_mosaic.version = 11 : i64} {
  func.func @_cnn_qnet_kernel(%arg0: i32, %arg1: memref<1x18x24x4xf32, #tpu.memory_space<vmem>>, %arg2: memref<9x4x16xf32, #tpu.memory_space<vmem>>, %arg3: memref<1x16xf32, #tpu.memory_space<vmem>>, %arg4: memref<9x16x32xf32, #tpu.memory_space<vmem>>, %arg5: memref<1x32xf32, #tpu.memory_space<vmem>>, %arg6: memref<9x32x64xf32, #tpu.memory_space<vmem>>, %arg7: memref<1x64xf32, #tpu.memory_space<vmem>>, %arg8: memref<1x192xf32, #tpu.memory_space<vmem>>, %arg9: memref<64x128xf32, #tpu.memory_space<vmem>>, %arg10: memref<1x128xf32, #tpu.memory_space<vmem>>, %arg11: memref<128x128xf32, #tpu.memory_space<vmem>>, %arg12: memref<1x128xf32, #tpu.memory_space<vmem>>, %arg13: memref<1x1x128xf32, #tpu.memory_space<vmem>>, %arg14: memref<16x24x16xf32, #tpu.memory_space<vmem>>, %arg15: memref<14x24x32xf32, #tpu.memory_space<vmem>>) attributes {dimension_semantics = [#tpu.dimension_semantics<parallel>], iteration_bounds = array<i64: 2>, scalar_prefetch = 0 : i64, scratch_operands = 2 : i64, tpu.core_type = #tpu.core_type<tc>, window_params = [{transform_indices = @transform_0, window_bounds = array<i64: 1, 18, 24, 4>}, {pipeline_mode = #tpu.pipeline_mode<synchronous>, transform_indices = @transform_1, window_bounds = array<i64: 9, 4, 16>}, {pipeline_mode = #tpu.pipeline_mode<synchronous>, transform_indices = @transform_2, window_bounds = array<i64: 1, 16>}, {pipeline_mode = #tpu.pipeline_mode<synchronous>, transform_indices = @transform_3, window_bounds = array<i64: 9, 16, 32>}, {pipeline_mode = #tpu.pipeline_mode<synchronous>, transform_indices = @transform_4, window_bounds = array<i64: 1, 32>}, {pipeline_mode = #tpu.pipeline_mode<synchronous>, transform_indices = @transform_5, window_bounds = array<i64: 9, 32, 64>}, {pipeline_mode = #tpu.pipeline_mode<synchronous>, transform_indices = @transform_6, window_bounds = array<i64: 1, 64>}, {pipeline_mode = #tpu.pipeline_mode<synchronous>, transform_indices = @transform_7, window_bounds = array<i64: 1, 192>}, {pipeline_mode = #tpu.pipeline_mode<synchronous>, transform_indices = @transform_8, window_bounds = array<i64: 64, 128>}, {pipeline_mode = #tpu.pipeline_mode<synchronous>, transform_indices = @transform_9, window_bounds = array<i64: 1, 128>}, {pipeline_mode = #tpu.pipeline_mode<synchronous>, transform_indices = @transform_10, window_bounds = array<i64: 128, 128>}, {pipeline_mode = #tpu.pipeline_mode<synchronous>, transform_indices = @transform_11, window_bounds = array<i64: 1, 128>}, {transform_indices = @transform_12, window_bounds = array<i64: 1, 1, 128>}]} {
    %cst = arith.constant 0.000000e+00 : f32
    %0 = vector.broadcast %cst : f32 to vector<256x16xf32>
    %c0 = arith.constant 0 : index
    %c0_0 = arith.constant 0 : index
    %c0_1 = arith.constant 0 : index
    %c0_2 = arith.constant 0 : index
    %1 = vector.load %arg1[%c0, %c0_0, %c0_1, %c0_2] : memref<1x18x24x4xf32, #tpu.memory_space<vmem>>, vector<1x16x16x4xf32>
    %2 = vector.shape_cast %1 : vector<1x16x16x4xf32> to vector<16x16x4xf32>
    %3 = vector.shape_cast %2 : vector<16x16x4xf32> to vector<256x4xf32>
    %c0_3 = arith.constant 0 : index
    %c0_4 = arith.constant 0 : index
    %c0_5 = arith.constant 0 : index
    %4 = vector.load %arg2[%c0_3, %c0_4, %c0_5] : memref<9x4x16xf32, #tpu.memory_space<vmem>>, vector<1x4x16xf32>
    %5 = vector.shape_cast %4 : vector<1x4x16xf32> to vector<4x16xf32>
    %cst_6 = arith.constant dense<0.000000e+00> : vector<256x16xf32>
    %6 = tpu.matmul %3, %5, %cst_6 {dimension_numbers = #tpu.dot_dimension_numbers<[1], [0], [0], [1], [0, 0, 1, 1], [], []>} : vector<256x4xf32>, vector<4x16xf32>, vector<256x16xf32> -> vector<256x16xf32>
    %7 = arith.addf %0, %6 : vector<256x16xf32>
    %c0_7 = arith.constant 0 : index
    %c0_8 = arith.constant 0 : index
    %c1 = arith.constant 1 : index
    %c0_9 = arith.constant 0 : index
    %8 = vector.load %arg1[%c0_7, %c0_8, %c1, %c0_9] : memref<1x18x24x4xf32, #tpu.memory_space<vmem>>, vector<1x16x16x4xf32>
    %9 = vector.shape_cast %8 : vector<1x16x16x4xf32> to vector<16x16x4xf32>
    %10 = vector.shape_cast %9 : vector<16x16x4xf32> to vector<256x4xf32>
    %c1_10 = arith.constant 1 : index
    %c0_11 = arith.constant 0 : index
    %c0_12 = arith.constant 0 : index
    %11 = vector.load %arg2[%c1_10, %c0_11, %c0_12] : memref<9x4x16xf32, #tpu.memory_space<vmem>>, vector<1x4x16xf32>
    %12 = vector.shape_cast %11 : vector<1x4x16xf32> to vector<4x16xf32>
    %cst_13 = arith.constant dense<0.000000e+00> : vector<256x16xf32>
    %13 = tpu.matmul %10, %12, %cst_13 {dimension_numbers = #tpu.dot_dimension_numbers<[1], [0], [0], [1], [0, 0, 1, 1], [], []>} : vector<256x4xf32>, vector<4x16xf32>, vector<256x16xf32> -> vector<256x16xf32>
    %14 = arith.addf %7, %13 : vector<256x16xf32>
    %c0_14 = arith.constant 0 : index
    %c0_15 = arith.constant 0 : index
    %c2 = arith.constant 2 : index
    %c0_16 = arith.constant 0 : index
    %15 = vector.load %arg1[%c0_14, %c0_15, %c2, %c0_16] : memref<1x18x24x4xf32, #tpu.memory_space<vmem>>, vector<1x16x16x4xf32>
    %16 = vector.shape_cast %15 : vector<1x16x16x4xf32> to vector<16x16x4xf32>
    %17 = vector.shape_cast %16 : vector<16x16x4xf32> to vector<256x4xf32>
    %c2_17 = arith.constant 2 : index
    %c0_18 = arith.constant 0 : index
    %c0_19 = arith.constant 0 : index
    %18 = vector.load %arg2[%c2_17, %c0_18, %c0_19] : memref<9x4x16xf32, #tpu.memory_space<vmem>>, vector<1x4x16xf32>
    %19 = vector.shape_cast %18 : vector<1x4x16xf32> to vector<4x16xf32>
    %cst_20 = arith.constant dense<0.000000e+00> : vector<256x16xf32>
    %20 = tpu.matmul %17, %19, %cst_20 {dimension_numbers = #tpu.dot_dimension_numbers<[1], [0], [0], [1], [0, 0, 1, 1], [], []>} : vector<256x4xf32>, vector<4x16xf32>, vector<256x16xf32> -> vector<256x16xf32>
    %21 = arith.addf %14, %20 : vector<256x16xf32>
    %c0_21 = arith.constant 0 : index
    %c1_22 = arith.constant 1 : index
    %c0_23 = arith.constant 0 : index
    %c0_24 = arith.constant 0 : index
    %22 = vector.load %arg1[%c0_21, %c1_22, %c0_23, %c0_24] : memref<1x18x24x4xf32, #tpu.memory_space<vmem>>, vector<1x16x16x4xf32>
    %23 = vector.shape_cast %22 : vector<1x16x16x4xf32> to vector<16x16x4xf32>
    %24 = vector.shape_cast %23 : vector<16x16x4xf32> to vector<256x4xf32>
    %c3 = arith.constant 3 : index
    %c0_25 = arith.constant 0 : index
    %c0_26 = arith.constant 0 : index
    %25 = vector.load %arg2[%c3, %c0_25, %c0_26] : memref<9x4x16xf32, #tpu.memory_space<vmem>>, vector<1x4x16xf32>
    %26 = vector.shape_cast %25 : vector<1x4x16xf32> to vector<4x16xf32>
    %cst_27 = arith.constant dense<0.000000e+00> : vector<256x16xf32>
    %27 = tpu.matmul %24, %26, %cst_27 {dimension_numbers = #tpu.dot_dimension_numbers<[1], [0], [0], [1], [0, 0, 1, 1], [], []>} : vector<256x4xf32>, vector<4x16xf32>, vector<256x16xf32> -> vector<256x16xf32>
    %28 = arith.addf %21, %27 : vector<256x16xf32>
    %c0_28 = arith.constant 0 : index
    %c1_29 = arith.constant 1 : index
    %c1_30 = arith.constant 1 : index
    %c0_31 = arith.constant 0 : index
    %29 = vector.load %arg1[%c0_28, %c1_29, %c1_30, %c0_31] : memref<1x18x24x4xf32, #tpu.memory_space<vmem>>, vector<1x16x16x4xf32>
    %30 = vector.shape_cast %29 : vector<1x16x16x4xf32> to vector<16x16x4xf32>
    %31 = vector.shape_cast %30 : vector<16x16x4xf32> to vector<256x4xf32>
    %c4 = arith.constant 4 : index
    %c0_32 = arith.constant 0 : index
    %c0_33 = arith.constant 0 : index
    %32 = vector.load %arg2[%c4, %c0_32, %c0_33] : memref<9x4x16xf32, #tpu.memory_space<vmem>>, vector<1x4x16xf32>
    %33 = vector.shape_cast %32 : vector<1x4x16xf32> to vector<4x16xf32>
    %cst_34 = arith.constant dense<0.000000e+00> : vector<256x16xf32>
    %34 = tpu.matmul %31, %33, %cst_34 {dimension_numbers = #tpu.dot_dimension_numbers<[1], [0], [0], [1], [0, 0, 1, 1], [], []>} : vector<256x4xf32>, vector<4x16xf32>, vector<256x16xf32> -> vector<256x16xf32>
    %35 = arith.addf %28, %34 : vector<256x16xf32>
    %c0_35 = arith.constant 0 : index
    %c1_36 = arith.constant 1 : index
    %c2_37 = arith.constant 2 : index
    %c0_38 = arith.constant 0 : index
    %36 = vector.load %arg1[%c0_35, %c1_36, %c2_37, %c0_38] : memref<1x18x24x4xf32, #tpu.memory_space<vmem>>, vector<1x16x16x4xf32>
    %37 = vector.shape_cast %36 : vector<1x16x16x4xf32> to vector<16x16x4xf32>
    %38 = vector.shape_cast %37 : vector<16x16x4xf32> to vector<256x4xf32>
    %c5 = arith.constant 5 : index
    %c0_39 = arith.constant 0 : index
    %c0_40 = arith.constant 0 : index
    %39 = vector.load %arg2[%c5, %c0_39, %c0_40] : memref<9x4x16xf32, #tpu.memory_space<vmem>>, vector<1x4x16xf32>
    %40 = vector.shape_cast %39 : vector<1x4x16xf32> to vector<4x16xf32>
    %cst_41 = arith.constant dense<0.000000e+00> : vector<256x16xf32>
    %41 = tpu.matmul %38, %40, %cst_41 {dimension_numbers = #tpu.dot_dimension_numbers<[1], [0], [0], [1], [0, 0, 1, 1], [], []>} : vector<256x4xf32>, vector<4x16xf32>, vector<256x16xf32> -> vector<256x16xf32>
    %42 = arith.addf %35, %41 : vector<256x16xf32>
    %c0_42 = arith.constant 0 : index
    %c2_43 = arith.constant 2 : index
    %c0_44 = arith.constant 0 : index
    %c0_45 = arith.constant 0 : index
    %43 = vector.load %arg1[%c0_42, %c2_43, %c0_44, %c0_45] : memref<1x18x24x4xf32, #tpu.memory_space<vmem>>, vector<1x16x16x4xf32>
    %44 = vector.shape_cast %43 : vector<1x16x16x4xf32> to vector<16x16x4xf32>
    %45 = vector.shape_cast %44 : vector<16x16x4xf32> to vector<256x4xf32>
    %c6 = arith.constant 6 : index
    %c0_46 = arith.constant 0 : index
    %c0_47 = arith.constant 0 : index
    %46 = vector.load %arg2[%c6, %c0_46, %c0_47] : memref<9x4x16xf32, #tpu.memory_space<vmem>>, vector<1x4x16xf32>
    %47 = vector.shape_cast %46 : vector<1x4x16xf32> to vector<4x16xf32>
    %cst_48 = arith.constant dense<0.000000e+00> : vector<256x16xf32>
    %48 = tpu.matmul %45, %47, %cst_48 {dimension_numbers = #tpu.dot_dimension_numbers<[1], [0], [0], [1], [0, 0, 1, 1], [], []>} : vector<256x4xf32>, vector<4x16xf32>, vector<256x16xf32> -> vector<256x16xf32>
    %49 = arith.addf %42, %48 : vector<256x16xf32>
    %c0_49 = arith.constant 0 : index
    %c2_50 = arith.constant 2 : index
    %c1_51 = arith.constant 1 : index
    %c0_52 = arith.constant 0 : index
    %50 = vector.load %arg1[%c0_49, %c2_50, %c1_51, %c0_52] : memref<1x18x24x4xf32, #tpu.memory_space<vmem>>, vector<1x16x16x4xf32>
    %51 = vector.shape_cast %50 : vector<1x16x16x4xf32> to vector<16x16x4xf32>
    %52 = vector.shape_cast %51 : vector<16x16x4xf32> to vector<256x4xf32>
    %c7 = arith.constant 7 : index
    %c0_53 = arith.constant 0 : index
    %c0_54 = arith.constant 0 : index
    %53 = vector.load %arg2[%c7, %c0_53, %c0_54] : memref<9x4x16xf32, #tpu.memory_space<vmem>>, vector<1x4x16xf32>
    %54 = vector.shape_cast %53 : vector<1x4x16xf32> to vector<4x16xf32>
    %cst_55 = arith.constant dense<0.000000e+00> : vector<256x16xf32>
    %55 = tpu.matmul %52, %54, %cst_55 {dimension_numbers = #tpu.dot_dimension_numbers<[1], [0], [0], [1], [0, 0, 1, 1], [], []>} : vector<256x4xf32>, vector<4x16xf32>, vector<256x16xf32> -> vector<256x16xf32>
    %56 = arith.addf %49, %55 : vector<256x16xf32>
    %c0_56 = arith.constant 0 : index
    %c2_57 = arith.constant 2 : index
    %c2_58 = arith.constant 2 : index
    %c0_59 = arith.constant 0 : index
    %57 = vector.load %arg1[%c0_56, %c2_57, %c2_58, %c0_59] : memref<1x18x24x4xf32, #tpu.memory_space<vmem>>, vector<1x16x16x4xf32>
    %58 = vector.shape_cast %57 : vector<1x16x16x4xf32> to vector<16x16x4xf32>
    %59 = vector.shape_cast %58 : vector<16x16x4xf32> to vector<256x4xf32>
    %c8 = arith.constant 8 : index
    %c0_60 = arith.constant 0 : index
    %c0_61 = arith.constant 0 : index
    %60 = vector.load %arg2[%c8, %c0_60, %c0_61] : memref<9x4x16xf32, #tpu.memory_space<vmem>>, vector<1x4x16xf32>
    %61 = vector.shape_cast %60 : vector<1x4x16xf32> to vector<4x16xf32>
    %cst_62 = arith.constant dense<0.000000e+00> : vector<256x16xf32>
    %62 = tpu.matmul %59, %61, %cst_62 {dimension_numbers = #tpu.dot_dimension_numbers<[1], [0], [0], [1], [0, 0, 1, 1], [], []>} : vector<256x4xf32>, vector<4x16xf32>, vector<256x16xf32> -> vector<256x16xf32>
    %63 = arith.addf %56, %62 : vector<256x16xf32>
    %c0_63 = arith.constant 0 : index
    %c0_64 = arith.constant 0 : index
    %64 = vector.load %arg3[%c0_63, %c0_64] : memref<1x16xf32, #tpu.memory_space<vmem>>, vector<1x16xf32>
    %65 = vector.broadcast %64 : vector<1x16xf32> to vector<256x16xf32>
    %66 = arith.addf %63, %65 : vector<256x16xf32>
    %cst_65 = arith.constant 0.000000e+00 : f32
    %67 = vector.broadcast %cst_65 : f32 to vector<256x16xf32>
    %68 = arith.maximumf %66, %67 : vector<256x16xf32>
    %69 = vector.shape_cast %68 : vector<256x16xf32> to vector<16x16x16xf32>
    %c0_66 = arith.constant 0 : index
    %c0_67 = arith.constant 0 : index
    %c0_68 = arith.constant 0 : index
    %70 = vector.load %arg14[%c0_66, %c0_67, %c0_68] : memref<16x24x16xf32, #tpu.memory_space<vmem>>, vector<16x16x16xf32>
    tpu.vector_store %arg14[%c0_66, %c0_67, %c0_68], %69 {strides = array<i32>} : memref<16x24x16xf32, #tpu.memory_space<vmem>>, vector<16x16x16xf32>,
    %cst_69 = arith.constant 0.000000e+00 : f32
    %71 = vector.broadcast %cst_69 : f32 to vector<16x8x16xf32>
    %c0_70 = arith.constant 0 : index
    %c16 = arith.constant 16 : index
    %c0_71 = arith.constant 0 : index
    %72 = vector.load %arg14[%c0_70, %c16, %c0_71] : memref<16x24x16xf32, #tpu.memory_space<vmem>>, vector<16x8x16xf32>
    tpu.vector_store %arg14[%c0_70, %c16, %c0_71], %71 {strides = array<i32>} : memref<16x24x16xf32, #tpu.memory_space<vmem>>, vector<16x8x16xf32>,
    %cst_72 = arith.constant 0.000000e+00 : f32
    %73 = vector.broadcast %cst_72 : f32 to vector<224x32xf32>
    %c0_73 = arith.constant 0 : index
    %c0_74 = arith.constant 0 : index
    %c0_75 = arith.constant 0 : index
    %74 = vector.load %arg14[%c0_73, %c0_74, %c0_75] : memref<16x24x16xf32, #tpu.memory_space<vmem>>, vector<14x16x16xf32>
    %75 = vector.shape_cast %74 : vector<14x16x16xf32> to vector<224x16xf32>
    %c0_76 = arith.constant 0 : index
    %c0_77 = arith.constant 0 : index
    %c0_78 = arith.constant 0 : index
    %76 = vector.load %arg4[%c0_76, %c0_77, %c0_78] : memref<9x16x32xf32, #tpu.memory_space<vmem>>, vector<1x16x32xf32>
    %77 = vector.shape_cast %76 : vector<1x16x32xf32> to vector<16x32xf32>
    %cst_79 = arith.constant dense<0.000000e+00> : vector<224x32xf32>
    %78 = tpu.matmul %75, %77, %cst_79 {dimension_numbers = #tpu.dot_dimension_numbers<[1], [0], [0], [1], [0, 0, 1, 1], [], []>} : vector<224x16xf32>, vector<16x32xf32>, vector<224x32xf32> -> vector<224x32xf32>
    %79 = arith.addf %73, %78 : vector<224x32xf32>
    %c0_80 = arith.constant 0 : index
    %c1_81 = arith.constant 1 : index
    %c0_82 = arith.constant 0 : index
    %80 = vector.load %arg14[%c0_80, %c1_81, %c0_82] : memref<16x24x16xf32, #tpu.memory_space<vmem>>, vector<14x16x16xf32>
    %81 = vector.shape_cast %80 : vector<14x16x16xf32> to vector<224x16xf32>
    %c1_83 = arith.constant 1 : index
    %c0_84 = arith.constant 0 : index
    %c0_85 = arith.constant 0 : index
    %82 = vector.load %arg4[%c1_83, %c0_84, %c0_85] : memref<9x16x32xf32, #tpu.memory_space<vmem>>, vector<1x16x32xf32>
    %83 = vector.shape_cast %82 : vector<1x16x32xf32> to vector<16x32xf32>
    %cst_86 = arith.constant dense<0.000000e+00> : vector<224x32xf32>
    %84 = tpu.matmul %81, %83, %cst_86 {dimension_numbers = #tpu.dot_dimension_numbers<[1], [0], [0], [1], [0, 0, 1, 1], [], []>} : vector<224x16xf32>, vector<16x32xf32>, vector<224x32xf32> -> vector<224x32xf32>
    %85 = arith.addf %79, %84 : vector<224x32xf32>
    %c0_87 = arith.constant 0 : index
    %c2_88 = arith.constant 2 : index
    %c0_89 = arith.constant 0 : index
    %86 = vector.load %arg14[%c0_87, %c2_88, %c0_89] : memref<16x24x16xf32, #tpu.memory_space<vmem>>, vector<14x16x16xf32>
    %87 = vector.shape_cast %86 : vector<14x16x16xf32> to vector<224x16xf32>
    %c2_90 = arith.constant 2 : index
    %c0_91 = arith.constant 0 : index
    %c0_92 = arith.constant 0 : index
    %88 = vector.load %arg4[%c2_90, %c0_91, %c0_92] : memref<9x16x32xf32, #tpu.memory_space<vmem>>, vector<1x16x32xf32>
    %89 = vector.shape_cast %88 : vector<1x16x32xf32> to vector<16x32xf32>
    %cst_93 = arith.constant dense<0.000000e+00> : vector<224x32xf32>
    %90 = tpu.matmul %87, %89, %cst_93 {dimension_numbers = #tpu.dot_dimension_numbers<[1], [0], [0], [1], [0, 0, 1, 1], [], []>} : vector<224x16xf32>, vector<16x32xf32>, vector<224x32xf32> -> vector<224x32xf32>
    %91 = arith.addf %85, %90 : vector<224x32xf32>
    %c1_94 = arith.constant 1 : index
    %c0_95 = arith.constant 0 : index
    %c0_96 = arith.constant 0 : index
    %92 = vector.load %arg14[%c1_94, %c0_95, %c0_96] : memref<16x24x16xf32, #tpu.memory_space<vmem>>, vector<14x16x16xf32>
    %93 = vector.shape_cast %92 : vector<14x16x16xf32> to vector<224x16xf32>
    %c3_97 = arith.constant 3 : index
    %c0_98 = arith.constant 0 : index
    %c0_99 = arith.constant 0 : index
    %94 = vector.load %arg4[%c3_97, %c0_98, %c0_99] : memref<9x16x32xf32, #tpu.memory_space<vmem>>, vector<1x16x32xf32>
    %95 = vector.shape_cast %94 : vector<1x16x32xf32> to vector<16x32xf32>
    %cst_100 = arith.constant dense<0.000000e+00> : vector<224x32xf32>
    %96 = tpu.matmul %93, %95, %cst_100 {dimension_numbers = #tpu.dot_dimension_numbers<[1], [0], [0], [1], [0, 0, 1, 1], [], []>} : vector<224x16xf32>, vector<16x32xf32>, vector<224x32xf32> -> vector<224x32xf32>
    %97 = arith.addf %91, %96 : vector<224x32xf32>
    %c1_101 = arith.constant 1 : index
    %c1_102 = arith.constant 1 : index
    %c0_103 = arith.constant 0 : index
    %98 = vector.load %arg14[%c1_101, %c1_102, %c0_103] : memref<16x24x16xf32, #tpu.memory_space<vmem>>, vector<14x16x16xf32>
    %99 = vector.shape_cast %98 : vector<14x16x16xf32> to vector<224x16xf32>
    %c4_104 = arith.constant 4 : index
    %c0_105 = arith.constant 0 : index
    %c0_106 = arith.constant 0 : index
    %100 = vector.load %arg4[%c4_104, %c0_105, %c0_106] : memref<9x16x32xf32, #tpu.memory_space<vmem>>, vector<1x16x32xf32>
    %101 = vector.shape_cast %100 : vector<1x16x32xf32> to vector<16x32xf32>
    %cst_107 = arith.constant dense<0.000000e+00> : vector<224x32xf32>
    %102 = tpu.matmul %99, %101, %cst_107 {dimension_numbers = #tpu.dot_dimension_numbers<[1], [0], [0], [1], [0, 0, 1, 1], [], []>} : vector<224x16xf32>, vector<16x32xf32>, vector<224x32xf32> -> vector<224x32xf32>
    %103 = arith.addf %97, %102 : vector<224x32xf32>
    %c1_108 = arith.constant 1 : index
    %c2_109 = arith.constant 2 : index
    %c0_110 = arith.constant 0 : index
    %104 = vector.load %arg14[%c1_108, %c2_109, %c0_110] : memref<16x24x16xf32, #tpu.memory_space<vmem>>, vector<14x16x16xf32>
    %105 = vector.shape_cast %104 : vector<14x16x16xf32> to vector<224x16xf32>
    %c5_111 = arith.constant 5 : index
    %c0_112 = arith.constant 0 : index
    %c0_113 = arith.constant 0 : index
    %106 = vector.load %arg4[%c5_111, %c0_112, %c0_113] : memref<9x16x32xf32, #tpu.memory_space<vmem>>, vector<1x16x32xf32>
    %107 = vector.shape_cast %106 : vector<1x16x32xf32> to vector<16x32xf32>
    %cst_114 = arith.constant dense<0.000000e+00> : vector<224x32xf32>
    %108 = tpu.matmul %105, %107, %cst_114 {dimension_numbers = #tpu.dot_dimension_numbers<[1], [0], [0], [1], [0, 0, 1, 1], [], []>} : vector<224x16xf32>, vector<16x32xf32>, vector<224x32xf32> -> vector<224x32xf32>
    %109 = arith.addf %103, %108 : vector<224x32xf32>
    %c2_115 = arith.constant 2 : index
    %c0_116 = arith.constant 0 : index
    %c0_117 = arith.constant 0 : index
    %110 = vector.load %arg14[%c2_115, %c0_116, %c0_117] : memref<16x24x16xf32, #tpu.memory_space<vmem>>, vector<14x16x16xf32>
    %111 = vector.shape_cast %110 : vector<14x16x16xf32> to vector<224x16xf32>
    %c6_118 = arith.constant 6 : index
    %c0_119 = arith.constant 0 : index
    %c0_120 = arith.constant 0 : index
    %112 = vector.load %arg4[%c6_118, %c0_119, %c0_120] : memref<9x16x32xf32, #tpu.memory_space<vmem>>, vector<1x16x32xf32>
    %113 = vector.shape_cast %112 : vector<1x16x32xf32> to vector<16x32xf32>
    %cst_121 = arith.constant dense<0.000000e+00> : vector<224x32xf32>
    %114 = tpu.matmul %111, %113, %cst_121 {dimension_numbers = #tpu.dot_dimension_numbers<[1], [0], [0], [1], [0, 0, 1, 1], [], []>} : vector<224x16xf32>, vector<16x32xf32>, vector<224x32xf32> -> vector<224x32xf32>
    %115 = arith.addf %109, %114 : vector<224x32xf32>
    %c2_122 = arith.constant 2 : index
    %c1_123 = arith.constant 1 : index
    %c0_124 = arith.constant 0 : index
    %116 = vector.load %arg14[%c2_122, %c1_123, %c0_124] : memref<16x24x16xf32, #tpu.memory_space<vmem>>, vector<14x16x16xf32>
    %117 = vector.shape_cast %116 : vector<14x16x16xf32> to vector<224x16xf32>
    %c7_125 = arith.constant 7 : index
    %c0_126 = arith.constant 0 : index
    %c0_127 = arith.constant 0 : index
    %118 = vector.load %arg4[%c7_125, %c0_126, %c0_127] : memref<9x16x32xf32, #tpu.memory_space<vmem>>, vector<1x16x32xf32>
    %119 = vector.shape_cast %118 : vector<1x16x32xf32> to vector<16x32xf32>
    %cst_128 = arith.constant dense<0.000000e+00> : vector<224x32xf32>
    %120 = tpu.matmul %117, %119, %cst_128 {dimension_numbers = #tpu.dot_dimension_numbers<[1], [0], [0], [1], [0, 0, 1, 1], [], []>} : vector<224x16xf32>, vector<16x32xf32>, vector<224x32xf32> -> vector<224x32xf32>
    %121 = arith.addf %115, %120 : vector<224x32xf32>
    %c2_129 = arith.constant 2 : index
    %c2_130 = arith.constant 2 : index
    %c0_131 = arith.constant 0 : index
    %122 = vector.load %arg14[%c2_129, %c2_130, %c0_131] : memref<16x24x16xf32, #tpu.memory_space<vmem>>, vector<14x16x16xf32>
    %123 = vector.shape_cast %122 : vector<14x16x16xf32> to vector<224x16xf32>
    %c8_132 = arith.constant 8 : index
    %c0_133 = arith.constant 0 : index
    %c0_134 = arith.constant 0 : index
    %124 = vector.load %arg4[%c8_132, %c0_133, %c0_134] : memref<9x16x32xf32, #tpu.memory_space<vmem>>, vector<1x16x32xf32>
    %125 = vector.shape_cast %124 : vector<1x16x32xf32> to vector<16x32xf32>
    %cst_135 = arith.constant dense<0.000000e+00> : vector<224x32xf32>
    %126 = tpu.matmul %123, %125, %cst_135 {dimension_numbers = #tpu.dot_dimension_numbers<[1], [0], [0], [1], [0, 0, 1, 1], [], []>} : vector<224x16xf32>, vector<16x32xf32>, vector<224x32xf32> -> vector<224x32xf32>
    %127 = arith.addf %121, %126 : vector<224x32xf32>
    %c0_136 = arith.constant 0 : index
    %c0_137 = arith.constant 0 : index
    %128 = vector.load %arg5[%c0_136, %c0_137] : memref<1x32xf32, #tpu.memory_space<vmem>>, vector<1x32xf32>
    %129 = vector.broadcast %128 : vector<1x32xf32> to vector<224x32xf32>
    %130 = arith.addf %127, %129 : vector<224x32xf32>
    %cst_138 = arith.constant 0.000000e+00 : f32
    %131 = vector.broadcast %cst_138 : f32 to vector<224x32xf32>
    %132 = arith.maximumf %130, %131 : vector<224x32xf32>
    %133 = vector.shape_cast %132 : vector<224x32xf32> to vector<14x16x32xf32>
    %c0_139 = arith.constant 0 : index
    %c0_140 = arith.constant 0 : index
    %c0_141 = arith.constant 0 : index
    %134 = vector.load %arg15[%c0_139, %c0_140, %c0_141] : memref<14x24x32xf32, #tpu.memory_space<vmem>>, vector<14x16x32xf32>
    tpu.vector_store %arg15[%c0_139, %c0_140, %c0_141], %133 {strides = array<i32>} : memref<14x24x32xf32, #tpu.memory_space<vmem>>, vector<14x16x32xf32>,
    %cst_142 = arith.constant 0.000000e+00 : f32
    %135 = vector.broadcast %cst_142 : f32 to vector<14x8x32xf32>
    %c0_143 = arith.constant 0 : index
    %c16_144 = arith.constant 16 : index
    %c0_145 = arith.constant 0 : index
    %136 = vector.load %arg15[%c0_143, %c16_144, %c0_145] : memref<14x24x32xf32, #tpu.memory_space<vmem>>, vector<14x8x32xf32>
    tpu.vector_store %arg15[%c0_143, %c16_144, %c0_145], %135 {strides = array<i32>} : memref<14x24x32xf32, #tpu.memory_space<vmem>>, vector<14x8x32xf32>,
    %cst_146 = arith.constant 0.000000e+00 : f32
    %137 = vector.broadcast %cst_146 : f32 to vector<192x64xf32>
    %c0_147 = arith.constant 0 : index
    %c0_148 = arith.constant 0 : index
    %c0_149 = arith.constant 0 : index
    %138 = vector.load %arg15[%c0_147, %c0_148, %c0_149] : memref<14x24x32xf32, #tpu.memory_space<vmem>>, vector<12x16x32xf32>
    %139 = vector.shape_cast %138 : vector<12x16x32xf32> to vector<192x32xf32>
    %c0_150 = arith.constant 0 : index
    %c0_151 = arith.constant 0 : index
    %c0_152 = arith.constant 0 : index
    %140 = vector.load %arg6[%c0_150, %c0_151, %c0_152] : memref<9x32x64xf32, #tpu.memory_space<vmem>>, vector<1x32x64xf32>
    %141 = vector.shape_cast %140 : vector<1x32x64xf32> to vector<32x64xf32>
    %cst_153 = arith.constant dense<0.000000e+00> : vector<192x64xf32>
    %142 = tpu.matmul %139, %141, %cst_153 {dimension_numbers = #tpu.dot_dimension_numbers<[1], [0], [0], [1], [0, 0, 1, 1], [], []>} : vector<192x32xf32>, vector<32x64xf32>, vector<192x64xf32> -> vector<192x64xf32>
    %143 = arith.addf %137, %142 : vector<192x64xf32>
    %c0_154 = arith.constant 0 : index
    %c1_155 = arith.constant 1 : index
    %c0_156 = arith.constant 0 : index
    %144 = vector.load %arg15[%c0_154, %c1_155, %c0_156] : memref<14x24x32xf32, #tpu.memory_space<vmem>>, vector<12x16x32xf32>
    %145 = vector.shape_cast %144 : vector<12x16x32xf32> to vector<192x32xf32>
    %c1_157 = arith.constant 1 : index
    %c0_158 = arith.constant 0 : index
    %c0_159 = arith.constant 0 : index
    %146 = vector.load %arg6[%c1_157, %c0_158, %c0_159] : memref<9x32x64xf32, #tpu.memory_space<vmem>>, vector<1x32x64xf32>
    %147 = vector.shape_cast %146 : vector<1x32x64xf32> to vector<32x64xf32>
    %cst_160 = arith.constant dense<0.000000e+00> : vector<192x64xf32>
    %148 = tpu.matmul %145, %147, %cst_160 {dimension_numbers = #tpu.dot_dimension_numbers<[1], [0], [0], [1], [0, 0, 1, 1], [], []>} : vector<192x32xf32>, vector<32x64xf32>, vector<192x64xf32> -> vector<192x64xf32>
    %149 = arith.addf %143, %148 : vector<192x64xf32>
    %c0_161 = arith.constant 0 : index
    %c2_162 = arith.constant 2 : index
    %c0_163 = arith.constant 0 : index
    %150 = vector.load %arg15[%c0_161, %c2_162, %c0_163] : memref<14x24x32xf32, #tpu.memory_space<vmem>>, vector<12x16x32xf32>
    %151 = vector.shape_cast %150 : vector<12x16x32xf32> to vector<192x32xf32>
    %c2_164 = arith.constant 2 : index
    %c0_165 = arith.constant 0 : index
    %c0_166 = arith.constant 0 : index
    %152 = vector.load %arg6[%c2_164, %c0_165, %c0_166] : memref<9x32x64xf32, #tpu.memory_space<vmem>>, vector<1x32x64xf32>
    %153 = vector.shape_cast %152 : vector<1x32x64xf32> to vector<32x64xf32>
    %cst_167 = arith.constant dense<0.000000e+00> : vector<192x64xf32>
    %154 = tpu.matmul %151, %153, %cst_167 {dimension_numbers = #tpu.dot_dimension_numbers<[1], [0], [0], [1], [0, 0, 1, 1], [], []>} : vector<192x32xf32>, vector<32x64xf32>, vector<192x64xf32> -> vector<192x64xf32>
    %155 = arith.addf %149, %154 : vector<192x64xf32>
    %c1_168 = arith.constant 1 : index
    %c0_169 = arith.constant 0 : index
    %c0_170 = arith.constant 0 : index
    %156 = vector.load %arg15[%c1_168, %c0_169, %c0_170] : memref<14x24x32xf32, #tpu.memory_space<vmem>>, vector<12x16x32xf32>
    %157 = vector.shape_cast %156 : vector<12x16x32xf32> to vector<192x32xf32>
    %c3_171 = arith.constant 3 : index
    %c0_172 = arith.constant 0 : index
    %c0_173 = arith.constant 0 : index
    %158 = vector.load %arg6[%c3_171, %c0_172, %c0_173] : memref<9x32x64xf32, #tpu.memory_space<vmem>>, vector<1x32x64xf32>
    %159 = vector.shape_cast %158 : vector<1x32x64xf32> to vector<32x64xf32>
    %cst_174 = arith.constant dense<0.000000e+00> : vector<192x64xf32>
    %160 = tpu.matmul %157, %159, %cst_174 {dimension_numbers = #tpu.dot_dimension_numbers<[1], [0], [0], [1], [0, 0, 1, 1], [], []>} : vector<192x32xf32>, vector<32x64xf32>, vector<192x64xf32> -> vector<192x64xf32>
    %161 = arith.addf %155, %160 : vector<192x64xf32>
    %c1_175 = arith.constant 1 : index
    %c1_176 = arith.constant 1 : index
    %c0_177 = arith.constant 0 : index
    %162 = vector.load %arg15[%c1_175, %c1_176, %c0_177] : memref<14x24x32xf32, #tpu.memory_space<vmem>>, vector<12x16x32xf32>
    %163 = vector.shape_cast %162 : vector<12x16x32xf32> to vector<192x32xf32>
    %c4_178 = arith.constant 4 : index
    %c0_179 = arith.constant 0 : index
    %c0_180 = arith.constant 0 : index
    %164 = vector.load %arg6[%c4_178, %c0_179, %c0_180] : memref<9x32x64xf32, #tpu.memory_space<vmem>>, vector<1x32x64xf32>
    %165 = vector.shape_cast %164 : vector<1x32x64xf32> to vector<32x64xf32>
    %cst_181 = arith.constant dense<0.000000e+00> : vector<192x64xf32>
    %166 = tpu.matmul %163, %165, %cst_181 {dimension_numbers = #tpu.dot_dimension_numbers<[1], [0], [0], [1], [0, 0, 1, 1], [], []>} : vector<192x32xf32>, vector<32x64xf32>, vector<192x64xf32> -> vector<192x64xf32>
    %167 = arith.addf %161, %166 : vector<192x64xf32>
    %c1_182 = arith.constant 1 : index
    %c2_183 = arith.constant 2 : index
    %c0_184 = arith.constant 0 : index
    %168 = vector.load %arg15[%c1_182, %c2_183, %c0_184] : memref<14x24x32xf32, #tpu.memory_space<vmem>>, vector<12x16x32xf32>
    %169 = vector.shape_cast %168 : vector<12x16x32xf32> to vector<192x32xf32>
    %c5_185 = arith.constant 5 : index
    %c0_186 = arith.constant 0 : index
    %c0_187 = arith.constant 0 : index
    %170 = vector.load %arg6[%c5_185, %c0_186, %c0_187] : memref<9x32x64xf32, #tpu.memory_space<vmem>>, vector<1x32x64xf32>
    %171 = vector.shape_cast %170 : vector<1x32x64xf32> to vector<32x64xf32>
    %cst_188 = arith.constant dense<0.000000e+00> : vector<192x64xf32>
    %172 = tpu.matmul %169, %171, %cst_188 {dimension_numbers = #tpu.dot_dimension_numbers<[1], [0], [0], [1], [0, 0, 1, 1], [], []>} : vector<192x32xf32>, vector<32x64xf32>, vector<192x64xf32> -> vector<192x64xf32>
    %173 = arith.addf %167, %172 : vector<192x64xf32>
    %c2_189 = arith.constant 2 : index
    %c0_190 = arith.constant 0 : index
    %c0_191 = arith.constant 0 : index
    %174 = vector.load %arg15[%c2_189, %c0_190, %c0_191] : memref<14x24x32xf32, #tpu.memory_space<vmem>>, vector<12x16x32xf32>
    %175 = vector.shape_cast %174 : vector<12x16x32xf32> to vector<192x32xf32>
    %c6_192 = arith.constant 6 : index
    %c0_193 = arith.constant 0 : index
    %c0_194 = arith.constant 0 : index
    %176 = vector.load %arg6[%c6_192, %c0_193, %c0_194] : memref<9x32x64xf32, #tpu.memory_space<vmem>>, vector<1x32x64xf32>
    %177 = vector.shape_cast %176 : vector<1x32x64xf32> to vector<32x64xf32>
    %cst_195 = arith.constant dense<0.000000e+00> : vector<192x64xf32>
    %178 = tpu.matmul %175, %177, %cst_195 {dimension_numbers = #tpu.dot_dimension_numbers<[1], [0], [0], [1], [0, 0, 1, 1], [], []>} : vector<192x32xf32>, vector<32x64xf32>, vector<192x64xf32> -> vector<192x64xf32>
    %179 = arith.addf %173, %178 : vector<192x64xf32>
    %c2_196 = arith.constant 2 : index
    %c1_197 = arith.constant 1 : index
    %c0_198 = arith.constant 0 : index
    %180 = vector.load %arg15[%c2_196, %c1_197, %c0_198] : memref<14x24x32xf32, #tpu.memory_space<vmem>>, vector<12x16x32xf32>
    %181 = vector.shape_cast %180 : vector<12x16x32xf32> to vector<192x32xf32>
    %c7_199 = arith.constant 7 : index
    %c0_200 = arith.constant 0 : index
    %c0_201 = arith.constant 0 : index
    %182 = vector.load %arg6[%c7_199, %c0_200, %c0_201] : memref<9x32x64xf32, #tpu.memory_space<vmem>>, vector<1x32x64xf32>
    %183 = vector.shape_cast %182 : vector<1x32x64xf32> to vector<32x64xf32>
    %cst_202 = arith.constant dense<0.000000e+00> : vector<192x64xf32>
    %184 = tpu.matmul %181, %183, %cst_202 {dimension_numbers = #tpu.dot_dimension_numbers<[1], [0], [0], [1], [0, 0, 1, 1], [], []>} : vector<192x32xf32>, vector<32x64xf32>, vector<192x64xf32> -> vector<192x64xf32>
    %185 = arith.addf %179, %184 : vector<192x64xf32>
    %c2_203 = arith.constant 2 : index
    %c2_204 = arith.constant 2 : index
    %c0_205 = arith.constant 0 : index
    %186 = vector.load %arg15[%c2_203, %c2_204, %c0_205] : memref<14x24x32xf32, #tpu.memory_space<vmem>>, vector<12x16x32xf32>
    %187 = vector.shape_cast %186 : vector<12x16x32xf32> to vector<192x32xf32>
    %c8_206 = arith.constant 8 : index
    %c0_207 = arith.constant 0 : index
    %c0_208 = arith.constant 0 : index
    %188 = vector.load %arg6[%c8_206, %c0_207, %c0_208] : memref<9x32x64xf32, #tpu.memory_space<vmem>>, vector<1x32x64xf32>
    %189 = vector.shape_cast %188 : vector<1x32x64xf32> to vector<32x64xf32>
    %cst_209 = arith.constant dense<0.000000e+00> : vector<192x64xf32>
    %190 = tpu.matmul %187, %189, %cst_209 {dimension_numbers = #tpu.dot_dimension_numbers<[1], [0], [0], [1], [0, 0, 1, 1], [], []>} : vector<192x32xf32>, vector<32x64xf32>, vector<192x64xf32> -> vector<192x64xf32>
    %191 = arith.addf %185, %190 : vector<192x64xf32>
    %c0_210 = arith.constant 0 : index
    %c0_211 = arith.constant 0 : index
    %192 = vector.load %arg7[%c0_210, %c0_211] : memref<1x64xf32, #tpu.memory_space<vmem>>, vector<1x64xf32>
    %193 = vector.broadcast %192 : vector<1x64xf32> to vector<192x64xf32>
    %194 = arith.addf %191, %193 : vector<192x64xf32>
    %cst_212 = arith.constant 0.000000e+00 : f32
    %195 = vector.broadcast %cst_212 : f32 to vector<192x64xf32>
    %196 = arith.maximumf %194, %195 : vector<192x64xf32>
    %c0_213 = arith.constant 0 : index
    %c0_214 = arith.constant 0 : index
    %197 = vector.load %arg8[%c0_213, %c0_214] : memref<1x192xf32, #tpu.memory_space<vmem>>, vector<1x192xf32>
    %cst_215 = arith.constant dense<0.000000e+00> : vector<1x64xf32>
    %198 = tpu.matmul %197, %196, %cst_215 {dimension_numbers = #tpu.dot_dimension_numbers<[1], [0], [0], [1], [0, 0, 1, 1], [], []>} : vector<1x192xf32>, vector<192x64xf32>, vector<1x64xf32> -> vector<1x64xf32>
    %c0_216 = arith.constant 0 : index
    %c0_217 = arith.constant 0 : index
    %199 = vector.load %arg9[%c0_216, %c0_217] : memref<64x128xf32, #tpu.memory_space<vmem>>, vector<64x128xf32>
    %cst_218 = arith.constant dense<0.000000e+00> : vector<1x128xf32>
    %200 = tpu.matmul %198, %199, %cst_218 {dimension_numbers = #tpu.dot_dimension_numbers<[1], [0], [0], [1], [0, 0, 1, 1], [], []>} : vector<1x64xf32>, vector<64x128xf32>, vector<1x128xf32> -> vector<1x128xf32>
    %c0_219 = arith.constant 0 : index
    %c0_220 = arith.constant 0 : index
    %201 = vector.load %arg10[%c0_219, %c0_220] : memref<1x128xf32, #tpu.memory_space<vmem>>, vector<1x128xf32>
    %202 = arith.addf %200, %201 : vector<1x128xf32>
    %cst_221 = arith.constant 0.000000e+00 : f32
    %203 = vector.broadcast %cst_221 : f32 to vector<1x128xf32>
    %204 = arith.maximumf %202, %203 : vector<1x128xf32>
    %c0_222 = arith.constant 0 : index
    %c0_223 = arith.constant 0 : index
    %205 = vector.load %arg11[%c0_222, %c0_223] : memref<128x128xf32, #tpu.memory_space<vmem>>, vector<128x128xf32>
    %cst_224 = arith.constant dense<0.000000e+00> : vector<1x128xf32>
    %206 = tpu.matmul %204, %205, %cst_224 {dimension_numbers = #tpu.dot_dimension_numbers<[1], [0], [0], [1], [0, 0, 1, 1], [], []>} : vector<1x128xf32>, vector<128x128xf32>, vector<1x128xf32> -> vector<1x128xf32>
    %c0_225 = arith.constant 0 : index
    %c0_226 = arith.constant 0 : index
    %207 = vector.load %arg12[%c0_225, %c0_226] : memref<1x128xf32, #tpu.memory_space<vmem>>, vector<1x128xf32>
    %208 = arith.addf %206, %207 : vector<1x128xf32>
    %c0_227 = arith.constant 0 : index
    %c0_228 = arith.constant 0 : index
    %c0_229 = arith.constant 0 : index
    %209 = vector.load %arg13[%c0_227, %c0_228, %c0_229] : memref<1x1x128xf32, #tpu.memory_space<vmem>>, vector<1x1x128xf32>
    %210 = vector.shape_cast %209 : vector<1x1x128xf32> to vector<1x128xf32>
    %211 = vector.shape_cast %208 : vector<1x128xf32> to vector<1x1x128xf32>
    tpu.vector_store %arg13[%c0_227, %c0_228, %c0_229], %211 {strides = array<i32>} : memref<1x1x128xf32, #tpu.memory_space<vmem>>, vector<1x1x128xf32>,
    return
  }
  func.func @transform_0(%arg0: i32) -> (i32, i32, i32, i32) {
    %c0_i32 = arith.constant 0 : i32
    %c0_i32_0 = arith.constant 0 : i32
    %c0_i32_1 = arith.constant 0 : i32
    %c0_i32_2 = arith.constant 0 : i32
    return %arg0, %c0_i32, %c0_i32_0, %c0_i32_1 : i32, i32, i32, i32
  }
  func.func @transform_1(%arg0: i32) -> (i32, i32, i32) {
    %c0_i32 = arith.constant 0 : i32
    %c0_i32_0 = arith.constant 0 : i32
    %c0_i32_1 = arith.constant 0 : i32
    %c0_i32_2 = arith.constant 0 : i32
    return %c0_i32, %c0_i32_0, %c0_i32_1 : i32, i32, i32
  }
  func.func @transform_2(%arg0: i32) -> (i32, i32) {
    %c0_i32 = arith.constant 0 : i32
    %c0_i32_0 = arith.constant 0 : i32
    %c0_i32_1 = arith.constant 0 : i32
    return %c0_i32, %c0_i32_0 : i32, i32
  }
  func.func @transform_3(%arg0: i32) -> (i32, i32, i32) {
    %c0_i32 = arith.constant 0 : i32
    %c0_i32_0 = arith.constant 0 : i32
    %c0_i32_1 = arith.constant 0 : i32
    %c0_i32_2 = arith.constant 0 : i32
    return %c0_i32, %c0_i32_0, %c0_i32_1 : i32, i32, i32
  }
  func.func @transform_4(%arg0: i32) -> (i32, i32) {
    %c0_i32 = arith.constant 0 : i32
    %c0_i32_0 = arith.constant 0 : i32
    %c0_i32_1 = arith.constant 0 : i32
    return %c0_i32, %c0_i32_0 : i32, i32
  }
  func.func @transform_5(%arg0: i32) -> (i32, i32, i32) {
    %c0_i32 = arith.constant 0 : i32
    %c0_i32_0 = arith.constant 0 : i32
    %c0_i32_1 = arith.constant 0 : i32
    %c0_i32_2 = arith.constant 0 : i32
    return %c0_i32, %c0_i32_0, %c0_i32_1 : i32, i32, i32
  }
  func.func @transform_6(%arg0: i32) -> (i32, i32) {
    %c0_i32 = arith.constant 0 : i32
    %c0_i32_0 = arith.constant 0 : i32
    %c0_i32_1 = arith.constant 0 : i32
    return %c0_i32, %c0_i32_0 : i32, i32
  }
  func.func @transform_7(%arg0: i32) -> (i32, i32) {
    %c0_i32 = arith.constant 0 : i32
    %c0_i32_0 = arith.constant 0 : i32
    %c0_i32_1 = arith.constant 0 : i32
    return %c0_i32, %c0_i32_0 : i32, i32
  }
  func.func @transform_8(%arg0: i32) -> (i32, i32) {
    %c0_i32 = arith.constant 0 : i32
    %c0_i32_0 = arith.constant 0 : i32
    %c0_i32_1 = arith.constant 0 : i32
    return %c0_i32, %c0_i32_0 : i32, i32
  }
  func.func @transform_9(%arg0: i32) -> (i32, i32) {
    %c0_i32 = arith.constant 0 : i32
    %c0_i32_0 = arith.constant 0 : i32
    %c0_i32_1 = arith.constant 0 : i32
    return %c0_i32, %c0_i32_0 : i32, i32
  }
  func.func @transform_10(%arg0: i32) -> (i32, i32) {
    %c0_i32 = arith.constant 0 : i32
    %c0_i32_0 = arith.constant 0 : i32
    %c0_i32_1 = arith.constant 0 : i32
    return %c0_i32, %c0_i32_0 : i32, i32
  }
  func.func @transform_11(%arg0: i32) -> (i32, i32) {
    %c0_i32 = arith.constant 0 : i32
    %c0_i32_0 = arith.constant 0 : i32
    %c0_i32_1 = arith.constant 0 : i32
    return %c0_i32, %c0_i32_0 : i32, i32
  }
  func.func @transform_12(%arg0: i32) -> (i32, i32, i32) {
    %c0_i32 = arith.constant 0 : i32
    %c0_i32_0 = arith.constant 0 : i32
    %c0_i32_1 = arith.constant 0 : i32
    return %arg0, %c0_i32, %c0_i32_0 : i32, i32, i32
  }
}

</mosaic_0001>

<llo_original>
// kernel: cnn_qnet_forward.1
$region0: #{cnn_qnet_forward.1}
  #allocation0 [shape = 'u32[]', space=smem, size = 0x4, offset = 0x4, fixed_abs, tag = 'smem constant byte address 0x4 - core index']
  #allocation1 [shape = 'u32[144,128]{1,0:T(1,128)}', space=vmem, size = 0x12000, scoped, tag = 'internal scratch']
  #allocation2 [shape = 'f32[16,24,16]{2,1,0:T(8,128)}', space=vmem, size = 0x30000, scoped, tag = 'scratch operand']
  #allocation3 [shape = 'f32[14,24,32]{2,1,0:T(8,128)}', space=vmem, size = 0x2a000, scoped, tag = 'scratch operand']
  %s0 = inlined_call_operand.vmem [shape: f32[2,18,24,4], index: 0, kind: input, shape index: {}]
  %s1 = inlined_call_operand.vmem [shape: f32[9,4,16], index: 1, kind: input, shape index: {}]
  %s2 = inlined_call_operand.vmem [shape: f32[1,16], index: 2, kind: input, shape index: {}]
  %s3 = inlined_call_operand.vmem [shape: f32[9,16,32], index: 3, kind: input, shape index: {}]
  %s4 = inlined_call_operand.vmem [shape: f32[1,32], index: 4, kind: input, shape index: {}]
  %s5 = inlined_call_operand.vmem [shape: f32[9,32,64], index: 5, kind: input, shape index: {}]
  %s6 = inlined_call_operand.vmem [shape: f32[1,64], index: 6, kind: input, shape index: {}]
  %s7 = inlined_call_operand.vmem [shape: f32[1,192], index: 7, kind: input, shape index: {}]
  %s8 = inlined_call_operand.vmem [shape: f32[64,128], index: 8, kind: input, shape index: {}]
  %s9 = inlined_call_operand.vmem [shape: f32[1,128], index: 9, kind: input, shape index: {}]
  %s10 = inlined_call_operand.vmem [shape: f32[128,128], index: 10, kind: input, shape index: {}]
  %s11 = inlined_call_operand.vmem [shape: f32[1,128], index: 11, kind: input, shape index: {}]
  %s12 = inlined_call_operand.hbm [shape: f32[2,1,128], index: 12, kind: output, shape index: {}]
  %s13 = sld [smem:[#allocation0]]
  $region81: #{cnn_qnet_forward.1} parent=0
    _
  %s15 = ssub.s32 1, %s13
  %s16 = scalar_select 0, %s15, %s13
  $region1: #{cnn_qnet_forward.1} parent=0
    #allocation4 [shape = 'u8[1024]{0}', space=vmem, size = 0x400, scoped, tag = 'output window, operand 0']
    #allocation5 [shape = 's32[2]{0}', space=sflag, size = 0x8, scoped, tag = 'scoped memory for cnn_qnet_forward.1']
    %17 = vsyncpa [#allocation5], 0
    %s18 = scalar_lea.sflag [#allocation5], 1
    %19 = vsyncpa %s18, 0
    loop: start=0, step=1, limit=4
    $region2: #{cnn_qnet_forward.1} parent=1 // loop_pre_header
      _
    $region3: #{cnn_qnet_forward.1} parent=1 // loop_header
      %s21 = sphi 0, %s25
      %p22 = scmp.ge.s32.totalorder %s21, 4
      %s31 = sphi 0, %s33
      %s34 = sphi 0, %s31
      %s35 = sphi 0, %s34
      %s51 = sphi 0, %s35
      %s55 = sphi 0, %s55
      %s57 = sphi 0, %s55
      %s58 = sphi 0, %s57
      %s72 = sphi 0, %s58
      %s76 = sphi 0, %s76
      %s78 = sphi 0, %s76
      %s79 = sphi 0, %s78
      %s93 = sphi 0, %s79
      %s97 = sphi 0, %s97
      %s99 = sphi 0, %s97
      %s100 = sphi 0, %s99
      %s114 = sphi 0, %s100
      %s118 = sphi 0, %s118
      %s120 = sphi 0, %s118
      %s121 = sphi 0, %s120
      %s135 = sphi 0, %s121
      %s139 = sphi 0, %s139
      %s141 = sphi 0, %s139
      %s142 = sphi 0, %s141
      %s156 = sphi 0, %s142
      %s160 = sphi 0, %s160
      %s162 = sphi 0, %s160
      %s163 = sphi 0, %s162
      %s177 = sphi 0, %s163
      %s181 = sphi 0, %s181
      %s183 = sphi 0, %s181
      %s184 = sphi 0, %s183
      %s198 = sphi 0, %s184
      %s202 = sphi 0, %s202
      %s204 = sphi 0, %s202
      %s205 = sphi 0, %s204
      %s219 = sphi 0, %s205
      %s223 = sphi 0, %s223
      %s225 = sphi 0, %s223
      %s226 = sphi 0, %s225
      %s240 = sphi 0, %s226
      %s244 = sphi 0, %s244
      %s246 = sphi 0, %s244
      %s247 = sphi 0, %s246
      %s261 = sphi 0, %s247
      %s265 = sphi 0, %s265
      %s267 = sphi 0, %s265
      %s268 = sphi 0, %s267
      %s282 = sphi 0, %s268
      %s288 = sphi 0, %s290
      %s291 = sphi 0, %s288
      %s292 = sphi 0, %s291
      %s308 = sphi 0, %s292
    $region4: #{cnn_qnet_forward.1} parent=1 // loop_header_branch
      %24 = sbr.rel (%p22) target = $region8
    $region5: #{cnn_qnet_forward.1} parent=1 // loop_body
      %s26 = ssub.s32 %s21, 1
      %s27 = ssub.s32 %s21, 2
      %s28 = sadd.s32 %s21, 1
      %s29 = ssub.s32 %s21, %s28
      %p30 = scmp.eq.s32.totalorder %s29, 0
      %s32 = sadd.s32 %s31, 1
      %s33 = scalar_select %p30, %s31, %s32
      %p36 = pneg %p30
      %p37 = scmp.eq.s32.totalorder %s21, 1
      %p38 = por %p36, %p37
      %p39 = scmp.ne.s32.totalorder %s31, %s34
      %p40 = scmp.eq.s32.totalorder %s21, 0
      %p41 = por %p39, %p40
      %p42 = scmp.ne.s32.totalorder %s31, %s34
      %p43 = scmp.eq.s32.totalorder %s26, 1
      %p44 = por %p42, %p43
      %p45 = scmp.ne.s32.totalorder %s34, %s35
      %p46 = scmp.eq.s32.totalorder %s26, 0
      %p47 = por %p45, %p46
      %p48 = scmp.ne.s32.totalorder %s34, %s35
      %p49 = scmp.eq.s32.totalorder %s27, 1
      %p50 = por %p48, %p49
      %p52 = scmp.ne.s32.totalorder %s35, %s51
      %p53 = scmp.eq.s32.totalorder %s27, 0
      %p54 = por %p52, %p53
      %s56 = sadd.s32 %s55, 1
      %p59 = scmp.eq.s32.totalorder %s21, 1
      %p60 = scmp.ne.s32.totalorder %s55, %s57
      %p61 = scmp.eq.s32.totalorder %s21, 0
      %p62 = por %p60, %p61
      %p63 = scmp.ne.s32.totalorder %s55, %s57
      %p64 = scmp.eq.s32.totalorder %s26, 1
      %p65 = por %p63, %p64
      %p66 = scmp.ne.s32.totalorder %s57, %s58
      %p67 = scmp.eq.s32.totalorder %s26, 0
      %p68 = por %p66, %p67
      %p69 = scmp.ne.s32.totalorder %s57, %s58
      %p70 = scmp.eq.s32.totalorder %s27, 1
      %p71 = por %p69, %p70
      %p73 = scmp.ne.s32.totalorder %s58, %s72
      %p74 = scmp.eq.s32.totalorder %s27, 0
      %p75 = por %p73, %p74
      %s77 = sadd.s32 %s76, 1
      %p80 = scmp.eq.s32.totalorder %s21, 1
      %p81 = scmp.ne.s32.totalorder %s76, %s78
      %p82 = scmp.eq.s32.totalorder %s21, 0
      %p83 = por %p81, %p82
      %p84 = scmp.ne.s32.totalorder %s76, %s78
      %p85 = scmp.eq.s32.totalorder %s26, 1
      %p86 = por %p84, %p85
      %p87 = scmp.ne.s32.totalorder %s78, %s79
      %p88 = scmp.eq.s32.totalorder %s26, 0
      %p89 = por %p87, %p88
      %p90 = scmp.ne.s32.totalorder %s78, %s79
      %p91 = scmp.eq.s32.totalorder %s27, 1
      %p92 = por %p90, %p91
      %p94 = scmp.ne.s32.totalorder %s79, %s93
      %p95 = scmp.eq.s32.totalorder %s27, 0
      %p96 = por %p94, %p95
      %s98 = sadd.s32 %s97, 1
      %p101 = scmp.eq.s32.totalorder %s21, 1
      %p102 = scmp.ne.s32.totalorder %s97, %s99
      %p103 = scmp.eq.s32.totalorder %s21, 0
      %p104 = por %p102, %p103
      %p105 = scmp.ne.s32.totalorder %s97, %s99
      %p106 = scmp.eq.s32.totalorder %s26, 1
      %p107 = por %p105, %p106
      %p108 = scmp.ne.s32.totalorder %s99, %s100
      %p109 = scmp.eq.s32.totalorder %s26, 0
      %p110 = por %p108, %p109
      %p111 = scmp.ne.s32.totalorder %s99, %s100
      %p112 = scmp.eq.s32.totalorder %s27, 1
      %p113 = por %p111, %p112
      %p115 = scmp.ne.s32.totalorder %s100, %s114
      %p116 = scmp.eq.s32.totalorder %s27, 0
      %p117 = por %p115, %p116
      %s119 = sadd.s32 %s118, 1
      %p122 = scmp.eq.s32.totalorder %s21, 1
      %p123 = scmp.ne.s32.totalorder %s118, %s120
      %p124 = scmp.eq.s32.totalorder %s21, 0
      %p125 = por %p123, %p124
      %p126 = scmp.ne.s32.totalorder %s118, %s120
      %p127 = scmp.eq.s32.totalorder %s26, 1
      %p128 = por %p126, %p127
      %p129 = scmp.ne.s32.totalorder %s120, %s121
      %p130 = scmp.eq.s32.totalorder %s26, 0
      %p131 = por %p129, %p130
      %p132 = scmp.ne.s32.totalorder %s120, %s121
      %p133 = scmp.eq.s32.totalorder %s27, 1
      %p134 = por %p132, %p133
      %p136 = scmp.ne.s32.totalorder %s121, %s135
      %p137 = scmp.eq.s32.totalorder %s27, 0
      %p138 = por %p136, %p137
      %s140 = sadd.s32 %s139, 1
      %p143 = scmp.eq.s32.totalorder %s21, 1
      %p144 = scmp.ne.s32.totalorder %s139, %s141
      %p145 = scmp.eq.s32.totalorder %s21, 0
      %p146 = por %p144, %p145
      %p147 = scmp.ne.s32.totalorder %s139, %s141
      %p148 = scmp.eq.s32.totalorder %s26, 1
      %p149 = por %p147, %p148
      %p150 = scmp.ne.s32.totalorder %s141, %s142
      %p151 = scmp.eq.s32.totalorder %s26, 0
      %p152 = por %p150, %p151
      %p153 = scmp.ne.s32.totalorder %s141, %s142
      %p154 = scmp.eq.s32.totalorder %s27, 1
      %p155 = por %p153, %p154
      %p157 = scmp.ne.s32.totalorder %s142, %s156
      %p158 = scmp.eq.s32.totalorder %s27, 0
      %p159 = por %p157, %p158
      %s161 = sadd.s32 %s160, 1
      %p164 = scmp.eq.s32.totalorder %s21, 1
      %p165 = scmp.ne.s32.totalorder %s160, %s162
      %p166 = scmp.eq.s32.totalorder %s21, 0
      %p167 = por %p165, %p166
      %p168 = scmp.ne.s32.totalorder %s160, %s162
      %p169 = scmp.eq.s32.totalorder %s26, 1
      %p170 = por %p168, %p169
      %p171 = scmp.ne.s32.totalorder %s162, %s163
      %p172 = scmp.eq.s32.totalorder %s26, 0
      %p173 = por %p171, %p172
      %p174 = scmp.ne.s32.totalorder %s162, %s163
      %p175 = scmp.eq.s32.totalorder %s27, 1
      %p176 = por %p174, %p175
      %p178 = scmp.ne.s32.totalorder %s163, %s177
      %p179 = scmp.eq.s32.totalorder %s27, 0
      %p180 = por %p178, %p179
      %s182 = sadd.s32 %s181, 1
      %p185 = scmp.eq.s32.totalorder %s21, 1
      %p186 = scmp.ne.s32.totalorder %s181, %s183
      %p187 = scmp.eq.s32.totalorder %s21, 0
      %p188 = por %p186, %p187
      %p189 = scmp.ne.s32.totalorder %s181, %s183
      %p190 = scmp.eq.s32.totalorder %s26, 1
      %p191 = por %p189, %p190
      %p192 = scmp.ne.s32.totalorder %s183, %s184
      %p193 = scmp.eq.s32.totalorder %s26, 0
      %p194 = por %p192, %p193
      %p195 = scmp.ne.s32.totalorder %s183, %s184
      %p196 = scmp.eq.s32.totalorder %s27, 1
      %p197 = por %p195, %p196
      %p199 = scmp.ne.s32.totalorder %s184, %s198
      %p200 = scmp.eq.s32.totalorder %s27, 0
      %p201 = por %p199, %p200
      %s203 = sadd.s32 %s202, 1
      %p206 = scmp.eq.s32.totalorder %s21, 1
      %p207 = scmp.ne.s32.totalorder %s202, %s204
      %p208 = scmp.eq.s32.totalorder %s21, 0
      %p209 = por %p207, %p208
      %p210 = scmp.ne.s32.totalorder %s202, %s204
      %p211 = scmp.eq.s32.totalorder %s26, 1
      %p212 = por %p210, %p211
      %p213 = scmp.ne.s32.totalorder %s204, %s205
      %p214 = scmp.eq.s32.totalorder %s26, 0
      %p215 = por %p213, %p214
      %p216 = scmp.ne.s32.totalorder %s204, %s205
      %p217 = scmp.eq.s32.totalorder %s27, 1
      %p218 = por %p216, %p217
      %p220 = scmp.ne.s32.totalorder %s205, %s219
      %p221 = scmp.eq.s32.totalorder %s27, 0
      %p222 = por %p220, %p221
      %s224 = sadd.s32 %s223, 1
      %p227 = scmp.eq.s32.totalorder %s21, 1
      %p228 = scmp.ne.s32.totalorder %s223, %s225
      %p229 = scmp.eq.s32.totalorder %s21, 0
      %p230 = por %p228, %p229
      %p231 = scmp.ne.s32.totalorder %s223, %s225
      %p232 = scmp.eq.s32.totalorder %s26, 1
      %p233 = por %p231, %p232
      %p234 = scmp.ne.s32.totalorder %s225, %s226
      %p235 = scmp.eq.s32.totalorder %s26, 0
      %p236 = por %p234, %p235
      %p237 = scmp.ne.s32.totalorder %s225, %s226
      %p238 = scmp.eq.s32.totalorder %s27, 1
      %p239 = por %p237, %p238
      %p241 = scmp.ne.s32.totalorder %s226, %s240
      %p242 = scmp.eq.s32.totalorder %s27, 0
      %p243 = por %p241, %p242
      %s245 = sadd.s32 %s244, 1
      %p248 = scmp.eq.s32.totalorder %s21, 1
      %p249 = scmp.ne.s32.totalorder %s244, %s246
      %p250 = scmp.eq.s32.totalorder %s21, 0
      %p251 = por %p249, %p250
      %p252 = scmp.ne.s32.totalorder %s244, %s246
      %p253 = scmp.eq.s32.totalorder %s26, 1
      %p254 = por %p252, %p253
      %p255 = scmp.ne.s32.totalorder %s246, %s247
      %p256 = scmp.eq.s32.totalorder %s26, 0
      %p257 = por %p255, %p256
      %p258 = scmp.ne.s32.totalorder %s246, %s247
      %p259 = scmp.eq.s32.totalorder %s27, 1
      %p260 = por %p258, %p259
      %p262 = scmp.ne.s32.totalorder %s247, %s261
      %p263 = scmp.eq.s32.totalorder %s27, 0
      %p264 = por %p262, %p263
      %s266 = sadd.s32 %s265, 1
      %p269 = scmp.eq.s32.totalorder %s21, 1
      %p270 = scmp.ne.s32.totalorder %s265, %s267
      %p271 = scmp.eq.s32.totalorder %s21, 0
      %p272 = por %p270, %p271
      %p273 = scmp.ne.s32.totalorder %s265, %s267
      %p274 = scmp.eq.s32.totalorder %s26, 1
      %p275 = por %p273, %p274
      %p276 = scmp.ne.s32.totalorder %s267, %s268
      %p277 = scmp.eq.s32.totalorder %s26, 0
      %p278 = por %p276, %p277
      %p279 = scmp.ne.s32.totalorder %s267, %s268
      %p280 = scmp.eq.s32.totalorder %s27, 1
      %p281 = por %p279, %p280
      %p283 = scmp.ne.s32.totalorder %s268, %s282
      %p284 = scmp.eq.s32.totalorder %s27, 0
      %p285 = por %p283, %p284
      %s286 = ssub.s32 %s21, %s28
      %p287 = scmp.eq.s32.totalorder %s286, 0
      %s289 = sadd.s32 %s288, 1
      %s290 = scalar_select %p287, %s288, %s289
      %p293 = pneg %p287
      %p294 = scmp.eq.s32.totalorder %s21, 1
      %p295 = por %p293, %p294
      %p296 = scmp.ne.s32.totalorder %s288, %s291
      %p297 = scmp.eq.s32.totalorder %s21, 0
      %p298 = por %p296, %p297
      %p299 = scmp.ne.s32.totalorder %s288, %s291
      %p300 = scmp.eq.s32.totalorder %s26, 1
      %p301 = por %p299, %p300
      %p302 = scmp.ne.s32.totalorder %s291, %s292
      %p303 = scmp.eq.s32.totalorder %s26, 0
      %p304 = por %p302, %p303
      %p305 = scmp.ne.s32.totalorder %s291, %s292
      %p306 = scmp.eq.s32.totalorder %s27, 1
      %p307 = por %p305, %p306
      %p309 = scmp.ne.s32.totalorder %s292, %s308
      %p310 = scmp.eq.s32.totalorder %s27, 0
      %p311 = por %p309, %p310
      %p312 = scmp.le.s32.totalorder 1, %s21
      %p313 = scmp.lt.s32.totalorder %s21, 3
      %p314 = pnand %p312, %p313
      %p315 = pneg %p314
      // Predicated region
      $region9: #{cnn_qnet_forward.1} parent=5 // pred_check
        _
      $region10: #{cnn_qnet_forward.1} parent=5 // pred_check_branch
        %317 = sbr.rel (%p314) target = $region12
      $region11: #{cnn_qnet_forward.1} parent=5 // pred_region
        %s318 = ssub.s32 %s21, 1
        // Predicated region
        $region13: #{cnn_qnet_forward.1} parent=11 // pred_check
          %p319 = pneg %p68
        $region14: #{cnn_qnet_forward.1} parent=11 // pred_check_branch
          %321 = sbr.rel (%p319) target = $region16
        $region15: #{cnn_qnet_forward.1} parent=11 // pred_region
          _
        $region16: #{cnn_qnet_forward.1} parent=11 // pred_fallthru
          _
        // Predicated region
        $region17: #{cnn_qnet_forward.1} parent=11 // pred_check
          %p322 = pneg %p89
        $region18: #{cnn_qnet_forward.1} parent=11 // pred_check_branch
          %324 = sbr.rel (%p322) target = $region20
        $region19: #{cnn_qnet_forward.1} parent=11 // pred_region
          _
        $region20: #{cnn_qnet_forward.1} parent=11 // pred_fallthru
          _
        // Predicated region
        $region21: #{cnn_qnet_forward.1} parent=11 // pred_check
          %p325 = pneg %p110
        $region22: #{cnn_qnet_forward.1} parent=11 // pred_check_branch
          %327 = sbr.rel (%p325) target = $region24
        $region23: #{cnn_qnet_forward.1} parent=11 // pred_region
          _
        $region24: #{cnn_qnet_forward.1} parent=11 // pred_fallthru
          _
        // Predicated region
        $region25: #{cnn_qnet_forward.1} parent=11 // pred_check
          %p328 = pneg %p131
        $region26: #{cnn_qnet_forward.1} parent=11 // pred_check_branch
          %330 = sbr.rel (%p328) target = $region28
        $region27: #{cnn_qnet_forward.1} parent=11 // pred_region
          _
        $region28: #{cnn_qnet_forward.1} parent=11 // pred_fallthru
          _
        // Predicated region
        $region29: #{cnn_qnet_forward.1} parent=11 // pred_check
          %p331 = pneg %p152
        $region30: #{cnn_qnet_forward.1} parent=11 // pred_check_branch
          %333 = sbr.rel (%p331) target = $region32
        $region31: #{cnn_qnet_forward.1} parent=11 // pred_region
          _
        $region32: #{cnn_qnet_forward.1} parent=11 // pred_fallthru
          _
        // Predicated region
        $region33: #{cnn_qnet_forward.1} parent=11 // pred_check
          %p334 = pneg %p173
        $region34: #{cnn_qnet_forward.1} parent=11 // pred_check_branch
          %336 = sbr.rel (%p334) target = $region36
        $region35: #{cnn_qnet_forward.1} parent=11 // pred_region
          _
        $region36: #{cnn_qnet_forward.1} parent=11 // pred_fallthru
          _
        // Predicated region
        $region37: #{cnn_qnet_forward.1} parent=11 // pred_check
          %p337 = pneg %p194
        $region38: #{cnn_qnet_forward.1} parent=11 // pred_check_branch
          %339 = sbr.rel (%p337) target = $region40
        $region39: #{cnn_qnet_forward.1} parent=11 // pred_region
          _
        $region40: #{cnn_qnet_forward.1} parent=11 // pred_fallthru
          _
        // Predicated region
        $region41: #{cnn_qnet_forward.1} parent=11 // pred_check
          %p340 = pneg %p215
        $region42: #{cnn_qnet_forward.1} parent=11 // pred_check_branch
          %342 = sbr.rel (%p340) target = $region44
        $region43: #{cnn_qnet_forward.1} parent=11 // pred_region
          _
        $region44: #{cnn_qnet_forward.1} parent=11 // pred_fallthru
          _
        // Predicated region
        $region45: #{cnn_qnet_forward.1} parent=11 // pred_check
          %p343 = pneg %p236
        $region46: #{cnn_qnet_forward.1} parent=11 // pred_check_branch
          %345 = sbr.rel (%p343) target = $region48
        $region47: #{cnn_qnet_forward.1} parent=11 // pred_region
          _
        $region48: #{cnn_qnet_forward.1} parent=11 // pred_fallthru
          _
        // Predicated region
        $region49: #{cnn_qnet_forward.1} parent=11 // pred_check
          %p346 = pneg %p257
        $region50: #{cnn_qnet_forward.1} parent=11 // pred_check_branch
          %348 = sbr.rel (%p346) target = $region52
        $region51: #{cnn_qnet_forward.1} parent=11 // pred_region
          _
        $region52: #{cnn_qnet_forward.1} parent=11 // pred_fallthru
          _
        // Predicated region
        $region53: #{cnn_qnet_forward.1} parent=11 // pred_check
          %p349 = pneg %p278
        $region54: #{cnn_qnet_forward.1} parent=11 // pred_check_branch
          %351 = sbr.rel (%p349) target = $region56
        $region55: #{cnn_qnet_forward.1} parent=11 // pred_region
          _
        $region56: #{cnn_qnet_forward.1} parent=11 // pred_fallthru
          _
      $region12: #{cnn_qnet_forward.1} parent=5 // pred_fallthru
        _
      %p352 = scmp.lt.s32.totalorder %s21, 2
      // Predicated region
      $region57: #{cnn_qnet_forward.1} parent=5 // pred_check
        %p353 = pneg %p352
      $region58: #{cnn_qnet_forward.1} parent=5 // pred_check_branch
        %355 = sbr.rel (%p353) target = $region60
      $region59: #{cnn_qnet_forward.1} parent=5 // pred_region
        // Predicated region
        $region61: #{cnn_qnet_forward.1} parent=59 // pred_check
          %p356 = pneg %p41
        $region62: #{cnn_qnet_forward.1} parent=59 // pred_check_branch
          %358 = sbr.rel (%p356) target = $region64
        $region63: #{cnn_qnet_forward.1} parent=59 // pred_region
          %p359 = scmp.lt.s32.totalorder %s21, 1
          %s360 = scalar_select %p359, %s21, 1
          %s361 = smul.addr %s360, 54
          %s362 = smul.addr %s361, 8
          %s363 = scalar_lea.vmem %s0, %s362
        $region64: #{cnn_qnet_forward.1} parent=59 // pred_fallthru
          _
      $region60: #{cnn_qnet_forward.1} parent=5 // pred_fallthru
        _
      %p364 = scmp.le.s32.totalorder 1, %s21
      %p365 = scmp.lt.s32.totalorder %s21, 3
      %p366 = pnand %p364, %p365
      %p367 = pneg %p366
      // Predicated region
      $region65: #{cnn_qnet_forward.1} parent=5 // pred_check
        _
      $region66: #{cnn_qnet_forward.1} parent=5 // pred_check_branch
        %369 = sbr.rel (%p366) target = $region68
      $region67: #{cnn_qnet_forward.1} parent=5 // pred_region
        %s370 = ssub.s32 %s21, 1
        %p371 = scmp.lt.s32.totalorder %s26, 1
        %s372 = scalar_select %p371, %s26, 1
        %s373 = smul.addr %s372, 54
        %s374 = smul.addr %s373, 8
        %s375 = scalar_lea.vmem %s0, %s374
        %p376 = pneg %p47
        %p377 = pneg %p44
        %p378 = pneg %p68
        %p379 = pneg %p65
        %p380 = pneg %p89
        %p381 = pneg %p86
        %p382 = pneg %p110
        %p383 = pneg %p107
        %p384 = pneg %p131
        %p385 = pneg %p128
        %p386 = pneg %p152
        %p387 = pneg %p149
        %p388 = pneg %p173
        %p389 = pneg %p170
        %p390 = pneg %p194
        %p391 = pneg %p191
        %p392 = pneg %p215
        %p393 = pneg %p212
        %p394 = pneg %p236
        %p395 = pneg %p233
        %p396 = pneg %p257
        %p397 = pneg %p254
        %p398 = pneg %p278
        %p399 = pneg %p275
        %p400 = pneg %p304
        %p401 = pneg %p301
        %s402 = sand.u32 %s291, 1
        %s403 = scalar_lea.sflag [#allocation5], %s402
        %s404 = sand.u32 %s291, 1
        %s405 = scalar_lea.vmem [#allocation4], %s404
        %p406 = scmp.lt.s32.totalorder %s26, 1
        %s407 = scalar_select %p406, %s26, 1
        %s408 = smul.addr %s407, 54
        %s409 = smul.addr %s408, 8
        %s410 = scalar_lea.vmem %s0, %s409
        %v411 = vld [vmem:[%s410] sm:$0xff]
        %v412 = vld [vmem:[%s410 + $0x8] sm:$0xff]
        %v413 = vld [vmem:[%s410 + $0x18] sm:$0xff]
        %v414 = vld [vmem:[%s410 + $0x20] sm:$0xff]
        %v415 = vld [vmem:[%s410 + $0x30] sm:$0xff]
        %v416 = vld [vmem:[%s410 + $0x38] sm:$0xff]
        %v417 = vld [vmem:[%s410 + $0x48] sm:$0xff]
        %v418 = vld [vmem:[%s410 + $0x50] sm:$0xff]
        %v419 = vld [vmem:[%s410 + $0x60] sm:$0xff]
        %v420 = vld [vmem:[%s410 + $0x68] sm:$0xff]
        %v421 = vld [vmem:[%s410 + $0x78] sm:$0xff]
        %v422 = vld [vmem:[%s410 + $0x80] sm:$0xff]
        %v423 = vld [vmem:[%s410 + $0x90] sm:$0xff]
        %v424 = vld [vmem:[%s410 + $0x98] sm:$0xff]
        %v425 = vld [vmem:[%s410 + $0xa8] sm:$0xff]
        %v426 = vld [vmem:[%s410 + $0xb0] sm:$0xff]
        %v427 = vld [vmem:[%s410 + $0xc0] sm:$0xff]
        %v428 = vld [vmem:[%s410 + $0xc8] sm:$0xff]
        %v429 = vld [vmem:[%s410 + $0xd8] sm:$0xff]
        %v430 = vld [vmem:[%s410 + $0xe0] sm:$0xff]
        %v431 = vld [vmem:[%s410 + $0xf0] sm:$0xff]
        %v432 = vld [vmem:[%s410 + $0xf8] sm:$0xff]
        %v433 = vld [vmem:[%s410 + $0x108] sm:$0xff]
        %v434 = vld [vmem:[%s410 + $0x110] sm:$0xff]
        %v435 = vld [vmem:[%s410 + $0x120] sm:$0xff]
        %v436 = vld [vmem:[%s410 + $0x128] sm:$0xff]
        %v437 = vld [vmem:[%s410 + $0x138] sm:$0xff]
        %v438 = vld [vmem:[%s410 + $0x140] sm:$0xff]
        %v439 = vld [vmem:[%s410 + $0x150] sm:$0xff]
        %v440 = vld [vmem:[%s410 + $0x158] sm:$0xff]
        %v441 = vld [vmem:[%s410 + $0x168] sm:$0xff]
        %v442 = vld [vmem:[%s410 + $0x170] sm:$0xff]
        %v443 = vld [vmem:[%s1] sm:$0xf]
        %v444 = vld [vmem:[%s410 + $0x1] sm:$0xff]
        %v445 = vld [vmem:[%s410 + $0x9] sm:$0xff]
        %v446 = vld [vmem:[%s410 + $0x19] sm:$0xff]
        %v447 = vld [vmem:[%s410 + $0x21] sm:$0xff]
        %v448 = vld [vmem:[%s410 + $0x31] sm:$0xff]
        %v449 = vld [vmem:[%s410 + $0x39] sm:$0xff]
        %v450 = vld [vmem:[%s410 + $0x49] sm:$0xff]
        %v451 = vld [vmem:[%s410 + $0x51] sm:$0xff]
        %v452 = vld [vmem:[%s410 + $0x61] sm:$0xff]
        %v453 = vld [vmem:[%s410 + $0x69] sm:$0xff]
        %v454 = vld [vmem:[%s410 + $0x79] sm:$0xff]
        %v455 = vld [vmem:[%s410 + $0x81] sm:$0xff]
        %v456 = vld [vmem:[%s410 + $0x91] sm:$0xff]
        %v457 = vld [vmem:[%s410 + $0x99] sm:$0xff]
        %v458 = vld [vmem:[%s410 + $0xa9] sm:$0xff]
        %v459 = vld [vmem:[%s410 + $0xb1] sm:$0xff]
        %v460 = vld [vmem:[%s410 + $0xc1] sm:$0xff]
        %v461 = vld [vmem:[%s410 + $0xc9] sm:$0xff]
        %v462 = vld [vmem:[%s410 + $0xd9] sm:$0xff]
        %v463 = vld [vmem:[%s410 + $0xe1] sm:$0xff]
        %v464 = vld [vmem:[%s410 + $0xf1] sm:$0xff]
        %v465 = vld [vmem:[%s410 + $0xf9] sm:$0xff]
        %v466 = vld [vmem:[%s410 + $0x109] sm:$0xff]
        %v467 = vld [vmem:[%s410 + $0x111] sm:$0xff]
        %v468 = vld [vmem:[%s410 + $0x121] sm:$0xff]
        %v469 = vld [vmem:[%s410 + $0x129] sm:$0xff]
        %v470 = vld [vmem:[%s410 + $0x139] sm:$0xff]
        %v471 = vld [vmem:[%s410 + $0x141] sm:$0xff]
        %v472 = vld [vmem:[%s410 + $0x151] sm:$0xff]
        %v473 = vld [vmem:[%s410 + $0x159] sm:$0xff]
        %v474 = vld [vmem:[%s410 + $0x169] sm:$0xff]
        %v475 = vld [vmem:[%s410 + $0x171] sm:$0xff]
        %s476 = scalar_lea.vmem %s1, 4
        %v477 = vld [vmem:[%s476] sm:$0xf]
        %vm478 = vcmask 31744
        %v480 = vsel %vm478, %v444, 0
        %v483 = vsel %vm478, %v445, 0
        %v486 = vsel %vm478, %v446, 0
        %v489 = vsel %vm478, %v447, 0
        %v492 = vsel %vm478, %v448, 0
        %v495 = vsel %vm478, %v449, 0
        %v498 = vsel %vm478, %v450, 0
        %v501 = vsel %vm478, %v451, 0
        %v504 = vsel %vm478, %v452, 0
        %v507 = vsel %vm478, %v453, 0
        %v510 = vsel %vm478, %v454, 0
        %v513 = vsel %vm478, %v455, 0
        %v516 = vsel %vm478, %v456, 0
        %v519 = vsel %vm478, %v457, 0
        %v522 = vsel %vm478, %v458, 0
        %v525 = vsel %vm478, %v459, 0
        %v528 = vsel %vm478, %v460, 0
        %v531 = vsel %vm478, %v461, 0
        %v534 = vsel %vm478, %v462, 0
        %v537 = vsel %vm478, %v463, 0
        %v540 = vsel %vm478, %v464, 0
        %v543 = vsel %vm478, %v465, 0
        %v546 = vsel %vm478, %v466, 0
        %v549 = vsel %vm478, %v467, 0
        %v552 = vsel %vm478, %v468, 0
        %v555 = vsel %vm478, %v469, 0
        %v558 = vsel %vm478, %v470, 0
        %v561 = vsel %vm478, %v471, 0
        %v564 = vsel %vm478, %v472, 0
        %v567 = vsel %vm478, %v473, 0
        %v570 = vsel %vm478, %v474, 0
        %v573 = vsel %vm478, %v475, 0
        %vm575 = vcmask 1043456
        %v577 = vsel %vm575, %v477, 0
        %579 = vmatprep.subr.mxu0 0.0
        %580 = vmatpush1.msra.mxu0 %v577
        %581 = vmatprep.subr.mxu0 0.0
        %582 = vmatpush1.msra.mxu0 0.0
        %583 = vmatprep.subr.mxu0 0.0
        %584 = vmatpush1.msra.mxu0 0.0
        %585 = vmatprep.subr.mxu0 0.0
        %586 = vmatpush1.msra.mxu0 0.0
        %587 = vmatprep.subr.mxu0 0.0
        %588 = vmatpush1.msra.mxu0 0.0
        %589 = vmatprep.subr.mxu0 0.0
        %590 = vmatpush1.msra.mxu0 0.0
        %591 = vmatprep.subr.mxu0 0.0
        %592 = vmatpush1.msra.mxu0 0.0
        %593 = vmatprep.subr.mxu0 0.0
        %594 = vmatpush1.msra.mxu0 0.0
        %595 = vmatprep.subr.mxu0 0.0
        %596 = vmatpush1.msra.mxu0 0.0
        %597 = vmatprep.subr.mxu0 0.0
        %598 = vmatpush1.msra.mxu0 0.0
        %599 = vmatprep.subr.mxu0 0.0
        %600 = vmatpush1.msra.mxu0 0.0
        %601 = vmatprep.subr.mxu0 0.0
        %602 = vmatpush1.msra.mxu0 0.0
        %603 = vmatprep.subr.mxu0 0.0
        %604 = vmatpush1.msra.mxu0 0.0
        %605 = vmatprep.subr.mxu0 0.0
        %606 = vmatpush1.msra.mxu0 0.0
        %607 = vmatprep.subr.mxu0 0.0
        %608 = vmatpush1.msra.mxu0 0.0
        %609 = vmatprep.subr.mxu0 0.0
        %610 = vmatpush1.msra.mxu0 0.0
        %611 = vmatprep.subr.mxu0 0.0
        %612 = vmatpush1.msra.mxu0 0.0
        %613 = vmatprep.subr.mxu0 0.0
        %614 = vmatpush1.msra.mxu0 0.0
        %615 = vmatprep.subr.mxu0 0.0
        %616 = vmatpush1.msra.mxu0 0.0
        %617 = vmatprep.subr.mxu0 0.0
        %618 = vmatpush1.msra.mxu0 0.0
        %619 = vmatprep.subr.mxu0 0.0
        %620 = vmatpush1.msra.mxu0 0.0
        %621 = vmatprep.subr.mxu0 0.0
        %622 = vmatpush1.msra.mxu0 0.0
        %623 = vmatprep.subr.mxu0 0.0
        %624 = vmatpush1.msra.mxu0 0.0
        %625 = vmatprep.subr.mxu0 0.0
        %626 = vmatpush1.msra.mxu0 0.0
        %627 = vmatprep.subr.mxu0 0.0
        %628 = vmatpush1.msra.mxu0 0.0
        %629 = vmatprep.subr.mxu0 0.0
        %630 = vmatpush1.msra.mxu0 0.0
        %631 = vmatprep.subr.mxu0 0.0
        %632 = vmatpush1.msra.mxu0 0.0
        %633 = vmatprep.subr.mxu0 0.0
        %634 = vmatpush1.msra.mxu0 0.0
        %635 = vmatprep.subr.mxu0 0.0
        %636 = vmatpush1.msra.mxu0 0.0
        %637 = vmatprep.subr.mxu0 0.0
        %638 = vmatpush1.msra.mxu0 0.0
        %639 = vmatprep.subr.mxu0 0.0
        %640 = vmatpush1.msra.mxu0 0.0
        %641 = vmatprep.subr.mxu0 0.0
        %642 = vmatpush1.msra.mxu0 0.0
        %643 = vmatprep.mubr.f32.mxu0 0.0
        %644 = vmatmul.mubr.f32.gmra.mrb[0].mxu0 %v480
        %v645 = vpop.f32.mrb[0].mxu0
        %v646 = vadd.f32 0.0, %v645
        %v647 = vpop.f32.mrb[0].mxu0
        %648 = vmatprep.mubr.f32.mxu0 0.0
        %649 = vmatmul.mubr.f32.gmra.mrb[0].mxu0 %v483
        %v650 = vpop.f32.mrb[0].mxu0
        %v651 = vadd.f32 0.0, %v650
        %v652 = vpop.f32.mrb[0].mxu0
        %653 = vmatprep.mubr.f32.mxu0 0.0
        %654 = vmatmul.mubr.f32.gmra.mrb[0].mxu0 %v486
        %v655 = vpop.f32.mrb[0].mxu0
        %v656 = vadd.f32 0.0, %v655
        %v657 = vpop.f32.mrb[0].mxu0
        %658 = vmatprep.mubr.f32.mxu0 0.0
        %659 = vmatmul.mubr.f32.gmra.mrb[0].mxu0 %v489
        %v660 = vpop.f32.mrb[0].mxu0
        %v661 = vadd.f32 0.0, %v660
        %v662 = vpop.f32.mrb[0].mxu0
        %663 = vmatprep.mubr.f32.mxu0 0.0
        %664 = vmatmul.mubr.f32.gmra.mrb[0].mxu0 %v492
        %v665 = vpop.f32.mrb[0].mxu0
        %v666 = vadd.f32 0.0, %v665
        %v667 = vpop.f32.mrb[0].mxu0
        %668 = vmatprep.mubr.f32.mxu0 0.0
        %669 = vmatmul.mubr.f32.gmra.mrb[0].mxu0 %v495
        %v670 = vpop.f32.mrb[0].mxu0
        %v671 = vadd.f32 0.0, %v670
        %v672 = vpop.f32.mrb[0].mxu0
        %673 = vmatprep.mubr.f32.mxu0 0.0
        %674 = vmatmul.mubr.f32.gmra.mrb[0].mxu0 %v498
        %v675 = vpop.f32.mrb[0].mxu0
        %v676 = vadd.f32 0.0, %v675
        %v677 = vpop.f32.mrb[0].mxu0
        %678 = vmatprep.mubr.f32.mxu0 0.0
        %679 = vmatmul.mubr.f32.gmra.mrb[0].mxu0 %v501
        %v680 = vpop.f32.mrb[0].mxu0
        %v681 = vadd.f32 0.0, %v680
        %v682 = vpop.f32.mrb[0].mxu0
        %683 = vmatprep.mubr.f32.mxu0 0.0
        %684 = vmatmul.mubr.f32.gmra.mrb[0].mxu0 %v504
        %v685 = vpop.f32.mrb[0].mxu0
        %v686 = vadd.f32 0.0, %v685
        %v687 = vpop.f32.mrb[0].mxu0
        %688 = vmatprep.mubr.f32.mxu0 0.0
        %689 = vmatmul.mubr.f32.gmra.mrb[0].mxu0 %v507
        %v690 = vpop.f32.mrb[0].mxu0
        %v691 = vadd.f32 0.0, %v690
        %v692 = vpop.f32.mrb[0].mxu0
        %693 = vmatprep.mubr.f32.mxu0 0.0
        %694 = vmatmul.mubr.f32.gmra.mrb[0].mxu0 %v510
        %v695 = vpop.f32.mrb[0].mxu0
        %v696 = vadd.f32 0.0, %v695
        %v697 = vpop.f32.mrb[0].mxu0
        %698 = vmatprep.mubr.f32.mxu0 0.0
        %699 = vmatmul.mubr.f32.gmra.mrb[0].mxu0 %v513
        %v700 = vpop.f32.mrb[0].mxu0
        %v701 = vadd.f32 0.0, %v700
        %v702 = vpop.f32.mrb[0].mxu0
        %703 = vmatprep.mubr.f32.mxu0 0.0
        %704 = vmatmul.mubr.f32.gmra.mrb[0].mxu0 %v516
        %v705 = vpop.f32.mrb[0].mxu0
        %v706 = vadd.f32 0.0, %v705
        %v707 = vpop.f32.mrb[0].mxu0
        %708 = vmatprep.mubr.f32.mxu0 0.0
        %709 = vmatmul.mubr.f32.gmra.mrb[0].mxu0 %v519
        %v710 = vpop.f32.mrb[0].mxu0
        %v711 = vadd.f32 0.0, %v710
        %v712 = vpop.f32.mrb[0].mxu0
        %713 = vmatprep.mubr.f32.mxu0 0.0
        %714 = vmatmul.mubr.f32.gmra.mrb[0].mxu0 %v522
        %v715 = vpop.f32.mrb[0].mxu0
        %v716 = vadd.f32 0.0, %v715
        %v717 = vpop.f32.mrb[0].mxu0
        %718 = vmatprep.mubr.f32.mxu0 0.0
        %719 = vmatmul.mubr.f32.gmra.mrb[0].mxu0 %v525
        %v720 = vpop.f32.mrb[0].mxu0
        %v721 = vadd.f32 0.0, %v720
        %v722 = vpop.f32.mrb[0].mxu0
        %723 = vmatprep.mubr.f32.mxu0 0.0
        %724 = vmatmul.mubr.f32.gmra.mrb[0].mxu0 %v528
        %v725 = vpop.f32.mrb[0].mxu0
        %v726 = vadd.f32 0.0, %v725
        %v727 = vpop.f32.mrb[0].mxu0
        %728 = vmatprep.mubr.f32.mxu0 0.0
        %729 = vmatmul.mubr.f32.gmra.mrb[0].mxu0 %v531
        %v730 = vpop.f32.mrb[0].mxu0
        %v731 = vadd.f32 0.0, %v730
        %v732 = vpop.f32.mrb[0].mxu0
        %733 = vmatprep.mubr.f32.mxu0 0.0
        %734 = vmatmul.mubr.f32.gmra.mrb[0].mxu0 %v534
        %v735 = vpop.f32.mrb[0].mxu0
        %v736 = vadd.f32 0.0, %v735
        %v737 = vpop.f32.mrb[0].mxu0
        %738 = vmatprep.mubr.f32.mxu0 0.0
        %739 = vmatmul.mubr.f32.gmra.mrb[0].mxu0 %v537
        %v740 = vpop.f32.mrb[0].mxu0
        %v741 = vadd.f32 0.0, %v740
        %v742 = vpop.f32.mrb[0].mxu0
        %743 = vmatprep.mubr.f32.mxu0 0.0
        %744 = vmatmul.mubr.f32.gmra.mrb[0].mxu0 %v540
        %v745 = vpop.f32.mrb[0].mxu0
        %v746 = vadd.f32 0.0, %v745
        %v747 = vpop.f32.mrb[0].mxu0
        %748 = vmatprep.mubr.f32.mxu0 0.0
        %749 = vmatmul.mubr.f32.gmra.mrb[0].mxu0 %v543
        %v750 = vpop.f32.mrb[0].mxu0
        %v751 = vadd.f32 0.0, %v750
        %v752 = vpop.f32.mrb[0].mxu0
        %753 = vmatprep.mubr.f32.mxu0 0.0
        %754 = vmatmul.mubr.f32.gmra.mrb[0].mxu0 %v546
        %v755 = vpop.f32.mrb[0].mxu0
        %v756 = vadd.f32 0.0, %v755
        %v757 = vpop.f32.mrb[0].mxu0
        %758 = vmatprep.mubr.f32.mxu0 0.0
        %759 = vmatmul.mubr.f32.gmra.mrb[0].mxu0 %v549
        %v760 = vpop.f32.mrb[0].mxu0
        %v761 = vadd.f32 0.0, %v760
        %v762 = vpop.f32.mrb[0].mxu0
        %763 = vmatprep.mubr.f32.mxu0 0.0
        %764 = vmatmul.mubr.f32.gmra.mrb[0].mxu0 %v552
        %v765 = vpop.f32.mrb[0].mxu0
        %v766 = vadd.f32 0.0, %v765
        %v767 = vpop.f32.mrb[0].mxu0
        %768 = vmatprep.mubr.f32.mxu0 0.0
        %769 = vmatmul.mubr.f32.gmra.mrb[0].mxu0 %v555
        %v770 = vpop.f32.mrb[0].mxu0
        %v771 = vadd.f32 0.0, %v770
        %v772 = vpop.f32.mrb[0].mxu0
        %773 = vmatprep.mubr.f32.mxu0 0.0
        %774 = vmatmul.mubr.f32.gmra.mrb[0].mxu0 %v558
        %v775 = vpop.f32.mrb[0].mxu0
        %v776 = vadd.f32 0.0, %v775
        %v777 = vpop.f32.mrb[0].mxu0
        %778 = vmatprep.mubr.f32.mxu0 0.0
        %779 = vmatmul.mubr.f32.gmra.mrb[0].mxu0 %v561
        %v780 = vpop.f32.mrb[0].mxu0
        %v781 = vadd.f32 0.0, %v780
        %v782 = vpop.f32.mrb[0].mxu0
        %783 = vmatprep.mubr.f32.mxu0 0.0
        %784 = vmatmul.mubr.f32.gmra.mrb[0].mxu0 %v564
        %v785 = vpop.f32.mrb[0].mxu0
        %v786 = vadd.f32 0.0, %v785
        %v787 = vpop.f32.mrb[0].mxu0
        %788 = vmatprep.mubr.f32.mxu0 0.0
        %789 = vmatmul.mubr.f32.gmra.mrb[0].mxu0 %v567
        %v790 = vpop.f32.mrb[0].mxu0
        %v791 = vadd.f32 0.0, %v790
        %v792 = vpop.f32.mrb[0].mxu0
        %793 = vmatprep.mubr.f32.mxu0 0.0
        %794 = vmatmul.mubr.f32.gmra.mrb[0].mxu0 %v570
        %v795 = vpop.f32.mrb[0].mxu0
        %v796 = vadd.f32 0.0, %v795
        %v797 = vpop.f32.mrb[0].mxu0
        %798 = vmatprep.mubr.f32.mxu0 0.0
        %799 = vmatmul.mubr.f32.gmra.mrb[0].mxu0 %v573
        %v800 = vpop.f32.mrb[0].mxu0
        %v801 = vadd.f32 0.0, %v800
        %v802 = vpop.f32.mrb[0].mxu0
        %803 = vdwg.mxu0
        %v805 = vsel %vm478, %v411, 0
        %v808 = vsel %vm478, %v412, 0
        %v811 = vsel %vm478, %v413, 0
        %v814 = vsel %vm478, %v414, 0
        %v817 = vsel %vm478, %v415, 0
        %v820 = vsel %vm478, %v416, 0
        %v823 = vsel %vm478, %v417, 0
        %v826 = vsel %vm478, %v418, 0
        %v829 = vsel %vm478, %v419, 0
        %v832 = vsel %vm478, %v420, 0
        %v835 = vsel %vm478, %v421, 0
        %v838 = vsel %vm478, %v422, 0
        %v841 = vsel %vm478, %v423, 0
        %v844 = vsel %vm478, %v424, 0
        %v847 = vsel %vm478, %v425, 0
        %v850 = vsel %vm478, %v426, 0
        %v853 = vsel %vm478, %v427, 0
        %v856 = vsel %vm478, %v428, 0
        %v859 = vsel %vm478, %v429, 0
        %v862 = vsel %vm478, %v430, 0
        %v865 = vsel %vm478, %v431, 0
        %v868 = vsel %vm478, %v432, 0
        %v871 = vsel %vm478, %v433, 0
        %v874 = vsel %vm478, %v434, 0
        %v877 = vsel %vm478, %v435, 0
        %v880 = vsel %vm478, %v436, 0
        %v883 = vsel %vm478, %v437, 0
        %v886 = vsel %vm478, %v438, 0
        %v889 = vsel %vm478, %v439, 0
        %v892 = vsel %vm478, %v440, 0
        %v895 = vsel %vm478, %v441, 0
        %v898 = vsel %vm478, %v442, 0
        %v901 = vsel %vm575, %v443, 0
        %903 = vmatprep.subr.mxu0 0.0
        %904 = vmatpush1.msra.mxu0 %v901
        %905 = vmatprep.subr.mxu0 0.0
        %906 = vmatpush1.msra.mxu0 0.0
        %907 = vmatprep.subr.mxu0 0.0
        %908 = vmatpush1.msra.mxu0 0.0
        %909 = vmatprep.subr.mxu0 0.0
        %910 = vmatpush1.msra.mxu0 0.0
        %911 = vmatprep.subr.mxu0 0.0
        %912 = vmatpush1.msra.mxu0 0.0
        %913 = vmatprep.subr.mxu0 0.0
        %914 = vmatpush1.msra.mxu0 0.0
        %915 = vmatprep.subr.mxu0 0.0
        %916 = vmatpush1.msra.mxu0 0.0
        %917 = vmatprep.subr.mxu0 0.0
        %918 = vmatpush1.msra.mxu0 0.0
        %919 = vmatprep.subr.mxu0 0.0
        %920 = vmatpush1.msra.mxu0 0.0
        %921 = vmatprep.subr.mxu0 0.0
        %922 = vmatpush1.msra.mxu0 0.0
        %923 = vmatprep.subr.mxu0 0.0
        %924 = vmatpush1.msra.mxu0 0.0
        %925 = vmatprep.subr.mxu0 0.0
        %926 = vmatpush1.msra.mxu0 0.0
        %927 = vmatprep.subr.mxu0 0.0
        %928 = vmatpush1.msra.mxu0 0.0
        %929 = vmatprep.subr.mxu0 0.0
        %930 = vmatpush1.msra.mxu0 0.0
        %931 = vmatprep.subr.mxu0 0.0
        %932 = vmatpush1.msra.mxu0 0.0
        %933 = vmatprep.subr.mxu0 0.0
        %934 = vmatpush1.msra.mxu0 0.0
        %935 = vmatprep.subr.mxu0 0.0
        %936 = vmatpush1.msra.mxu0 0.0
        %937 = vmatprep.subr.mxu0 0.0
        %938 = vmatpush1.msra.mxu0 0.0
        %939 = vmatprep.subr.mxu0 0.0
        %940 = vmatpush1.msra.mxu0 0.0
        %941 = vmatprep.subr.mxu0 0.0
        %942 = vmatpush1.msra.mxu0 0.0
        %943 = vmatprep.subr.mxu0 0.0
        %944 = vmatpush1.msra.mxu0 0.0
        %945 = vmatprep.subr.mxu0 0.0
        %946 = vmatpush1.msra.mxu0 0.0
        %947 = vmatprep.subr.mxu0 0.0
        %948 = vmatpush1.msra.mxu0 0.0
        %949 = vmatprep.subr.mxu0 0.0
        %950 = vmatpush1.msra.mxu0 0.0
        %951 = vmatprep.subr.mxu0 0.0
        %952 = vmatpush1.msra.mxu0 0.0
        %953 = vmatprep.subr.mxu0 0.0
        %954 = vmatpush1.msra.mxu0 0.0
        %955 = vmatprep.subr.mxu0 0.0
        %956 = vmatpush1.msra.mxu0 0.0
        %957 = vmatprep.subr.mxu0 0.0
        %958 = vmatpush1.msra.mxu0 0.0
        %959 = vmatprep.subr.mxu0 0.0
        %960 = vmatpush1.msra.mxu0 0.0
        %961 = vmatprep.subr.mxu0 0.0
        %962 = vmatpush1.msra.mxu0 0.0
        %963 = vmatprep.subr.mxu0 0.0
        %964 = vmatpush1.msra.mxu0 0.0
        %965 = vmatprep.subr.mxu0 0.0
        %966 = vmatpush1.msra.mxu0 0.0
        %967 = vmatprep.mubr.f32.mxu0 0.0
        %968 = vmatmul.mubr.f32.gmra.mrb[0].mxu0 %v805
        %v969 = vpop.f32.mrb[0].mxu0
        %v970 = vadd.f32 %v646, %v969
        %v971 = vpop.f32.mrb[0].mxu0
        %972 = vmatprep.mubr.f32.mxu0 0.0
        %973 = vmatmul.mubr.f32.gmra.mrb[0].mxu0 %v808
        %v974 = vpop.f32.mrb[0].mxu0
        %v975 = vadd.f32 %v651, %v974
        %v976 = vpop.f32.mrb[0].mxu0
        %977 = vmatprep.mubr.f32.mxu0 0.0
        %978 = vmatmul.mubr.f32.gmra.mrb[0].mxu0 %v811
        %v979 = vpop.f32.mrb[0].mxu0
        %v980 = vadd.f32 %v656, %v979
        %v981 = vpop.f32.mrb[0].mxu0
        %982 = vmatprep.mubr.f32.mxu0 0.0
        %983 = vmatmul.mubr.f32.gmra.mrb[0].mxu0 %v814
        %v984 = vpop.f32.mrb[0].mxu0
        %v985 = vadd.f32 %v661, %v984
        %v986 = vpop.f32.mrb[0].mxu0
        %987 = vmatprep.mubr.f32.mxu0 0.0
        %988 = vmatmul.mubr.f32.gmra.mrb[0].mxu0 %v817
        %v989 = vpop.f32.mrb[0].mxu0
        %v990 = vadd.f32 %v666, %v989
        %v991 = vpop.f32.mrb[0].mxu0
        %992 = vmatprep.mubr.f32.mxu0 0.0
        %993 = vmatmul.mubr.f32.gmra.mrb[0].mxu0 %v820
        %v994 = vpop.f32.mrb[0].mxu0
        %v995 = vadd.f32 %v671, %v994
        %v996 = vpop.f32.mrb[0].mxu0
        %997 = vmatprep.mubr.f32.mxu0 0.0
        %998 = vmatmul.mubr.f32.gmra.mrb[0].mxu0 %v823
        %v999 = vpop.f32.mrb[0].mxu0
        %v1000 = vadd.f32 %v676, %v999
        %v1001 = vpop.f32.mrb[0].mxu0
        %1002 = vmatprep.mubr.f32.mxu0 0.0
        %1003 = vmatmul.mubr.f32.gmra.mrb[0].mxu0 %v826
        %v1004 = vpop.f32.mrb[0].mxu0
        %v1005 = vadd.f32 %v681, %v1004
        %v1006 = vpop.f32.mrb[0].mxu0
        %1007 = vmatprep.mubr.f32.mxu0 0.0
        %1008 = vmatmul.mubr.f32.gmra.mrb[0].mxu0 %v829
        %v1009 = vpop.f32.mrb[0].mxu0
        %v1010 = vadd.f32 %v686, %v1009
        %v1011 = vpop.f32.mrb[0].mxu0
        %1012 = vmatprep.mubr.f32.mxu0 0.0
        %1013 = vmatmul.mubr.f32.gmra.mrb[0].mxu0 %v832
        %v1014 = vpop.f32.mrb[0].mxu0
        %v1015 = vadd.f32 %v691, %v1014
        %v1016 = vpop.f32.mrb[0].mxu0
        %1017 = vmatprep.mubr.f32.mxu0 0.0
        %1018 = vmatmul.mubr.f32.gmra.mrb[0].mxu0 %v835
        %v1019 = vpop.f32.mrb[0].mxu0
        %v1020 = vadd.f32 %v696, %v1019
        %v1021 = vpop.f32.mrb[0].mxu0
        %1022 = vmatprep.mubr.f32.mxu0 0.0
        %1023 = vmatmul.mubr.f32.gmra.mrb[0].mxu0 %v838
        %v1024 = vpop.f32.mrb[0].mxu0
        %v1025 = vadd.f32 %v701, %v1024
        %v1026 = vpop.f32.mrb[0].mxu0
        %1027 = vmatprep.mubr.f32.mxu0 0.0
        %1028 = vmatmul.mubr.f32.gmra.mrb[0].mxu0 %v841
        %v1029 = vpop.f32.mrb[0].mxu0
        %v1030 = vadd.f32 %v706, %v1029
        %v1031 = vpop.f32.mrb[0].mxu0
        %1032 = vmatprep.mubr.f32.mxu0 0.0
        %1033 = vmatmul.mubr.f32.gmra.mrb[0].mxu0 %v844
        %v1034 = vpop.f32.mrb[0].mxu0
        %v1035 = vadd.f32 %v711, %v1034
        %v1036 = vpop.f32.mrb[0].mxu0
        %1037 = vmatprep.mubr.f32.mxu0 0.0
        %1038 = vmatmul.mubr.f32.gmra.mrb[0].mxu0 %v847
        %v1039 = vpop.f32.mrb[0].mxu0
        %v1040 = vadd.f32 %v716, %v1039
        %v1041 = vpop.f32.mrb[0].mxu0
        %1042 = vmatprep.mubr.f32.mxu0 0.0
        %1043 = vmatmul.mubr.f32.gmra.mrb[0].mxu0 %v850
        %v1044 = vpop.f32.mrb[0].mxu0
        %v1045 = vadd.f32 %v721, %v1044
        %v1046 = vpop.f32.mrb[0].mxu0
        %1047 = vmatprep.mubr.f32.mxu0 0.0
        %1048 = vmatmul.mubr.f32.gmra.mrb[0].mxu0 %v853
        %v1049 = vpop.f32.mrb[0].mxu0
        %v1050 = vadd.f32 %v726, %v1049
        %v1051 = vpop.f32.mrb[0].mxu0
        %1052 = vmatprep.mubr.f32.mxu0 0.0
        %1053 = vmatmul.mubr.f32.gmra.mrb[0].mxu0 %v856
        %v1054 = vpop.f32.mrb[0].mxu0
        %v1055 = vadd.f32 %v731, %v1054
        %v1056 = vpop.f32.mrb[0].mxu0
        %1057 = vmatprep.mubr.f32.mxu0 0.0
        %1058 = vmatmul.mubr.f32.gmra.mrb[0].mxu0 %v859
        %v1059 = vpop.f32.mrb[0].mxu0
        %v1060 = vadd.f32 %v736, %v1059
        %v1061 = vpop.f32.mrb[0].mxu0
        %1062 = vmatprep.mubr.f32.mxu0 0.0
        %1063 = vmatmul.mubr.f32.gmra.mrb[0].mxu0 %v862
        %v1064 = vpop.f32.mrb[0].mxu0
        %v1065 = vadd.f32 %v741, %v1064
        %v1066 = vpop.f32.mrb[0].mxu0
        %1067 = vmatprep.mubr.f32.mxu0 0.0
        %1068 = vmatmul.mubr.f32.gmra.mrb[0].mxu0 %v865
        %v1069 = vpop.f32.mrb[0].mxu0
        %v1070 = vadd.f32 %v746, %v1069
        %v1071 = vpop.f32.mrb[0].mxu0
        %1072 = vmatprep.mubr.f32.mxu0 0.0
        %1073 = vmatmul.mubr.f32.gmra.mrb[0].mxu0 %v868
        %v1074 = vpop.f32.mrb[0].mxu0
        %v1075 = vadd.f32 %v751, %v1074
        %v1076 = vpop.f32.mrb[0].mxu0
        %1077 = vmatprep.mubr.f32.mxu0 0.0
        %1078 = vmatmul.mubr.f32.gmra.mrb[0].mxu0 %v871
        %v1079 = vpop.f32.mrb[0].mxu0
        %v1080 = vadd.f32 %v756, %v1079
        %v1081 = vpop.f32.mrb[0].mxu0
        %1082 = vmatprep.mubr.f32.mxu0 0.0
        %1083 = vmatmul.mubr.f32.gmra.mrb[0].mxu0 %v874
        %v1084 = vpop.f32.mrb[0].mxu0
        %v1085 = vadd.f32 %v761, %v1084
        %v1086 = vpop.f32.mrb[0].mxu0
        %1087 = vmatprep.mubr.f32.mxu0 0.0
        %1088 = vmatmul.mubr.f32.gmra.mrb[0].mxu0 %v877
        %v1089 = vpop.f32.mrb[0].mxu0
        %v1090 = vadd.f32 %v766, %v1089
        %v1091 = vpop.f32.mrb[0].mxu0
        %1092 = vmatprep.mubr.f32.mxu0 0.0
        %1093 = vmatmul.mubr.f32.gmra.mrb[0].mxu0 %v880
        %v1094 = vpop.f32.mrb[0].mxu0
        %v1095 = vadd.f32 %v771, %v1094
        %v1096 = vpop.f32.mrb[0].mxu0
        %1097 = vmatprep.mubr.f32.mxu0 0.0
        %1098 = vmatmul.mubr.f32.gmra.mrb[0].mxu0 %v883
        %v1099 = vpop.f32.mrb[0].mxu0
        %v1100 = vadd.f32 %v776, %v1099
        %v1101 = vpop.f32.mrb[0].mxu0
        %1102 = vmatprep.mubr.f32.mxu0 0.0
        %1103 = vmatmul.mubr.f32.gmra.mrb[0].mxu0 %v886
        %v1104 = vpop.f32.mrb[0].mxu0
        %v1105 = vadd.f32 %v781, %v1104
        %v1106 = vpop.f32.mrb[0].mxu0
        %1107 = vmatprep.mubr.f32.mxu0 0.0
        %1108 = vmatmul.mubr.f32.gmra.mrb[0].mxu0 %v889
        %v1109 = vpop.f32.mrb[0].mxu0
        %v1110 = vadd.f32 %v786, %v1109
        %v1111 = vpop.f32.mrb[0].mxu0
        %1112 = vmatprep.mubr.f32.mxu0 0.0
        %1113 = vmatmul.mubr.f32.gmra.mrb[0].mxu0 %v892
        %v1114 = vpop.f32.mrb[0].mxu0
        %v1115 = vadd.f32 %v791, %v1114
        %v1116 = vpop.f32.mrb[0].mxu0
        %1117 = vmatprep.mubr.f32.mxu0 0.0
        %1118 = vmatmul.mubr.f32.gmra.mrb[0].mxu0 %v895
        %v1119 = vpop.f32.mrb[0].mxu0
        %v1120 = vadd.f32 %v796, %v1119
        %v1121 = vpop.f32.mrb[0].mxu0
        %1122 = vmatprep.mubr.f32.mxu0 0.0
        %1123 = vmatmul.mubr.f32.gmra.mrb[0].mxu0 %v898
        %v1124 = vpop.f32.mrb[0].mxu0
        %v1125 = vadd.f32 %v801, %v1124
        %v1126 = vpop.f32.mrb[0].mxu0
        %1127 = vdwg.mxu0
        %v1128 = vld [vmem:[%s410 + $0x2] sm:$0xff]
        %v1129 = vld [vmem:[%s410 + $0xa] sm:$0xff]
        %v1130 = vld [vmem:[%s410 + $0x1a] sm:$0xff]
        %v1131 = vld [vmem:[%s410 + $0x22] sm:$0xff]
        %v1132 = vld [vmem:[%s410 + $0x32] sm:$0xff]
        %v1133 = vld [vmem:[%s410 + $0x3a] sm:$0xff]
        %v1134 = vld [vmem:[%s410 + $0x4a] sm:$0xff]
        %v1135 = vld [vmem:[%s410 + $0x52] sm:$0xff]
        %v1136 = vld [vmem:[%s410 + $0x62] sm:$0xff]
        %v1137 = vld [vmem:[%s410 + $0x6a] sm:$0xff]
        %v1138 = vld [vmem:[%s410 + $0x7a] sm:$0xff]
        %v1139 = vld [vmem:[%s410 + $0x82] sm:$0xff]
        %v1140 = vld [vmem:[%s410 + $0x92] sm:$0xff]
        %v1141 = vld [vmem:[%s410 + $0x9a] sm:$0xff]
        %v1142 = vld [vmem:[%s410 + $0xaa] sm:$0xff]
        %v1143 = vld [vmem:[%s410 + $0xb2] sm:$0xff]
        %v1144 = vld [vmem:[%s410 + $0xc2] sm:$0xff]
        %v1145 = vld [vmem:[%s410 + $0xca] sm:$0xff]
        %v1146 = vld [vmem:[%s410 + $0xda] sm:$0xff]
        %v1147 = vld [vmem:[%s410 + $0xe2] sm:$0xff]
        %v1148 = vld [vmem:[%s410 + $0xf2] sm:$0xff]
        %v1149 = vld [vmem:[%s410 + $0xfa] sm:$0xff]
        %v1150 = vld [vmem:[%s410 + $0x10a] sm:$0xff]
        %v1151 = vld [vmem:[%s410 + $0x112] sm:$0xff]
        %v1152 = vld [vmem:[%s410 + $0x122] sm:$0xff]
        %v1153 = vld [vmem:[%s410 + $0x12a] sm:$0xff]
        %v1154 = vld [vmem:[%s410 + $0x13a] sm:$0xff]
        %v1155 = vld [vmem:[%s410 + $0x142] sm:$0xff]
        %v1156 = vld [vmem:[%s410 + $0x152] sm:$0xff]
        %v1157 = vld [vmem:[%s410 + $0x15a] sm:$0xff]
        %v1158 = vld [vmem:[%s410 + $0x16a] sm:$0xff]
        %v1159 = vld [vmem:[%s410 + $0x172] sm:$0xff]
        %s1160 = scalar_lea.vmem %s1, 8
        %v1161 = vld [vmem:[%s1160] sm:$0xf]
        %v1163 = vsel %vm478, %v1128, 0
        %v1166 = vsel %vm478, %v1129, 0
        %v1169 = vsel %vm478, %v1130, 0
        %v1172 = vsel %vm478, %v1131, 0
        %v1175 = vsel %vm478, %v1132, 0
        %v1178 = vsel %vm478, %v1133, 0
        %v1181 = vsel %vm478, %v1134, 0
        %v1184 = vsel %vm478, %v1135, 0
        %v1187 = vsel %vm478, %v1136, 0
        %v1190 = vsel %vm478, %v1137, 0
        %v1193 = vsel %vm478, %v1138, 0
        %v1196 = vsel %vm478, %v1139, 0
        %v1199 = vsel %vm478, %v1140, 0
        %v1202 = vsel %vm478, %v1141, 0
        %v1205 = vsel %vm478, %v1142, 0
        %v1208 = vsel %vm478, %v1143, 0
        %v1211 = vsel %vm478, %v1144, 0
        %v1214 = vsel %vm478, %v1145, 0
        %v1217 = vsel %vm478, %v1146, 0
        %v1220 = vsel %vm478, %v1147, 0
        %v1223 = vsel %vm478, %v1148, 0
        %v1226 = vsel %vm478, %v1149, 0
        %v1229 = vsel %vm478, %v1150, 0
        %v1232 = vsel %vm478, %v1151, 0
        %v1235 = vsel %vm478, %v1152, 0
        %v1238 = vsel %vm478, %v1153, 0
        %v1241 = vsel %vm478, %v1154, 0
        %v1244 = vsel %vm478, %v1155, 0
        %v1247 = vsel %vm478, %v1156, 0
        %v1250 = vsel %vm478, %v1157, 0
        %v1253 = vsel %vm478, %v1158, 0
        %v1256 = vsel %vm478, %v1159, 0
        %v1259 = vsel %vm575, %v1161, 0
        %1261 = vmatprep.subr.mxu0 0.0
        %1262 = vmatpush1.msra.mxu0 %v1259
        %1263 = vmatprep.subr.mxu0 0.0
        %1264 = vmatpush1.msra.mxu0 0.0
        %1265 = vmatprep.subr.mxu0 0.0
        %1266 = vmatpush1.msra.mxu0 0.0
        %1267 = vmatprep.subr.mxu0 0.0
        %1268 = vmatpush1.msra.mxu0 0.0
        %1269 = vmatprep.subr.mxu0 0.0
        %1270 = vmatpush1.msra.mxu0 0.0
        %1271 = vmatprep.subr.mxu0 0.0
        %1272 = vmatpush1.msra.mxu0 0.0
        %1273 = vmatprep.subr.mxu0 0.0
        %1274 = vmatpush1.msra.mxu0 0.0
        %1275 = vmatprep.subr.mxu0 0.0
        %1276 = vmatpush1.msra.mxu0 0.0
        %1277 = vmatprep.subr.mxu0 0.0
        %1278 = vmatpush1.msra.mxu0 0.0
        %1279 = vmatprep.subr.mxu0 0.0
        %1280 = vmatpush1.msra.mxu0 0.0
        %1281 = vmatprep.subr.mxu0 0.0
        %1282 = vmatpush1.msra.mxu0 0.0
        %1283 = vmatprep.subr.mxu0 0.0
        %1284 = vmatpush1.msra.mxu0 0.0
        %1285 = vmatprep.subr.mxu0 0.0
        %1286 = vmatpush1.msra.mxu0 0.0
        %1287 = vmatprep.subr.mxu0 0.0
        %1288 = vmatpush1.msra.mxu0 0.0
        %1289 = vmatprep.subr.mxu0 0.0
        %1290 = vmatpush1.msra.mxu0 0.0
        %1291 = vmatprep.subr.mxu0 0.0
        %1292 = vmatpush1.msra.mxu0 0.0
        %1293 = vmatprep.subr.mxu0 0.0
        %1294 = vmatpush1.msra.mxu0 0.0
        %1295 = vmatprep.subr.mxu0 0.0
        %1296 = vmatpush1.msra.mxu0 0.0
        %1297 = vmatprep.subr.mxu0 0.0
        %1298 = vmatpush1.msra.mxu0 0.0
        %1299 = vmatprep.subr.mxu0 0.0
        %1300 = vmatpush1.msra.mxu0 0.0
        %1301 = vmatprep.subr.mxu0 0.0
        %1302 = vmatpush1.msra.mxu0 0.0
        %1303 = vmatprep.subr.mxu0 0.0
        %1304 = vmatpush1.msra.mxu0 0.0
        %1305 = vmatprep.subr.mxu0 0.0
        %1306 = vmatpush1.msra.mxu0 0.0
        %1307 = vmatprep.subr.mxu0 0.0
        %1308 = vmatpush1.msra.mxu0 0.0
        %1309 = vmatprep.subr.mxu0 0.0
        %1310 = vmatpush1.msra.mxu0 0.0
        %1311 = vmatprep.subr.mxu0 0.0
        %1312 = vmatpush1.msra.mxu0 0.0
        %1313 = vmatprep.subr.mxu0 0.0
        %1314 = vmatpush1.msra.mxu0 0.0
        %1315 = vmatprep.subr.mxu0 0.0
        %1316 = vmatpush1.msra.mxu0 0.0
        %1317 = vmatprep.subr.mxu0 0.0
        %1318 = vmatpush1.msra.mxu0 0.0
        %1319 = vmatprep.subr.mxu0 0.0
        %1320 = vmatpush1.msra.mxu0 0.0
        %1321 = vmatprep.subr.mxu0 0.0
        %1322 = vmatpush1.msra.mxu0 0.0
        %1323 = vmatprep.subr.mxu0 0.0
        %1324 = vmatpush1.msra.mxu0 0.0
        %1325 = vmatprep.mubr.f32.mxu0 0.0
        %1326 = vmatmul.mubr.f32.gmra.mrb[0].mxu0 %v1163
        %v1327 = vpop.f32.mrb[0].mxu0
        %v1328 = vadd.f32 0.0, %v1327
        %v1329 = vpop.f32.mrb[0].mxu0
        %1330 = vmatprep.mubr.f32.mxu0 0.0
        %1331 = vmatmul.mubr.f32.gmra.mrb[0].mxu0 %v1166
        %v1332 = vpop.f32.mrb[0].mxu0
        %v1333 = vadd.f32 0.0, %v1332
        %v1334 = vpop.f32.mrb[0].mxu0
        %1335 = vmatprep.mubr.f32.mxu0 0.0
        %1336 = vmatmul.mubr.f32.gmra.mrb[0].mxu0 %v1169
        %v1337 = vpop.f32.mrb[0].mxu0
        %v1338 = vadd.f32 0.0, %v1337
        %v1339 = vpop.f32.mrb[0].mxu0
        %1340 = vmatprep.mubr.f32.mxu0 0.0
        %1341 = vmatmul.mubr.f32.gmra.mrb[0].mxu0 %v1172
        %v1342 = vpop.f32.mrb[0].mxu0
        %v1343 = vadd.f32 0.0, %v1342
        %v1344 = vpop.f32.mrb[0].mxu0
        %1345 = vmatprep.mubr.f32.mxu0 0.0
        %1346 = vmatmul.mubr.f32.gmra.mrb[0].mxu0 %v1175
        %v1347 = vpop.f32.mrb[0].mxu0
        %v1348 = vadd.f32 0.0, %v1347
        %v1349 = vpop.f32.mrb[0].mxu0
        %1350 = vmatprep.mubr.f32.mxu0 0.0
        %1351 = vmatmul.mubr.f32.gmra.mrb[0].mxu0 %v1178
        %v1352 = vpop.f32.mrb[0].mxu0
        %v1353 = vadd.f32 0.0, %v1352
        %v1354 = vpop.f32.mrb[0].mxu0
        %1355 = vmatprep.mubr.f32.mxu0 0.0
        %1356 = vmatmul.mubr.f32.gmra.mrb[0].mxu0 %v1181
        %v1357 = vpop.f32.mrb[0].mxu0
        %v1358 = vadd.f32 0.0, %v1357
        %v1359 = vpop.f32.mrb[0].mxu0
        %1360 = vmatprep.mubr.f32.mxu0 0.0
        %1361 = vmatmul.mubr.f32.gmra.mrb[0].mxu0 %v1184
        %v1362 = vpop.f32.mrb[0].mxu0
        %v1363 = vadd.f32 0.0, %v1362
        %v1364 = vpop.f32.mrb[0].mxu0
        %1365 = vmatprep.mubr.f32.mxu0 0.0
        %1366 = vmatmul.mubr.f32.gmra.mrb[0].mxu0 %v1187
        %v1367 = vpop.f32.mrb[0].mxu0
        %v1368 = vadd.f32 0.0, %v1367
        %v1369 = vpop.f32.mrb[0].mxu0
        %1370 = vmatprep.mubr.f32.mxu0 0.0
        %1371 = vmatmul.mubr.f32.gmra.mrb[0].mxu0 %v1190
        %v1372 = vpop.f32.mrb[0].mxu0
        %v1373 = vadd.f32 0.0, %v1372
        %v1374 = vpop.f32.mrb[0].mxu0
        %1375 = vmatprep.mubr.f32.mxu0 0.0
        %1376 = vmatmul.mubr.f32.gmra.mrb[0].mxu0 %v1193
        %v1377 = vpop.f32.mrb[0].mxu0
        %v1378 = vadd.f32 0.0, %v1377
        %v1379 = vpop.f32.mrb[0].mxu0
        %1380 = vmatprep.mubr.f32.mxu0 0.0
        %1381 = vmatmul.mubr.f32.gmra.mrb[0].mxu0 %v1196
        %v1382 = vpop.f32.mrb[0].mxu0
        %v1383 = vadd.f32 0.0, %v1382
        %v1384 = vpop.f32.mrb[0].mxu0
        %1385 = vmatprep.mubr.f32.mxu0 0.0
        %1386 = vmatmul.mubr.f32.gmra.mrb[0].mxu0 %v1199
        %v1387 = vpop.f32.mrb[0].mxu0
        %v1388 = vadd.f32 0.0, %v1387
        %v1389 = vpop.f32.mrb[0].mxu0
        %1390 = vmatprep.mubr.f32.mxu0 0.0
        %1391 = vmatmul.mubr.f32.gmra.mrb[0].mxu0 %v1202
        %v1392 = vpop.f32.mrb[0].mxu0
        %v1393 = vadd.f32 0.0, %v1392
        %v1394 = vpop.f32.mrb[0].mxu0
        %1395 = vmatprep.mubr.f32.mxu0 0.0
        %1396 = vmatmul.mubr.f32.gmra.mrb[0].mxu0 %v1205
        %v1397 = vpop.f32.mrb[0].mxu0
        %v1398 = vadd.f32 0.0, %v1397
        %v1399 = vpop.f32.mrb[0].mxu0
        %1400 = vmatprep.mubr.f32.mxu0 0.0
        %1401 = vmatmul.mubr.f32.gmra.mrb[0].mxu0 %v1208
        %v1402 = vpop.f32.mrb[0].mxu0
        %v1403 = vadd.f32 0.0, %v1402
        %v1404 = vpop.f32.mrb[0].mxu0
        %1405 = vmatprep.mubr.f32.mxu0 0.0
        %1406 = vmatmul.mubr.f32.gmra.mrb[0].mxu0 %v1211
        %v1407 = vpop.f32.mrb[0].mxu0
        %v1408 = vadd.f32 0.0, %v1407
        %v1409 = vpop.f32.mrb[0].mxu0
        %1410 = vmatprep.mubr.f32.mxu0 0.0
        %1411 = vmatmul.mubr.f32.gmra.mrb[0].mxu0 %v1214
        %v1412 = vpop.f32.mrb[0].mxu0
        %v1413 = vadd.f32 0.0, %v1412
        %v1414 = vpop.f32.mrb[0].mxu0
        %1415 = vmatprep.mubr.f32.mxu0 0.0
        %1416 = vmatmul.mubr.f32.gmra.mrb[0].mxu0 %v1217
        %v1417 = vpop.f32.mrb[0].mxu0
        %v1418 = vadd.f32 0.0, %v1417
        %v1419 = vpop.f32.mrb[0].mxu0
        %1420 = vmatprep.mubr.f32.mxu0 0.0
        %1421 = vmatmul.mubr.f32.gmra.mrb[0].mxu0 %v1220
        %v1422 = vpop.f32.mrb[0].mxu0
        %v1423 = vadd.f32 0.0, %v1422
        %v1424 = vpop.f32.mrb[0].mxu0
        %1425 = vmatprep.mubr.f32.mxu0 0.0
        %1426 = vmatmul.mubr.f32.gmra.mrb[0].mxu0 %v1223
        %v1427 = vpop.f32.mrb[0].mxu0
        %v1428 = vadd.f32 0.0, %v1427
        %v1429 = vpop.f32.mrb[0].mxu0
        %1430 = vmatprep.mubr.f32.mxu0 0.0
        %1431 = vmatmul.mubr.f32.gmra.mrb[0].mxu0 %v1226
        %v1432 = vpop.f32.mrb[0].mxu0
        %v1433 = vadd.f32 0.0, %v1432
        %v1434 = vpop.f32.mrb[0].mxu0
        %1435 = vmatprep.mubr.f32.mxu0 0.0
        %1436 = vmatmul.mubr.f32.gmra.mrb[0].mxu0 %v1229
        %v1437 = vpop.f32.mrb[0].mxu0
        %v1438 = vadd.f32 0.0, %v1437
        %v1439 = vpop.f32.mrb[0].mxu0
        %1440 = vmatprep.mubr.f32.mxu0 0.0
        %1441 = vmatmul.mubr.f32.gmra.mrb[0].mxu0 %v1232
        %v1442 = vpop.f32.mrb[0].mxu0
        %v1443 = vadd.f32 0.0, %v1442
        %v1444 = vpop.f32.mrb[0].mxu0
        %1445 = vmatprep.mubr.f32.mxu0 0.0
        %1446 = vmatmul.mubr.f32.gmra.mrb[0].mxu0 %v1235
        %v1447 = vpop.f32.mrb[0].mxu0
        %v1448 = vadd.f32 0.0, %v1447
        %v1449 = vpop.f32.mrb[0].mxu0
        %1450 = vmatprep.mubr.f32.mxu0 0.0
        %1451 = vmatmul.mubr.f32.gmra.mrb[0].mxu0 %v1238
        %v1452 = vpop.f32.mrb[0].mxu0
        %v1453 = vadd.f32 0.0, %v1452
        %v1454 = vpop.f32.mrb[0].mxu0
        %1455 = vmatprep.mubr.f32.mxu0 0.0
        %1456 = vmatmul.mubr.f32.gmra.mrb[0].mxu0 %v1241
        %v1457 = vpop.f32.mrb[0].mxu0
        %v1458 = vadd.f32 0.0, %v1457
        %v1459 = vpop.f32.mrb[0].mxu0
        %1460 = vmatprep.mubr.f32.mxu0 0.0
        %1461 = vmatmul.mubr.f32.gmra.mrb[0].mxu0 %v1244
        %v1462 = vpop.f32.mrb[0].mxu0
        %v1463 = vadd.f32 0.0, %v1462
        %v1464 = vpop.f32.mrb[0].mxu0
        %1465 = vmatprep.mubr.f32.mxu0 0.0
        %1466 = vmatmul.mubr.f32.gmra.mrb[0].mxu0 %v1247
        %v1467 = vpop.f32.mrb[0].mxu0
        %v1468 = vadd.f32 0.0, %v1467
        %v1469 = vpop.f32.mrb[0].mxu0
        %1470 = vmatprep.mubr.f32.mxu0 0.0
        %1471 = vmatmul.mubr.f32.gmra.mrb[0].mxu0 %v1250
        %v1472 = vpop.f32.mrb[0].mxu0
        %v1473 = vadd.f32 0.0, %v1472
        %v1474 = vpop.f32.mrb[0].mxu0
        %1475 = vmatprep.mubr.f32.mxu0 0.0
        %1476 = vmatmul.mubr.f32.gmra.mrb[0].mxu0 %v1253
        %v1477 = vpop.f32.mrb[0].mxu0
        %v1478 = vadd.f32 0.0, %v1477
        %v1479 = vpop.f32.mrb[0].mxu0
        %1480 = vmatprep.mubr.f32.mxu0 0.0
        %1481 = vmatmul.mubr.f32.gmra.mrb[0].mxu0 %v1256
        %v1482 = vpop.f32.mrb[0].mxu0
        %v1483 = vadd.f32 0.0, %v1482
        %v1484 = vpop.f32.mrb[0].mxu0
        %1485 = vdwg.mxu0
        %v1486 = vadd.f32 %v970, %v1328
        %v1487 = vadd.f32 %v975, %v1333
        %v1488 = vadd.f32 %v980, %v1338
        %v1489 = vadd.f32 %v985, %v1343
        %v1490 = vadd.f32 %v990, %v1348
        %v1491 = vadd.f32 %v995, %v1353
        %v1492 = vadd.f32 %v1000, %v1358
        %v1493 = vadd.f32 %v1005, %v1363
        %v1494 = vadd.f32 %v1010, %v1368
        %v1495 = vadd.f32 %v1015, %v1373
        %v1496 = vadd.f32 %v1020, %v1378
        %v1497 = vadd.f32 %v1025, %v1383
        %v1498 = vadd.f32 %v1030, %v1388
        %v1499 = vadd.f32 %v1035, %v1393
        %v1500 = vadd.f32 %v1040, %v1398
        %v1501 = vadd.f32 %v1045, %v1403
        %v1502 = vadd.f32 %v1050, %v1408
        %v1503 = vadd.f32 %v1055, %v1413
        %v1504 = vadd.f32 %v1060, %v1418
        %v1505 = vadd.f32 %v1065, %v1423
        %v1506 = vadd.f32 %v1070, %v1428
        %v1507 = vadd.f32 %v1075, %v1433
        %v1508 = vadd.f32 %v1080, %v1438
        %v1509 = vadd.f32 %v1085, %v1443
        %v1510 = vadd.f32 %v1090, %v1448
        %v1511 = vadd.f32 %v1095, %v1453
        %v1512 = vadd.f32 %v1100, %v1458
        %v1513 = vadd.f32 %v1105, %v1463
        %v1514 = vadd.f32 %v1110, %v1468
        %v1515 = vadd.f32 %v1115, %v1473
        %v1516 = vadd.f32 %v1120, %v1478
        %v1517 = vadd.f32 %v1125, %v1483
        %s1518 = scalar_lea.vmem %s410, 24
        %v1519 = vld [vmem:[%s1518] sm:$0xff]
        %v1520 = vld [vmem:[%s1518 + $0x8] sm:$0xff]
        %v1521 = vld [vmem:[%s1518 + $0x18] sm:$0xff]
        %v1522 = vld [vmem:[%s1518 + $0x20] sm:$0xff]
        %v1523 = vld [vmem:[%s1518 + $0x30] sm:$0xff]
        %v1524 = vld [vmem:[%s1518 + $0x38] sm:$0xff]
        %v1525 = vld [vmem:[%s1518 + $0x48] sm:$0xff]
        %v1526 = vld [vmem:[%s1518 + $0x50] sm:$0xff]
        %v1527 = vld [vmem:[%s1518 + $0x60] sm:$0xff]
        %v1528 = vld [vmem:[%s1518 + $0x68] sm:$0xff]
        %v1529 = vld [vmem:[%s1518 + $0x78] sm:$0xff]
        %v1530 = vld [vmem:[%s1518 + $0x80] sm:$0xff]
        %v1531 = vld [vmem:[%s1518 + $0x90] sm:$0xff]
        %v1532 = vld [vmem:[%s1518 + $0x98] sm:$0xff]
        %v1533 = vld [vmem:[%s1518 + $0xa8] sm:$0xff]
        %v1534 = vld [vmem:[%s1518 + $0xb0] sm:$0xff]
        %v1535 = vld [vmem:[%s1518 + $0xc0] sm:$0xff]
        %v1536 = vld [vmem:[%s1518 + $0xc8] sm:$0xff]
        %v1537 = vld [vmem:[%s1518 + $0xd8] sm:$0xff]
        %v1538 = vld [vmem:[%s1518 + $0xe0] sm:$0xff]
        %v1539 = vld [vmem:[%s1518 + $0xf0] sm:$0xff]
        %v1540 = vld [vmem:[%s1518 + $0xf8] sm:$0xff]
        %v1541 = vld [vmem:[%s1518 + $0x108] sm:$0xff]
        %v1542 = vld [vmem:[%s1518 + $0x110] sm:$0xff]
        %v1543 = vld [vmem:[%s1518 + $0x120] sm:$0xff]
        %v1544 = vld [vmem:[%s1518 + $0x128] sm:$0xff]
        %v1545 = vld [vmem:[%s1518 + $0x138] sm:$0xff]
        %v1546 = vld [vmem:[%s1518 + $0x140] sm:$0xff]
        %v1547 = vld [vmem:[%s1518 + $0x150] sm:$0xff]
        %v1548 = vld [vmem:[%s1518 + $0x158] sm:$0xff]
        %v1549 = vld [vmem:[%s1518 + $0x168] sm:$0xff]
        %v1550 = vld [vmem:[%s1518 + $0x170] sm:$0xff]
        %s1551 = scalar_lea.vmem %s1, 12
        %v1552 = vld [vmem:[%s1551] sm:$0xf]
        %v1554 = vsel %vm478, %v1519, 0
        %v1557 = vsel %vm478, %v1520, 0
        %v1560 = vsel %vm478, %v1521, 0
        %v1563 = vsel %vm478, %v1522, 0
        %v1566 = vsel %vm478, %v1523, 0
        %v1569 = vsel %vm478, %v1524, 0
        %v1572 = vsel %vm478, %v1525, 0
        %v1575 = vsel %vm478, %v1526, 0
        %v1578 = vsel %vm478, %v1527, 0
        %v1581 = vsel %vm478, %v1528, 0
        %v1584 = vsel %vm478, %v1529, 0
        %v1587 = vsel %vm478, %v1530, 0
        %v1590 = vsel %vm478, %v1531, 0
        %v1593 = vsel %vm478, %v1532, 0
        %v1596 = vsel %vm478, %v1533, 0
        %v1599 = vsel %vm478, %v1534, 0
        %v1602 = vsel %vm478, %v1535, 0
        %v1605 = vsel %vm478, %v1536, 0
        %v1608 = vsel %vm478, %v1537, 0
        %v1611 = vsel %vm478, %v1538, 0
        %v1614 = vsel %vm478, %v1539, 0
        %v1617 = vsel %vm478, %v1540, 0
        %v1620 = vsel %vm478, %v1541, 0
        %v1623 = vsel %vm478, %v1542, 0
        %v1626 = vsel %vm478, %v1543, 0
        %v1629 = vsel %vm478, %v1544, 0
        %v1632 = vsel %vm478, %v1545, 0
        %v1635 = vsel %vm478, %v1546, 0
        %v1638 = vsel %vm478, %v1547, 0
        %v1641 = vsel %vm478, %v1548, 0
        %v1644 = vsel %vm478, %v1549, 0
        %v1647 = vsel %vm478, %v1550, 0
        %v1650 = vsel %vm575, %v1552, 0
        %1652 = vmatprep.subr.mxu0 0.0
        %1653 = vmatpush1.msra.mxu0 %v1650
        %1654 = vmatprep.subr.mxu0 0.0
        %1655 = vmatpush1.msra.mxu0 0.0
        %1656 = vmatprep.subr.mxu0 0.0
        %1657 = vmatpush1.msra.mxu0 0.0
        %1658 = vmatprep.subr.mxu0 0.0
        %1659 = vmatpush1.msra.mxu0 0.0
        %1660 = vmatprep.subr.mxu0 0.0
        %1661 = vmatpush1.msra.mxu0 0.0
        %1662 = vmatprep.subr.mxu0 0.0
        %1663 = vmatpush1.msra.mxu0 0.0
        %1664 = vmatprep.subr.mxu0 0.0
        %1665 = vmatpush1.msra.mxu0 0.0
        %1666 = vmatprep.subr.mxu0 0.0
        %1667 = vmatpush1.msra.mxu0 0.0
        %1668 = vmatprep.subr.mxu0 0.0
        %1669 = vmatpush1.msra.mxu0 0.0
        %1670 = vmatprep.subr.mxu0 0.0
        %1671 = vmatpush1.msra.mxu0 0.0
        %1672 = vmatprep.subr.mxu0 0.0
        %1673 = vmatpush1.msra.mxu0 0.0
        %1674 = vmatprep.subr.mxu0 0.0
        %1675 = vmatpush1.msra.mxu0 0.0
        %1676 = vmatprep.subr.mxu0 0.0
        %1677 = vmatpush1.msra.mxu0 0.0
        %1678 = vmatprep.subr.mxu0 0.0
        %1679 = vmatpush1.msra.mxu0 0.0
        %1680 = vmatprep.subr.mxu0 0.0
        %1681 = vmatpush1.msra.mxu0 0.0
        %1682 = vmatprep.subr.mxu0 0.0
        %1683 = vmatpush1.msra.mxu0 0.0
        %1684 = vmatprep.subr.mxu0 0.0
        %1685 = vmatpush1.msra.mxu0 0.0
        %1686 = vmatprep.subr.mxu0 0.0
        %1687 = vmatpush1.msra.mxu0 0.0
        %1688 = vmatprep.subr.mxu0 0.0
        %1689 = vmatpush1.msra.mxu0 0.0
        %1690 = vmatprep.subr.mxu0 0.0
        %1691 = vmatpush1.msra.mxu0 0.0
        %1692 = vmatprep.subr.mxu0 0.0
        %1693 = vmatpush1.msra.mxu0 0.0
        %1694 = vmatprep.subr.mxu0 0.0
        %1695 = vmatpush1.msra.mxu0 0.0
        %1696 = vmatprep.subr.mxu0 0.0
        %1697 = vmatpush1.msra.mxu0 0.0
        %1698 = vmatprep.subr.mxu0 0.0
        %1699 = vmatpush1.msra.mxu0 0.0
        %1700 = vmatprep.subr.mxu0 0.0
        %1701 = vmatpush1.msra.mxu0 0.0
        %1702 = vmatprep.subr.mxu0 0.0
        %1703 = vmatpush1.msra.mxu0 0.0
        %1704 = vmatprep.subr.mxu0 0.0
        %1705 = vmatpush1.msra.mxu0 0.0
        %1706 = vmatprep.subr.mxu0 0.0
        %1707 = vmatpush1.msra.mxu0 0.0
        %1708 = vmatprep.subr.mxu0 0.0
        %1709 = vmatpush1.msra.mxu0 0.0
        %1710 = vmatprep.subr.mxu0 0.0
        %1711 = vmatpush1.msra.mxu0 0.0
        %1712 = vmatprep.subr.mxu0 0.0
        %1713 = vmatpush1.msra.mxu0 0.0
        %1714 = vmatprep.subr.mxu0 0.0
        %1715 = vmatpush1.msra.mxu0 0.0
        %1716 = vmatprep.mubr.f32.mxu0 0.0
        %1717 = vmatmul.mubr.f32.gmra.mrb[0].mxu0 %v1554
        %v1718 = vpop.f32.mrb[0].mxu0
        %v1719 = vadd.f32 0.0, %v1718
        %v1720 = vpop.f32.mrb[0].mxu0
        %1721 = vmatprep.mubr.f32.mxu0 0.0
        %1722 = vmatmul.mubr.f32.gmra.mrb[0].mxu0 %v1557
        %v1723 = vpop.f32.mrb[0].mxu0
        %v1724 = vadd.f32 0.0, %v1723
        %v1725 = vpop.f32.mrb[0].mxu0
        %1726 = vmatprep.mubr.f32.mxu0 0.0
        %1727 = vmatmul.mubr.f32.gmra.mrb[0].mxu0 %v1560
        %v1728 = vpop.f32.mrb[0].mxu0
        %v1729 = vadd.f32 0.0, %v1728
        %v1730 = vpop.f32.mrb[0].mxu0
        %1731 = vmatprep.mubr.f32.mxu0 0.0
        %1732 = vmatmul.mubr.f32.gmra.mrb[0].mxu0 %v1563
        %v1733 = vpop.f32.mrb[0].mxu0
        %v1734 = vadd.f32 0.0, %v1733
        %v1735 = vpop.f32.mrb[0].mxu0
        %1736 = vmatprep.mubr.f32.mxu0 0.0
        %1737 = vmatmul.mubr.f32.gmra.mrb[0].mxu0 %v1566
        %v1738 = vpop.f32.mrb[0].mxu0
        %v1739 = vadd.f32 0.0, %v1738
        %v1740 = vpop.f32.mrb[0].mxu0
        %1741 = vmatprep.mubr.f32.mxu0 0.0
        %1742 = vmatmul.mubr.f32.gmra.mrb[0].mxu0 %v1569
        %v1743 = vpop.f32.mrb[0].mxu0
        %v1744 = vadd.f32 0.0, %v1743
        %v1745 = vpop.f32.mrb[0].mxu0
        %1746 = vmatprep.mubr.f32.mxu0 0.0
        %1747 = vmatmul.mubr.f32.gmra.mrb[0].mxu0 %v1572
        %v1748 = vpop.f32.mrb[0].mxu0
        %v1749 = vadd.f32 0.0, %v1748
        %v1750 = vpop.f32.mrb[0].mxu0
        %1751 = vmatprep.mubr.f32.mxu0 0.0
        %1752 = vmatmul.mubr.f32.gmra.mrb[0].mxu0 %v1575
        %v1753 = vpop.f32.mrb[0].mxu0
        %v1754 = vadd.f32 0.0, %v1753
        %v1755 = vpop.f32.mrb[0].mxu0
        %1756 = vmatprep.mubr.f32.mxu0 0.0
        %1757 = vmatmul.mubr.f32.gmra.mrb[0].mxu0 %v1578
        %v1758 = vpop.f32.mrb[0].mxu0
        %v1759 = vadd.f32 0.0, %v1758
        %v1760 = vpop.f32.mrb[0].mxu0
        %1761 = vmatprep.mubr.f32.mxu0 0.0
        %1762 = vmatmul.mubr.f32.gmra.mrb[0].mxu0 %v1581
        %v1763 = vpop.f32.mrb[0].mxu0
        %v1764 = vadd.f32 0.0, %v1763
        %v1765 = vpop.f32.mrb[0].mxu0
        %1766 = vmatprep.mubr.f32.mxu0 0.0
        %1767 = vmatmul.mubr.f32.gmra.mrb[0].mxu0 %v1584
        %v1768 = vpop.f32.mrb[0].mxu0
        %v1769 = vadd.f32 0.0, %v1768
        %v1770 = vpop.f32.mrb[0].mxu0
        %1771 = vmatprep.mubr.f32.mxu0 0.0
        %1772 = vmatmul.mubr.f32.gmra.mrb[0].mxu0 %v1587
        %v1773 = vpop.f32.mrb[0].mxu0
        %v1774 = vadd.f32 0.0, %v1773
        %v1775 = vpop.f32.mrb[0].mxu0
        %1776 = vmatprep.mubr.f32.mxu0 0.0
        %1777 = vmatmul.mubr.f32.gmra.mrb[0].mxu0 %v1590
        %v1778 = vpop.f32.mrb[0].mxu0
        %v1779 = vadd.f32 0.0, %v1778
        %v1780 = vpop.f32.mrb[0].mxu0
        %1781 = vmatprep.mubr.f32.mxu0 0.0
        %1782 = vmatmul.mubr.f32.gmra.mrb[0].mxu0 %v1593
        %v1783 = vpop.f32.mrb[0].mxu0
        %v1784 = vadd.f32 0.0, %v1783
        %v1785 = vpop.f32.mrb[0].mxu0
        %1786 = vmatprep.mubr.f32.mxu0 0.0
        %1787 = vmatmul.mubr.f32.gmra.mrb[0].mxu0 %v1596
        %v1788 = vpop.f32.mrb[0].mxu0
        %v1789 = vadd.f32 0.0, %v1788
        %v1790 = vpop.f32.mrb[0].mxu0
        %1791 = vmatprep.mubr.f32.mxu0 0.0
        %1792 = vmatmul.mubr.f32.gmra.mrb[0].mxu0 %v1599
        %v1793 = vpop.f32.mrb[0].mxu0
        %v1794 = vadd.f32 0.0, %v1793
        %v1795 = vpop.f32.mrb[0].mxu0
        %1796 = vmatprep.mubr.f32.mxu0 0.0
        %1797 = vmatmul.mubr.f32.gmra.mrb[0].mxu0 %v1602
        %v1798 = vpop.f32.mrb[0].mxu0
        %v1799 = vadd.f32 0.0, %v1798
        %v1800 = vpop.f32.mrb[0].mxu0
        %1801 = vmatprep.mubr.f32.mxu0 0.0
        %1802 = vmatmul.mubr.f32.gmra.mrb[0].mxu0 %v1605
        %v1803 = vpop.f32.mrb[0].mxu0
        %v1804 = vadd.f32 0.0, %v1803
        %v1805 = vpop.f32.mrb[0].mxu0
        %1806 = vmatprep.mubr.f32.mxu0 0.0
        %1807 = vmatmul.mubr.f32.gmra.mrb[0].mxu0 %v1608
        %v1808 = vpop.f32.mrb[0].mxu0
        %v1809 = vadd.f32 0.0, %v1808
        %v1810 = vpop.f32.mrb[0].mxu0
        %1811 = vmatprep.mubr.f32.mxu0 0.0
        %1812 = vmatmul.mubr.f32.gmra.mrb[0].mxu0 %v1611
        %v1813 = vpop.f32.mrb[0].mxu0
        %v1814 = vadd.f32 0.0, %v1813
        %v1815 = vpop.f32.mrb[0].mxu0
        %1816 = vmatprep.mubr.f32.mxu0 0.0
        %1817 = vmatmul.mubr.f32.gmra.mrb[0].mxu0 %v1614
        %v1818 = vpop.f32.mrb[0].mxu0
        %v1819 = vadd.f32 0.0, %v1818
        %v1820 = vpop.f32.mrb[0].mxu0
        %1821 = vmatprep.mubr.f32.mxu0 0.0
        %1822 = vmatmul.mubr.f32.gmra.mrb[0].mxu0 %v1617
        %v1823 = vpop.f32.mrb[0].mxu0
        %v1824 = vadd.f32 0.0, %v1823
        %v1825 = vpop.f32.mrb[0].mxu0
        %1826 = vmatprep.mubr.f32.mxu0 0.0
        %1827 = vmatmul.mubr.f32.gmra.mrb[0].mxu0 %v1620
        %v1828 = vpop.f32.mrb[0].mxu0
        %v1829 = vadd.f32 0.0, %v1828
        %v1830 = vpop.f32.mrb[0].mxu0
        %1831 = vmatprep.mubr.f32.mxu0 0.0
        %1832 = vmatmul.mubr.f32.gmra.mrb[0].mxu0 %v1623
        %v1833 = vpop.f32.mrb[0].mxu0
        %v1834 = vadd.f32 0.0, %v1833
        %v1835 = vpop.f32.mrb[0].mxu0
        %1836 = vmatprep.mubr.f32.mxu0 0.0
        %1837 = vmatmul.mubr.f32.gmra.mrb[0].mxu0 %v1626
        %v1838 = vpop.f32.mrb[0].mxu0
        %v1839 = vadd.f32 0.0, %v1838
        %v1840 = vpop.f32.mrb[0].mxu0
        %1841 = vmatprep.mubr.f32.mxu0 0.0
        %1842 = vmatmul.mubr.f32.gmra.mrb[0].mxu0 %v1629
        %v1843 = vpop.f32.mrb[0].mxu0
        %v1844 = vadd.f32 0.0, %v1843
        %v1845 = vpop.f32.mrb[0].mxu0
        %1846 = vmatprep.mubr.f32.mxu0 0.0
        %1847 = vmatmul.mubr.f32.gmra.mrb[0].mxu0 %v1632
        %v1848 = vpop.f32.mrb[0].mxu0
        %v1849 = vadd.f32 0.0, %v1848
        %v1850 = vpop.f32.mrb[0].mxu0
        %1851 = vmatprep.mubr.f32.mxu0 0.0
        %1852 = vmatmul.mubr.f32.gmra.mrb[0].mxu0 %v1635
        %v1853 = vpop.f32.mrb[0].mxu0
        %v1854 = vadd.f32 0.0, %v1853
        %v1855 = vpop.f32.mrb[0].mxu0
        %1856 = vmatprep.mubr.f32.mxu0 0.0
        %1857 = vmatmul.mubr.f32.gmra.mrb[0].mxu0 %v1638
        %v1858 = vpop.f32.mrb[0].mxu0
        %v1859 = vadd.f32 0.0, %v1858
        %v1860 = vpop.f32.mrb[0].mxu0
        %1861 = vmatprep.mubr.f32.mxu0 0.0
        %1862 = vmatmul.mubr.f32.gmra.mrb[0].mxu0 %v1641
        %v1863 = vpop.f32.mrb[0].mxu0
        %v1864 = vadd.f32 0.0, %v1863
        %v1865 = vpop.f32.mrb[0].mxu0
        %1866 = vmatprep.mubr.f32.mxu0 0.0
        %1867 = vmatmul.mubr.f32.gmra.mrb[0].mxu0 %v1644
        %v1868 = vpop.f32.mrb[0].mxu0
        %v1869 = vadd.f32 0.0, %v1868
        %v1870 = vpop.f32.mrb[0].mxu0
        %1871 = vmatprep.mubr.f32.mxu0 0.0
        %1872 = vmatmul.mubr.f32.gmra.mrb[0].mxu0 %v1647
        %v1873 = vpop.f32.mrb[0].mxu0
        %v1874 = vadd.f32 0.0, %v1873
        %v1875 = vpop.f32.mrb[0].mxu0
        %1876 = vdwg.mxu0
        %v1877 = vadd.f32 %v1486, %v1719
        %v1878 = vadd.f32 %v1487, %v1724
        %v1879 = vadd.f32 %v1488, %v1729
        %v1880 = vadd.f32 %v1489, %v1734
        %v1881 = vadd.f32 %v1490, %v1739
        %v1882 = vadd.f32 %v1491, %v1744
        %v1883 = vadd.f32 %v1492, %v1749
        %v1884 = vadd.f32 %v1493, %v1754
        %v1885 = vadd.f32 %v1494, %v1759
        %v1886 = vadd.f32 %v1495, %v1764
        %v1887 = vadd.f32 %v1496, %v1769
        %v1888 = vadd.f32 %v1497, %v1774
        %v1889 = vadd.f32 %v1498, %v1779
        %v1890 = vadd.f32 %v1499, %v1784
        %v1891 = vadd.f32 %v1500, %v1789
        %v1892 = vadd.f32 %v1501, %v1794
        %v1893 = vadd.f32 %v1502, %v1799
        %v1894 = vadd.f32 %v1503, %v1804
        %v1895 = vadd.f32 %v1504, %v1809
        %v1896 = vadd.f32 %v1505, %v1814
        %v1897 = vadd.f32 %v1506, %v1819
        %v1898 = vadd.f32 %v1507, %v1824
        %v1899 = vadd.f32 %v1508, %v1829
        %v1900 = vadd.f32 %v1509, %v1834
        %v1901 = vadd.f32 %v1510, %v1839
        %v1902 = vadd.f32 %v1511, %v1844
        %v1903 = vadd.f32 %v1512, %v1849
        %v1904 = vadd.f32 %v1513, %v1854
        %v1905 = vadd.f32 %v1514, %v1859
        %v1906 = vadd.f32 %v1515, %v1864
        %v1907 = vadd.f32 %v1516, %v1869
        %v1908 = vadd.f32 %v1517, %v1874
        %v1909 = vld [vmem:[%s1518 + $0x1] sm:$0xff]
        %v1910 = vld [vmem:[%s1518 + $0x9] sm:$0xff]
        %v1911 = vld [vmem:[%s1518 + $0x19] sm:$0xff]
        %v1912 = vld [vmem:[%s1518 + $0x21] sm:$0xff]
        %v1913 = vld [vmem:[%s1518 + $0x31] sm:$0xff]
        %v1914 = vld [vmem:[%s1518 + $0x39] sm:$0xff]
        %v1915 = vld [vmem:[%s1518 + $0x49] sm:$0xff]
        %v1916 = vld [vmem:[%s1518 + $0x51] sm:$0xff]
        %v1917 = vld [vmem:[%s1518 + $0x61] sm:$0xff]
        %v1918 = vld [vmem:[%s1518 + $0x69] sm:$0xff]
        %v1919 = vld [vmem:[%s1518 + $0x79] sm:$0xff]
        %v1920 = vld [vmem:[%s1518 + $0x81] sm:$0xff]
        %v1921 = vld [vmem:[%s1518 + $0x91] sm:$0xff]
        %v1922 = vld [vmem:[%s1518 + $0x99] sm:$0xff]
        %v1923 = vld [vmem:[%s1518 + $0xa9] sm:$0xff]
        %v1924 = vld [vmem:[%s1518 + $0xb1] sm:$0xff]
        %v1925 = vld [vmem:[%s1518 + $0xc1] sm:$0xff]
        %v1926 = vld [vmem:[%s1518 + $0xc9] sm:$0xff]
        %v1927 = vld [vmem:[%s1518 + $0xd9] sm:$0xff]
        %v1928 = vld [vmem:[%s1518 + $0xe1] sm:$0xff]
        %v1929 = vld [vmem:[%s1518 + $0xf1] sm:$0xff]
        %v1930 = vld [vmem:[%s1518 + $0xf9] sm:$0xff]
        %v1931 = vld [vmem:[%s1518 + $0x109] sm:$0xff]
        %v1932 = vld [vmem:[%s1518 + $0x111] sm:$0xff]
        %v1933 = vld [vmem:[%s1518 + $0x121] sm:$0xff]
        %v1934 = vld [vmem:[%s1518 + $0x129] sm:$0xff]
        %v1935 = vld [vmem:[%s1518 + $0x139] sm:$0xff]
        %v1936 = vld [vmem:[%s1518 + $0x141] sm:$0xff]
        %v1937 = vld [vmem:[%s1518 + $0x151] sm:$0xff]
        %v1938 = vld [vmem:[%s1518 + $0x159] sm:$0xff]
        %v1939 = vld [vmem:[%s1518 + $0x169] sm:$0xff]
        %v1940 = vld [vmem:[%s1518 + $0x171] sm:$0xff]
        %s1941 = scalar_lea.vmem %s1, 16
        %v1942 = vld [vmem:[%s1941] sm:$0xf]
        %v1944 = vsel %vm478, %v1909, 0
        %v1947 = vsel %vm478, %v1910, 0
        %v1950 = vsel %vm478, %v1911, 0
        %v1953 = vsel %vm478, %v1912, 0
        %v1956 = vsel %vm478, %v1913, 0
        %v1959 = vsel %vm478, %v1914, 0
        %v1962 = vsel %vm478, %v1915, 0
        %v1965 = vsel %vm478, %v1916, 0
        %v1968 = vsel %vm478, %v1917, 0
        %v1971 = vsel %vm478, %v1918, 0
        %v1974 = vsel %vm478, %v1919, 0
        %v1977 = vsel %vm478, %v1920, 0
        %v1980 = vsel %vm478, %v1921, 0
        %v1983 = vsel %vm478, %v1922, 0
        %v1986 = vsel %vm478, %v1923, 0
        %v1989 = vsel %vm478, %v1924, 0
        %v1992 = vsel %vm478, %v1925, 0
        %v1995 = vsel %vm478, %v1926, 0
        %v1998 = vsel %vm478, %v1927, 0
        %v2001 = vsel %vm478, %v1928, 0
        %v2004 = vsel %vm478, %v1929, 0
        %v2007 = vsel %vm478, %v1930, 0
        %v2010 = vsel %vm478, %v1931, 0
        %v2013 = vsel %vm478, %v1932, 0
        %v2016 = vsel %vm478, %v1933, 0
        %v2019 = vsel %vm478, %v1934, 0
        %v2022 = vsel %vm478, %v1935, 0
        %v2025 = vsel %vm478, %v1936, 0
        %v2028 = vsel %vm478, %v1937, 0
        %v2031 = vsel %vm478, %v1938, 0
        %v2034 = vsel %vm478, %v1939, 0
        %v2037 = vsel %vm478, %v1940, 0
        %v2040 = vsel %vm575, %v1942, 0
        %2042 = vmatprep.subr.mxu0 0.0
        %2043 = vmatpush1.msra.mxu0 %v2040
        %2044 = vmatprep.subr.mxu0 0.0
        %2045 = vmatpush1.msra.mxu0 0.0
        %2046 = vmatprep.subr.mxu0 0.0
        %2047 = vmatpush1.msra.mxu0 0.0
        %2048 = vmatprep.subr.mxu0 0.0
        %2049 = vmatpush1.msra.mxu0 0.0
        %2050 = vmatprep.subr.mxu0 0.0
        %2051 = vmatpush1.msra.mxu0 0.0
        %2052 = vmatprep.subr.mxu0 0.0
        %2053 = vmatpush1.msra.mxu0 0.0
        %2054 = vmatprep.subr.mxu0 0.0
        %2055 = vmatpush1.msra.mxu0 0.0
        %2056 = vmatprep.subr.mxu0 0.0
        %2057 = vmatpush1.msra.mxu0 0.0
        %2058 = vmatprep.subr.mxu0 0.0
        %2059 = vmatpush1.msra.mxu0 0.0
        %2060 = vmatprep.subr.mxu0 0.0
        %2061 = vmatpush1.msra.mxu0 0.0
        %2062 = vmatprep.subr.mxu0 0.0
        %2063 = vmatpush1.msra.mxu0 0.0
        %2064 = vmatprep.subr.mxu0 0.0
        %2065 = vmatpush1.msra.mxu0 0.0
        %2066 = vmatprep.subr.mxu0 0.0
        %2067 = vmatpush1.msra.mxu0 0.0
        %2068 = vmatprep.subr.mxu0 0.0
        %2069 = vmatpush1.msra.mxu0 0.0
        %2070 = vmatprep.subr.mxu0 0.0
        %2071 = vmatpush1.msra.mxu0 0.0
        %2072 = vmatprep.subr.mxu0 0.0
        %2073 = vmatpush1.msra.mxu0 0.0
        %2074 = vmatprep.subr.mxu0 0.0
        %2075 = vmatpush1.msra.mxu0 0.0
        %2076 = vmatprep.subr.mxu0 0.0
        %2077 = vmatpush1.msra.mxu0 0.0
        %2078 = vmatprep.subr.mxu0 0.0
        %2079 = vmatpush1.msra.mxu0 0.0
        %2080 = vmatprep.subr.mxu0 0.0
        %2081 = vmatpush1.msra.mxu0 0.0
        %2082 = vmatprep.subr.mxu0 0.0
        %2083 = vmatpush1.msra.mxu0 0.0
        %2084 = vmatprep.subr.mxu0 0.0
        %2085 = vmatpush1.msra.mxu0 0.0
        %2086 = vmatprep.subr.mxu0 0.0
        %2087 = vmatpush1.msra.mxu0 0.0
        %2088 = vmatprep.subr.mxu0 0.0
        %2089 = vmatpush1.msra.mxu0 0.0
        %2090 = vmatprep.subr.mxu0 0.0
        %2091 = vmatpush1.msra.mxu0 0.0
        %2092 = vmatprep.subr.mxu0 0.0
        %2093 = vmatpush1.msra.mxu0 0.0
        %2094 = vmatprep.subr.mxu0 0.0
        %2095 = vmatpush1.msra.mxu0 0.0
        %2096 = vmatprep.subr.mxu0 0.0
        %2097 = vmatpush1.msra.mxu0 0.0
        %2098 = vmatprep.subr.mxu0 0.0
        %2099 = vmatpush1.msra.mxu0 0.0
        %2100 = vmatprep.subr.mxu0 0.0
        %2101 = vmatpush1.msra.mxu0 0.0
        %2102 = vmatprep.subr.mxu0 0.0
        %2103 = vmatpush1.msra.mxu0 0.0
        %2104 = vmatprep.subr.mxu0 0.0
        %2105 = vmatpush1.msra.mxu0 0.0
        %2106 = vmatprep.mubr.f32.mxu0 0.0
        %2107 = vmatmul.mubr.f32.gmra.mrb[0].mxu0 %v1944
        %v2108 = vpop.f32.mrb[0].mxu0
        %v2109 = vadd.f32 0.0, %v2108
        %v2110 = vpop.f32.mrb[0].mxu0
        %2111 = vmatprep.mubr.f32.mxu0 0.0
        %2112 = vmatmul.mubr.f32.gmra.mrb[0].mxu0 %v1947
        %v2113 = vpop.f32.mrb[0].mxu0
        %v2114 = vadd.f32 0.0, %v2113
        %v2115 = vpop.f32.mrb[0].mxu0
        %2116 = vmatprep.mubr.f32.mxu0 0.0
        %2117 = vmatmul.mubr.f32.gmra.mrb[0].mxu0 %v1950
        %v2118 = vpop.f32.mrb[0].mxu0
        %v2119 = vadd.f32 0.0, %v2118
        %v2120 = vpop.f32.mrb[0].mxu0
        %2121 = vmatprep.mubr.f32.mxu0 0.0
        %2122 = vmatmul.mubr.f32.gmra.mrb[0].mxu0 %v1953
        %v2123 = vpop.f32.mrb[0].mxu0
        %v2124 = vadd.f32 0.0, %v2123
        %v2125 = vpop.f32.mrb[0].mxu0
        %2126 = vmatprep.mubr.f32.mxu0 0.0
        %2127 = vmatmul.mubr.f32.gmra.mrb[0].mxu0 %v1956
        %v2128 = vpop.f32.mrb[0].mxu0
        %v2129 = vadd.f32 0.0, %v2128
        %v2130 = vpop.f32.mrb[0].mxu0
        %2131 = vmatprep.mubr.f32.mxu0 0.0
        %2132 = vmatmul.mubr.f32.gmra.mrb[0].mxu0 %v1959
        %v2133 = vpop.f32.mrb[0].mxu0
        %v2134 = vadd.f32 0.0, %v2133
        %v2135 = vpop.f32.mrb[0].mxu0
        %2136 = vmatprep.mubr.f32.mxu0 0.0
        %2137 = vmatmul.mubr.f32.gmra.mrb[0].mxu0 %v1962
        %v2138 = vpop.f32.mrb[0].mxu0
        %v2139 = vadd.f32 0.0, %v2138
        %v2140 = vpop.f32.mrb[0].mxu0
        %2141 = vmatprep.mubr.f32.mxu0 0.0
        %2142 = vmatmul.mubr.f32.gmra.mrb[0].mxu0 %v1965
        %v2143 = vpop.f32.mrb[0].mxu0
        %v2144 = vadd.f32 0.0, %v2143
        %v2145 = vpop.f32.mrb[0].mxu0
        %2146 = vmatprep.mubr.f32.mxu0 0.0
        %2147 = vmatmul.mubr.f32.gmra.mrb[0].mxu0 %v1968
        %v2148 = vpop.f32.mrb[0].mxu0
        %v2149 = vadd.f32 0.0, %v2148
        %v2150 = vpop.f32.mrb[0].mxu0
        %2151 = vmatprep.mubr.f32.mxu0 0.0
        %2152 = vmatmul.mubr.f32.gmra.mrb[0].mxu0 %v1971
        %v2153 = vpop.f32.mrb[0].mxu0
        %v2154 = vadd.f32 0.0, %v2153
        %v2155 = vpop.f32.mrb[0].mxu0
        %2156 = vmatprep.mubr.f32.mxu0 0.0
        %2157 = vmatmul.mubr.f32.gmra.mrb[0].mxu0 %v1974
        %v2158 = vpop.f32.mrb[0].mxu0
        %v2159 = vadd.f32 0.0, %v2158
        %v2160 = vpop.f32.mrb[0].mxu0
        %2161 = vmatprep.mubr.f32.mxu0 0.0
        %2162 = vmatmul.mubr.f32.gmra.mrb[0].mxu0 %v1977
        %v2163 = vpop.f32.mrb[0].mxu0
        %v2164 = vadd.f32 0.0, %v2163
        %v2165 = vpop.f32.mrb[0].mxu0
        %2166 = vmatprep.mubr.f32.mxu0 0.0
        %2167 = vmatmul.mubr.f32.gmra.mrb[0].mxu0 %v1980
        %v2168 = vpop.f32.mrb[0].mxu0
        %v2169 = vadd.f32 0.0, %v2168
        %v2170 = vpop.f32.mrb[0].mxu0
        %2171 = vmatprep.mubr.f32.mxu0 0.0
        %2172 = vmatmul.mubr.f32.gmra.mrb[0].mxu0 %v1983
        %v2173 = vpop.f32.mrb[0].mxu0
        %v2174 = vadd.f32 0.0, %v2173
        %v2175 = vpop.f32.mrb[0].mxu0
        %2176 = vmatprep.mubr.f32.mxu0 0.0
        %2177 = vmatmul.mubr.f32.gmra.mrb[0].mxu0 %v1986
        %v2178 = vpop.f32.mrb[0].mxu0
        %v2179 = vadd.f32 0.0, %v2178
        %v2180 = vpop.f32.mrb[0].mxu0
        %2181 = vmatprep.mubr.f32.mxu0 0.0
        %2182 = vmatmul.mubr.f32.gmra.mrb[0].mxu0 %v1989
        %v2183 = vpop.f32.mrb[0].mxu0
        %v2184 = vadd.f32 0.0, %v2183
        %v2185 = vpop.f32.mrb[0].mxu0
        %2186 = vmatprep.mubr.f32.mxu0 0.0
        %2187 = vmatmul.mubr.f32.gmra.mrb[0].mxu0 %v1992
        %v2188 = vpop.f32.mrb[0].mxu0
        %v2189 = vadd.f32 0.0, %v2188
        %v2190 = vpop.f32.mrb[0].mxu0
        %2191 = vmatprep.mubr.f32.mxu0 0.0
        %2192 = vmatmul.mubr.f32.gmra.mrb[0].mxu0 %v1995
        %v2193 = vpop.f32.mrb[0].mxu0
        %v2194 = vadd.f32 0.0, %v2193
        %v2195 = vpop.f32.mrb[0].mxu0
        %2196 = vmatprep.mubr.f32.mxu0 0.0
        %2197 = vmatmul.mubr.f32.gmra.mrb[0].mxu0 %v1998
        %v2198 = vpop.f32.mrb[0].mxu0
        %v2199 = vadd.f32 0.0, %v2198
        %v2200 = vpop.f32.mrb[0].mxu0
        %2201 = vmatprep.mubr.f32.mxu0 0.0
        %2202 = vmatmul.mubr.f32.gmra.mrb[0].mxu0 %v2001
        %v2203 = vpop.f32.mrb[0].mxu0
        %v2204 = vadd.f32 0.0, %v2203
        %v2205 = vpop.f32.mrb[0].mxu0
        %2206 = vmatprep.mubr.f32.mxu0 0.0
        %2207 = vmatmul.mubr.f32.gmra.mrb[0].mxu0 %v2004
        %v2208 = vpop.f32.mrb[0].mxu0
        %v2209 = vadd.f32 0.0, %v2208
        %v2210 = vpop.f32.mrb[0].mxu0
        %2211 = vmatprep.mubr.f32.mxu0 0.0
        %2212 = vmatmul.mubr.f32.gmra.mrb[0].mxu0 %v2007
        %v2213 = vpop.f32.mrb[0].mxu0
        %v2214 = vadd.f32 0.0, %v2213
        %v2215 = vpop.f32.mrb[0].mxu0
        %2216 = vmatprep.mubr.f32.mxu0 0.0
        %2217 = vmatmul.mubr.f32.gmra.mrb[0].mxu0 %v2010
        %v2218 = vpop.f32.mrb[0].mxu0
        %v2219 = vadd.f32 0.0, %v2218
        %v2220 = vpop.f32.mrb[0].mxu0
        %2221 = vmatprep.mubr.f32.mxu0 0.0
        %2222 = vmatmul.mubr.f32.gmra.mrb[0].mxu0 %v2013
        %v2223 = vpop.f32.mrb[0].mxu0
        %v2224 = vadd.f32 0.0, %v2223
        %v2225 = vpop.f32.mrb[0].mxu0
        %2226 = vmatprep.mubr.f32.mxu0 0.0
        %2227 = vmatmul.mubr.f32.gmra.mrb[0].mxu0 %v2016
        %v2228 = vpop.f32.mrb[0].mxu0
        %v2229 = vadd.f32 0.0, %v2228
        %v2230 = vpop.f32.mrb[0].mxu0
        %2231 = vmatprep.mubr.f32.mxu0 0.0
        %2232 = vmatmul.mubr.f32.gmra.mrb[0].mxu0 %v2019
        %v2233 = vpop.f32.mrb[0].mxu0
        %v2234 = vadd.f32 0.0, %v2233
        %v2235 = vpop.f32.mrb[0].mxu0
        %2236 = vmatprep.mubr.f32.mxu0 0.0
        %2237 = vmatmul.mubr.f32.gmra.mrb[0].mxu0 %v2022
        %v2238 = vpop.f32.mrb[0].mxu0
        %v2239 = vadd.f32 0.0, %v2238
        %v2240 = vpop.f32.mrb[0].mxu0
        %2241 = vmatprep.mubr.f32.mxu0 0.0
        %2242 = vmatmul.mubr.f32.gmra.mrb[0].mxu0 %v2025
        %v2243 = vpop.f32.mrb[0].mxu0
        %v2244 = vadd.f32 0.0, %v2243
        %v2245 = vpop.f32.mrb[0].mxu0
        %2246 = vmatprep.mubr.f32.mxu0 0.0
        %2247 = vmatmul.mubr.f32.gmra.mrb[0].mxu0 %v2028
        %v2248 = vpop.f32.mrb[0].mxu0
        %v2249 = vadd.f32 0.0, %v2248
        %v2250 = vpop.f32.mrb[0].mxu0
        %2251 = vmatprep.mubr.f32.mxu0 0.0
        %2252 = vmatmul.mubr.f32.gmra.mrb[0].mxu0 %v2031
        %v2253 = vpop.f32.mrb[0].mxu0
        %v2254 = vadd.f32 0.0, %v2253
        %v2255 = vpop.f32.mrb[0].mxu0
        %2256 = vmatprep.mubr.f32.mxu0 0.0
        %2257 = vmatmul.mubr.f32.gmra.mrb[0].mxu0 %v2034
        %v2258 = vpop.f32.mrb[0].mxu0
        %v2259 = vadd.f32 0.0, %v2258
        %v2260 = vpop.f32.mrb[0].mxu0
        %2261 = vmatprep.mubr.f32.mxu0 0.0
        %2262 = vmatmul.mubr.f32.gmra.mrb[0].mxu0 %v2037
        %v2263 = vpop.f32.mrb[0].mxu0
        %v2264 = vadd.f32 0.0, %v2263
        %v2265 = vpop.f32.mrb[0].mxu0
        %2266 = vdwg.mxu0
        %v2267 = vadd.f32 %v1877, %v2109
        %v2268 = vadd.f32 %v1878, %v2114
        %v2269 = vadd.f32 %v1879, %v2119
        %v2270 = vadd.f32 %v1880, %v2124
        %v2271 = vadd.f32 %v1881, %v2129
        %v2272 = vadd.f32 %v1882, %v2134
        %v2273 = vadd.f32 %v1883, %v2139
        %v2274 = vadd.f32 %v1884, %v2144
        %v2275 = vadd.f32 %v1885, %v2149
        %v2276 = vadd.f32 %v1886, %v2154
        %v2277 = vadd.f32 %v1887, %v2159
        %v2278 = vadd.f32 %v1888, %v2164
        %v2279 = vadd.f32 %v1889, %v2169
        %v2280 = vadd.f32 %v1890, %v2174
        %v2281 = vadd.f32 %v1891, %v2179
        %v2282 = vadd.f32 %v1892, %v2184
        %v2283 = vadd.f32 %v1893, %v2189
        %v2284 = vadd.f32 %v1894, %v2194
        %v2285 = vadd.f32 %v1895, %v2199
        %v2286 = vadd.f32 %v1896, %v2204
        %v2287 = vadd.f32 %v1897, %v2209
        %v2288 = vadd.f32 %v1898, %v2214
        %v2289 = vadd.f32 %v1899, %v2219
        %v2290 = vadd.f32 %v1900, %v2224
        %v2291 = vadd.f32 %v1901, %v2229
        %v2292 = vadd.f32 %v1902, %v2234
        %v2293 = vadd.f32 %v1903, %v2239
        %v2294 = vadd.f32 %v1904, %v2244
        %v2295 = vadd.f32 %v1905, %v2249
        %v2296 = vadd.f32 %v1906, %v2254
        %v2297 = vadd.f32 %v1907, %v2259
        %v2298 = vadd.f32 %v1908, %v2264
        %v2299 = vld [vmem:[%s1518 + $0x2] sm:$0xff]
        %v2300 = vld [vmem:[%s1518 + $0xa] sm:$0xff]
        %v2301 = vld [vmem:[%s1518 + $0x1a] sm:$0xff]
        %v2302 = vld [vmem:[%s1518 + $0x22] sm:$0xff]
        %v2303 = vld [vmem:[%s1518 + $0x32] sm:$0xff]
        %v2304 = vld [vmem:[%s1518 + $0x3a] sm:$0xff]
        %v2305 = vld [vmem:[%s1518 + $0x4a] sm:$0xff]
        %v2306 = vld [vmem:[%s1518 + $0x52] sm:$0xff]
        %v2307 = vld [vmem:[%s1518 + $0x62] sm:$0xff]
        %v2308 = vld [vmem:[%s1518 + $0x6a] sm:$0xff]
        %v2309 = vld [vmem:[%s1518 + $0x7a] sm:$0xff]
        %v2310 = vld [vmem:[%s1518 + $0x82] sm:$0xff]
        %v2311 = vld [vmem:[%s1518 + $0x92] sm:$0xff]
        %v2312 = vld [vmem:[%s1518 + $0x9a] sm:$0xff]
        %v2313 = vld [vmem:[%s1518 + $0xaa] sm:$0xff]
        %v2314 = vld [vmem:[%s1518 + $0xb2] sm:$0xff]
        %v2315 = vld [vmem:[%s1518 + $0xc2] sm:$0xff]
        %v2316 = vld [vmem:[%s1518 + $0xca] sm:$0xff]
        %v2317 = vld [vmem:[%s1518 + $0xda] sm:$0xff]
        %v2318 = vld [vmem:[%s1518 + $0xe2] sm:$0xff]
        %v2319 = vld [vmem:[%s1518 + $0xf2] sm:$0xff]
        %v2320 = vld [vmem:[%s1518 + $0xfa] sm:$0xff]
        %v2321 = vld [vmem:[%s1518 + $0x10a] sm:$0xff]
        %v2322 = vld [vmem:[%s1518 + $0x112] sm:$0xff]
        %v2323 = vld [vmem:[%s1518 + $0x122] sm:$0xff]
        %v2324 = vld [vmem:[%s1518 + $0x12a] sm:$0xff]
        %v2325 = vld [vmem:[%s1518 + $0x13a] sm:$0xff]
        %v2326 = vld [vmem:[%s1518 + $0x142] sm:$0xff]
        %v2327 = vld [vmem:[%s1518 + $0x152] sm:$0xff]
        %v2328 = vld [vmem:[%s1518 + $0x15a] sm:$0xff]
        %v2329 = vld [vmem:[%s1518 + $0x16a] sm:$0xff]
        %v2330 = vld [vmem:[%s1518 + $0x172] sm:$0xff]
        %s2331 = scalar_lea.vmem %s1, 20
        %v2332 = vld [vmem:[%s2331] sm:$0xf]
        %v2334 = vsel %vm478, %v2299, 0
        %v2337 = vsel %vm478, %v2300, 0
        %v2340 = vsel %vm478, %v2301, 0
        %v2343 = vsel %vm478, %v2302, 0
        %v2346 = vsel %vm478, %v2303, 0
        %v2349 = vsel %vm478, %v2304, 0
        %v2352 = vsel %vm478, %v2305, 0
        %v2355 = vsel %vm478, %v2306, 0
        %v2358 = vsel %vm478, %v2307, 0
        %v2361 = vsel %vm478, %v2308, 0
        %v2364 = vsel %vm478, %v2309, 0
        %v2367 = vsel %vm478, %v2310, 0
        %v2370 = vsel %vm478, %v2311, 0
        %v2373 = vsel %vm478, %v2312, 0
        %v2376 = vsel %vm478, %v2313, 0
        %v2379 = vsel %vm478, %v2314, 0
        %v2382 = vsel %vm478, %v2315, 0
        %v2385 = vsel %vm478, %v2316, 0
        %v2388 = vsel %vm478, %v2317, 0
        %v2391 = vsel %vm478, %v2318, 0
        %v2394 = vsel %vm478, %v2319, 0
        %v2397 = vsel %vm478, %v2320, 0
        %v2400 = vsel %vm478, %v2321, 0
        %v2403 = vsel %vm478, %v2322, 0
        %v2406 = vsel %vm478, %v2323, 0
        %v2409 = vsel %vm478, %v2324, 0
        %v2412 = vsel %vm478, %v2325, 0
        %v2415 = vsel %vm478, %v2326, 0
        %v2418 = vsel %vm478, %v2327, 0
        %v2421 = vsel %vm478, %v2328, 0
        %v2424 = vsel %vm478, %v2329, 0
        %v2427 = vsel %vm478, %v2330, 0
        %v2430 = vsel %vm575, %v2332, 0
        %2432 = vmatprep.subr.mxu0 0.0
        %2433 = vmatpush1.msra.mxu0 %v2430
        %2434 = vmatprep.subr.mxu0 0.0
        %2435 = vmatpush1.msra.mxu0 0.0
        %2436 = vmatprep.subr.mxu0 0.0
        %2437 = vmatpush1.msra.mxu0 0.0
        %2438 = vmatprep.subr.mxu0 0.0
        %2439 = vmatpush1.msra.mxu0 0.0
        %2440 = vmatprep.subr.mxu0 0.0
        %2441 = vmatpush1.msra.mxu0 0.0
        %2442 = vmatprep.subr.mxu0 0.0
        %2443 = vmatpush1.msra.mxu0 0.0
        %2444 = vmatprep.subr.mxu0 0.0
        %2445 = vmatpush1.msra.mxu0 0.0
        %2446 = vmatprep.subr.mxu0 0.0
        %2447 = vmatpush1.msra.mxu0 0.0
        %2448 = vmatprep.subr.mxu0 0.0
        %2449 = vmatpush1.msra.mxu0 0.0
        %2450 = vmatprep.subr.mxu0 0.0
        %2451 = vmatpush1.msra.mxu0 0.0
        %2452 = vmatprep.subr.mxu0 0.0
        %2453 = vmatpush1.msra.mxu0 0.0
        %2454 = vmatprep.subr.mxu0 0.0
        %2455 = vmatpush1.msra.mxu0 0.0
        %2456 = vmatprep.subr.mxu0 0.0
        %2457 = vmatpush1.msra.mxu0 0.0
        %2458 = vmatprep.subr.mxu0 0.0
        %2459 = vmatpush1.msra.mxu0 0.0
        %2460 = vmatprep.subr.mxu0 0.0
        %2461 = vmatpush1.msra.mxu0 0.0
        %2462 = vmatprep.subr.mxu0 0.0
        %2463 = vmatpush1.msra.mxu0 0.0
        %2464 = vmatprep.subr.mxu0 0.0
        %2465 = vmatpush1.msra.mxu0 0.0
        %2466 = vmatprep.subr.mxu0 0.0
        %2467 = vmatpush1.msra.mxu0 0.0
        %2468 = vmatprep.subr.mxu0 0.0
        %2469 = vmatpush1.msra.mxu0 0.0
        %2470 = vmatprep.subr.mxu0 0.0
        %2471 = vmatpush1.msra.mxu0 0.0
        %2472 = vmatprep.subr.mxu0 0.0
        %2473 = vmatpush1.msra.mxu0 0.0
        %2474 = vmatprep.subr.mxu0 0.0
        %2475 = vmatpush1.msra.mxu0 0.0
        %2476 = vmatprep.subr.mxu0 0.0
        %2477 = vmatpush1.msra.mxu0 0.0
        %2478 = vmatprep.subr.mxu0 0.0
        %2479 = vmatpush1.msra.mxu0 0.0
        %2480 = vmatprep.subr.mxu0 0.0
        %2481 = vmatpush1.msra.mxu0 0.0
        %2482 = vmatprep.subr.mxu0 0.0
        %2483 = vmatpush1.msra.mxu0 0.0
        %2484 = vmatprep.subr.mxu0 0.0
        %2485 = vmatpush1.msra.mxu0 0.0
        %2486 = vmatprep.subr.mxu0 0.0
        %2487 = vmatpush1.msra.mxu0 0.0
        %2488 = vmatprep.subr.mxu0 0.0
        %2489 = vmatpush1.msra.mxu0 0.0
        %2490 = vmatprep.subr.mxu0 0.0
        %2491 = vmatpush1.msra.mxu0 0.0
        %2492 = vmatprep.subr.mxu0 0.0
        %2493 = vmatpush1.msra.mxu0 0.0
        %2494 = vmatprep.subr.mxu0 0.0
        %2495 = vmatpush1.msra.mxu0 0.0
        %2496 = vmatprep.mubr.f32.mxu0 0.0
        %2497 = vmatmul.mubr.f32.gmra.mrb[0].mxu0 %v2334
        %v2498 = vpop.f32.mrb[0].mxu0
        %v2499 = vadd.f32 0.0, %v2498
        %v2500 = vpop.f32.mrb[0].mxu0
        %2501 = vmatprep.mubr.f32.mxu0 0.0
        %2502 = vmatmul.mubr.f32.gmra.mrb[0].mxu0 %v2337
        %v2503 = vpop.f32.mrb[0].mxu0
        %v2504 = vadd.f32 0.0, %v2503
        %v2505 = vpop.f32.mrb[0].mxu0
        %2506 = vmatprep.mubr.f32.mxu0 0.0
        %2507 = vmatmul.mubr.f32.gmra.mrb[0].mxu0 %v2340
        %v2508 = vpop.f32.mrb[0].mxu0
        %v2509 = vadd.f32 0.0, %v2508
        %v2510 = vpop.f32.mrb[0].mxu0
        %2511 = vmatprep.mubr.f32.mxu0 0.0
        %2512 = vmatmul.mubr.f32.gmra.mrb[0].mxu0 %v2343
        %v2513 = vpop.f32.mrb[0].mxu0
        %v2514 = vadd.f32 0.0, %v2513
        %v2515 = vpop.f32.mrb[0].mxu0
        %2516 = vmatprep.mubr.f32.mxu0 0.0
        %2517 = vmatmul.mubr.f32.gmra.mrb[0].mxu0 %v2346
        %v2518 = vpop.f32.mrb[0].mxu0
        %v2519 = vadd.f32 0.0, %v2518
        %v2520 = vpop.f32.mrb[0].mxu0
        %2521 = vmatprep.mubr.f32.mxu0 0.0
        %2522 = vmatmul.mubr.f32.gmra.mrb[0].mxu0 %v2349
        %v2523 = vpop.f32.mrb[0].mxu0
        %v2524 = vadd.f32 0.0, %v2523
        %v2525 = vpop.f32.mrb[0].mxu0
        %2526 = vmatprep.mubr.f32.mxu0 0.0
        %2527 = vmatmul.mubr.f32.gmra.mrb[0].mxu0 %v2352
        %v2528 = vpop.f32.mrb[0].mxu0
        %v2529 = vadd.f32 0.0, %v2528
        %v2530 = vpop.f32.mrb[0].mxu0
        %2531 = vmatprep.mubr.f32.mxu0 0.0
        %2532 = vmatmul.mubr.f32.gmra.mrb[0].mxu0 %v2355
        %v2533 = vpop.f32.mrb[0].mxu0
        %v2534 = vadd.f32 0.0, %v2533
        %v2535 = vpop.f32.mrb[0].mxu0
        %2536 = vmatprep.mubr.f32.mxu0 0.0
        %2537 = vmatmul.mubr.f32.gmra.mrb[0].mxu0 %v2358
        %v2538 = vpop.f32.mrb[0].mxu0
        %v2539 = vadd.f32 0.0, %v2538
        %v2540 = vpop.f32.mrb[0].mxu0
        %2541 = vmatprep.mubr.f32.mxu0 0.0
        %2542 = vmatmul.mubr.f32.gmra.mrb[0].mxu0 %v2361
        %v2543 = vpop.f32.mrb[0].mxu0
        %v2544 = vadd.f32 0.0, %v2543
        %v2545 = vpop.f32.mrb[0].mxu0
        %2546 = vmatprep.mubr.f32.mxu0 0.0
        %2547 = vmatmul.mubr.f32.gmra.mrb[0].mxu0 %v2364
        %v2548 = vpop.f32.mrb[0].mxu0
        %v2549 = vadd.f32 0.0, %v2548
        %v2550 = vpop.f32.mrb[0].mxu0
        %2551 = vmatprep.mubr.f32.mxu0 0.0
        %2552 = vmatmul.mubr.f32.gmra.mrb[0].mxu0 %v2367
        %v2553 = vpop.f32.mrb[0].mxu0
        %v2554 = vadd.f32 0.0, %v2553
        %v2555 = vpop.f32.mrb[0].mxu0
        %2556 = vmatprep.mubr.f32.mxu0 0.0
        %2557 = vmatmul.mubr.f32.gmra.mrb[0].mxu0 %v2370
        %v2558 = vpop.f32.mrb[0].mxu0
        %v2559 = vadd.f32 0.0, %v2558
        %v2560 = vpop.f32.mrb[0].mxu0
        %2561 = vmatprep.mubr.f32.mxu0 0.0
        %2562 = vmatmul.mubr.f32.gmra.mrb[0].mxu0 %v2373
        %v2563 = vpop.f32.mrb[0].mxu0
        %v2564 = vadd.f32 0.0, %v2563
        %v2565 = vpop.f32.mrb[0].mxu0
        %2566 = vmatprep.mubr.f32.mxu0 0.0
        %2567 = vmatmul.mubr.f32.gmra.mrb[0].mxu0 %v2376
        %v2568 = vpop.f32.mrb[0].mxu0
        %v2569 = vadd.f32 0.0, %v2568
        %v2570 = vpop.f32.mrb[0].mxu0
        %2571 = vmatprep.mubr.f32.mxu0 0.0
        %2572 = vmatmul.mubr.f32.gmra.mrb[0].mxu0 %v2379
        %v2573 = vpop.f32.mrb[0].mxu0
        %v2574 = vadd.f32 0.0, %v2573
        %v2575 = vpop.f32.mrb[0].mxu0
        %2576 = vmatprep.mubr.f32.mxu0 0.0
        %2577 = vmatmul.mubr.f32.gmra.mrb[0].mxu0 %v2382
        %v2578 = vpop.f32.mrb[0].mxu0
        %v2579 = vadd.f32 0.0, %v2578
        %v2580 = vpop.f32.mrb[0].mxu0
        %2581 = vmatprep.mubr.f32.mxu0 0.0
        %2582 = vmatmul.mubr.f32.gmra.mrb[0].mxu0 %v2385
        %v2583 = vpop.f32.mrb[0].mxu0
        %v2584 = vadd.f32 0.0, %v2583
        %v2585 = vpop.f32.mrb[0].mxu0
        %2586 = vmatprep.mubr.f32.mxu0 0.0
        %2587 = vmatmul.mubr.f32.gmra.mrb[0].mxu0 %v2388
        %v2588 = vpop.f32.mrb[0].mxu0
        %v2589 = vadd.f32 0.0, %v2588
        %v2590 = vpop.f32.mrb[0].mxu0
        %2591 = vmatprep.mubr.f32.mxu0 0.0
        %2592 = vmatmul.mubr.f32.gmra.mrb[0].mxu0 %v2391
        %v2593 = vpop.f32.mrb[0].mxu0
        %v2594 = vadd.f32 0.0, %v2593
        %v2595 = vpop.f32.mrb[0].mxu0
        %2596 = vmatprep.mubr.f32.mxu0 0.0
        %2597 = vmatmul.mubr.f32.gmra.mrb[0].mxu0 %v2394
        %v2598 = vpop.f32.mrb[0].mxu0
        %v2599 = vadd.f32 0.0, %v2598
        %v2600 = vpop.f32.mrb[0].mxu0
        %2601 = vmatprep.mubr.f32.mxu0 0.0
        %2602 = vmatmul.mubr.f32.gmra.mrb[0].mxu0 %v2397
        %v2603 = vpop.f32.mrb[0].mxu0
        %v2604 = vadd.f32 0.0, %v2603
        %v2605 = vpop.f32.mrb[0].mxu0
        %2606 = vmatprep.mubr.f32.mxu0 0.0
        %2607 = vmatmul.mubr.f32.gmra.mrb[0].mxu0 %v2400
        %v2608 = vpop.f32.mrb[0].mxu0
        %v2609 = vadd.f32 0.0, %v2608
        %v2610 = vpop.f32.mrb[0].mxu0
        %2611 = vmatprep.mubr.f32.mxu0 0.0
        %2612 = vmatmul.mubr.f32.gmra.mrb[0].mxu0 %v2403
        %v2613 = vpop.f32.mrb[0].mxu0
        %v2614 = vadd.f32 0.0, %v2613
        %v2615 = vpop.f32.mrb[0].mxu0
        %2616 = vmatprep.mubr.f32.mxu0 0.0
        %2617 = vmatmul.mubr.f32.gmra.mrb[0].mxu0 %v2406
        %v2618 = vpop.f32.mrb[0].mxu0
        %v2619 = vadd.f32 0.0, %v2618
        %v2620 = vpop.f32.mrb[0].mxu0
        %2621 = vmatprep.mubr.f32.mxu0 0.0
        %2622 = vmatmul.mubr.f32.gmra.mrb[0].mxu0 %v2409
        %v2623 = vpop.f32.mrb[0].mxu0
        %v2624 = vadd.f32 0.0, %v2623
        %v2625 = vpop.f32.mrb[0].mxu0
        %2626 = vmatprep.mubr.f32.mxu0 0.0
        %2627 = vmatmul.mubr.f32.gmra.mrb[0].mxu0 %v2412
        %v2628 = vpop.f32.mrb[0].mxu0
        %v2629 = vadd.f32 0.0, %v2628
        %v2630 = vpop.f32.mrb[0].mxu0
        %2631 = vmatprep.mubr.f32.mxu0 0.0
        %2632 = vmatmul.mubr.f32.gmra.mrb[0].mxu0 %v2415
        %v2633 = vpop.f32.mrb[0].mxu0
        %v2634 = vadd.f32 0.0, %v2633
        %v2635 = vpop.f32.mrb[0].mxu0
        %2636 = vmatprep.mubr.f32.mxu0 0.0
        %2637 = vmatmul.mubr.f32.gmra.mrb[0].mxu0 %v2418
        %v2638 = vpop.f32.mrb[0].mxu0
        %v2639 = vadd.f32 0.0, %v2638
        %v2640 = vpop.f32.mrb[0].mxu0
        %2641 = vmatprep.mubr.f32.mxu0 0.0
        %2642 = vmatmul.mubr.f32.gmra.mrb[0].mxu0 %v2421
        %v2643 = vpop.f32.mrb[0].mxu0
        %v2644 = vadd.f32 0.0, %v2643
        %v2645 = vpop.f32.mrb[0].mxu0
        %2646 = vmatprep.mubr.f32.mxu0 0.0
        %2647 = vmatmul.mubr.f32.gmra.mrb[0].mxu0 %v2424
        %v2648 = vpop.f32.mrb[0].mxu0
        %v2649 = vadd.f32 0.0, %v2648
        %v2650 = vpop.f32.mrb[0].mxu0
        %2651 = vmatprep.mubr.f32.mxu0 0.0
        %2652 = vmatmul.mubr.f32.gmra.mrb[0].mxu0 %v2427
        %v2653 = vpop.f32.mrb[0].mxu0
        %v2654 = vadd.f32 0.0, %v2653
        %v2655 = vpop.f32.mrb[0].mxu0
        %2656 = vdwg.mxu0
        %v2657 = vadd.f32 %v2267, %v2499
        %v2658 = vadd.f32 %v2268, %v2504
        %v2659 = vadd.f32 %v2269, %v2509
        %v2660 = vadd.f32 %v2270, %v2514
        %v2661 = vadd.f32 %v2271, %v2519
        %v2662 = vadd.f32 %v2272, %v2524
        %v2663 = vadd.f32 %v2273, %v2529
        %v2664 = vadd.f32 %v2274, %v2534
        %v2665 = vadd.f32 %v2275, %v2539
        %v2666 = vadd.f32 %v2276, %v2544
        %v2667 = vadd.f32 %v2277, %v2549
        %v2668 = vadd.f32 %v2278, %v2554
        %v2669 = vadd.f32 %v2279, %v2559
        %v2670 = vadd.f32 %v2280, %v2564
        %v2671 = vadd.f32 %v2281, %v2569
        %v2672 = vadd.f32 %v2282, %v2574
        %v2673 = vadd.f32 %v2283, %v2579
        %v2674 = vadd.f32 %v2284, %v2584
        %v2675 = vadd.f32 %v2285, %v2589
        %v2676 = vadd.f32 %v2286, %v2594
        %v2677 = vadd.f32 %v2287, %v2599
        %v2678 = vadd.f32 %v2288, %v2604
        %v2679 = vadd.f32 %v2289, %v2609
        %v2680 = vadd.f32 %v2290, %v2614
        %v2681 = vadd.f32 %v2291, %v2619
        %v2682 = vadd.f32 %v2292, %v2624
        %v2683 = vadd.f32 %v2293, %v2629
        %v2684 = vadd.f32 %v2294, %v2634
        %v2685 = vadd.f32 %v2295, %v2639
        %v2686 = vadd.f32 %v2296, %v2644
        %v2687 = vadd.f32 %v2297, %v2649
        %v2688 = vadd.f32 %v2298, %v2654
        %s2689 = scalar_lea.vmem %s410, 48
        %v2690 = vld [vmem:[%s2689] sm:$0xff]
        %v2691 = vld [vmem:[%s2689 + $0x8] sm:$0xff]
        %v2692 = vld [vmem:[%s2689 + $0x18] sm:$0xff]
        %v2693 = vld [vmem:[%s2689 + $0x20] sm:$0xff]
        %v2694 = vld [vmem:[%s2689 + $0x30] sm:$0xff]
        %v2695 = vld [vmem:[%s2689 + $0x38] sm:$0xff]
        %v2696 = vld [vmem:[%s2689 + $0x48] sm:$0xff]
        %v2697 = vld [vmem:[%s2689 + $0x50] sm:$0xff]
        %v2698 = vld [vmem:[%s2689 + $0x60] sm:$0xff]
        %v2699 = vld [vmem:[%s2689 + $0x68] sm:$0xff]
        %v2700 = vld [vmem:[%s2689 + $0x78] sm:$0xff]
        %v2701 = vld [vmem:[%s2689 + $0x80] sm:$0xff]
        %v2702 = vld [vmem:[%s2689 + $0x90] sm:$0xff]
        %v2703 = vld [vmem:[%s2689 + $0x98] sm:$0xff]
        %v2704 = vld [vmem:[%s2689 + $0xa8] sm:$0xff]
        %v2705 = vld [vmem:[%s2689 + $0xb0] sm:$0xff]
        %v2706 = vld [vmem:[%s2689 + $0xc0] sm:$0xff]
        %v2707 = vld [vmem:[%s2689 + $0xc8] sm:$0xff]
        %v2708 = vld [vmem:[%s2689 + $0xd8] sm:$0xff]
        %v2709 = vld [vmem:[%s2689 + $0xe0] sm:$0xff]
        %v2710 = vld [vmem:[%s2689 + $0xf0] sm:$0xff]
        %v2711 = vld [vmem:[%s2689 + $0xf8] sm:$0xff]
        %v2712 = vld [vmem:[%s2689 + $0x108] sm:$0xff]
        %v2713 = vld [vmem:[%s2689 + $0x110] sm:$0xff]
        %v2714 = vld [vmem:[%s2689 + $0x120] sm:$0xff]
        %v2715 = vld [vmem:[%s2689 + $0x128] sm:$0xff]
        %v2716 = vld [vmem:[%s2689 + $0x138] sm:$0xff]
        %v2717 = vld [vmem:[%s2689 + $0x140] sm:$0xff]
        %v2718 = vld [vmem:[%s2689 + $0x150] sm:$0xff]
        %v2719 = vld [vmem:[%s2689 + $0x158] sm:$0xff]
        %v2720 = vld [vmem:[%s2689 + $0x168] sm:$0xff]
        %v2721 = vld [vmem:[%s2689 + $0x170] sm:$0xff]
        %s2722 = scalar_lea.vmem %s1, 24
        %v2723 = vld [vmem:[%s2722] sm:$0xf]
        %v2725 = vsel %vm478, %v2690, 0
        %v2728 = vsel %vm478, %v2691, 0
        %v2731 = vsel %vm478, %v2692, 0
        %v2734 = vsel %vm478, %v2693, 0
        %v2737 = vsel %vm478, %v2694, 0
        %v2740 = vsel %vm478, %v2695, 0
        %v2743 = vsel %vm478, %v2696, 0
        %v2746 = vsel %vm478, %v2697, 0
        %v2749 = vsel %vm478, %v2698, 0
        %v2752 = vsel %vm478, %v2699, 0
        %v2755 = vsel %vm478, %v2700, 0
        %v2758 = vsel %vm478, %v2701, 0
        %v2761 = vsel %vm478, %v2702, 0
        %v2764 = vsel %vm478, %v2703, 0
        %v2767 = vsel %vm478, %v2704, 0
        %v2770 = vsel %vm478, %v2705, 0
        %v2773 = vsel %vm478, %v2706, 0
        %v2776 = vsel %vm478, %v2707, 0
        %v2779 = vsel %vm478, %v2708, 0
        %v2782 = vsel %vm478, %v2709, 0
        %v2785 = vsel %vm478, %v2710, 0
        %v2788 = vsel %vm478, %v2711, 0
        %v2791 = vsel %vm478, %v2712, 0
        %v2794 = vsel %vm478, %v2713, 0
        %v2797 = vsel %vm478, %v2714, 0
        %v2800 = vsel %vm478, %v2715, 0
        %v2803 = vsel %vm478, %v2716, 0
        %v2806 = vsel %vm478, %v2717, 0
        %v2809 = vsel %vm478, %v2718, 0
        %v2812 = vsel %vm478, %v2719, 0
        %v2815 = vsel %vm478, %v2720, 0
        %v2818 = vsel %vm478, %v2721, 0
        %v2821 = vsel %vm575, %v2723, 0
        %2823 = vmatprep.subr.mxu0 0.0
        %2824 = vmatpush1.msra.mxu0 %v2821
        %2825 = vmatprep.subr.mxu0 0.0
        %2826 = vmatpush1.msra.mxu0 0.0
        %2827 = vmatprep.subr.mxu0 0.0
        %2828 = vmatpush1.msra.mxu0 0.0
        %2829 = vmatprep.subr.mxu0 0.0
        %2830 = vmatpush1.msra.mxu0 0.0
        %2831 = vmatprep.subr.mxu0 0.0
        %2832 = vmatpush1.msra.mxu0 0.0
        %2833 = vmatprep.subr.mxu0 0.0
        %2834 = vmatpush1.msra.mxu0 0.0
        %2835 = vmatprep.subr.mxu0 0.0
        %2836 = vmatpush1.msra.mxu0 0.0
        %2837 = vmatprep.subr.mxu0 0.0
        %2838 = vmatpush1.msra.mxu0 0.0
        %2839 = vmatprep.subr.mxu0 0.0
        %2840 = vmatpush1.msra.mxu0 0.0
        %2841 = vmatprep.subr.mxu0 0.0
        %2842 = vmatpush1.msra.mxu0 0.0
        %2843 = vmatprep.subr.mxu0 0.0
        %2844 = vmatpush1.msra.mxu0 0.0
        %2845 = vmatprep.subr.mxu0 0.0
        %2846 = vmatpush1.msra.mxu0 0.0
        %2847 = vmatprep.subr.mxu0 0.0
        %2848 = vmatpush1.msra.mxu0 0.0
        %2849 = vmatprep.subr.mxu0 0.0
        %2850 = vmatpush1.msra.mxu0 0.0
        %2851 = vmatprep.subr.mxu0 0.0
        %2852 = vmatpush1.msra.mxu0 0.0
        %2853 = vmatprep.subr.mxu0 0.0
        %2854 = vmatpush1.msra.mxu0 0.0
        %2855 = vmatprep.subr.mxu0 0.0
        %2856 = vmatpush1.msra.mxu0 0.0
        %2857 = vmatprep.subr.mxu0 0.0
        %2858 = vmatpush1.msra.mxu0 0.0
        %2859 = vmatprep.subr.mxu0 0.0
        %2860 = vmatpush1.msra.mxu0 0.0
        %2861 = vmatprep.subr.mxu0 0.0
        %2862 = vmatpush1.msra.mxu0 0.0
        %2863 = vmatprep.subr.mxu0 0.0
        %2864 = vmatpush1.msra.mxu0 0.0
        %2865 = vmatprep.subr.mxu0 0.0
        %2866 = vmatpush1.msra.mxu0 0.0
        %2867 = vmatprep.subr.mxu0 0.0
        %2868 = vmatpush1.msra.mxu0 0.0
        %2869 = vmatprep.subr.mxu0 0.0
        %2870 = vmatpush1.msra.mxu0 0.0
        %2871 = vmatprep.subr.mxu0 0.0
        %2872 = vmatpush1.msra.mxu0 0.0
        %2873 = vmatprep.subr.mxu0 0.0
        %2874 = vmatpush1.msra.mxu0 0.0
        %2875 = vmatprep.subr.mxu0 0.0
        %2876 = vmatpush1.msra.mxu0 0.0
        %2877 = vmatprep.subr.mxu0 0.0
        %2878 = vmatpush1.msra.mxu0 0.0
        %2879 = vmatprep.subr.mxu0 0.0
        %2880 = vmatpush1.msra.mxu0 0.0
        %2881 = vmatprep.subr.mxu0 0.0
        %2882 = vmatpush1.msra.mxu0 0.0
        %2883 = vmatprep.subr.mxu0 0.0
        %2884 = vmatpush1.msra.mxu0 0.0
        %2885 = vmatprep.subr.mxu0 0.0
        %2886 = vmatpush1.msra.mxu0 0.0
        %2887 = vmatprep.mubr.f32.mxu0 0.0
        %2888 = vmatmul.mubr.f32.gmra.mrb[0].mxu0 %v2725
        %v2889 = vpop.f32.mrb[0].mxu0
        %v2890 = vadd.f32 0.0, %v2889
        %v2891 = vpop.f32.mrb[0].mxu0
        %2892 = vmatprep.mubr.f32.mxu0 0.0
        %2893 = vmatmul.mubr.f32.gmra.mrb[0].mxu0 %v2728
        %v2894 = vpop.f32.mrb[0].mxu0
        %v2895 = vadd.f32 0.0, %v2894
        %v2896 = vpop.f32.mrb[0].mxu0
        %2897 = vmatprep.mubr.f32.mxu0 0.0
        %2898 = vmatmul.mubr.f32.gmra.mrb[0].mxu0 %v2731
        %v2899 = vpop.f32.mrb[0].mxu0
        %v2900 = vadd.f32 0.0, %v2899
        %v2901 = vpop.f32.mrb[0].mxu0
        %2902 = vmatprep.mubr.f32.mxu0 0.0
        %2903 = vmatmul.mubr.f32.gmra.mrb[0].mxu0 %v2734
        %v2904 = vpop.f32.mrb[0].mxu0
        %v2905 = vadd.f32 0.0, %v2904
        %v2906 = vpop.f32.mrb[0].mxu0
        %2907 = vmatprep.mubr.f32.mxu0 0.0
        %2908 = vmatmul.mubr.f32.gmra.mrb[0].mxu0 %v2737
        %v2909 = vpop.f32.mrb[0].mxu0
        %v2910 = vadd.f32 0.0, %v2909
        %v2911 = vpop.f32.mrb[0].mxu0
        %2912 = vmatprep.mubr.f32.mxu0 0.0
        %2913 = vmatmul.mubr.f32.gmra.mrb[0].mxu0 %v2740
        %v2914 = vpop.f32.mrb[0].mxu0
        %v2915 = vadd.f32 0.0, %v2914
        %v2916 = vpop.f32.mrb[0].mxu0
        %2917 = vmatprep.mubr.f32.mxu0 0.0
        %2918 = vmatmul.mubr.f32.gmra.mrb[0].mxu0 %v2743
        %v2919 = vpop.f32.mrb[0].mxu0
        %v2920 = vadd.f32 0.0, %v2919
        %v2921 = vpop.f32.mrb[0].mxu0
        %2922 = vmatprep.mubr.f32.mxu0 0.0
        %2923 = vmatmul.mubr.f32.gmra.mrb[0].mxu0 %v2746
        %v2924 = vpop.f32.mrb[0].mxu0
        %v2925 = vadd.f32 0.0, %v2924
        %v2926 = vpop.f32.mrb[0].mxu0
        %2927 = vmatprep.mubr.f32.mxu0 0.0
        %2928 = vmatmul.mubr.f32.gmra.mrb[0].mxu0 %v2749
        %v2929 = vpop.f32.mrb[0].mxu0
        %v2930 = vadd.f32 0.0, %v2929
        %v2931 = vpop.f32.mrb[0].mxu0
        %2932 = vmatprep.mubr.f32.mxu0 0.0
        %2933 = vmatmul.mubr.f32.gmra.mrb[0].mxu0 %v2752
        %v2934 = vpop.f32.mrb[0].mxu0
        %v2935 = vadd.f32 0.0, %v2934
        %v2936 = vpop.f32.mrb[0].mxu0
        %2937 = vmatprep.mubr.f32.mxu0 0.0
        %2938 = vmatmul.mubr.f32.gmra.mrb[0].mxu0 %v2755
        %v2939 = vpop.f32.mrb[0].mxu0
        %v2940 = vadd.f32 0.0, %v2939
        %v2941 = vpop.f32.mrb[0].mxu0
        %2942 = vmatprep.mubr.f32.mxu0 0.0
        %2943 = vmatmul.mubr.f32.gmra.mrb[0].mxu0 %v2758
        %v2944 = vpop.f32.mrb[0].mxu0
        %v2945 = vadd.f32 0.0, %v2944
        %v2946 = vpop.f32.mrb[0].mxu0
        %2947 = vmatprep.mubr.f32.mxu0 0.0
        %2948 = vmatmul.mubr.f32.gmra.mrb[0].mxu0 %v2761
        %v2949 = vpop.f32.mrb[0].mxu0
        %v2950 = vadd.f32 0.0, %v2949
        %v2951 = vpop.f32.mrb[0].mxu0
        %2952 = vmatprep.mubr.f32.mxu0 0.0
        %2953 = vmatmul.mubr.f32.gmra.mrb[0].mxu0 %v2764
        %v2954 = vpop.f32.mrb[0].mxu0
        %v2955 = vadd.f32 0.0, %v2954
        %v2956 = vpop.f32.mrb[0].mxu0
        %2957 = vmatprep.mubr.f32.mxu0 0.0
        %2958 = vmatmul.mubr.f32.gmra.mrb[0].mxu0 %v2767
        %v2959 = vpop.f32.mrb[0].mxu0
        %v2960 = vadd.f32 0.0, %v2959
        %v2961 = vpop.f32.mrb[0].mxu0
        %2962 = vmatprep.mubr.f32.mxu0 0.0
        %2963 = vmatmul.mubr.f32.gmra.mrb[0].mxu0 %v2770
        %v2964 = vpop.f32.mrb[0].mxu0
        %v2965 = vadd.f32 0.0, %v2964
        %v2966 = vpop.f32.mrb[0].mxu0
        %2967 = vmatprep.mubr.f32.mxu0 0.0
        %2968 = vmatmul.mubr.f32.gmra.mrb[0].mxu0 %v2773
        %v2969 = vpop.f32.mrb[0].mxu0
        %v2970 = vadd.f32 0.0, %v2969
        %v2971 = vpop.f32.mrb[0].mxu0
        %2972 = vmatprep.mubr.f32.mxu0 0.0
        %2973 = vmatmul.mubr.f32.gmra.mrb[0].mxu0 %v2776
        %v2974 = vpop.f32.mrb[0].mxu0
        %v2975 = vadd.f32 0.0, %v2974
        %v2976 = vpop.f32.mrb[0].mxu0
        %2977 = vmatprep.mubr.f32.mxu0 0.0
        %2978 = vmatmul.mubr.f32.gmra.mrb[0].mxu0 %v2779
        %v2979 = vpop.f32.mrb[0].mxu0
        %v2980 = vadd.f32 0.0, %v2979
        %v2981 = vpop.f32.mrb[0].mxu0
        %2982 = vmatprep.mubr.f32.mxu0 0.0
        %2983 = vmatmul.mubr.f32.gmra.mrb[0].mxu0 %v2782
        %v2984 = vpop.f32.mrb[0].mxu0
        %v2985 = vadd.f32 0.0, %v2984
        %v2986 = vpop.f32.mrb[0].mxu0
        %2987 = vmatprep.mubr.f32.mxu0 0.0
        %2988 = vmatmul.mubr.f32.gmra.mrb[0].mxu0 %v2785
        %v2989 = vpop.f32.mrb[0].mxu0
        %v2990 = vadd.f32 0.0, %v2989
        %v2991 = vpop.f32.mrb[0].mxu0
        %2992 = vmatprep.mubr.f32.mxu0 0.0
        %2993 = vmatmul.mubr.f32.gmra.mrb[0].mxu0 %v2788
        %v2994 = vpop.f32.mrb[0].mxu0
        %v2995 = vadd.f32 0.0, %v2994
        %v2996 = vpop.f32.mrb[0].mxu0
        %2997 = vmatprep.mubr.f32.mxu0 0.0
        %2998 = vmatmul.mubr.f32.gmra.mrb[0].mxu0 %v2791
        %v2999 = vpop.f32.mrb[0].mxu0
        %v3000 = vadd.f32 0.0, %v2999
        %v3001 = vpop.f32.mrb[0].mxu0
        %3002 = vmatprep.mubr.f32.mxu0 0.0
        %3003 = vmatmul.mubr.f32.gmra.mrb[0].mxu0 %v2794
        %v3004 = vpop.f32.mrb[0].mxu0
        %v3005 = vadd.f32 0.0, %v3004
        %v3006 = vpop.f32.mrb[0].mxu0
        %3007 = vmatprep.mubr.f32.mxu0 0.0
        %3008 = vmatmul.mubr.f32.gmra.mrb[0].mxu0 %v2797
        %v3009 = vpop.f32.mrb[0].mxu0
        %v3010 = vadd.f32 0.0, %v3009
        %v3011 = vpop.f32.mrb[0].mxu0
        %3012 = vmatprep.mubr.f32.mxu0 0.0
        %3013 = vmatmul.mubr.f32.gmra.mrb[0].mxu0 %v2800
        %v3014 = vpop.f32.mrb[0].mxu0
        %v3015 = vadd.f32 0.0, %v3014
        %v3016 = vpop.f32.mrb[0].mxu0
        %3017 = vmatprep.mubr.f32.mxu0 0.0
        %3018 = vmatmul.mubr.f32.gmra.mrb[0].mxu0 %v2803
        %v3019 = vpop.f32.mrb[0].mxu0
        %v3020 = vadd.f32 0.0, %v3019
        %v3021 = vpop.f32.mrb[0].mxu0
        %3022 = vmatprep.mubr.f32.mxu0 0.0
        %3023 = vmatmul.mubr.f32.gmra.mrb[0].mxu0 %v2806
        %v3024 = vpop.f32.mrb[0].mxu0
        %v3025 = vadd.f32 0.0, %v3024
        %v3026 = vpop.f32.mrb[0].mxu0
        %3027 = vmatprep.mubr.f32.mxu0 0.0
        %3028 = vmatmul.mubr.f32.gmra.mrb[0].mxu0 %v2809
        %v3029 = vpop.f32.mrb[0].mxu0
        %v3030 = vadd.f32 0.0, %v3029
        %v3031 = vpop.f32.mrb[0].mxu0
        %3032 = vmatprep.mubr.f32.mxu0 0.0
        %3033 = vmatmul.mubr.f32.gmra.mrb[0].mxu0 %v2812
        %v3034 = vpop.f32.mrb[0].mxu0
        %v3035 = vadd.f32 0.0, %v3034
        %v3036 = vpop.f32.mrb[0].mxu0
        %3037 = vmatprep.mubr.f32.mxu0 0.0
        %3038 = vmatmul.mubr.f32.gmra.mrb[0].mxu0 %v2815
        %v3039 = vpop.f32.mrb[0].mxu0
        %v3040 = vadd.f32 0.0, %v3039
        %v3041 = vpop.f32.mrb[0].mxu0
        %3042 = vmatprep.mubr.f32.mxu0 0.0
        %3043 = vmatmul.mubr.f32.gmra.mrb[0].mxu0 %v2818
        %v3044 = vpop.f32.mrb[0].mxu0
        %v3045 = vadd.f32 0.0, %v3044
        %v3046 = vpop.f32.mrb[0].mxu0
        %3047 = vdwg.mxu0
        %v3048 = vadd.f32 %v2657, %v2890
        %v3049 = vadd.f32 %v2658, %v2895
        %v3050 = vadd.f32 %v2659, %v2900
        %v3051 = vadd.f32 %v2660, %v2905
        %v3052 = vadd.f32 %v2661, %v2910
        %v3053 = vadd.f32 %v2662, %v2915
        %v3054 = vadd.f32 %v2663, %v2920
        %v3055 = vadd.f32 %v2664, %v2925
        %v3056 = vadd.f32 %v2665, %v2930
        %v3057 = vadd.f32 %v2666, %v2935
        %v3058 = vadd.f32 %v2667, %v2940
        %v3059 = vadd.f32 %v2668, %v2945
        %v3060 = vadd.f32 %v2669, %v2950
        %v3061 = vadd.f32 %v2670, %v2955
        %v3062 = vadd.f32 %v2671, %v2960
        %v3063 = vadd.f32 %v2672, %v2965
        %v3064 = vadd.f32 %v2673, %v2970
        %v3065 = vadd.f32 %v2674, %v2975
        %v3066 = vadd.f32 %v2675, %v2980
        %v3067 = vadd.f32 %v2676, %v2985
        %v3068 = vadd.f32 %v2677, %v2990
        %v3069 = vadd.f32 %v2678, %v2995
        %v3070 = vadd.f32 %v2679, %v3000
        %v3071 = vadd.f32 %v2680, %v3005
        %v3072 = vadd.f32 %v2681, %v3010
        %v3073 = vadd.f32 %v2682, %v3015
        %v3074 = vadd.f32 %v2683, %v3020
        %v3075 = vadd.f32 %v2684, %v3025
        %v3076 = vadd.f32 %v2685, %v3030
        %v3077 = vadd.f32 %v2686, %v3035
        %v3078 = vadd.f32 %v2687, %v3040
        %v3079 = vadd.f32 %v2688, %v3045
        %v3080 = vld [vmem:[%s2689 + $0x1] sm:$0xff]
        %v3081 = vld [vmem:[%s2689 + $0x9] sm:$0xff]
        %v3082 = vld [vmem:[%s2689 + $0x19] sm:$0xff]
        %v3083 = vld [vmem:[%s2689 + $0x21] sm:$0xff]
        %v3084 = vld [vmem:[%s2689 + $0x31] sm:$0xff]
        %v3085 = vld [vmem:[%s2689 + $0x39] sm:$0xff]
        %v3086 = vld [vmem:[%s2689 + $0x49] sm:$0xff]
        %v3087 = vld [vmem:[%s2689 + $0x51] sm:$0xff]
        %v3088 = vld [vmem:[%s2689 + $0x61] sm:$0xff]
        %v3089 = vld [vmem:[%s2689 + $0x69] sm:$0xff]
        %v3090 = vld [vmem:[%s2689 + $0x79] sm:$0xff]
        %v3091 = vld [vmem:[%s2689 + $0x81] sm:$0xff]
        %v3092 = vld [vmem:[%s2689 + $0x91] sm:$0xff]
        %v3093 = vld [vmem:[%s2689 + $0x99] sm:$0xff]
        %v3094 = vld [vmem:[%s2689 + $0xa9] sm:$0xff]
        %v3095 = vld [vmem:[%s2689 + $0xb1] sm:$0xff]
        %v3096 = vld [vmem:[%s2689 + $0xc1] sm:$0xff]
        %v3097 = vld [vmem:[%s2689 + $0xc9] sm:$0xff]
        %v3098 = vld [vmem:[%s2689 + $0xd9] sm:$0xff]
        %v3099 = vld [vmem:[%s2689 + $0xe1] sm:$0xff]
        %v3100 = vld [vmem:[%s2689 + $0xf1] sm:$0xff]
        %v3101 = vld [vmem:[%s2689 + $0xf9] sm:$0xff]
        %v3102 = vld [vmem:[%s2689 + $0x109] sm:$0xff]
        %v3103 = vld [vmem:[%s2689 + $0x111] sm:$0xff]
        %v3104 = vld [vmem:[%s2689 + $0x121] sm:$0xff]
        %v3105 = vld [vmem:[%s2689 + $0x129] sm:$0xff]
        %v3106 = vld [vmem:[%s2689 + $0x139] sm:$0xff]
        %v3107 = vld [vmem:[%s2689 + $0x141] sm:$0xff]
        %v3108 = vld [vmem:[%s2689 + $0x151] sm:$0xff]
        %v3109 = vld [vmem:[%s2689 + $0x159] sm:$0xff]
        %v3110 = vld [vmem:[%s2689 + $0x169] sm:$0xff]
        %v3111 = vld [vmem:[%s2689 + $0x171] sm:$0xff]
        %s3112 = scalar_lea.vmem %s1, 28
        %v3113 = vld [vmem:[%s3112] sm:$0xf]
        %v3115 = vsel %vm478, %v3080, 0
        %v3118 = vsel %vm478, %v3081, 0
        %v3121 = vsel %vm478, %v3082, 0
        %v3124 = vsel %vm478, %v3083, 0
        %v3127 = vsel %vm478, %v3084, 0
        %v3130 = vsel %vm478, %v3085, 0
        %v3133 = vsel %vm478, %v3086, 0
        %v3136 = vsel %vm478, %v3087, 0
        %v3139 = vsel %vm478, %v3088, 0
        %v3142 = vsel %vm478, %v3089, 0
        %v3145 = vsel %vm478, %v3090, 0
        %v3148 = vsel %vm478, %v3091, 0
        %v3151 = vsel %vm478, %v3092, 0
        %v3154 = vsel %vm478, %v3093, 0
        %v3157 = vsel %vm478, %v3094, 0
        %v3160 = vsel %vm478, %v3095, 0
        %v3163 = vsel %vm478, %v3096, 0
        %v3166 = vsel %vm478, %v3097, 0
        %v3169 = vsel %vm478, %v3098, 0
        %v3172 = vsel %vm478, %v3099, 0
        %v3175 = vsel %vm478, %v3100, 0
        %v3178 = vsel %vm478, %v3101, 0
        %v3181 = vsel %vm478, %v3102, 0
        %v3184 = vsel %vm478, %v3103, 0
        %v3187 = vsel %vm478, %v3104, 0
        %v3190 = vsel %vm478, %v3105, 0
        %v3193 = vsel %vm478, %v3106, 0
        %v3196 = vsel %vm478, %v3107, 0
        %v3199 = vsel %vm478, %v3108, 0
        %v3202 = vsel %vm478, %v3109, 0
        %v3205 = vsel %vm478, %v3110, 0
        %v3208 = vsel %vm478, %v3111, 0
        %v3211 = vsel %vm575, %v3113, 0
        %3213 = vmatprep.subr.mxu0 0.0
        %3214 = vmatpush1.msra.mxu0 %v3211
        %3215 = vmatprep.subr.mxu0 0.0
        %3216 = vmatpush1.msra.mxu0 0.0
        %3217 = vmatprep.subr.mxu0 0.0
        %3218 = vmatpush1.msra.mxu0 0.0
        %3219 = vmatprep.subr.mxu0 0.0
        %3220 = vmatpush1.msra.mxu0 0.0
        %3221 = vmatprep.subr.mxu0 0.0
        %3222 = vmatpush1.msra.mxu0 0.0
        %3223 = vmatprep.subr.mxu0 0.0
        %3224 = vmatpush1.msra.mxu0 0.0
        %3225 = vmatprep.subr.mxu0 0.0
        %3226 = vmatpush1.msra.mxu0 0.0
        %3227 = vmatprep.subr.mxu0 0.0
        %3228 = vmatpush1.msra.mxu0 0.0
        %3229 = vmatprep.subr.mxu0 0.0
        %3230 = vmatpush1.msra.mxu0 0.0
        %3231 = vmatprep.subr.mxu0 0.0
        %3232 = vmatpush1.msra.mxu0 0.0
        %3233 = vmatprep.subr.mxu0 0.0
        %3234 = vmatpush1.msra.mxu0 0.0
        %3235 = vmatprep.subr.mxu0 0.0
        %3236 = vmatpush1.msra.mxu0 0.0
        %3237 = vmatprep.subr.mxu0 0.0
        %3238 = vmatpush1.msra.mxu0 0.0
        %3239 = vmatprep.subr.mxu0 0.0
        %3240 = vmatpush1.msra.mxu0 0.0
        %3241 = vmatprep.subr.mxu0 0.0
        %3242 = vmatpush1.msra.mxu0 0.0
        %3243 = vmatprep.subr.mxu0 0.0
        %3244 = vmatpush1.msra.mxu0 0.0
        %3245 = vmatprep.subr.mxu0 0.0
        %3246 = vmatpush1.msra.mxu0 0.0
        %3247 = vmatprep.subr.mxu0 0.0
        %3248 = vmatpush1.msra.mxu0 0.0
        %3249 = vmatprep.subr.mxu0 0.0
        %3250 = vmatpush1.msra.mxu0 0.0
        %3251 = vmatprep.subr.mxu0 0.0
        %3252 = vmatpush1.msra.mxu0 0.0
        %3253 = vmatprep.subr.mxu0 0.0
        %3254 = vmatpush1.msra.mxu0 0.0
        %3255 = vmatprep.subr.mxu0 0.0
        %3256 = vmatpush1.msra.mxu0 0.0
        %3257 = vmatprep.subr.mxu0 0.0
        %3258 = vmatpush1.msra.mxu0 0.0
        %3259 = vmatprep.subr.mxu0 0.0
        %3260 = vmatpush1.msra.mxu0 0.0
        %3261 = vmatprep.subr.mxu0 0.0
        %3262 = vmatpush1.msra.mxu0 0.0
        %3263 = vmatprep.subr.mxu0 0.0
        %3264 = vmatpush1.msra.mxu0 0.0
        %3265 = vmatprep.subr.mxu0 0.0
        %3266 = vmatpush1.msra.mxu0 0.0
        %3267 = vmatprep.subr.mxu0 0.0
        %3268 = vmatpush1.msra.mxu0 0.0
        %3269 = vmatprep.subr.mxu0 0.0
        %3270 = vmatpush1.msra.mxu0 0.0
        %3271 = vmatprep.subr.mxu0 0.0
        %3272 = vmatpush1.msra.mxu0 0.0
        %3273 = vmatprep.subr.mxu0 0.0
        %3274 = vmatpush1.msra.mxu0 0.0
        %3275 = vmatprep.subr.mxu0 0.0
        %3276 = vmatpush1.msra.mxu0 0.0
        %3277 = vmatprep.mubr.f32.mxu0 0.0
        %3278 = vmatmul.mubr.f32.gmra.mrb[0].mxu0 %v3115
        %v3279 = vpop.f32.mrb[0].mxu0
        %v3280 = vadd.f32 0.0, %v3279
        %v3281 = vpop.f32.mrb[0].mxu0
        %3282 = vmatprep.mubr.f32.mxu0 0.0
        %3283 = vmatmul.mubr.f32.gmra.mrb[0].mxu0 %v3118
        %v3284 = vpop.f32.mrb[0].mxu0
        %v3285 = vadd.f32 0.0, %v3284
        %v3286 = vpop.f32.mrb[0].mxu0
        %3287 = vmatprep.mubr.f32.mxu0 0.0
        %3288 = vmatmul.mubr.f32.gmra.mrb[0].mxu0 %v3121
        %v3289 = vpop.f32.mrb[0].mxu0
        %v3290 = vadd.f32 0.0, %v3289
        %v3291 = vpop.f32.mrb[0].mxu0
        %3292 = vmatprep.mubr.f32.mxu0 0.0
        %3293 = vmatmul.mubr.f32.gmra.mrb[0].mxu0 %v3124
        %v3294 = vpop.f32.mrb[0].mxu0
        %v3295 = vadd.f32 0.0, %v3294
        %v3296 = vpop.f32.mrb[0].mxu0
        %3297 = vmatprep.mubr.f32.mxu0 0.0
        %3298 = vmatmul.mubr.f32.gmra.mrb[0].mxu0 %v3127
        %v3299 = vpop.f32.mrb[0].mxu0
        %v3300 = vadd.f32 0.0, %v3299
        %v3301 = vpop.f32.mrb[0].mxu0
        %3302 = vmatprep.mubr.f32.mxu0 0.0
        %3303 = vmatmul.mubr.f32.gmra.mrb[0].mxu0 %v3130
        %v3304 = vpop.f32.mrb[0].mxu0
        %v3305 = vadd.f32 0.0, %v3304
        %v3306 = vpop.f32.mrb[0].mxu0
        %3307 = vmatprep.mubr.f32.mxu0 0.0
        %3308 = vmatmul.mubr.f32.gmra.mrb[0].mxu0 %v3133
        %v3309 = vpop.f32.mrb[0].mxu0
        %v3310 = vadd.f32 0.0, %v3309
        %v3311 = vpop.f32.mrb[0].mxu0
        %3312 = vmatprep.mubr.f32.mxu0 0.0
        %3313 = vmatmul.mubr.f32.gmra.mrb[0].mxu0 %v3136
        %v3314 = vpop.f32.mrb[0].mxu0
        %v3315 = vadd.f32 0.0, %v3314
        %v3316 = vpop.f32.mrb[0].mxu0
        %3317 = vmatprep.mubr.f32.mxu0 0.0
        %3318 = vmatmul.mubr.f32.gmra.mrb[0].mxu0 %v3139
        %v3319 = vpop.f32.mrb[0].mxu0
        %v3320 = vadd.f32 0.0, %v3319
        %v3321 = vpop.f32.mrb[0].mxu0
        %3322 = vmatprep.mubr.f32.mxu0 0.0
        %3323 = vmatmul.mubr.f32.gmra.mrb[0].mxu0 %v3142
        %v3324 = vpop.f32.mrb[0].mxu0
        %v3325 = vadd.f32 0.0, %v3324
        %v3326 = vpop.f32.mrb[0].mxu0
        %3327 = vmatprep.mubr.f32.mxu0 0.0
        %3328 = vmatmul.mubr.f32.gmra.mrb[0].mxu0 %v3145
        %v3329 = vpop.f32.mrb[0].mxu0
        %v3330 = vadd.f32 0.0, %v3329
        %v3331 = vpop.f32.mrb[0].mxu0
        %3332 = vmatprep.mubr.f32.mxu0 0.0
        %3333 = vmatmul.mubr.f32.gmra.mrb[0].mxu0 %v3148
        %v3334 = vpop.f32.mrb[0].mxu0
        %v3335 = vadd.f32 0.0, %v3334
        %v3336 = vpop.f32.mrb[0].mxu0
        %3337 = vmatprep.mubr.f32.mxu0 0.0
        %3338 = vmatmul.mubr.f32.gmra.mrb[0].mxu0 %v3151
        %v3339 = vpop.f32.mrb[0].mxu0
        %v3340 = vadd.f32 0.0, %v3339
        %v3341 = vpop.f32.mrb[0].mxu0
        %3342 = vmatprep.mubr.f32.mxu0 0.0
        %3343 = vmatmul.mubr.f32.gmra.mrb[0].mxu0 %v3154
        %v3344 = vpop.f32.mrb[0].mxu0
        %v3345 = vadd.f32 0.0, %v3344
        %v3346 = vpop.f32.mrb[0].mxu0
        %3347 = vmatprep.mubr.f32.mxu0 0.0
        %3348 = vmatmul.mubr.f32.gmra.mrb[0].mxu0 %v3157
        %v3349 = vpop.f32.mrb[0].mxu0
        %v3350 = vadd.f32 0.0, %v3349
        %v3351 = vpop.f32.mrb[0].mxu0
        %3352 = vmatprep.mubr.f32.mxu0 0.0
        %3353 = vmatmul.mubr.f32.gmra.mrb[0].mxu0 %v3160
        %v3354 = vpop.f32.mrb[0].mxu0
        %v3355 = vadd.f32 0.0, %v3354
        %v3356 = vpop.f32.mrb[0].mxu0
        %3357 = vmatprep.mubr.f32.mxu0 0.0
        %3358 = vmatmul.mubr.f32.gmra.mrb[0].mxu0 %v3163
        %v3359 = vpop.f32.mrb[0].mxu0
        %v3360 = vadd.f32 0.0, %v3359
        %v3361 = vpop.f32.mrb[0].mxu0
        %3362 = vmatprep.mubr.f32.mxu0 0.0
        %3363 = vmatmul.mubr.f32.gmra.mrb[0].mxu0 %v3166
        %v3364 = vpop.f32.mrb[0].mxu0
        %v3365 = vadd.f32 0.0, %v3364
        %v3366 = vpop.f32.mrb[0].mxu0
        %3367 = vmatprep.mubr.f32.mxu0 0.0
        %3368 = vmatmul.mubr.f32.gmra.mrb[0].mxu0 %v3169
        %v3369 = vpop.f32.mrb[0].mxu0
        %v3370 = vadd.f32 0.0, %v3369
        %v3371 = vpop.f32.mrb[0].mxu0
        %3372 = vmatprep.mubr.f32.mxu0 0.0
        %3373 = vmatmul.mubr.f32.gmra.mrb[0].mxu0 %v3172
        %v3374 = vpop.f32.mrb[0].mxu0
        %v3375 = vadd.f32 0.0, %v3374
        %v3376 = vpop.f32.mrb[0].mxu0
        %3377 = vmatprep.mubr.f32.mxu0 0.0
        %3378 = vmatmul.mubr.f32.gmra.mrb[0].mxu0 %v3175
        %v3379 = vpop.f32.mrb[0].mxu0
        %v3380 = vadd.f32 0.0, %v3379
        %v3381 = vpop.f32.mrb[0].mxu0
        %3382 = vmatprep.mubr.f32.mxu0 0.0
        %3383 = vmatmul.mubr.f32.gmra.mrb[0].mxu0 %v3178
        %v3384 = vpop.f32.mrb[0].mxu0
        %v3385 = vadd.f32 0.0, %v3384
        %v3386 = vpop.f32.mrb[0].mxu0
        %3387 = vmatprep.mubr.f32.mxu0 0.0
        %3388 = vmatmul.mubr.f32.gmra.mrb[0].mxu0 %v3181
        %v3389 = vpop.f32.mrb[0].mxu0
        %v3390 = vadd.f32 0.0, %v3389
        %v3391 = vpop.f32.mrb[0].mxu0
        %3392 = vmatprep.mubr.f32.mxu0 0.0
        %3393 = vmatmul.mubr.f32.gmra.mrb[0].mxu0 %v3184
        %v3394 = vpop.f32.mrb[0].mxu0
        %v3395 = vadd.f32 0.0, %v3394
        %v3396 = vpop.f32.mrb[0].mxu0
        %3397 = vmatprep.mubr.f32.mxu0 0.0
        %3398 = vmatmul.mubr.f32.gmra.mrb[0].mxu0 %v3187
        %v3399 = vpop.f32.mrb[0].mxu0
        %v3400 = vadd.f32 0.0, %v3399
        %v3401 = vpop.f32.mrb[0].mxu0
        %3402 = vmatprep.mubr.f32.mxu0 0.0
        %3403 = vmatmul.mubr.f32.gmra.mrb[0].mxu0 %v3190
        %v3404 = vpop.f32.mrb[0].mxu0
        %v3405 = vadd.f32 0.0, %v3404
        %v3406 = vpop.f32.mrb[0].mxu0
        %3407 = vmatprep.mubr.f32.mxu0 0.0
        %3408 = vmatmul.mubr.f32.gmra.mrb[0].mxu0 %v3193
        %v3409 = vpop.f32.mrb[0].mxu0
        %v3410 = vadd.f32 0.0, %v3409
        %v3411 = vpop.f32.mrb[0].mxu0
        %3412 = vmatprep.mubr.f32.mxu0 0.0
        %3413 = vmatmul.mubr.f32.gmra.mrb[0].mxu0 %v3196
        %v3414 = vpop.f32.mrb[0].mxu0
        %v3415 = vadd.f32 0.0, %v3414
        %v3416 = vpop.f32.mrb[0].mxu0
        %3417 = vmatprep.mubr.f32.mxu0 0.0
        %3418 = vmatmul.mubr.f32.gmra.mrb[0].mxu0 %v3199
        %v3419 = vpop.f32.mrb[0].mxu0
        %v3420 = vadd.f32 0.0, %v3419
        %v3421 = vpop.f32.mrb[0].mxu0
        %3422 = vmatprep.mubr.f32.mxu0 0.0
        %3423 = vmatmul.mubr.f32.gmra.mrb[0].mxu0 %v3202
        %v3424 = vpop.f32.mrb[0].mxu0
        %v3425 = vadd.f32 0.0, %v3424
        %v3426 = vpop.f32.mrb[0].mxu0
        %3427 = vmatprep.mubr.f32.mxu0 0.0
        %3428 = vmatmul.mubr.f32.gmra.mrb[0].mxu0 %v3205
        %v3429 = vpop.f32.mrb[0].mxu0
        %v3430 = vadd.f32 0.0, %v3429
        %v3431 = vpop.f32.mrb[0].mxu0
        %3432 = vmatprep.mubr.f32.mxu0 0.0
        %3433 = vmatmul.mubr.f32.gmra.mrb[0].mxu0 %v3208
        %v3434 = vpop.f32.mrb[0].mxu0
        %v3435 = vadd.f32 0.0, %v3434
        %v3436 = vpop.f32.mrb[0].mxu0
        %3437 = vdwg.mxu0
        %v3438 = vadd.f32 %v3048, %v3280
        %v3439 = vadd.f32 %v3049, %v3285
        %v3440 = vadd.f32 %v3050, %v3290
        %v3441 = vadd.f32 %v3051, %v3295
        %v3442 = vadd.f32 %v3052, %v3300
        %v3443 = vadd.f32 %v3053, %v3305
        %v3444 = vadd.f32 %v3054, %v3310
        %v3445 = vadd.f32 %v3055, %v3315
        %v3446 = vadd.f32 %v3056, %v3320
        %v3447 = vadd.f32 %v3057, %v3325
        %v3448 = vadd.f32 %v3058, %v3330
        %v3449 = vadd.f32 %v3059, %v3335
        %v3450 = vadd.f32 %v3060, %v3340
        %v3451 = vadd.f32 %v3061, %v3345
        %v3452 = vadd.f32 %v3062, %v3350
        %v3453 = vadd.f32 %v3063, %v3355
        %v3454 = vadd.f32 %v3064, %v3360
        %v3455 = vadd.f32 %v3065, %v3365
        %v3456 = vadd.f32 %v3066, %v3370
        %v3457 = vadd.f32 %v3067, %v3375
        %v3458 = vadd.f32 %v3068, %v3380
        %v3459 = vadd.f32 %v3069, %v3385
        %v3460 = vadd.f32 %v3070, %v3390
        %v3461 = vadd.f32 %v3071, %v3395
        %v3462 = vadd.f32 %v3072, %v3400
        %v3463 = vadd.f32 %v3073, %v3405
        %v3464 = vadd.f32 %v3074, %v3410
        %v3465 = vadd.f32 %v3075, %v3415
        %v3466 = vadd.f32 %v3076, %v3420
        %v3467 = vadd.f32 %v3077, %v3425
        %v3468 = vadd.f32 %v3078, %v3430
        %v3469 = vadd.f32 %v3079, %v3435
        %v3470 = vld [vmem:[%s2689 + $0x2] sm:$0xff]
        %v3471 = vld [vmem:[%s2689 + $0xa] sm:$0xff]
        %v3472 = vld [vmem:[%s2689 + $0x1a] sm:$0xff]
        %v3473 = vld [vmem:[%s2689 + $0x22] sm:$0xff]
        %v3474 = vld [vmem:[%s2689 + $0x32] sm:$0xff]
        %v3475 = vld [vmem:[%s2689 + $0x3a] sm:$0xff]
        %v3476 = vld [vmem:[%s2689 + $0x4a] sm:$0xff]
        %v3477 = vld [vmem:[%s2689 + $0x52] sm:$0xff]
        %v3478 = vld [vmem:[%s2689 + $0x62] sm:$0xff]
        %v3479 = vld [vmem:[%s2689 + $0x6a] sm:$0xff]
        %v3480 = vld [vmem:[%s2689 + $0x7a] sm:$0xff]
        %v3481 = vld [vmem:[%s2689 + $0x82] sm:$0xff]
        %v3482 = vld [vmem:[%s2689 + $0x92] sm:$0xff]
        %v3483 = vld [vmem:[%s2689 + $0x9a] sm:$0xff]
        %v3484 = vld [vmem:[%s2689 + $0xaa] sm:$0xff]
        %v3485 = vld [vmem:[%s2689 + $0xb2] sm:$0xff]
        %v3486 = vld [vmem:[%s2689 + $0xc2] sm:$0xff]
        %v3487 = vld [vmem:[%s2689 + $0xca] sm:$0xff]
        %v3488 = vld [vmem:[%s2689 + $0xda] sm:$0xff]
        %v3489 = vld [vmem:[%s2689 + $0xe2] sm:$0xff]
        %v3490 = vld [vmem:[%s2689 + $0xf2] sm:$0xff]
        %v3491 = vld [vmem:[%s2689 + $0xfa] sm:$0xff]
        %v3492 = vld [vmem:[%s2689 + $0x10a] sm:$0xff]
        %v3493 = vld [vmem:[%s2689 + $0x112] sm:$0xff]
        %v3494 = vld [vmem:[%s2689 + $0x122] sm:$0xff]
        %v3495 = vld [vmem:[%s2689 + $0x12a] sm:$0xff]
        %v3496 = vld [vmem:[%s2689 + $0x13a] sm:$0xff]
        %v3497 = vld [vmem:[%s2689 + $0x142] sm:$0xff]
        %v3498 = vld [vmem:[%s2689 + $0x152] sm:$0xff]
        %v3499 = vld [vmem:[%s2689 + $0x15a] sm:$0xff]
        %v3500 = vld [vmem:[%s2689 + $0x16a] sm:$0xff]
        %v3501 = vld [vmem:[%s2689 + $0x172] sm:$0xff]
        %s3502 = scalar_lea.vmem %s1, 32
        %v3503 = vld [vmem:[%s3502] sm:$0xf]
        %v3505 = vsel %vm478, %v3470, 0
        %v3508 = vsel %vm478, %v3471, 0
        %v3511 = vsel %vm478, %v3472, 0
        %v3514 = vsel %vm478, %v3473, 0
        %v3517 = vsel %vm478, %v3474, 0
        %v3520 = vsel %vm478, %v3475, 0
        %v3523 = vsel %vm478, %v3476, 0
        %v3526 = vsel %vm478, %v3477, 0
        %v3529 = vsel %vm478, %v3478, 0
        %v3532 = vsel %vm478, %v3479, 0
        %v3535 = vsel %vm478, %v3480, 0
        %v3538 = vsel %vm478, %v3481, 0
        %v3541 = vsel %vm478, %v3482, 0
        %v3544 = vsel %vm478, %v3483, 0
        %v3547 = vsel %vm478, %v3484, 0
        %v3550 = vsel %vm478, %v3485, 0
        %v3553 = vsel %vm478, %v3486, 0
        %v3556 = vsel %vm478, %v3487, 0
        %v3559 = vsel %vm478, %v3488, 0
        %v3562 = vsel %vm478, %v3489, 0
        %v3565 = vsel %vm478, %v3490, 0
        %v3568 = vsel %vm478, %v3491, 0
        %v3571 = vsel %vm478, %v3492, 0
        %v3574 = vsel %vm478, %v3493, 0
        %v3577 = vsel %vm478, %v3494, 0
        %v3580 = vsel %vm478, %v3495, 0
        %v3583 = vsel %vm478, %v3496, 0
        %v3586 = vsel %vm478, %v3497, 0
        %v3589 = vsel %vm478, %v3498, 0
        %v3592 = vsel %vm478, %v3499, 0
        %v3595 = vsel %vm478, %v3500, 0
        %v3598 = vsel %vm478, %v3501, 0
        %v3601 = vsel %vm575, %v3503, 0
        %3603 = vmatprep.subr.mxu0 0.0
        %3604 = vmatpush1.msra.mxu0 %v3601
        %3605 = vmatprep.subr.mxu0 0.0
        %3606 = vmatpush1.msra.mxu0 0.0
        %3607 = vmatprep.subr.mxu0 0.0
        %3608 = vmatpush1.msra.mxu0 0.0
        %3609 = vmatprep.subr.mxu0 0.0
        %3610 = vmatpush1.msra.mxu0 0.0
        %3611 = vmatprep.subr.mxu0 0.0
        %3612 = vmatpush1.msra.mxu0 0.0
        %3613 = vmatprep.subr.mxu0 0.0
        %3614 = vmatpush1.msra.mxu0 0.0
        %3615 = vmatprep.subr.mxu0 0.0
        %3616 = vmatpush1.msra.mxu0 0.0
        %3617 = vmatprep.subr.mxu0 0.0
        %3618 = vmatpush1.msra.mxu0 0.0
        %3619 = vmatprep.subr.mxu0 0.0
        %3620 = vmatpush1.msra.mxu0 0.0
        %3621 = vmatprep.subr.mxu0 0.0
        %3622 = vmatpush1.msra.mxu0 0.0
        %3623 = vmatprep.subr.mxu0 0.0
        %3624 = vmatpush1.msra.mxu0 0.0
        %3625 = vmatprep.subr.mxu0 0.0
        %3626 = vmatpush1.msra.mxu0 0.0
        %3627 = vmatprep.subr.mxu0 0.0
        %3628 = vmatpush1.msra.mxu0 0.0
        %3629 = vmatprep.subr.mxu0 0.0
        %3630 = vmatpush1.msra.mxu0 0.0
        %3631 = vmatprep.subr.mxu0 0.0
        %3632 = vmatpush1.msra.mxu0 0.0
        %3633 = vmatprep.subr.mxu0 0.0
        %3634 = vmatpush1.msra.mxu0 0.0
        %3635 = vmatprep.subr.mxu0 0.0
        %3636 = vmatpush1.msra.mxu0 0.0
        %3637 = vmatprep.subr.mxu0 0.0
        %3638 = vmatpush1.msra.mxu0 0.0
        %3639 = vmatprep.subr.mxu0 0.0
        %3640 = vmatpush1.msra.mxu0 0.0
        %3641 = vmatprep.subr.mxu0 0.0
        %3642 = vmatpush1.msra.mxu0 0.0
        %3643 = vmatprep.subr.mxu0 0.0
        %3644 = vmatpush1.msra.mxu0 0.0
        %3645 = vmatprep.subr.mxu0 0.0
        %3646 = vmatpush1.msra.mxu0 0.0
        %3647 = vmatprep.subr.mxu0 0.0
        %3648 = vmatpush1.msra.mxu0 0.0
        %3649 = vmatprep.subr.mxu0 0.0
        %3650 = vmatpush1.msra.mxu0 0.0
        %3651 = vmatprep.subr.mxu0 0.0
        %3652 = vmatpush1.msra.mxu0 0.0
        %3653 = vmatprep.subr.mxu0 0.0
        %3654 = vmatpush1.msra.mxu0 0.0
        %3655 = vmatprep.subr.mxu0 0.0
        %3656 = vmatpush1.msra.mxu0 0.0
        %3657 = vmatprep.subr.mxu0 0.0
        %3658 = vmatpush1.msra.mxu0 0.0
        %3659 = vmatprep.subr.mxu0 0.0
        %3660 = vmatpush1.msra.mxu0 0.0
        %3661 = vmatprep.subr.mxu0 0.0
        %3662 = vmatpush1.msra.mxu0 0.0
        %3663 = vmatprep.subr.mxu0 0.0
        %3664 = vmatpush1.msra.mxu0 0.0
        %3665 = vmatprep.subr.mxu0 0.0
        %3666 = vmatpush1.msra.mxu0 0.0
        %3667 = vmatprep.mubr.f32.mxu0 0.0
        %3668 = vmatmul.mubr.f32.gmra.mrb[0].mxu0 %v3505
        %v3669 = vpop.f32.mrb[0].mxu0
        %v3670 = vadd.f32 0.0, %v3669
        %v3671 = vpop.f32.mrb[0].mxu0
        %3672 = vmatprep.mubr.f32.mxu0 0.0
        %3673 = vmatmul.mubr.f32.gmra.mrb[0].mxu0 %v3508
        %v3674 = vpop.f32.mrb[0].mxu0
        %v3675 = vadd.f32 0.0, %v3674
        %v3676 = vpop.f32.mrb[0].mxu0
        %3677 = vmatprep.mubr.f32.mxu0 0.0
        %3678 = vmatmul.mubr.f32.gmra.mrb[0].mxu0 %v3511
        %v3679 = vpop.f32.mrb[0].mxu0
        %v3680 = vadd.f32 0.0, %v3679
        %v3681 = vpop.f32.mrb[0].mxu0
        %3682 = vmatprep.mubr.f32.mxu0 0.0
        %3683 = vmatmul.mubr.f32.gmra.mrb[0].mxu0 %v3514
        %v3684 = vpop.f32.mrb[0].mxu0
        %v3685 = vadd.f32 0.0, %v3684
        %v3686 = vpop.f32.mrb[0].mxu0
        %3687 = vmatprep.mubr.f32.mxu0 0.0
        %3688 = vmatmul.mubr.f32.gmra.mrb[0].mxu0 %v3517
        %v3689 = vpop.f32.mrb[0].mxu0
        %v3690 = vadd.f32 0.0, %v3689
        %v3691 = vpop.f32.mrb[0].mxu0
        %3692 = vmatprep.mubr.f32.mxu0 0.0
        %3693 = vmatmul.mubr.f32.gmra.mrb[0].mxu0 %v3520
        %v3694 = vpop.f32.mrb[0].mxu0
        %v3695 = vadd.f32 0.0, %v3694
        %v3696 = vpop.f32.mrb[0].mxu0
        %3697 = vmatprep.mubr.f32.mxu0 0.0
        %3698 = vmatmul.mubr.f32.gmra.mrb[0].mxu0 %v3523
        %v3699 = vpop.f32.mrb[0].mxu0
        %v3700 = vadd.f32 0.0, %v3699
        %v3701 = vpop.f32.mrb[0].mxu0
        %3702 = vmatprep.mubr.f32.mxu0 0.0
        %3703 = vmatmul.mubr.f32.gmra.mrb[0].mxu0 %v3526
        %v3704 = vpop.f32.mrb[0].mxu0
        %v3705 = vadd.f32 0.0, %v3704
        %v3706 = vpop.f32.mrb[0].mxu0
        %3707 = vmatprep.mubr.f32.mxu0 0.0
        %3708 = vmatmul.mubr.f32.gmra.mrb[0].mxu0 %v3529
        %v3709 = vpop.f32.mrb[0].mxu0
        %v3710 = vadd.f32 0.0, %v3709
        %v3711 = vpop.f32.mrb[0].mxu0
        %3712 = vmatprep.mubr.f32.mxu0 0.0
        %3713 = vmatmul.mubr.f32.gmra.mrb[0].mxu0 %v3532
        %v3714 = vpop.f32.mrb[0].mxu0
        %v3715 = vadd.f32 0.0, %v3714
        %v3716 = vpop.f32.mrb[0].mxu0
        %3717 = vmatprep.mubr.f32.mxu0 0.0
        %3718 = vmatmul.mubr.f32.gmra.mrb[0].mxu0 %v3535
        %v3719 = vpop.f32.mrb[0].mxu0
        %v3720 = vadd.f32 0.0, %v3719
        %v3721 = vpop.f32.mrb[0].mxu0
        %3722 = vmatprep.mubr.f32.mxu0 0.0
        %3723 = vmatmul.mubr.f32.gmra.mrb[0].mxu0 %v3538
        %v3724 = vpop.f32.mrb[0].mxu0
        %v3725 = vadd.f32 0.0, %v3724
        %v3726 = vpop.f32.mrb[0].mxu0
        %3727 = vmatprep.mubr.f32.mxu0 0.0
        %3728 = vmatmul.mubr.f32.gmra.mrb[0].mxu0 %v3541
        %v3729 = vpop.f32.mrb[0].mxu0
        %v3730 = vadd.f32 0.0, %v3729
        %v3731 = vpop.f32.mrb[0].mxu0
        %3732 = vmatprep.mubr.f32.mxu0 0.0
        %3733 = vmatmul.mubr.f32.gmra.mrb[0].mxu0 %v3544
        %v3734 = vpop.f32.mrb[0].mxu0
        %v3735 = vadd.f32 0.0, %v3734
        %v3736 = vpop.f32.mrb[0].mxu0
        %3737 = vmatprep.mubr.f32.mxu0 0.0
        %3738 = vmatmul.mubr.f32.gmra.mrb[0].mxu0 %v3547
        %v3739 = vpop.f32.mrb[0].mxu0
        %v3740 = vadd.f32 0.0, %v3739
        %v3741 = vpop.f32.mrb[0].mxu0
        %3742 = vmatprep.mubr.f32.mxu0 0.0
        %3743 = vmatmul.mubr.f32.gmra.mrb[0].mxu0 %v3550
        %v3744 = vpop.f32.mrb[0].mxu0
        %v3745 = vadd.f32 0.0, %v3744
        %v3746 = vpop.f32.mrb[0].mxu0
        %3747 = vmatprep.mubr.f32.mxu0 0.0
        %3748 = vmatmul.mubr.f32.gmra.mrb[0].mxu0 %v3553
        %v3749 = vpop.f32.mrb[0].mxu0
        %v3750 = vadd.f32 0.0, %v3749
        %v3751 = vpop.f32.mrb[0].mxu0
        %3752 = vmatprep.mubr.f32.mxu0 0.0
        %3753 = vmatmul.mubr.f32.gmra.mrb[0].mxu0 %v3556
        %v3754 = vpop.f32.mrb[0].mxu0
        %v3755 = vadd.f32 0.0, %v3754
        %v3756 = vpop.f32.mrb[0].mxu0
        %3757 = vmatprep.mubr.f32.mxu0 0.0
        %3758 = vmatmul.mubr.f32.gmra.mrb[0].mxu0 %v3559
        %v3759 = vpop.f32.mrb[0].mxu0
        %v3760 = vadd.f32 0.0, %v3759
        %v3761 = vpop.f32.mrb[0].mxu0
        %3762 = vmatprep.mubr.f32.mxu0 0.0
        %3763 = vmatmul.mubr.f32.gmra.mrb[0].mxu0 %v3562
        %v3764 = vpop.f32.mrb[0].mxu0
        %v3765 = vadd.f32 0.0, %v3764
        %v3766 = vpop.f32.mrb[0].mxu0
        %3767 = vmatprep.mubr.f32.mxu0 0.0
        %3768 = vmatmul.mubr.f32.gmra.mrb[0].mxu0 %v3565
        %v3769 = vpop.f32.mrb[0].mxu0
        %v3770 = vadd.f32 0.0, %v3769
        %v3771 = vpop.f32.mrb[0].mxu0
        %3772 = vmatprep.mubr.f32.mxu0 0.0
        %3773 = vmatmul.mubr.f32.gmra.mrb[0].mxu0 %v3568
        %v3774 = vpop.f32.mrb[0].mxu0
        %v3775 = vadd.f32 0.0, %v3774
        %v3776 = vpop.f32.mrb[0].mxu0
        %3777 = vmatprep.mubr.f32.mxu0 0.0
        %3778 = vmatmul.mubr.f32.gmra.mrb[0].mxu0 %v3571
        %v3779 = vpop.f32.mrb[0].mxu0
        %v3780 = vadd.f32 0.0, %v3779
        %v3781 = vpop.f32.mrb[0].mxu0
        %3782 = vmatprep.mubr.f32.mxu0 0.0
        %3783 = vmatmul.mubr.f32.gmra.mrb[0].mxu0 %v3574
        %v3784 = vpop.f32.mrb[0].mxu0
        %v3785 = vadd.f32 0.0, %v3784
        %v3786 = vpop.f32.mrb[0].mxu0
        %3787 = vmatprep.mubr.f32.mxu0 0.0
        %3788 = vmatmul.mubr.f32.gmra.mrb[0].mxu0 %v3577
        %v3789 = vpop.f32.mrb[0].mxu0
        %v3790 = vadd.f32 0.0, %v3789
        %v3791 = vpop.f32.mrb[0].mxu0
        %3792 = vmatprep.mubr.f32.mxu0 0.0
        %3793 = vmatmul.mubr.f32.gmra.mrb[0].mxu0 %v3580
        %v3794 = vpop.f32.mrb[0].mxu0
        %v3795 = vadd.f32 0.0, %v3794
        %v3796 = vpop.f32.mrb[0].mxu0
        %3797 = vmatprep.mubr.f32.mxu0 0.0
        %3798 = vmatmul.mubr.f32.gmra.mrb[0].mxu0 %v3583
        %v3799 = vpop.f32.mrb[0].mxu0
        %v3800 = vadd.f32 0.0, %v3799
        %v3801 = vpop.f32.mrb[0].mxu0
        %3802 = vmatprep.mubr.f32.mxu0 0.0
        %3803 = vmatmul.mubr.f32.gmra.mrb[0].mxu0 %v3586
        %v3804 = vpop.f32.mrb[0].mxu0
        %v3805 = vadd.f32 0.0, %v3804
        %v3806 = vpop.f32.mrb[0].mxu0
        %3807 = vmatprep.mubr.f32.mxu0 0.0
        %3808 = vmatmul.mubr.f32.gmra.mrb[0].mxu0 %v3589
        %v3809 = vpop.f32.mrb[0].mxu0
        %v3810 = vadd.f32 0.0, %v3809
        %v3811 = vpop.f32.mrb[0].mxu0
        %3812 = vmatprep.mubr.f32.mxu0 0.0
        %3813 = vmatmul.mubr.f32.gmra.mrb[0].mxu0 %v3592
        %v3814 = vpop.f32.mrb[0].mxu0
        %v3815 = vadd.f32 0.0, %v3814
        %v3816 = vpop.f32.mrb[0].mxu0
        %3817 = vmatprep.mubr.f32.mxu0 0.0
        %3818 = vmatmul.mubr.f32.gmra.mrb[0].mxu0 %v3595
        %v3819 = vpop.f32.mrb[0].mxu0
        %v3820 = vadd.f32 0.0, %v3819
        %v3821 = vpop.f32.mrb[0].mxu0
        %3822 = vmatprep.mubr.f32.mxu0 0.0
        %3823 = vmatmul.mubr.f32.gmra.mrb[0].mxu0 %v3598
        %v3824 = vpop.f32.mrb[0].mxu0
        %v3825 = vadd.f32 0.0, %v3824
        %v3826 = vpop.f32.mrb[0].mxu0
        %3827 = vdwg.mxu0
        %v3828 = vadd.f32 %v3438, %v3670
        %v3829 = vadd.f32 %v3439, %v3675
        %v3830 = vadd.f32 %v3440, %v3680
        %v3831 = vadd.f32 %v3441, %v3685
        %v3832 = vadd.f32 %v3442, %v3690
        %v3833 = vadd.f32 %v3443, %v3695
        %v3834 = vadd.f32 %v3444, %v3700
        %v3835 = vadd.f32 %v3445, %v3705
        %v3836 = vadd.f32 %v3446, %v3710
        %v3837 = vadd.f32 %v3447, %v3715
        %v3838 = vadd.f32 %v3448, %v3720
        %v3839 = vadd.f32 %v3449, %v3725
        %v3840 = vadd.f32 %v3450, %v3730
        %v3841 = vadd.f32 %v3451, %v3735
        %v3842 = vadd.f32 %v3452, %v3740
        %v3843 = vadd.f32 %v3453, %v3745
        %v3844 = vadd.f32 %v3454, %v3750
        %v3845 = vadd.f32 %v3455, %v3755
        %v3846 = vadd.f32 %v3456, %v3760
        %v3847 = vadd.f32 %v3457, %v3765
        %v3848 = vadd.f32 %v3458, %v3770
        %v3849 = vadd.f32 %v3459, %v3775
        %v3850 = vadd.f32 %v3460, %v3780
        %v3851 = vadd.f32 %v3461, %v3785
        %v3852 = vadd.f32 %v3462, %v3790
        %v3853 = vadd.f32 %v3463, %v3795
        %v3854 = vadd.f32 %v3464, %v3800
        %v3855 = vadd.f32 %v3465, %v3805
        %v3856 = vadd.f32 %v3466, %v3810
        %v3857 = vadd.f32 %v3467, %v3815
        %v3858 = vadd.f32 %v3468, %v3820
        %v3859 = vadd.f32 %v3469, %v3825
        %v3860 = vld [vmem:[%s2] sm:$0x1]
        %v3862 = vlaneseq
        %v3863 = vshrl.u32 %v3862, 7
        %v3864 = vsub.s32 0, %v3863
        %v3865 = vrot.slane %v3860, %v3864
        %v3867 = vadd.f32 %v3828, %v3865
        %v3868 = vadd.f32 %v3829, %v3865
        %v3869 = vadd.f32 %v3830, %v3865
        %v3870 = vadd.f32 %v3831, %v3865
        %v3871 = vadd.f32 %v3832, %v3865
        %v3872 = vadd.f32 %v3833, %v3865
        %v3873 = vadd.f32 %v3834, %v3865
        %v3874 = vadd.f32 %v3835, %v3865
        %v3875 = vadd.f32 %v3836, %v3865
        %v3876 = vadd.f32 %v3837, %v3865
        %v3877 = vadd.f32 %v3838, %v3865
        %v3878 = vadd.f32 %v3839, %v3865
        %v3879 = vadd.f32 %v3840, %v3865
        %v3880 = vadd.f32 %v3841, %v3865
        %v3881 = vadd.f32 %v3842, %v3865
        %v3882 = vadd.f32 %v3843, %v3865
        %v3883 = vadd.f32 %v3844, %v3865
        %v3884 = vadd.f32 %v3845, %v3865
        %v3885 = vadd.f32 %v3846, %v3865
        %v3886 = vadd.f32 %v3847, %v3865
        %v3887 = vadd.f32 %v3848, %v3865
        %v3888 = vadd.f32 %v3849, %v3865
        %v3889 = vadd.f32 %v3850, %v3865
        %v3890 = vadd.f32 %v3851, %v3865
        %v3891 = vadd.f32 %v3852, %v3865
        %v3892 = vadd.f32 %v3853, %v3865
        %v3893 = vadd.f32 %v3854, %v3865
        %v3894 = vadd.f32 %v3855, %v3865
        %v3895 = vadd.f32 %v3856, %v3865
        %v3896 = vadd.f32 %v3857, %v3865
        %v3897 = vadd.f32 %v3858, %v3865
        %v3898 = vadd.f32 %v3859, %v3865
        %v3899 = vmax.f32 %v3867, 0.0
        %v3900 = vmax.f32 %v3868, 0.0
        %v3901 = vmax.f32 %v3869, 0.0
        %v3902 = vmax.f32 %v3870, 0.0
        %v3903 = vmax.f32 %v3871, 0.0
        %v3904 = vmax.f32 %v3872, 0.0
        %v3905 = vmax.f32 %v3873, 0.0
        %v3906 = vmax.f32 %v3874, 0.0
        %v3907 = vmax.f32 %v3875, 0.0
        %v3908 = vmax.f32 %v3876, 0.0
        %v3909 = vmax.f32 %v3877, 0.0
        %v3910 = vmax.f32 %v3878, 0.0
        %v3911 = vmax.f32 %v3879, 0.0
        %v3912 = vmax.f32 %v3880, 0.0
        %v3913 = vmax.f32 %v3881, 0.0
        %v3914 = vmax.f32 %v3882, 0.0
        %v3915 = vmax.f32 %v3883, 0.0
        %v3916 = vmax.f32 %v3884, 0.0
        %v3917 = vmax.f32 %v3885, 0.0
        %v3918 = vmax.f32 %v3886, 0.0
        %v3919 = vmax.f32 %v3887, 0.0
        %v3920 = vmax.f32 %v3888, 0.0
        %v3921 = vmax.f32 %v3889, 0.0
        %v3922 = vmax.f32 %v3890, 0.0
        %v3923 = vmax.f32 %v3891, 0.0
        %v3924 = vmax.f32 %v3892, 0.0
        %v3925 = vmax.f32 %v3893, 0.0
        %v3926 = vmax.f32 %v3894, 0.0
        %v3927 = vmax.f32 %v3895, 0.0
        %v3928 = vmax.f32 %v3896, 0.0
        %v3929 = vmax.f32 %v3897, 0.0
        %v3930 = vmax.f32 %v3898, 0.0
        %vm3931 = vcmask 130048
        %3932 = vst.msk [vmem:[#allocation2] sm:$0xff] %vm3931, %v3899
        %3933 = vst.msk [vmem:[#allocation2 + $0x8] sm:$0xff] %vm3931, %v3900
        %3934 = vst.msk [vmem:[#allocation2 + $0x18] sm:$0xff] %vm3931, %v3901
        %3935 = vst.msk [vmem:[#allocation2 + $0x20] sm:$0xff] %vm3931, %v3902
        %3936 = vst.msk [vmem:[#allocation2 + $0x30] sm:$0xff] %vm3931, %v3903
        %3937 = vst.msk [vmem:[#allocation2 + $0x38] sm:$0xff] %vm3931, %v3904
        %3938 = vst.msk [vmem:[#allocation2 + $0x48] sm:$0xff] %vm3931, %v3905
        %3939 = vst.msk [vmem:[#allocation2 + $0x50] sm:$0xff] %vm3931, %v3906
        %3940 = vst.msk [vmem:[#allocation2 + $0x60] sm:$0xff] %vm3931, %v3907
        %3941 = vst.msk [vmem:[#allocation2 + $0x68] sm:$0xff] %vm3931, %v3908
        %3942 = vst.msk [vmem:[#allocation2 + $0x78] sm:$0xff] %vm3931, %v3909
        %3943 = vst.msk [vmem:[#allocation2 + $0x80] sm:$0xff] %vm3931, %v3910
        %3944 = vst.msk [vmem:[#allocation2 + $0x90] sm:$0xff] %vm3931, %v3911
        %3945 = vst.msk [vmem:[#allocation2 + $0x98] sm:$0xff] %vm3931, %v3912
        %3946 = vst.msk [vmem:[#allocation2 + $0xa8] sm:$0xff] %vm3931, %v3913
        %3947 = vst.msk [vmem:[#allocation2 + $0xb0] sm:$0xff] %vm3931, %v3914
        %3948 = vst.msk [vmem:[#allocation2 + $0xc0] sm:$0xff] %vm3931, %v3915
        %3949 = vst.msk [vmem:[#allocation2 + $0xc8] sm:$0xff] %vm3931, %v3916
        %3950 = vst.msk [vmem:[#allocation2 + $0xd8] sm:$0xff] %vm3931, %v3917
        %3951 = vst.msk [vmem:[#allocation2 + $0xe0] sm:$0xff] %vm3931, %v3918
        %3952 = vst.msk [vmem:[#allocation2 + $0xf0] sm:$0xff] %vm3931, %v3919
        %3953 = vst.msk [vmem:[#allocation2 + $0xf8] sm:$0xff] %vm3931, %v3920
        %3954 = vst.msk [vmem:[#allocation2 + $0x108] sm:$0xff] %vm3931, %v3921
        %3955 = vst.msk [vmem:[#allocation2 + $0x110] sm:$0xff] %vm3931, %v3922
        %3956 = vst.msk [vmem:[#allocation2 + $0x120] sm:$0xff] %vm3931, %v3923
        %3957 = vst.msk [vmem:[#allocation2 + $0x128] sm:$0xff] %vm3931, %v3924
        %3958 = vst.msk [vmem:[#allocation2 + $0x138] sm:$0xff] %vm3931, %v3925
        %3959 = vst.msk [vmem:[#allocation2 + $0x140] sm:$0xff] %vm3931, %v3926
        %3960 = vst.msk [vmem:[#allocation2 + $0x150] sm:$0xff] %vm3931, %v3927
        %3961 = vst.msk [vmem:[#allocation2 + $0x158] sm:$0xff] %vm3931, %v3928
        %3962 = vst.msk [vmem:[#allocation2 + $0x168] sm:$0xff] %vm3931, %v3929
        %3963 = vst.msk [vmem:[#allocation2 + $0x170] sm:$0xff] %vm3931, %v3930
        %3964 = vst.msk [vmem:[#allocation2 + $0x10] sm:$0xff] %vm3931, 0.0
        %3965 = vst.msk [vmem:[#allocation2 + $0x28] sm:$0xff] %vm3931, 0.0
        %3966 = vst.msk [vmem:[#allocation2 + $0x40] sm:$0xff] %vm3931, 0.0
        %3967 = vst.msk [vmem:[#allocation2 + $0x58] sm:$0xff] %vm3931, 0.0
        %3968 = vst.msk [vmem:[#allocation2 + $0x70] sm:$0xff] %vm3931, 0.0
        %3969 = vst.msk [vmem:[#allocation2 + $0x88] sm:$0xff] %vm3931, 0.0
        %3970 = vst.msk [vmem:[#allocation2 + $0xa0] sm:$0xff] %vm3931, 0.0
        %3971 = vst.msk [vmem:[#allocation2 + $0xb8] sm:$0xff] %vm3931, 0.0
        %3972 = vst.msk [vmem:[#allocation2 + $0xd0] sm:$0xff] %vm3931, 0.0
        %3973 = vst.msk [vmem:[#allocation2 + $0xe8] sm:$0xff] %vm3931, 0.0
        %3974 = vst.msk [vmem:[#allocation2 + $0x100] sm:$0xff] %vm3931, 0.0
        %3975 = vst.msk [vmem:[#allocation2 + $0x118] sm:$0xff] %vm3931, 0.0
        %3976 = vst.msk [vmem:[#allocation2 + $0x130] sm:$0xff] %vm3931, 0.0
        %3977 = vst.msk [vmem:[#allocation2 + $0x148] sm:$0xff] %vm3931, 0.0
        %3978 = vst.msk [vmem:[#allocation2 + $0x160] sm:$0xff] %vm3931, 0.0
        %3979 = vst.msk [vmem:[#allocation2 + $0x178] sm:$0xff] %vm3931, 0.0
        %v3980 = vld [vmem:[#allocation2] sm:$0xff]
        %v3981 = vld [vmem:[#allocation2 + $0x8] sm:$0xff]
        %v3982 = vld [vmem:[#allocation2 + $0x18] sm:$0xff]
        %v3983 = vld [vmem:[#allocation2 + $0x20] sm:$0xff]
        %v3984 = vld [vmem:[#allocation2 + $0x30] sm:$0xff]
        %v3985 = vld [vmem:[#allocation2 + $0x38] sm:$0xff]
        %v3986 = vld [vmem:[#allocation2 + $0x48] sm:$0xff]
        %v3987 = vld [vmem:[#allocation2 + $0x50] sm:$0xff]
        %v3988 = vld [vmem:[#allocation2 + $0x60] sm:$0xff]
        %v3989 = vld [vmem:[#allocation2 + $0x68] sm:$0xff]
        %v3990 = vld [vmem:[#allocation2 + $0x78] sm:$0xff]
        %v3991 = vld [vmem:[#allocation2 + $0x80] sm:$0xff]
        %v3992 = vld [vmem:[#allocation2 + $0x90] sm:$0xff]
        %v3993 = vld [vmem:[#allocation2 + $0x98] sm:$0xff]
        %v3994 = vld [vmem:[#allocation2 + $0xa8] sm:$0xff]
        %v3995 = vld [vmem:[#allocation2 + $0xb0] sm:$0xff]
        %v3996 = vld [vmem:[#allocation2 + $0xc0] sm:$0xff]
        %v3997 = vld [vmem:[#allocation2 + $0xc8] sm:$0xff]
        %v3998 = vld [vmem:[#allocation2 + $0xd8] sm:$0xff]
        %v3999 = vld [vmem:[#allocation2 + $0xe0] sm:$0xff]
        %v4000 = vld [vmem:[#allocation2 + $0xf0] sm:$0xff]
        %v4001 = vld [vmem:[#allocation2 + $0xf8] sm:$0xff]
        %v4002 = vld [vmem:[#allocation2 + $0x108] sm:$0xff]
        %v4003 = vld [vmem:[#allocation2 + $0x110] sm:$0xff]
        %v4004 = vld [vmem:[#allocation2 + $0x120] sm:$0xff]
        %v4005 = vld [vmem:[#allocation2 + $0x128] sm:$0xff]
        %v4006 = vld [vmem:[#allocation2 + $0x138] sm:$0xff]
        %v4007 = vld [vmem:[#allocation2 + $0x140] sm:$0xff]
        %v4008 = vld [vmem:[%s3] sm:$0xff]
        %v4009 = vld [vmem:[%s3 + $0x8] sm:$0xff]
        %v4010 = vld [vmem:[#allocation2 + $0x1] sm:$0xff]
        %v4011 = vld [vmem:[#allocation2 + $0x9] sm:$0xff]
        %v4012 = vld [vmem:[#allocation2 + $0x19] sm:$0xff]
        %v4013 = vld [vmem:[#allocation2 + $0x21] sm:$0xff]
        %v4014 = vld [vmem:[#allocation2 + $0x31] sm:$0xff]
        %v4015 = vld [vmem:[#allocation2 + $0x39] sm:$0xff]
        %v4016 = vld [vmem:[#allocation2 + $0x49] sm:$0xff]
        %v4017 = vld [vmem:[#allocation2 + $0x51] sm:$0xff]
        %v4018 = vld [vmem:[#allocation2 + $0x61] sm:$0xff]
        %v4019 = vld [vmem:[#allocation2 + $0x69] sm:$0xff]
        %v4020 = vld [vmem:[#allocation2 + $0x79] sm:$0xff]
        %v4021 = vld [vmem:[#allocation2 + $0x81] sm:$0xff]
        %v4022 = vld [vmem:[#allocation2 + $0x91] sm:$0xff]
        %v4023 = vld [vmem:[#allocation2 + $0x99] sm:$0xff]
        %v4024 = vld [vmem:[#allocation2 + $0xa9] sm:$0xff]
        %v4025 = vld [vmem:[#allocation2 + $0xb1] sm:$0xff]
        %v4026 = vld [vmem:[#allocation2 + $0xc1] sm:$0xff]
        %v4027 = vld [vmem:[#allocation2 + $0xc9] sm:$0xff]
        %v4028 = vld [vmem:[#allocation2 + $0xd9] sm:$0xff]
        %v4029 = vld [vmem:[#allocation2 + $0xe1] sm:$0xff]
        %v4030 = vld [vmem:[#allocation2 + $0xf1] sm:$0xff]
        %v4031 = vld [vmem:[#allocation2 + $0xf9] sm:$0xff]
        %v4032 = vld [vmem:[#allocation2 + $0x109] sm:$0xff]
        %v4033 = vld [vmem:[#allocation2 + $0x111] sm:$0xff]
        %v4034 = vld [vmem:[#allocation2 + $0x121] sm:$0xff]
        %v4035 = vld [vmem:[#allocation2 + $0x129] sm:$0xff]
        %v4036 = vld [vmem:[#allocation2 + $0x139] sm:$0xff]
        %v4037 = vld [vmem:[#allocation2 + $0x141] sm:$0xff]
        %s4038 = scalar_lea.vmem %s3, 16
        %v4039 = vld [vmem:[%s4038] sm:$0xff]
        %v4040 = vld [vmem:[%s4038 + $0x8] sm:$0xff]
        %v4042 = vsel %vm3931, %v4010, 0
        %v4045 = vsel %vm3931, %v4011, 0
        %v4048 = vsel %vm3931, %v4012, 0
        %v4051 = vsel %vm3931, %v4013, 0
        %v4054 = vsel %vm3931, %v4014, 0
        %v4057 = vsel %vm3931, %v4015, 0
        %v4060 = vsel %vm3931, %v4016, 0
        %v4063 = vsel %vm3931, %v4017, 0
        %v4066 = vsel %vm3931, %v4018, 0
        %v4069 = vsel %vm3931, %v4019, 0
        %v4072 = vsel %vm3931, %v4020, 0
        %v4075 = vsel %vm3931, %v4021, 0
        %v4078 = vsel %vm3931, %v4022, 0
        %v4081 = vsel %vm3931, %v4023, 0
        %v4084 = vsel %vm3931, %v4024, 0
        %v4087 = vsel %vm3931, %v4025, 0
        %v4090 = vsel %vm3931, %v4026, 0
        %v4093 = vsel %vm3931, %v4027, 0
        %v4096 = vsel %vm3931, %v4028, 0
        %v4099 = vsel %vm3931, %v4029, 0
        %v4102 = vsel %vm3931, %v4030, 0
        %v4105 = vsel %vm3931, %v4031, 0
        %v4108 = vsel %vm3931, %v4032, 0
        %v4111 = vsel %vm3931, %v4033, 0
        %v4114 = vsel %vm3931, %v4034, 0
        %v4117 = vsel %vm3931, %v4035, 0
        %v4120 = vsel %vm3931, %v4036, 0
        %v4123 = vsel %vm3931, %v4037, 0
        %4125 = vmatprep.subr.mxu0 0.0
        %4126 = vmatpush1.msra.mxu0 %v4039
        %4127 = vmatprep.subr.mxu0 0.0
        %4128 = vmatpush1.msra.mxu0 %v4040
        %4129 = vmatprep.subr.mxu0 0.0
        %4130 = vmatpush1.msra.mxu0 0.0
        %4131 = vmatprep.subr.mxu0 0.0
        %4132 = vmatpush1.msra.mxu0 0.0
        %4133 = vmatprep.subr.mxu0 0.0
        %4134 = vmatpush1.msra.mxu0 0.0
        %4135 = vmatprep.subr.mxu0 0.0
        %4136 = vmatpush1.msra.mxu0 0.0
        %4137 = vmatprep.subr.mxu0 0.0
        %4138 = vmatpush1.msra.mxu0 0.0
        %4139 = vmatprep.subr.mxu0 0.0
        %4140 = vmatpush1.msra.mxu0 0.0
        %4141 = vmatprep.subr.mxu0 0.0
        %4142 = vmatpush1.msra.mxu0 0.0
        %4143 = vmatprep.subr.mxu0 0.0
        %4144 = vmatpush1.msra.mxu0 0.0
        %4145 = vmatprep.subr.mxu0 0.0
        %4146 = vmatpush1.msra.mxu0 0.0
        %4147 = vmatprep.subr.mxu0 0.0
        %4148 = vmatpush1.msra.mxu0 0.0
        %4149 = vmatprep.subr.mxu0 0.0
        %4150 = vmatpush1.msra.mxu0 0.0
        %4151 = vmatprep.subr.mxu0 0.0
        %4152 = vmatpush1.msra.mxu0 0.0
        %4153 = vmatprep.subr.mxu0 0.0
        %4154 = vmatpush1.msra.mxu0 0.0
        %4155 = vmatprep.subr.mxu0 0.0
        %4156 = vmatpush1.msra.mxu0 0.0
        %4157 = vmatprep.subr.mxu0 0.0
        %4158 = vmatpush1.msra.mxu0 0.0
        %4159 = vmatprep.subr.mxu0 0.0
        %4160 = vmatpush1.msra.mxu0 0.0
        %4161 = vmatprep.subr.mxu0 0.0
        %4162 = vmatpush1.msra.mxu0 0.0
        %4163 = vmatprep.subr.mxu0 0.0
        %4164 = vmatpush1.msra.mxu0 0.0
        %4165 = vmatprep.subr.mxu0 0.0
        %4166 = vmatpush1.msra.mxu0 0.0
        %4167 = vmatprep.subr.mxu0 0.0
        %4168 = vmatpush1.msra.mxu0 0.0
        %4169 = vmatprep.subr.mxu0 0.0
        %4170 = vmatpush1.msra.mxu0 0.0
        %4171 = vmatprep.subr.mxu0 0.0
        %4172 = vmatpush1.msra.mxu0 0.0
        %4173 = vmatprep.subr.mxu0 0.0
        %4174 = vmatpush1.msra.mxu0 0.0
        %4175 = vmatprep.subr.mxu0 0.0
        %4176 = vmatpush1.msra.mxu0 0.0
        %4177 = vmatprep.subr.mxu0 0.0
        %4178 = vmatpush1.msra.mxu0 0.0
        %4179 = vmatprep.subr.mxu0 0.0
        %4180 = vmatpush1.msra.mxu0 0.0
        %4181 = vmatprep.subr.mxu0 0.0
        %4182 = vmatpush1.msra.mxu0 0.0
        %4183 = vmatprep.subr.mxu0 0.0
        %4184 = vmatpush1.msra.mxu0 0.0
        %4185 = vmatprep.subr.mxu0 0.0
        %4186 = vmatpush1.msra.mxu0 0.0
        %4187 = vmatprep.subr.mxu0 0.0
        %4188 = vmatpush1.msra.mxu0 0.0
        %4189 = vmatprep.mubr.f32.mxu0 0.0
        %4190 = vmatmul.mubr.f32.gmra.mrb[0].mxu0 %v4042
        %v4191 = vpop.f32.mrb[0].mxu0
        %v4192 = vadd.f32 0.0, %v4191
        %v4193 = vpop.f32.mrb[0].mxu0
        %4194 = vmatprep.mubr.f32.mxu0 0.0
        %4195 = vmatmul.mubr.f32.gmra.mrb[0].mxu0 %v4045
        %v4196 = vpop.f32.mrb[0].mxu0
        %v4197 = vadd.f32 0.0, %v4196
        %v4198 = vpop.f32.mrb[0].mxu0
        %4199 = vmatprep.mubr.f32.mxu0 0.0
        %4200 = vmatmul.mubr.f32.gmra.mrb[0].mxu0 %v4048
        %v4201 = vpop.f32.mrb[0].mxu0
        %v4202 = vadd.f32 0.0, %v4201
        %v4203 = vpop.f32.mrb[0].mxu0
        %4204 = vmatprep.mubr.f32.mxu0 0.0
        %4205 = vmatmul.mubr.f32.gmra.mrb[0].mxu0 %v4051
        %v4206 = vpop.f32.mrb[0].mxu0
        %v4207 = vadd.f32 0.0, %v4206
        %v4208 = vpop.f32.mrb[0].mxu0
        %4209 = vmatprep.mubr.f32.mxu0 0.0
        %4210 = vmatmul.mubr.f32.gmra.mrb[0].mxu0 %v4054
        %v4211 = vpop.f32.mrb[0].mxu0
        %v4212 = vadd.f32 0.0, %v4211
        %v4213 = vpop.f32.mrb[0].mxu0
        %4214 = vmatprep.mubr.f32.mxu0 0.0
        %4215 = vmatmul.mubr.f32.gmra.mrb[0].mxu0 %v4057
        %v4216 = vpop.f32.mrb[0].mxu0
        %v4217 = vadd.f32 0.0, %v4216
        %v4218 = vpop.f32.mrb[0].mxu0
        %4219 = vmatprep.mubr.f32.mxu0 0.0
        %4220 = vmatmul.mubr.f32.gmra.mrb[0].mxu0 %v4060
        %v4221 = vpop.f32.mrb[0].mxu0
        %v4222 = vadd.f32 0.0, %v4221
        %v4223 = vpop.f32.mrb[0].mxu0
        %4224 = vmatprep.mubr.f32.mxu0 0.0
        %4225 = vmatmul.mubr.f32.gmra.mrb[0].mxu0 %v4063
        %v4226 = vpop.f32.mrb[0].mxu0
        %v4227 = vadd.f32 0.0, %v4226
        %v4228 = vpop.f32.mrb[0].mxu0
        %4229 = vmatprep.mubr.f32.mxu0 0.0
        %4230 = vmatmul.mubr.f32.gmra.mrb[0].mxu0 %v4066
        %v4231 = vpop.f32.mrb[0].mxu0
        %v4232 = vadd.f32 0.0, %v4231
        %v4233 = vpop.f32.mrb[0].mxu0
        %4234 = vmatprep.mubr.f32.mxu0 0.0
        %4235 = vmatmul.mubr.f32.gmra.mrb[0].mxu0 %v4069
        %v4236 = vpop.f32.mrb[0].mxu0
        %v4237 = vadd.f32 0.0, %v4236
        %v4238 = vpop.f32.mrb[0].mxu0
        %4239 = vmatprep.mubr.f32.mxu0 0.0
        %4240 = vmatmul.mubr.f32.gmra.mrb[0].mxu0 %v4072
        %v4241 = vpop.f32.mrb[0].mxu0
        %v4242 = vadd.f32 0.0, %v4241
        %v4243 = vpop.f32.mrb[0].mxu0
        %4244 = vmatprep.mubr.f32.mxu0 0.0
        %4245 = vmatmul.mubr.f32.gmra.mrb[0].mxu0 %v4075
        %v4246 = vpop.f32.mrb[0].mxu0
        %v4247 = vadd.f32 0.0, %v4246
        %v4248 = vpop.f32.mrb[0].mxu0
        %4249 = vmatprep.mubr.f32.mxu0 0.0
        %4250 = vmatmul.mubr.f32.gmra.mrb[0].mxu0 %v4078
        %v4251 = vpop.f32.mrb[0].mxu0
        %v4252 = vadd.f32 0.0, %v4251
        %v4253 = vpop.f32.mrb[0].mxu0
        %4254 = vmatprep.mubr.f32.mxu0 0.0
        %4255 = vmatmul.mubr.f32.gmra.mrb[0].mxu0 %v4081
        %v4256 = vpop.f32.mrb[0].mxu0
        %v4257 = vadd.f32 0.0, %v4256
        %v4258 = vpop.f32.mrb[0].mxu0
        %4259 = vmatprep.mubr.f32.mxu0 0.0
        %4260 = vmatmul.mubr.f32.gmra.mrb[0].mxu0 %v4084
        %v4261 = vpop.f32.mrb[0].mxu0
        %v4262 = vadd.f32 0.0, %v4261
        %v4263 = vpop.f32.mrb[0].mxu0
        %4264 = vmatprep.mubr.f32.mxu0 0.0
        %4265 = vmatmul.mubr.f32.gmra.mrb[0].mxu0 %v4087
        %v4266 = vpop.f32.mrb[0].mxu0
        %v4267 = vadd.f32 0.0, %v4266
        %v4268 = vpop.f32.mrb[0].mxu0
        %4269 = vmatprep.mubr.f32.mxu0 0.0
        %4270 = vmatmul.mubr.f32.gmra.mrb[0].mxu0 %v4090
        %v4271 = vpop.f32.mrb[0].mxu0
        %v4272 = vadd.f32 0.0, %v4271
        %v4273 = vpop.f32.mrb[0].mxu0
        %4274 = vmatprep.mubr.f32.mxu0 0.0
        %4275 = vmatmul.mubr.f32.gmra.mrb[0].mxu0 %v4093
        %v4276 = vpop.f32.mrb[0].mxu0
        %v4277 = vadd.f32 0.0, %v4276
        %v4278 = vpop.f32.mrb[0].mxu0
        %4279 = vmatprep.mubr.f32.mxu0 0.0
        %4280 = vmatmul.mubr.f32.gmra.mrb[0].mxu0 %v4096
        %v4281 = vpop.f32.mrb[0].mxu0
        %v4282 = vadd.f32 0.0, %v4281
        %v4283 = vpop.f32.mrb[0].mxu0
        %4284 = vmatprep.mubr.f32.mxu0 0.0
        %4285 = vmatmul.mubr.f32.gmra.mrb[0].mxu0 %v4099
        %v4286 = vpop.f32.mrb[0].mxu0
        %v4287 = vadd.f32 0.0, %v4286
        %v4288 = vpop.f32.mrb[0].mxu0
        %4289 = vmatprep.mubr.f32.mxu0 0.0
        %4290 = vmatmul.mubr.f32.gmra.mrb[0].mxu0 %v4102
        %v4291 = vpop.f32.mrb[0].mxu0
        %v4292 = vadd.f32 0.0, %v4291
        %v4293 = vpop.f32.mrb[0].mxu0
        %4294 = vmatprep.mubr.f32.mxu0 0.0
        %4295 = vmatmul.mubr.f32.gmra.mrb[0].mxu0 %v4105
        %v4296 = vpop.f32.mrb[0].mxu0
        %v4297 = vadd.f32 0.0, %v4296
        %v4298 = vpop.f32.mrb[0].mxu0
        %4299 = vmatprep.mubr.f32.mxu0 0.0
        %4300 = vmatmul.mubr.f32.gmra.mrb[0].mxu0 %v4108
        %v4301 = vpop.f32.mrb[0].mxu0
        %v4302 = vadd.f32 0.0, %v4301
        %v4303 = vpop.f32.mrb[0].mxu0
        %4304 = vmatprep.mubr.f32.mxu0 0.0
        %4305 = vmatmul.mubr.f32.gmra.mrb[0].mxu0 %v4111
        %v4306 = vpop.f32.mrb[0].mxu0
        %v4307 = vadd.f32 0.0, %v4306
        %v4308 = vpop.f32.mrb[0].mxu0
        %4309 = vmatprep.mubr.f32.mxu0 0.0
        %4310 = vmatmul.mubr.f32.gmra.mrb[0].mxu0 %v4114
        %v4311 = vpop.f32.mrb[0].mxu0
        %v4312 = vadd.f32 0.0, %v4311
        %v4313 = vpop.f32.mrb[0].mxu0
        %4314 = vmatprep.mubr.f32.mxu0 0.0
        %4315 = vmatmul.mubr.f32.gmra.mrb[0].mxu0 %v4117
        %v4316 = vpop.f32.mrb[0].mxu0
        %v4317 = vadd.f32 0.0, %v4316
        %v4318 = vpop.f32.mrb[0].mxu0
        %4319 = vmatprep.mubr.f32.mxu0 0.0
        %4320 = vmatmul.mubr.f32.gmra.mrb[0].mxu0 %v4120
        %v4321 = vpop.f32.mrb[0].mxu0
        %v4322 = vadd.f32 0.0, %v4321
        %v4323 = vpop.f32.mrb[0].mxu0
        %4324 = vmatprep.mubr.f32.mxu0 0.0
        %4325 = vmatmul.mubr.f32.gmra.mrb[0].mxu0 %v4123
        %v4326 = vpop.f32.mrb[0].mxu0
        %v4327 = vadd.f32 0.0, %v4326
        %v4328 = vpop.f32.mrb[0].mxu0
        %4329 = vdwg.mxu0
        %v4331 = vsel %vm3931, %v3980, 0
        %v4334 = vsel %vm3931, %v3981, 0
        %v4337 = vsel %vm3931, %v3982, 0
        %v4340 = vsel %vm3931, %v3983, 0
        %v4343 = vsel %vm3931, %v3984, 0
        %v4346 = vsel %vm3931, %v3985, 0
        %v4349 = vsel %vm3931, %v3986, 0
        %v4352 = vsel %vm3931, %v3987, 0
        %v4355 = vsel %vm3931, %v3988, 0
        %v4358 = vsel %vm3931, %v3989, 0
        %v4361 = vsel %vm3931, %v3990, 0
        %v4364 = vsel %vm3931, %v3991, 0
        %v4367 = vsel %vm3931, %v3992, 0
        %v4370 = vsel %vm3931, %v3993, 0
        %v4373 = vsel %vm3931, %v3994, 0
        %v4376 = vsel %vm3931, %v3995, 0
        %v4379 = vsel %vm3931, %v3996, 0
        %v4382 = vsel %vm3931, %v3997, 0
        %v4385 = vsel %vm3931, %v3998, 0
        %v4388 = vsel %vm3931, %v3999, 0
        %v4391 = vsel %vm3931, %v4000, 0
        %v4394 = vsel %vm3931, %v4001, 0
        %v4397 = vsel %vm3931, %v4002, 0
        %v4400 = vsel %vm3931, %v4003, 0
        %v4403 = vsel %vm3931, %v4004, 0
        %v4406 = vsel %vm3931, %v4005, 0
        %v4409 = vsel %vm3931, %v4006, 0
        %v4412 = vsel %vm3931, %v4007, 0
        %4414 = vmatprep.subr.mxu0 0.0
        %4415 = vmatpush1.msra.mxu0 %v4008
        %4416 = vmatprep.subr.mxu0 0.0
        %4417 = vmatpush1.msra.mxu0 %v4009
        %4418 = vmatprep.subr.mxu0 0.0
        %4419 = vmatpush1.msra.mxu0 0.0
        %4420 = vmatprep.subr.mxu0 0.0
        %4421 = vmatpush1.msra.mxu0 0.0
        %4422 = vmatprep.subr.mxu0 0.0
        %4423 = vmatpush1.msra.mxu0 0.0
        %4424 = vmatprep.subr.mxu0 0.0
        %4425 = vmatpush1.msra.mxu0 0.0
        %4426 = vmatprep.subr.mxu0 0.0
        %4427 = vmatpush1.msra.mxu0 0.0
        %4428 = vmatprep.subr.mxu0 0.0
        %4429 = vmatpush1.msra.mxu0 0.0
        %4430 = vmatprep.subr.mxu0 0.0
        %4431 = vmatpush1.msra.mxu0 0.0
        %4432 = vmatprep.subr.mxu0 0.0
        %4433 = vmatpush1.msra.mxu0 0.0
        %4434 = vmatprep.subr.mxu0 0.0
        %4435 = vmatpush1.msra.mxu0 0.0
        %4436 = vmatprep.subr.mxu0 0.0
        %4437 = vmatpush1.msra.mxu0 0.0
        %4438 = vmatprep.subr.mxu0 0.0
        %4439 = vmatpush1.msra.mxu0 0.0
        %4440 = vmatprep.subr.mxu0 0.0
        %4441 = vmatpush1.msra.mxu0 0.0
        %4442 = vmatprep.subr.mxu0 0.0
        %4443 = vmatpush1.msra.mxu0 0.0
        %4444 = vmatprep.subr.mxu0 0.0
        %4445 = vmatpush1.msra.mxu0 0.0
        %4446 = vmatprep.subr.mxu0 0.0
        %4447 = vmatpush1.msra.mxu0 0.0
        %4448 = vmatprep.subr.mxu0 0.0
        %4449 = vmatpush1.msra.mxu0 0.0
        %4450 = vmatprep.subr.mxu0 0.0
        %4451 = vmatpush1.msra.mxu0 0.0
        %4452 = vmatprep.subr.mxu0 0.0
        %4453 = vmatpush1.msra.mxu0 0.0
        %4454 = vmatprep.subr.mxu0 0.0
        %4455 = vmatpush1.msra.mxu0 0.0
        %4456 = vmatprep.subr.mxu0 0.0
        %4457 = vmatpush1.msra.mxu0 0.0
        %4458 = vmatprep.subr.mxu0 0.0
        %4459 = vmatpush1.msra.mxu0 0.0
        %4460 = vmatprep.subr.mxu0 0.0
        %4461 = vmatpush1.msra.mxu0 0.0
        %4462 = vmatprep.subr.mxu0 0.0
        %4463 = vmatpush1.msra.mxu0 0.0
        %4464 = vmatprep.subr.mxu0 0.0
        %4465 = vmatpush1.msra.mxu0 0.0
        %4466 = vmatprep.subr.mxu0 0.0
        %4467 = vmatpush1.msra.mxu0 0.0
        %4468 = vmatprep.subr.mxu0 0.0
        %4469 = vmatpush1.msra.mxu0 0.0
        %4470 = vmatprep.subr.mxu0 0.0
        %4471 = vmatpush1.msra.mxu0 0.0
        %4472 = vmatprep.subr.mxu0 0.0
        %4473 = vmatpush1.msra.mxu0 0.0
        %4474 = vmatprep.subr.mxu0 0.0
        %4475 = vmatpush1.msra.mxu0 0.0
        %4476 = vmatprep.subr.mxu0 0.0
        %4477 = vmatpush1.msra.mxu0 0.0
        %4478 = vmatprep.mubr.f32.mxu0 0.0
        %4479 = vmatmul.mubr.f32.gmra.mrb[0].mxu0 %v4331
        %v4480 = vpop.f32.mrb[0].mxu0
        %v4481 = vadd.f32 %v4192, %v4480
        %v4482 = vpop.f32.mrb[0].mxu0
        %4483 = vmatprep.mubr.f32.mxu0 0.0
        %4484 = vmatmul.mubr.f32.gmra.mrb[0].mxu0 %v4334
        %v4485 = vpop.f32.mrb[0].mxu0
        %v4486 = vadd.f32 %v4197, %v4485
        %v4487 = vpop.f32.mrb[0].mxu0
        %4488 = vmatprep.mubr.f32.mxu0 0.0
        %4489 = vmatmul.mubr.f32.gmra.mrb[0].mxu0 %v4337
        %v4490 = vpop.f32.mrb[0].mxu0
        %v4491 = vadd.f32 %v4202, %v4490
        %v4492 = vpop.f32.mrb[0].mxu0
        %4493 = vmatprep.mubr.f32.mxu0 0.0
        %4494 = vmatmul.mubr.f32.gmra.mrb[0].mxu0 %v4340
        %v4495 = vpop.f32.mrb[0].mxu0
        %v4496 = vadd.f32 %v4207, %v4495
        %v4497 = vpop.f32.mrb[0].mxu0
        %4498 = vmatprep.mubr.f32.mxu0 0.0
        %4499 = vmatmul.mubr.f32.gmra.mrb[0].mxu0 %v4343
        %v4500 = vpop.f32.mrb[0].mxu0
        %v4501 = vadd.f32 %v4212, %v4500
        %v4502 = vpop.f32.mrb[0].mxu0
        %4503 = vmatprep.mubr.f32.mxu0 0.0
        %4504 = vmatmul.mubr.f32.gmra.mrb[0].mxu0 %v4346
        %v4505 = vpop.f32.mrb[0].mxu0
        %v4506 = vadd.f32 %v4217, %v4505
        %v4507 = vpop.f32.mrb[0].mxu0
        %4508 = vmatprep.mubr.f32.mxu0 0.0
        %4509 = vmatmul.mubr.f32.gmra.mrb[0].mxu0 %v4349
        %v4510 = vpop.f32.mrb[0].mxu0
        %v4511 = vadd.f32 %v4222, %v4510
        %v4512 = vpop.f32.mrb[0].mxu0
        %4513 = vmatprep.mubr.f32.mxu0 0.0
        %4514 = vmatmul.mubr.f32.gmra.mrb[0].mxu0 %v4352
        %v4515 = vpop.f32.mrb[0].mxu0
        %v4516 = vadd.f32 %v4227, %v4515
        %v4517 = vpop.f32.mrb[0].mxu0
        %4518 = vmatprep.mubr.f32.mxu0 0.0
        %4519 = vmatmul.mubr.f32.gmra.mrb[0].mxu0 %v4355
        %v4520 = vpop.f32.mrb[0].mxu0
        %v4521 = vadd.f32 %v4232, %v4520
        %v4522 = vpop.f32.mrb[0].mxu0
        %4523 = vmatprep.mubr.f32.mxu0 0.0
        %4524 = vmatmul.mubr.f32.gmra.mrb[0].mxu0 %v4358
        %v4525 = vpop.f32.mrb[0].mxu0
        %v4526 = vadd.f32 %v4237, %v4525
        %v4527 = vpop.f32.mrb[0].mxu0
        %4528 = vmatprep.mubr.f32.mxu0 0.0
        %4529 = vmatmul.mubr.f32.gmra.mrb[0].mxu0 %v4361
        %v4530 = vpop.f32.mrb[0].mxu0
        %v4531 = vadd.f32 %v4242, %v4530
        %v4532 = vpop.f32.mrb[0].mxu0
        %4533 = vmatprep.mubr.f32.mxu0 0.0
        %4534 = vmatmul.mubr.f32.gmra.mrb[0].mxu0 %v4364
        %v4535 = vpop.f32.mrb[0].mxu0
        %v4536 = vadd.f32 %v4247, %v4535
        %v4537 = vpop.f32.mrb[0].mxu0
        %4538 = vmatprep.mubr.f32.mxu0 0.0
        %4539 = vmatmul.mubr.f32.gmra.mrb[0].mxu0 %v4367
        %v4540 = vpop.f32.mrb[0].mxu0
        %v4541 = vadd.f32 %v4252, %v4540
        %v4542 = vpop.f32.mrb[0].mxu0
        %4543 = vmatprep.mubr.f32.mxu0 0.0
        %4544 = vmatmul.mubr.f32.gmra.mrb[0].mxu0 %v4370
        %v4545 = vpop.f32.mrb[0].mxu0
        %v4546 = vadd.f32 %v4257, %v4545
        %v4547 = vpop.f32.mrb[0].mxu0
        %4548 = vmatprep.mubr.f32.mxu0 0.0
        %4549 = vmatmul.mubr.f32.gmra.mrb[0].mxu0 %v4373
        %v4550 = vpop.f32.mrb[0].mxu0
        %v4551 = vadd.f32 %v4262, %v4550
        %v4552 = vpop.f32.mrb[0].mxu0
        %4553 = vmatprep.mubr.f32.mxu0 0.0
        %4554 = vmatmul.mubr.f32.gmra.mrb[0].mxu0 %v4376
        %v4555 = vpop.f32.mrb[0].mxu0
        %v4556 = vadd.f32 %v4267, %v4555
        %v4557 = vpop.f32.mrb[0].mxu0
        %4558 = vmatprep.mubr.f32.mxu0 0.0
        %4559 = vmatmul.mubr.f32.gmra.mrb[0].mxu0 %v4379
        %v4560 = vpop.f32.mrb[0].mxu0
        %v4561 = vadd.f32 %v4272, %v4560
        %v4562 = vpop.f32.mrb[0].mxu0
        %4563 = vmatprep.mubr.f32.mxu0 0.0
        %4564 = vmatmul.mubr.f32.gmra.mrb[0].mxu0 %v4382
        %v4565 = vpop.f32.mrb[0].mxu0
        %v4566 = vadd.f32 %v4277, %v4565
        %v4567 = vpop.f32.mrb[0].mxu0
        %4568 = vmatprep.mubr.f32.mxu0 0.0
        %4569 = vmatmul.mubr.f32.gmra.mrb[0].mxu0 %v4385
        %v4570 = vpop.f32.mrb[0].mxu0
        %v4571 = vadd.f32 %v4282, %v4570
        %v4572 = vpop.f32.mrb[0].mxu0
        %4573 = vmatprep.mubr.f32.mxu0 0.0
        %4574 = vmatmul.mubr.f32.gmra.mrb[0].mxu0 %v4388
        %v4575 = vpop.f32.mrb[0].mxu0
        %v4576 = vadd.f32 %v4287, %v4575
        %v4577 = vpop.f32.mrb[0].mxu0
        %4578 = vmatprep.mubr.f32.mxu0 0.0
        %4579 = vmatmul.mubr.f32.gmra.mrb[0].mxu0 %v4391
        %v4580 = vpop.f32.mrb[0].mxu0
        %v4581 = vadd.f32 %v4292, %v4580
        %v4582 = vpop.f32.mrb[0].mxu0
        %4583 = vmatprep.mubr.f32.mxu0 0.0
        %4584 = vmatmul.mubr.f32.gmra.mrb[0].mxu0 %v4394
        %v4585 = vpop.f32.mrb[0].mxu0
        %v4586 = vadd.f32 %v4297, %v4585
        %v4587 = vpop.f32.mrb[0].mxu0
        %4588 = vmatprep.mubr.f32.mxu0 0.0
        %4589 = vmatmul.mubr.f32.gmra.mrb[0].mxu0 %v4397
        %v4590 = vpop.f32.mrb[0].mxu0
        %v4591 = vadd.f32 %v4302, %v4590
        %v4592 = vpop.f32.mrb[0].mxu0
        %4593 = vmatprep.mubr.f32.mxu0 0.0
        %4594 = vmatmul.mubr.f32.gmra.mrb[0].mxu0 %v4400
        %v4595 = vpop.f32.mrb[0].mxu0
        %v4596 = vadd.f32 %v4307, %v4595
        %v4597 = vpop.f32.mrb[0].mxu0
        %4598 = vmatprep.mubr.f32.mxu0 0.0
        %4599 = vmatmul.mubr.f32.gmra.mrb[0].mxu0 %v4403
        %v4600 = vpop.f32.mrb[0].mxu0
        %v4601 = vadd.f32 %v4312, %v4600
        %v4602 = vpop.f32.mrb[0].mxu0
        %4603 = vmatprep.mubr.f32.mxu0 0.0
        %4604 = vmatmul.mubr.f32.gmra.mrb[0].mxu0 %v4406
        %v4605 = vpop.f32.mrb[0].mxu0
        %v4606 = vadd.f32 %v4317, %v4605
        %v4607 = vpop.f32.mrb[0].mxu0
        %4608 = vmatprep.mubr.f32.mxu0 0.0
        %4609 = vmatmul.mubr.f32.gmra.mrb[0].mxu0 %v4409
        %v4610 = vpop.f32.mrb[0].mxu0
        %v4611 = vadd.f32 %v4322, %v4610
        %v4612 = vpop.f32.mrb[0].mxu0
        %4613 = vmatprep.mubr.f32.mxu0 0.0
        %4614 = vmatmul.mubr.f32.gmra.mrb[0].mxu0 %v4412
        %v4615 = vpop.f32.mrb[0].mxu0
        %v4616 = vadd.f32 %v4327, %v4615
        %v4617 = vpop.f32.mrb[0].mxu0
        %4618 = vdwg.mxu0
        %v4619 = vld [vmem:[#allocation2 + $0x2] sm:$0xff]
        %v4620 = vld [vmem:[#allocation2 + $0xa] sm:$0xff]
        %v4621 = vld [vmem:[#allocation2 + $0x1a] sm:$0xff]
        %v4622 = vld [vmem:[#allocation2 + $0x22] sm:$0xff]
        %v4623 = vld [vmem:[#allocation2 + $0x32] sm:$0xff]
        %v4624 = vld [vmem:[#allocation2 + $0x3a] sm:$0xff]
        %v4625 = vld [vmem:[#allocation2 + $0x4a] sm:$0xff]
        %v4626 = vld [vmem:[#allocation2 + $0x52] sm:$0xff]
        %v4627 = vld [vmem:[#allocation2 + $0x62] sm:$0xff]
        %v4628 = vld [vmem:[#allocation2 + $0x6a] sm:$0xff]
        %v4629 = vld [vmem:[#allocation2 + $0x7a] sm:$0xff]
        %v4630 = vld [vmem:[#allocation2 + $0x82] sm:$0xff]
        %v4631 = vld [vmem:[#allocation2 + $0x92] sm:$0xff]
        %v4632 = vld [vmem:[#allocation2 + $0x9a] sm:$0xff]
        %v4633 = vld [vmem:[#allocation2 + $0xaa] sm:$0xff]
        %v4634 = vld [vmem:[#allocation2 + $0xb2] sm:$0xff]
        %v4635 = vld [vmem:[#allocation2 + $0xc2] sm:$0xff]
        %v4636 = vld [vmem:[#allocation2 + $0xca] sm:$0xff]
        %v4637 = vld [vmem:[#allocation2 + $0xda] sm:$0xff]
        %v4638 = vld [vmem:[#allocation2 + $0xe2] sm:$0xff]
        %v4639 = vld [vmem:[#allocation2 + $0xf2] sm:$0xff]
        %v4640 = vld [vmem:[#allocation2 + $0xfa] sm:$0xff]
        %v4641 = vld [vmem:[#allocation2 + $0x10a] sm:$0xff]
        %v4642 = vld [vmem:[#allocation2 + $0x112] sm:$0xff]
        %v4643 = vld [vmem:[#allocation2 + $0x122] sm:$0xff]
        %v4644 = vld [vmem:[#allocation2 + $0x12a] sm:$0xff]
        %v4645 = vld [vmem:[#allocation2 + $0x13a] sm:$0xff]
        %v4646 = vld [vmem:[#allocation2 + $0x142] sm:$0xff]
        %s4647 = scalar_lea.vmem %s3, 32
        %v4648 = vld [vmem:[%s4647] sm:$0xff]
        %v4649 = vld [vmem:[%s4647 + $0x8] sm:$0xff]
        %v4651 = vsel %vm3931, %v4619, 0
        %v4654 = vsel %vm3931, %v4620, 0
        %v4657 = vsel %vm3931, %v4621, 0
        %v4660 = vsel %vm3931, %v4622, 0
        %v4663 = vsel %vm3931, %v4623, 0
        %v4666 = vsel %vm3931, %v4624, 0
        %v4669 = vsel %vm3931, %v4625, 0
        %v4672 = vsel %vm3931, %v4626, 0
        %v4675 = vsel %vm3931, %v4627, 0
        %v4678 = vsel %vm3931, %v4628, 0
        %v4681 = vsel %vm3931, %v4629, 0
        %v4684 = vsel %vm3931, %v4630, 0
        %v4687 = vsel %vm3931, %v4631, 0
        %v4690 = vsel %vm3931, %v4632, 0
        %v4693 = vsel %vm3931, %v4633, 0
        %v4696 = vsel %vm3931, %v4634, 0
        %v4699 = vsel %vm3931, %v4635, 0
        %v4702 = vsel %vm3931, %v4636, 0
        %v4705 = vsel %vm3931, %v4637, 0
        %v4708 = vsel %vm3931, %v4638, 0
        %v4711 = vsel %vm3931, %v4639, 0
        %v4714 = vsel %vm3931, %v4640, 0
        %v4717 = vsel %vm3931, %v4641, 0
        %v4720 = vsel %vm3931, %v4642, 0
        %v4723 = vsel %vm3931, %v4643, 0
        %v4726 = vsel %vm3931, %v4644, 0
        %v4729 = vsel %vm3931, %v4645, 0
        %v4732 = vsel %vm3931, %v4646, 0
        %4734 = vmatprep.subr.mxu0 0.0
        %4735 = vmatpush1.msra.mxu0 %v4648
        %4736 = vmatprep.subr.mxu0 0.0
        %4737 = vmatpush1.msra.mxu0 %v4649
        %4738 = vmatprep.subr.mxu0 0.0
        %4739 = vmatpush1.msra.mxu0 0.0
        %4740 = vmatprep.subr.mxu0 0.0
        %4741 = vmatpush1.msra.mxu0 0.0
        %4742 = vmatprep.subr.mxu0 0.0
        %4743 = vmatpush1.msra.mxu0 0.0
        %4744 = vmatprep.subr.mxu0 0.0
        %4745 = vmatpush1.msra.mxu0 0.0
        %4746 = vmatprep.subr.mxu0 0.0
        %4747 = vmatpush1.msra.mxu0 0.0
        %4748 = vmatprep.subr.mxu0 0.0
        %4749 = vmatpush1.msra.mxu0 0.0
        %4750 = vmatprep.subr.mxu0 0.0
        %4751 = vmatpush1.msra.mxu0 0.0
        %4752 = vmatprep.subr.mxu0 0.0
        %4753 = vmatpush1.msra.mxu0 0.0
        %4754 = vmatprep.subr.mxu0 0.0
        %4755 = vmatpush1.msra.mxu0 0.0
        %4756 = vmatprep.subr.mxu0 0.0
        %4757 = vmatpush1.msra.mxu0 0.0
        %4758 = vmatprep.subr.mxu0 0.0
        %4759 = vmatpush1.msra.mxu0 0.0
        %4760 = vmatprep.subr.mxu0 0.0
        %4761 = vmatpush1.msra.mxu0 0.0
        %4762 = vmatprep.subr.mxu0 0.0
        %4763 = vmatpush1.msra.mxu0 0.0
        %4764 = vmatprep.subr.mxu0 0.0
        %4765 = vmatpush1.msra.mxu0 0.0
        %4766 = vmatprep.subr.mxu0 0.0
        %4767 = vmatpush1.msra.mxu0 0.0
        %4768 = vmatprep.subr.mxu0 0.0
        %4769 = vmatpush1.msra.mxu0 0.0
        %4770 = vmatprep.subr.mxu0 0.0
        %4771 = vmatpush1.msra.mxu0 0.0
        %4772 = vmatprep.subr.mxu0 0.0
        %4773 = vmatpush1.msra.mxu0 0.0
        %4774 = vmatprep.subr.mxu0 0.0
        %4775 = vmatpush1.msra.mxu0 0.0
        %4776 = vmatprep.subr.mxu0 0.0
        %4777 = vmatpush1.msra.mxu0 0.0
        %4778 = vmatprep.subr.mxu0 0.0
        %4779 = vmatpush1.msra.mxu0 0.0
        %4780 = vmatprep.subr.mxu0 0.0
        %4781 = vmatpush1.msra.mxu0 0.0
        %4782 = vmatprep.subr.mxu0 0.0
        %4783 = vmatpush1.msra.mxu0 0.0
        %4784 = vmatprep.subr.mxu0 0.0
        %4785 = vmatpush1.msra.mxu0 0.0
        %4786 = vmatprep.subr.mxu0 0.0
        %4787 = vmatpush1.msra.mxu0 0.0
        %4788 = vmatprep.subr.mxu0 0.0
        %4789 = vmatpush1.msra.mxu0 0.0
        %4790 = vmatprep.subr.mxu0 0.0
        %4791 = vmatpush1.msra.mxu0 0.0
        %4792 = vmatprep.subr.mxu0 0.0
        %4793 = vmatpush1.msra.mxu0 0.0
        %4794 = vmatprep.subr.mxu0 0.0
        %4795 = vmatpush1.msra.mxu0 0.0
        %4796 = vmatprep.subr.mxu0 0.0
        %4797 = vmatpush1.msra.mxu0 0.0
        %4798 = vmatprep.mubr.f32.mxu0 0.0
        %4799 = vmatmul.mubr.f32.gmra.mrb[0].mxu0 %v4651
        %v4800 = vpop.f32.mrb[0].mxu0
        %v4801 = vadd.f32 0.0, %v4800
        %v4802 = vpop.f32.mrb[0].mxu0
        %4803 = vmatprep.mubr.f32.mxu0 0.0
        %4804 = vmatmul.mubr.f32.gmra.mrb[0].mxu0 %v4654
        %v4805 = vpop.f32.mrb[0].mxu0
        %v4806 = vadd.f32 0.0, %v4805
        %v4807 = vpop.f32.mrb[0].mxu0
        %4808 = vmatprep.mubr.f32.mxu0 0.0
        %4809 = vmatmul.mubr.f32.gmra.mrb[0].mxu0 %v4657
        %v4810 = vpop.f32.mrb[0].mxu0
        %v4811 = vadd.f32 0.0, %v4810
        %v4812 = vpop.f32.mrb[0].mxu0
        %4813 = vmatprep.mubr.f32.mxu0 0.0
        %4814 = vmatmul.mubr.f32.gmra.mrb[0].mxu0 %v4660
        %v4815 = vpop.f32.mrb[0].mxu0
        %v4816 = vadd.f32 0.0, %v4815
        %v4817 = vpop.f32.mrb[0].mxu0
        %4818 = vmatprep.mubr.f32.mxu0 0.0
        %4819 = vmatmul.mubr.f32.gmra.mrb[0].mxu0 %v4663
        %v4820 = vpop.f32.mrb[0].mxu0
        %v4821 = vadd.f32 0.0, %v4820
        %v4822 = vpop.f32.mrb[0].mxu0
        %4823 = vmatprep.mubr.f32.mxu0 0.0
        %4824 = vmatmul.mubr.f32.gmra.mrb[0].mxu0 %v4666
        %v4825 = vpop.f32.mrb[0].mxu0
        %v4826 = vadd.f32 0.0, %v4825
        %v4827 = vpop.f32.mrb[0].mxu0
        %4828 = vmatprep.mubr.f32.mxu0 0.0
        %4829 = vmatmul.mubr.f32.gmra.mrb[0].mxu0 %v4669
        %v4830 = vpop.f32.mrb[0].mxu0
        %v4831 = vadd.f32 0.0, %v4830
        %v4832 = vpop.f32.mrb[0].mxu0
        %4833 = vmatprep.mubr.f32.mxu0 0.0
        %4834 = vmatmul.mubr.f32.gmra.mrb[0].mxu0 %v4672
        %v4835 = vpop.f32.mrb[0].mxu0
        %v4836 = vadd.f32 0.0, %v4835
        %v4837 = vpop.f32.mrb[0].mxu0
        %4838 = vmatprep.mubr.f32.mxu0 0.0
        %4839 = vmatmul.mubr.f32.gmra.mrb[0].mxu0 %v4675
        %v4840 = vpop.f32.mrb[0].mxu0
        %v4841 = vadd.f32 0.0, %v4840
        %v4842 = vpop.f32.mrb[0].mxu0
        %4843 = vmatprep.mubr.f32.mxu0 0.0
        %4844 = vmatmul.mubr.f32.gmra.mrb[0].mxu0 %v4678
        %v4845 = vpop.f32.mrb[0].mxu0
        %v4846 = vadd.f32 0.0, %v4845
        %v4847 = vpop.f32.mrb[0].mxu0
        %4848 = vmatprep.mubr.f32.mxu0 0.0
        %4849 = vmatmul.mubr.f32.gmra.mrb[0].mxu0 %v4681
        %v4850 = vpop.f32.mrb[0].mxu0
        %v4851 = vadd.f32 0.0, %v4850
        %v4852 = vpop.f32.mrb[0].mxu0
        %4853 = vmatprep.mubr.f32.mxu0 0.0
        %4854 = vmatmul.mubr.f32.gmra.mrb[0].mxu0 %v4684
        %v4855 = vpop.f32.mrb[0].mxu0
        %v4856 = vadd.f32 0.0, %v4855
        %v4857 = vpop.f32.mrb[0].mxu0
        %4858 = vmatprep.mubr.f32.mxu0 0.0
        %4859 = vmatmul.mubr.f32.gmra.mrb[0].mxu0 %v4687
        %v4860 = vpop.f32.mrb[0].mxu0
        %v4861 = vadd.f32 0.0, %v4860
        %v4862 = vpop.f32.mrb[0].mxu0
        %4863 = vmatprep.mubr.f32.mxu0 0.0
        %4864 = vmatmul.mubr.f32.gmra.mrb[0].mxu0 %v4690
        %v4865 = vpop.f32.mrb[0].mxu0
        %v4866 = vadd.f32 0.0, %v4865
        %v4867 = vpop.f32.mrb[0].mxu0
        %4868 = vmatprep.mubr.f32.mxu0 0.0
        %4869 = vmatmul.mubr.f32.gmra.mrb[0].mxu0 %v4693
        %v4870 = vpop.f32.mrb[0].mxu0
        %v4871 = vadd.f32 0.0, %v4870
        %v4872 = vpop.f32.mrb[0].mxu0
        %4873 = vmatprep.mubr.f32.mxu0 0.0
        %4874 = vmatmul.mubr.f32.gmra.mrb[0].mxu0 %v4696
        %v4875 = vpop.f32.mrb[0].mxu0
        %v4876 = vadd.f32 0.0, %v4875
        %v4877 = vpop.f32.mrb[0].mxu0
        %4878 = vmatprep.mubr.f32.mxu0 0.0
        %4879 = vmatmul.mubr.f32.gmra.mrb[0].mxu0 %v4699
        %v4880 = vpop.f32.mrb[0].mxu0
        %v4881 = vadd.f32 0.0, %v4880
        %v4882 = vpop.f32.mrb[0].mxu0
        %4883 = vmatprep.mubr.f32.mxu0 0.0
        %4884 = vmatmul.mubr.f32.gmra.mrb[0].mxu0 %v4702
        %v4885 = vpop.f32.mrb[0].mxu0
        %v4886 = vadd.f32 0.0, %v4885
        %v4887 = vpop.f32.mrb[0].mxu0
        %4888 = vmatprep.mubr.f32.mxu0 0.0
        %4889 = vmatmul.mubr.f32.gmra.mrb[0].mxu0 %v4705
        %v4890 = vpop.f32.mrb[0].mxu0
        %v4891 = vadd.f32 0.0, %v4890
        %v4892 = vpop.f32.mrb[0].mxu0
        %4893 = vmatprep.mubr.f32.mxu0 0.0
        %4894 = vmatmul.mubr.f32.gmra.mrb[0].mxu0 %v4708
        %v4895 = vpop.f32.mrb[0].mxu0
        %v4896 = vadd.f32 0.0, %v4895
        %v4897 = vpop.f32.mrb[0].mxu0
        %4898 = vmatprep.mubr.f32.mxu0 0.0
        %4899 = vmatmul.mubr.f32.gmra.mrb[0].mxu0 %v4711
        %v4900 = vpop.f32.mrb[0].mxu0
        %v4901 = vadd.f32 0.0, %v4900
        %v4902 = vpop.f32.mrb[0].mxu0
        %4903 = vmatprep.mubr.f32.mxu0 0.0
        %4904 = vmatmul.mubr.f32.gmra.mrb[0].mxu0 %v4714
        %v4905 = vpop.f32.mrb[0].mxu0
        %v4906 = vadd.f32 0.0, %v4905
        %v4907 = vpop.f32.mrb[0].mxu0
        %4908 = vmatprep.mubr.f32.mxu0 0.0
        %4909 = vmatmul.mubr.f32.gmra.mrb[0].mxu0 %v4717
        %v4910 = vpop.f32.mrb[0].mxu0
        %v4911 = vadd.f32 0.0, %v4910
        %v4912 = vpop.f32.mrb[0].mxu0
        %4913 = vmatprep.mubr.f32.mxu0 0.0
        %4914 = vmatmul.mubr.f32.gmra.mrb[0].mxu0 %v4720
        %v4915 = vpop.f32.mrb[0].mxu0
        %v4916 = vadd.f32 0.0, %v4915
        %v4917 = vpop.f32.mrb[0].mxu0
        %4918 = vmatprep.mubr.f32.mxu0 0.0
        %4919 = vmatmul.mubr.f32.gmra.mrb[0].mxu0 %v4723
        %v4920 = vpop.f32.mrb[0].mxu0
        %v4921 = vadd.f32 0.0, %v4920
        %v4922 = vpop.f32.mrb[0].mxu0
        %4923 = vmatprep.mubr.f32.mxu0 0.0
        %4924 = vmatmul.mubr.f32.gmra.mrb[0].mxu0 %v4726
        %v4925 = vpop.f32.mrb[0].mxu0
        %v4926 = vadd.f32 0.0, %v4925
        %v4927 = vpop.f32.mrb[0].mxu0
        %4928 = vmatprep.mubr.f32.mxu0 0.0
        %4929 = vmatmul.mubr.f32.gmra.mrb[0].mxu0 %v4729
        %v4930 = vpop.f32.mrb[0].mxu0
        %v4931 = vadd.f32 0.0, %v4930
        %v4932 = vpop.f32.mrb[0].mxu0
        %4933 = vmatprep.mubr.f32.mxu0 0.0
        %4934 = vmatmul.mubr.f32.gmra.mrb[0].mxu0 %v4732
        %v4935 = vpop.f32.mrb[0].mxu0
        %v4936 = vadd.f32 0.0, %v4935
        %v4937 = vpop.f32.mrb[0].mxu0
        %4938 = vdwg.mxu0
        %v4939 = vadd.f32 %v4481, %v4801
        %v4940 = vadd.f32 %v4486, %v4806
        %v4941 = vadd.f32 %v4491, %v4811
        %v4942 = vadd.f32 %v4496, %v4816
        %v4943 = vadd.f32 %v4501, %v4821
        %v4944 = vadd.f32 %v4506, %v4826
        %v4945 = vadd.f32 %v4511, %v4831
        %v4946 = vadd.f32 %v4516, %v4836
        %v4947 = vadd.f32 %v4521, %v4841
        %v4948 = vadd.f32 %v4526, %v4846
        %v4949 = vadd.f32 %v4531, %v4851
        %v4950 = vadd.f32 %v4536, %v4856
        %v4951 = vadd.f32 %v4541, %v4861
        %v4952 = vadd.f32 %v4546, %v4866
        %v4953 = vadd.f32 %v4551, %v4871
        %v4954 = vadd.f32 %v4556, %v4876
        %v4955 = vadd.f32 %v4561, %v4881
        %v4956 = vadd.f32 %v4566, %v4886
        %v4957 = vadd.f32 %v4571, %v4891
        %v4958 = vadd.f32 %v4576, %v4896
        %v4959 = vadd.f32 %v4581, %v4901
        %v4960 = vadd.f32 %v4586, %v4906
        %v4961 = vadd.f32 %v4591, %v4911
        %v4962 = vadd.f32 %v4596, %v4916
        %v4963 = vadd.f32 %v4601, %v4921
        %v4964 = vadd.f32 %v4606, %v4926
        %v4965 = vadd.f32 %v4611, %v4931
        %v4966 = vadd.f32 %v4616, %v4936
        %s4967 = scalar_lea.vmem [#allocation2], 24
        %v4968 = vld [vmem:[%s4967] sm:$0xff]
        %v4969 = vld [vmem:[%s4967 + $0x8] sm:$0xff]
        %v4970 = vld [vmem:[%s4967 + $0x18] sm:$0xff]
        %v4971 = vld [vmem:[%s4967 + $0x20] sm:$0xff]
        %v4972 = vld [vmem:[%s4967 + $0x30] sm:$0xff]
        %v4973 = vld [vmem:[%s4967 + $0x38] sm:$0xff]
        %v4974 = vld [vmem:[%s4967 + $0x48] sm:$0xff]
        %v4975 = vld [vmem:[%s4967 + $0x50] sm:$0xff]
        %v4976 = vld [vmem:[%s4967 + $0x60] sm:$0xff]
        %v4977 = vld [vmem:[%s4967 + $0x68] sm:$0xff]
        %v4978 = vld [vmem:[%s4967 + $0x78] sm:$0xff]
        %v4979 = vld [vmem:[%s4967 + $0x80] sm:$0xff]
        %v4980 = vld [vmem:[%s4967 + $0x90] sm:$0xff]
        %v4981 = vld [vmem:[%s4967 + $0x98] sm:$0xff]
        %v4982 = vld [vmem:[%s4967 + $0xa8] sm:$0xff]
        %v4983 = vld [vmem:[%s4967 + $0xb0] sm:$0xff]
        %v4984 = vld [vmem:[%s4967 + $0xc0] sm:$0xff]
        %v4985 = vld [vmem:[%s4967 + $0xc8] sm:$0xff]
        %v4986 = vld [vmem:[%s4967 + $0xd8] sm:$0xff]
        %v4987 = vld [vmem:[%s4967 + $0xe0] sm:$0xff]
        %v4988 = vld [vmem:[%s4967 + $0xf0] sm:$0xff]
        %v4989 = vld [vmem:[%s4967 + $0xf8] sm:$0xff]
        %v4990 = vld [vmem:[%s4967 + $0x108] sm:$0xff]
        %v4991 = vld [vmem:[%s4967 + $0x110] sm:$0xff]
        %v4992 = vld [vmem:[%s4967 + $0x120] sm:$0xff]
        %v4993 = vld [vmem:[%s4967 + $0x128] sm:$0xff]
        %v4994 = vld [vmem:[%s4967 + $0x138] sm:$0xff]
        %v4995 = vld [vmem:[%s4967 + $0x140] sm:$0xff]
        %s4996 = scalar_lea.vmem %s3, 48
        %v4997 = vld [vmem:[%s4996] sm:$0xff]
        %v4998 = vld [vmem:[%s4996 + $0x8] sm:$0xff]
        %v5000 = vsel %vm3931, %v4968, 0
        %v5003 = vsel %vm3931, %v4969, 0
        %v5006 = vsel %vm3931, %v4970, 0
        %v5009 = vsel %vm3931, %v4971, 0
        %v5012 = vsel %vm3931, %v4972, 0
        %v5015 = vsel %vm3931, %v4973, 0
        %v5018 = vsel %vm3931, %v4974, 0
        %v5021 = vsel %vm3931, %v4975, 0
        %v5024 = vsel %vm3931, %v4976, 0
        %v5027 = vsel %vm3931, %v4977, 0
        %v5030 = vsel %vm3931, %v4978, 0
        %v5033 = vsel %vm3931, %v4979, 0
        %v5036 = vsel %vm3931, %v4980, 0
        %v5039 = vsel %vm3931, %v4981, 0
        %v5042 = vsel %vm3931, %v4982, 0
        %v5045 = vsel %vm3931, %v4983, 0
        %v5048 = vsel %vm3931, %v4984, 0
        %v5051 = vsel %vm3931, %v4985, 0
        %v5054 = vsel %vm3931, %v4986, 0
        %v5057 = vsel %vm3931, %v4987, 0
        %v5060 = vsel %vm3931, %v4988, 0
        %v5063 = vsel %vm3931, %v4989, 0
        %v5066 = vsel %vm3931, %v4990, 0
        %v5069 = vsel %vm3931, %v4991, 0
        %v5072 = vsel %vm3931, %v4992, 0
        %v5075 = vsel %vm3931, %v4993, 0
        %v5078 = vsel %vm3931, %v4994, 0
        %v5081 = vsel %vm3931, %v4995, 0
        %5083 = vmatprep.subr.mxu0 0.0
        %5084 = vmatpush1.msra.mxu0 %v4997
        %5085 = vmatprep.subr.mxu0 0.0
        %5086 = vmatpush1.msra.mxu0 %v4998
        %5087 = vmatprep.subr.mxu0 0.0
        %5088 = vmatpush1.msra.mxu0 0.0
        %5089 = vmatprep.subr.mxu0 0.0
        %5090 = vmatpush1.msra.mxu0 0.0
        %5091 = vmatprep.subr.mxu0 0.0
        %5092 = vmatpush1.msra.mxu0 0.0
        %5093 = vmatprep.subr.mxu0 0.0
        %5094 = vmatpush1.msra.mxu0 0.0
        %5095 = vmatprep.subr.mxu0 0.0
        %5096 = vmatpush1.msra.mxu0 0.0
        %5097 = vmatprep.subr.mxu0 0.0
        %5098 = vmatpush1.msra.mxu0 0.0
        %5099 = vmatprep.subr.mxu0 0.0
        %5100 = vmatpush1.msra.mxu0 0.0
        %5101 = vmatprep.subr.mxu0 0.0
        %5102 = vmatpush1.msra.mxu0 0.0
        %5103 = vmatprep.subr.mxu0 0.0
        %5104 = vmatpush1.msra.mxu0 0.0
        %5105 = vmatprep.subr.mxu0 0.0
        %5106 = vmatpush1.msra.mxu0 0.0
        %5107 = vmatprep.subr.mxu0 0.0
        %5108 = vmatpush1.msra.mxu0 0.0
        %5109 = vmatprep.subr.mxu0 0.0
        %5110 = vmatpush1.msra.mxu0 0.0
        %5111 = vmatprep.subr.mxu0 0.0
        %5112 = vmatpush1.msra.mxu0 0.0
        %5113 = vmatprep.subr.mxu0 0.0
        %5114 = vmatpush1.msra.mxu0 0.0
        %5115 = vmatprep.subr.mxu0 0.0
        %5116 = vmatpush1.msra.mxu0 0.0
        %5117 = vmatprep.subr.mxu0 0.0
        %5118 = vmatpush1.msra.mxu0 0.0
        %5119 = vmatprep.subr.mxu0 0.0
        %5120 = vmatpush1.msra.mxu0 0.0
        %5121 = vmatprep.subr.mxu0 0.0
        %5122 = vmatpush1.msra.mxu0 0.0
        %5123 = vmatprep.subr.mxu0 0.0
        %5124 = vmatpush1.msra.mxu0 0.0
        %5125 = vmatprep.subr.mxu0 0.0
        %5126 = vmatpush1.msra.mxu0 0.0
        %5127 = vmatprep.subr.mxu0 0.0
        %5128 = vmatpush1.msra.mxu0 0.0
        %5129 = vmatprep.subr.mxu0 0.0
        %5130 = vmatpush1.msra.mxu0 0.0
        %5131 = vmatprep.subr.mxu0 0.0
        %5132 = vmatpush1.msra.mxu0 0.0
        %5133 = vmatprep.subr.mxu0 0.0
        %5134 = vmatpush1.msra.mxu0 0.0
        %5135 = vmatprep.subr.mxu0 0.0
        %5136 = vmatpush1.msra.mxu0 0.0
        %5137 = vmatprep.subr.mxu0 0.0
        %5138 = vmatpush1.msra.mxu0 0.0
        %5139 = vmatprep.subr.mxu0 0.0
        %5140 = vmatpush1.msra.mxu0 0.0
        %5141 = vmatprep.subr.mxu0 0.0
        %5142 = vmatpush1.msra.mxu0 0.0
        %5143 = vmatprep.subr.mxu0 0.0
        %5144 = vmatpush1.msra.mxu0 0.0
        %5145 = vmatprep.subr.mxu0 0.0
        %5146 = vmatpush1.msra.mxu0 0.0
        %5147 = vmatprep.mubr.f32.mxu0 0.0
        %5148 = vmatmul.mubr.f32.gmra.mrb[0].mxu0 %v5000
        %v5149 = vpop.f32.mrb[0].mxu0
        %v5150 = vadd.f32 0.0, %v5149
        %v5151 = vpop.f32.mrb[0].mxu0
        %5152 = vmatprep.mubr.f32.mxu0 0.0
        %5153 = vmatmul.mubr.f32.gmra.mrb[0].mxu0 %v5003
        %v5154 = vpop.f32.mrb[0].mxu0
        %v5155 = vadd.f32 0.0, %v5154
        %v5156 = vpop.f32.mrb[0].mxu0
        %5157 = vmatprep.mubr.f32.mxu0 0.0
        %5158 = vmatmul.mubr.f32.gmra.mrb[0].mxu0 %v5006
        %v5159 = vpop.f32.mrb[0].mxu0
        %v5160 = vadd.f32 0.0, %v5159
        %v5161 = vpop.f32.mrb[0].mxu0
        %5162 = vmatprep.mubr.f32.mxu0 0.0
        %5163 = vmatmul.mubr.f32.gmra.mrb[0].mxu0 %v5009
        %v5164 = vpop.f32.mrb[0].mxu0
        %v5165 = vadd.f32 0.0, %v5164
        %v5166 = vpop.f32.mrb[0].mxu0
        %5167 = vmatprep.mubr.f32.mxu0 0.0
        %5168 = vmatmul.mubr.f32.gmra.mrb[0].mxu0 %v5012
        %v5169 = vpop.f32.mrb[0].mxu0
        %v5170 = vadd.f32 0.0, %v5169
        %v5171 = vpop.f32.mrb[0].mxu0
        %5172 = vmatprep.mubr.f32.mxu0 0.0
        %5173 = vmatmul.mubr.f32.gmra.mrb[0].mxu0 %v5015
        %v5174 = vpop.f32.mrb[0].mxu0
        %v5175 = vadd.f32 0.0, %v5174
        %v5176 = vpop.f32.mrb[0].mxu0
        %5177 = vmatprep.mubr.f32.mxu0 0.0
        %5178 = vmatmul.mubr.f32.gmra.mrb[0].mxu0 %v5018
        %v5179 = vpop.f32.mrb[0].mxu0
        %v5180 = vadd.f32 0.0, %v5179
        %v5181 = vpop.f32.mrb[0].mxu0
        %5182 = vmatprep.mubr.f32.mxu0 0.0
        %5183 = vmatmul.mubr.f32.gmra.mrb[0].mxu0 %v5021
        %v5184 = vpop.f32.mrb[0].mxu0
        %v5185 = vadd.f32 0.0, %v5184
        %v5186 = vpop.f32.mrb[0].mxu0
        %5187 = vmatprep.mubr.f32.mxu0 0.0
        %5188 = vmatmul.mubr.f32.gmra.mrb[0].mxu0 %v5024
        %v5189 = vpop.f32.mrb[0].mxu0
        %v5190 = vadd.f32 0.0, %v5189
        %v5191 = vpop.f32.mrb[0].mxu0
        %5192 = vmatprep.mubr.f32.mxu0 0.0
        %5193 = vmatmul.mubr.f32.gmra.mrb[0].mxu0 %v5027
        %v5194 = vpop.f32.mrb[0].mxu0
        %v5195 = vadd.f32 0.0, %v5194
        %v5196 = vpop.f32.mrb[0].mxu0
        %5197 = vmatprep.mubr.f32.mxu0 0.0
        %5198 = vmatmul.mubr.f32.gmra.mrb[0].mxu0 %v5030
        %v5199 = vpop.f32.mrb[0].mxu0
        %v5200 = vadd.f32 0.0, %v5199
        %v5201 = vpop.f32.mrb[0].mxu0
        %5202 = vmatprep.mubr.f32.mxu0 0.0
        %5203 = vmatmul.mubr.f32.gmra.mrb[0].mxu0 %v5033
        %v5204 = vpop.f32.mrb[0].mxu0
        %v5205 = vadd.f32 0.0, %v5204
        %v5206 = vpop.f32.mrb[0].mxu0
        %5207 = vmatprep.mubr.f32.mxu0 0.0
        %5208 = vmatmul.mubr.f32.gmra.mrb[0].mxu0 %v5036
        %v5209 = vpop.f32.mrb[0].mxu0
        %v5210 = vadd.f32 0.0, %v5209
        %v5211 = vpop.f32.mrb[0].mxu0
        %5212 = vmatprep.mubr.f32.mxu0 0.0
        %5213 = vmatmul.mubr.f32.gmra.mrb[0].mxu0 %v5039
        %v5214 = vpop.f32.mrb[0].mxu0
        %v5215 = vadd.f32 0.0, %v5214
        %v5216 = vpop.f32.mrb[0].mxu0
        %5217 = vmatprep.mubr.f32.mxu0 0.0
        %5218 = vmatmul.mubr.f32.gmra.mrb[0].mxu0 %v5042
        %v5219 = vpop.f32.mrb[0].mxu0
        %v5220 = vadd.f32 0.0, %v5219
        %v5221 = vpop.f32.mrb[0].mxu0
        %5222 = vmatprep.mubr.f32.mxu0 0.0
        %5223 = vmatmul.mubr.f32.gmra.mrb[0].mxu0 %v5045
        %v5224 = vpop.f32.mrb[0].mxu0
        %v5225 = vadd.f32 0.0, %v5224
        %v5226 = vpop.f32.mrb[0].mxu0
        %5227 = vmatprep.mubr.f32.mxu0 0.0
        %5228 = vmatmul.mubr.f32.gmra.mrb[0].mxu0 %v5048
        %v5229 = vpop.f32.mrb[0].mxu0
        %v5230 = vadd.f32 0.0, %v5229
        %v5231 = vpop.f32.mrb[0].mxu0
        %5232 = vmatprep.mubr.f32.mxu0 0.0
        %5233 = vmatmul.mubr.f32.gmra.mrb[0].mxu0 %v5051
        %v5234 = vpop.f32.mrb[0].mxu0
        %v5235 = vadd.f32 0.0, %v5234
        %v5236 = vpop.f32.mrb[0].mxu0
        %5237 = vmatprep.mubr.f32.mxu0 0.0
        %5238 = vmatmul.mubr.f32.gmra.mrb[0].mxu0 %v5054
        %v5239 = vpop.f32.mrb[0].mxu0
        %v5240 = vadd.f32 0.0, %v5239
        %v5241 = vpop.f32.mrb[0].mxu0
        %5242 = vmatprep.mubr.f32.mxu0 0.0
        %5243 = vmatmul.mubr.f32.gmra.mrb[0].mxu0 %v5057
        %v5244 = vpop.f32.mrb[0].mxu0
        %v5245 = vadd.f32 0.0, %v5244
        %v5246 = vpop.f32.mrb[0].mxu0
        %5247 = vmatprep.mubr.f32.mxu0 0.0
        %5248 = vmatmul.mubr.f32.gmra.mrb[0].mxu0 %v5060
        %v5249 = vpop.f32.mrb[0].mxu0
        %v5250 = vadd.f32 0.0, %v5249
        %v5251 = vpop.f32.mrb[0].mxu0
        %5252 = vmatprep.mubr.f32.mxu0 0.0
        %5253 = vmatmul.mubr.f32.gmra.mrb[0].mxu0 %v5063
        %v5254 = vpop.f32.mrb[0].mxu0
        %v5255 = vadd.f32 0.0, %v5254
        %v5256 = vpop.f32.mrb[0].mxu0
        %5257 = vmatprep.mubr.f32.mxu0 0.0
        %5258 = vmatmul.mubr.f32.gmra.mrb[0].mxu0 %v5066
        %v5259 = vpop.f32.mrb[0].mxu0
        %v5260 = vadd.f32 0.0, %v5259
        %v5261 = vpop.f32.mrb[0].mxu0
        %5262 = vmatprep.mubr.f32.mxu0 0.0
        %5263 = vmatmul.mubr.f32.gmra.mrb[0].mxu0 %v5069
        %v5264 = vpop.f32.mrb[0].mxu0
        %v5265 = vadd.f32 0.0, %v5264
        %v5266 = vpop.f32.mrb[0].mxu0
        %5267 = vmatprep.mubr.f32.mxu0 0.0
        %5268 = vmatmul.mubr.f32.gmra.mrb[0].mxu0 %v5072
        %v5269 = vpop.f32.mrb[0].mxu0
        %v5270 = vadd.f32 0.0, %v5269
        %v5271 = vpop.f32.mrb[0].mxu0
        %5272 = vmatprep.mubr.f32.mxu0 0.0
        %5273 = vmatmul.mubr.f32.gmra.mrb[0].mxu0 %v5075
        %v5274 = vpop.f32.mrb[0].mxu0
        %v5275 = vadd.f32 0.0, %v5274
        %v5276 = vpop.f32.mrb[0].mxu0
        %5277 = vmatprep.mubr.f32.mxu0 0.0
        %5278 = vmatmul.mubr.f32.gmra.mrb[0].mxu0 %v5078
        %v5279 = vpop.f32.mrb[0].mxu0
        %v5280 = vadd.f32 0.0, %v5279
        %v5281 = vpop.f32.mrb[0].mxu0
        %5282 = vmatprep.mubr.f32.mxu0 0.0
        %5283 = vmatmul.mubr.f32.gmra.mrb[0].mxu0 %v5081
        %v5284 = vpop.f32.mrb[0].mxu0
        %v5285 = vadd.f32 0.0, %v5284
        %v5286 = vpop.f32.mrb[0].mxu0
        %5287 = vdwg.mxu0
        %v5288 = vadd.f32 %v4939, %v5150
        %v5289 = vadd.f32 %v4940, %v5155
        %v5290 = vadd.f32 %v4941, %v5160
        %v5291 = vadd.f32 %v4942, %v5165
        %v5292 = vadd.f32 %v4943, %v5170
        %v5293 = vadd.f32 %v4944, %v5175
        %v5294 = vadd.f32 %v4945, %v5180
        %v5295 = vadd.f32 %v4946, %v5185
        %v5296 = vadd.f32 %v4947, %v5190
        %v5297 = vadd.f32 %v4948, %v5195
        %v5298 = vadd.f32 %v4949, %v5200
        %v5299 = vadd.f32 %v4950, %v5205
        %v5300 = vadd.f32 %v4951, %v5210
        %v5301 = vadd.f32 %v4952, %v5215
        %v5302 = vadd.f32 %v4953, %v5220
        %v5303 = vadd.f32 %v4954, %v5225
        %v5304 = vadd.f32 %v4955, %v5230
        %v5305 = vadd.f32 %v4956, %v5235
        %v5306 = vadd.f32 %v4957, %v5240
        %v5307 = vadd.f32 %v4958, %v5245
        %v5308 = vadd.f32 %v4959, %v5250
        %v5309 = vadd.f32 %v4960, %v5255
        %v5310 = vadd.f32 %v4961, %v5260
        %v5311 = vadd.f32 %v4962, %v5265
        %v5312 = vadd.f32 %v4963, %v5270
        %v5313 = vadd.f32 %v4964, %v5275
        %v5314 = vadd.f32 %v4965, %v5280
        %v5315 = vadd.f32 %v4966, %v5285
        %v5316 = vld [vmem:[%s4967 + $0x1] sm:$0xff]
        %v5317 = vld [vmem:[%s4967 + $0x9] sm:$0xff]
        %v5318 = vld [vmem:[%s4967 + $0x19] sm:$0xff]
        %v5319 = vld [vmem:[%s4967 + $0x21] sm:$0xff]
        %v5320 = vld [vmem:[%s4967 + $0x31] sm:$0xff]
        %v5321 = vld [vmem:[%s4967 + $0x39] sm:$0xff]
        %v5322 = vld [vmem:[%s4967 + $0x49] sm:$0xff]
        %v5323 = vld [vmem:[%s4967 + $0x51] sm:$0xff]
        %v5324 = vld [vmem:[%s4967 + $0x61] sm:$0xff]
        %v5325 = vld [vmem:[%s4967 + $0x69] sm:$0xff]
        %v5326 = vld [vmem:[%s4967 + $0x79] sm:$0xff]
        %v5327 = vld [vmem:[%s4967 + $0x81] sm:$0xff]
        %v5328 = vld [vmem:[%s4967 + $0x91] sm:$0xff]
        %v5329 = vld [vmem:[%s4967 + $0x99] sm:$0xff]
        %v5330 = vld [vmem:[%s4967 + $0xa9] sm:$0xff]
        %v5331 = vld [vmem:[%s4967 + $0xb1] sm:$0xff]
        %v5332 = vld [vmem:[%s4967 + $0xc1] sm:$0xff]
        %v5333 = vld [vmem:[%s4967 + $0xc9] sm:$0xff]
        %v5334 = vld [vmem:[%s4967 + $0xd9] sm:$0xff]
        %v5335 = vld [vmem:[%s4967 + $0xe1] sm:$0xff]
        %v5336 = vld [vmem:[%s4967 + $0xf1] sm:$0xff]
        %v5337 = vld [vmem:[%s4967 + $0xf9] sm:$0xff]
        %v5338 = vld [vmem:[%s4967 + $0x109] sm:$0xff]
        %v5339 = vld [vmem:[%s4967 + $0x111] sm:$0xff]
        %v5340 = vld [vmem:[%s4967 + $0x121] sm:$0xff]
        %v5341 = vld [vmem:[%s4967 + $0x129] sm:$0xff]
        %v5342 = vld [vmem:[%s4967 + $0x139] sm:$0xff]
        %v5343 = vld [vmem:[%s4967 + $0x141] sm:$0xff]
        %s5344 = scalar_lea.vmem %s3, 64
        %v5345 = vld [vmem:[%s5344] sm:$0xff]
        %v5346 = vld [vmem:[%s5344 + $0x8] sm:$0xff]
        %v5348 = vsel %vm3931, %v5316, 0
        %v5351 = vsel %vm3931, %v5317, 0
        %v5354 = vsel %vm3931, %v5318, 0
        %v5357 = vsel %vm3931, %v5319, 0
        %v5360 = vsel %vm3931, %v5320, 0
        %v5363 = vsel %vm3931, %v5321, 0
        %v5366 = vsel %vm3931, %v5322, 0
        %v5369 = vsel %vm3931, %v5323, 0
        %v5372 = vsel %vm3931, %v5324, 0
        %v5375 = vsel %vm3931, %v5325, 0
        %v5378 = vsel %vm3931, %v5326, 0
        %v5381 = vsel %vm3931, %v5327, 0
        %v5384 = vsel %vm3931, %v5328, 0
        %v5387 = vsel %vm3931, %v5329, 0
        %v5390 = vsel %vm3931, %v5330, 0
        %v5393 = vsel %vm3931, %v5331, 0
        %v5396 = vsel %vm3931, %v5332, 0
        %v5399 = vsel %vm3931, %v5333, 0
        %v5402 = vsel %vm3931, %v5334, 0
        %v5405 = vsel %vm3931, %v5335, 0
        %v5408 = vsel %vm3931, %v5336, 0
        %v5411 = vsel %vm3931, %v5337, 0
        %v5414 = vsel %vm3931, %v5338, 0
        %v5417 = vsel %vm3931, %v5339, 0
        %v5420 = vsel %vm3931, %v5340, 0
        %v5423 = vsel %vm3931, %v5341, 0
        %v5426 = vsel %vm3931, %v5342, 0
        %v5429 = vsel %vm3931, %v5343, 0
        %5431 = vmatprep.subr.mxu0 0.0
        %5432 = vmatpush1.msra.mxu0 %v5345
        %5433 = vmatprep.subr.mxu0 0.0
        %5434 = vmatpush1.msra.mxu0 %v5346
        %5435 = vmatprep.subr.mxu0 0.0
        %5436 = vmatpush1.msra.mxu0 0.0
        %5437 = vmatprep.subr.mxu0 0.0
        %5438 = vmatpush1.msra.mxu0 0.0
        %5439 = vmatprep.subr.mxu0 0.0
        %5440 = vmatpush1.msra.mxu0 0.0
        %5441 = vmatprep.subr.mxu0 0.0
        %5442 = vmatpush1.msra.mxu0 0.0
        %5443 = vmatprep.subr.mxu0 0.0
        %5444 = vmatpush1.msra.mxu0 0.0
        %5445 = vmatprep.subr.mxu0 0.0
        %5446 = vmatpush1.msra.mxu0 0.0
        %5447 = vmatprep.subr.mxu0 0.0
        %5448 = vmatpush1.msra.mxu0 0.0
        %5449 = vmatprep.subr.mxu0 0.0
        %5450 = vmatpush1.msra.mxu0 0.0
        %5451 = vmatprep.subr.mxu0 0.0
        %5452 = vmatpush1.msra.mxu0 0.0
        %5453 = vmatprep.subr.mxu0 0.0
        %5454 = vmatpush1.msra.mxu0 0.0
        %5455 = vmatprep.subr.mxu0 0.0
        %5456 = vmatpush1.msra.mxu0 0.0
        %5457 = vmatprep.subr.mxu0 0.0
        %5458 = vmatpush1.msra.mxu0 0.0
        %5459 = vmatprep.subr.mxu0 0.0
        %5460 = vmatpush1.msra.mxu0 0.0
        %5461 = vmatprep.subr.mxu0 0.0
        %5462 = vmatpush1.msra.mxu0 0.0
        %5463 = vmatprep.subr.mxu0 0.0
        %5464 = vmatpush1.msra.mxu0 0.0
        %5465 = vmatprep.subr.mxu0 0.0
        %5466 = vmatpush1.msra.mxu0 0.0
        %5467 = vmatprep.subr.mxu0 0.0
        %5468 = vmatpush1.msra.mxu0 0.0
        %5469 = vmatprep.subr.mxu0 0.0
        %5470 = vmatpush1.msra.mxu0 0.0
        %5471 = vmatprep.subr.mxu0 0.0
        %5472 = vmatpush1.msra.mxu0 0.0
        %5473 = vmatprep.subr.mxu0 0.0
        %5474 = vmatpush1.msra.mxu0 0.0
        %5475 = vmatprep.subr.mxu0 0.0
        %5476 = vmatpush1.msra.mxu0 0.0
        %5477 = vmatprep.subr.mxu0 0.0
        %5478 = vmatpush1.msra.mxu0 0.0
        %5479 = vmatprep.subr.mxu0 0.0
        %5480 = vmatpush1.msra.mxu0 0.0
        %5481 = vmatprep.subr.mxu0 0.0
        %5482 = vmatpush1.msra.mxu0 0.0
        %5483 = vmatprep.subr.mxu0 0.0
        %5484 = vmatpush1.msra.mxu0 0.0
        %5485 = vmatprep.subr.mxu0 0.0
        %5486 = vmatpush1.msra.mxu0 0.0
        %5487 = vmatprep.subr.mxu0 0.0
        %5488 = vmatpush1.msra.mxu0 0.0
        %5489 = vmatprep.subr.mxu0 0.0
        %5490 = vmatpush1.msra.mxu0 0.0
        %5491 = vmatprep.subr.mxu0 0.0
        %5492 = vmatpush1.msra.mxu0 0.0
        %5493 = vmatprep.subr.mxu0 0.0
        %5494 = vmatpush1.msra.mxu0 0.0
        %5495 = vmatprep.mubr.f32.mxu0 0.0
        %5496 = vmatmul.mubr.f32.gmra.mrb[0].mxu0 %v5348
        %v5497 = vpop.f32.mrb[0].mxu0
        %v5498 = vadd.f32 0.0, %v5497
        %v5499 = vpop.f32.mrb[0].mxu0
        %5500 = vmatprep.mubr.f32.mxu0 0.0
        %5501 = vmatmul.mubr.f32.gmra.mrb[0].mxu0 %v5351
        %v5502 = vpop.f32.mrb[0].mxu0
        %v5503 = vadd.f32 0.0, %v5502
        %v5504 = vpop.f32.mrb[0].mxu0
        %5505 = vmatprep.mubr.f32.mxu0 0.0
        %5506 = vmatmul.mubr.f32.gmra.mrb[0].mxu0 %v5354
        %v5507 = vpop.f32.mrb[0].mxu0
        %v5508 = vadd.f32 0.0, %v5507
        %v5509 = vpop.f32.mrb[0].mxu0
        %5510 = vmatprep.mubr.f32.mxu0 0.0
        %5511 = vmatmul.mubr.f32.gmra.mrb[0].mxu0 %v5357
        %v5512 = vpop.f32.mrb[0].mxu0
        %v5513 = vadd.f32 0.0, %v5512
        %v5514 = vpop.f32.mrb[0].mxu0
        %5515 = vmatprep.mubr.f32.mxu0 0.0
        %5516 = vmatmul.mubr.f32.gmra.mrb[0].mxu0 %v5360
        %v5517 = vpop.f32.mrb[0].mxu0
        %v5518 = vadd.f32 0.0, %v5517
        %v5519 = vpop.f32.mrb[0].mxu0
        %5520 = vmatprep.mubr.f32.mxu0 0.0
        %5521 = vmatmul.mubr.f32.gmra.mrb[0].mxu0 %v5363
        %v5522 = vpop.f32.mrb[0].mxu0
        %v5523 = vadd.f32 0.0, %v5522
        %v5524 = vpop.f32.mrb[0].mxu0
        %5525 = vmatprep.mubr.f32.mxu0 0.0
        %5526 = vmatmul.mubr.f32.gmra.mrb[0].mxu0 %v5366
        %v5527 = vpop.f32.mrb[0].mxu0
        %v5528 = vadd.f32 0.0, %v5527
        %v5529 = vpop.f32.mrb[0].mxu0
        %5530 = vmatprep.mubr.f32.mxu0 0.0
        %5531 = vmatmul.mubr.f32.gmra.mrb[0].mxu0 %v5369
        %v5532 = vpop.f32.mrb[0].mxu0
        %v5533 = vadd.f32 0.0, %v5532
        %v5534 = vpop.f32.mrb[0].mxu0
        %5535 = vmatprep.mubr.f32.mxu0 0.0
        %5536 = vmatmul.mubr.f32.gmra.mrb[0].mxu0 %v5372
        %v5537 = vpop.f32.mrb[0].mxu0
        %v5538 = vadd.f32 0.0, %v5537
        %v5539 = vpop.f32.mrb[0].mxu0
        %5540 = vmatprep.mubr.f32.mxu0 0.0
        %5541 = vmatmul.mubr.f32.gmra.mrb[0].mxu0 %v5375
        %v5542 = vpop.f32.mrb[0].mxu0
        %v5543 = vadd.f32 0.0, %v5542
        %v5544 = vpop.f32.mrb[0].mxu0
        %5545 = vmatprep.mubr.f32.mxu0 0.0
        %5546 = vmatmul.mubr.f32.gmra.mrb[0].mxu0 %v5378
        %v5547 = vpop.f32.mrb[0].mxu0
        %v5548 = vadd.f32 0.0, %v5547
        %v5549 = vpop.f32.mrb[0].mxu0
        %5550 = vmatprep.mubr.f32.mxu0 0.0
        %5551 = vmatmul.mubr.f32.gmra.mrb[0].mxu0 %v5381
        %v5552 = vpop.f32.mrb[0].mxu0
        %v5553 = vadd.f32 0.0, %v5552
        %v5554 = vpop.f32.mrb[0].mxu0
        %5555 = vmatprep.mubr.f32.mxu0 0.0
        %5556 = vmatmul.mubr.f32.gmra.mrb[0].mxu0 %v5384
        %v5557 = vpop.f32.mrb[0].mxu0
        %v5558 = vadd.f32 0.0, %v5557
        %v5559 = vpop.f32.mrb[0].mxu0
        %5560 = vmatprep.mubr.f32.mxu0 0.0
        %5561 = vmatmul.mubr.f32.gmra.mrb[0].mxu0 %v5387
        %v5562 = vpop.f32.mrb[0].mxu0
        %v5563 = vadd.f32 0.0, %v5562
        %v5564 = vpop.f32.mrb[0].mxu0
        %5565 = vmatprep.mubr.f32.mxu0 0.0
        %5566 = vmatmul.mubr.f32.gmra.mrb[0].mxu0 %v5390
        %v5567 = vpop.f32.mrb[0].mxu0
        %v5568 = vadd.f32 0.0, %v5567
        %v5569 = vpop.f32.mrb[0].mxu0
        %5570 = vmatprep.mubr.f32.mxu0 0.0
        %5571 = vmatmul.mubr.f32.gmra.mrb[0].mxu0 %v5393
        %v5572 = vpop.f32.mrb[0].mxu0
        %v5573 = vadd.f32 0.0, %v5572
        %v5574 = vpop.f32.mrb[0].mxu0
        %5575 = vmatprep.mubr.f32.mxu0 0.0
        %5576 = vmatmul.mubr.f32.gmra.mrb[0].mxu0 %v5396
        %v5577 = vpop.f32.mrb[0].mxu0
        %v5578 = vadd.f32 0.0, %v5577
        %v5579 = vpop.f32.mrb[0].mxu0
        %5580 = vmatprep.mubr.f32.mxu0 0.0
        %5581 = vmatmul.mubr.f32.gmra.mrb[0].mxu0 %v5399
        %v5582 = vpop.f32.mrb[0].mxu0
        %v5583 = vadd.f32 0.0, %v5582
        %v5584 = vpop.f32.mrb[0].mxu0
        %5585 = vmatprep.mubr.f32.mxu0 0.0
        %5586 = vmatmul.mubr.f32.gmra.mrb[0].mxu0 %v5402
        %v5587 = vpop.f32.mrb[0].mxu0
        %v5588 = vadd.f32 0.0, %v5587
        %v5589 = vpop.f32.mrb[0].mxu0
        %5590 = vmatprep.mubr.f32.mxu0 0.0
        %5591 = vmatmul.mubr.f32.gmra.mrb[0].mxu0 %v5405
        %v5592 = vpop.f32.mrb[0].mxu0
        %v5593 = vadd.f32 0.0, %v5592
        %v5594 = vpop.f32.mrb[0].mxu0
        %5595 = vmatprep.mubr.f32.mxu0 0.0
        %5596 = vmatmul.mubr.f32.gmra.mrb[0].mxu0 %v5408
        %v5597 = vpop.f32.mrb[0].mxu0
        %v5598 = vadd.f32 0.0, %v5597
        %v5599 = vpop.f32.mrb[0].mxu0
        %5600 = vmatprep.mubr.f32.mxu0 0.0
        %5601 = vmatmul.mubr.f32.gmra.mrb[0].mxu0 %v5411
        %v5602 = vpop.f32.mrb[0].mxu0
        %v5603 = vadd.f32 0.0, %v5602
        %v5604 = vpop.f32.mrb[0].mxu0
        %5605 = vmatprep.mubr.f32.mxu0 0.0
        %5606 = vmatmul.mubr.f32.gmra.mrb[0].mxu0 %v5414
        %v5607 = vpop.f32.mrb[0].mxu0
        %v5608 = vadd.f32 0.0, %v5607
        %v5609 = vpop.f32.mrb[0].mxu0
        %5610 = vmatprep.mubr.f32.mxu0 0.0
        %5611 = vmatmul.mubr.f32.gmra.mrb[0].mxu0 %v5417
        %v5612 = vpop.f32.mrb[0].mxu0
        %v5613 = vadd.f32 0.0, %v5612
        %v5614 = vpop.f32.mrb[0].mxu0
        %5615 = vmatprep.mubr.f32.mxu0 0.0
        %5616 = vmatmul.mubr.f32.gmra.mrb[0].mxu0 %v5420
        %v5617 = vpop.f32.mrb[0].mxu0
        %v5618 = vadd.f32 0.0, %v5617
        %v5619 = vpop.f32.mrb[0].mxu0
        %5620 = vmatprep.mubr.f32.mxu0 0.0
        %5621 = vmatmul.mubr.f32.gmra.mrb[0].mxu0 %v5423
        %v5622 = vpop.f32.mrb[0].mxu0
        %v5623 = vadd.f32 0.0, %v5622
        %v5624 = vpop.f32.mrb[0].mxu0
        %5625 = vmatprep.mubr.f32.mxu0 0.0
        %5626 = vmatmul.mubr.f32.gmra.mrb[0].mxu0 %v5426
        %v5627 = vpop.f32.mrb[0].mxu0
        %v5628 = vadd.f32 0.0, %v5627
        %v5629 = vpop.f32.mrb[0].mxu0
        %5630 = vmatprep.mubr.f32.mxu0 0.0
        %5631 = vmatmul.mubr.f32.gmra.mrb[0].mxu0 %v5429
        %v5632 = vpop.f32.mrb[0].mxu0
        %v5633 = vadd.f32 0.0, %v5632
        %v5634 = vpop.f32.mrb[0].mxu0
        %5635 = vdwg.mxu0
        %v5636 = vadd.f32 %v5288, %v5498
        %v5637 = vadd.f32 %v5289, %v5503
        %v5638 = vadd.f32 %v5290, %v5508
        %v5639 = vadd.f32 %v5291, %v5513
        %v5640 = vadd.f32 %v5292, %v5518
        %v5641 = vadd.f32 %v5293, %v5523
        %v5642 = vadd.f32 %v5294, %v5528
        %v5643 = vadd.f32 %v5295, %v5533
        %v5644 = vadd.f32 %v5296, %v5538
        %v5645 = vadd.f32 %v5297, %v5543
        %v5646 = vadd.f32 %v5298, %v5548
        %v5647 = vadd.f32 %v5299, %v5553
        %v5648 = vadd.f32 %v5300, %v5558
        %v5649 = vadd.f32 %v5301, %v5563
        %v5650 = vadd.f32 %v5302, %v5568
        %v5651 = vadd.f32 %v5303, %v5573
        %v5652 = vadd.f32 %v5304, %v5578
        %v5653 = vadd.f32 %v5305, %v5583
        %v5654 = vadd.f32 %v5306, %v5588
        %v5655 = vadd.f32 %v5307, %v5593
        %v5656 = vadd.f32 %v5308, %v5598
        %v5657 = vadd.f32 %v5309, %v5603
        %v5658 = vadd.f32 %v5310, %v5608
        %v5659 = vadd.f32 %v5311, %v5613
        %v5660 = vadd.f32 %v5312, %v5618
        %v5661 = vadd.f32 %v5313, %v5623
        %v5662 = vadd.f32 %v5314, %v5628
        %v5663 = vadd.f32 %v5315, %v5633
        %v5664 = vld [vmem:[%s4967 + $0x2] sm:$0xff]
        %v5665 = vld [vmem:[%s4967 + $0xa] sm:$0xff]
        %v5666 = vld [vmem:[%s4967 + $0x1a] sm:$0xff]
        %v5667 = vld [vmem:[%s4967 + $0x22] sm:$0xff]
        %v5668 = vld [vmem:[%s4967 + $0x32] sm:$0xff]
        %v5669 = vld [vmem:[%s4967 + $0x3a] sm:$0xff]
        %v5670 = vld [vmem:[%s4967 + $0x4a] sm:$0xff]
        %v5671 = vld [vmem:[%s4967 + $0x52] sm:$0xff]
        %v5672 = vld [vmem:[%s4967 + $0x62] sm:$0xff]
        %v5673 = vld [vmem:[%s4967 + $0x6a] sm:$0xff]
        %v5674 = vld [vmem:[%s4967 + $0x7a] sm:$0xff]
        %v5675 = vld [vmem:[%s4967 + $0x82] sm:$0xff]
        %v5676 = vld [vmem:[%s4967 + $0x92] sm:$0xff]
        %v5677 = vld [vmem:[%s4967 + $0x9a] sm:$0xff]
        %v5678 = vld [vmem:[%s4967 + $0xaa] sm:$0xff]
        %v5679 = vld [vmem:[%s4967 + $0xb2] sm:$0xff]
        %v5680 = vld [vmem:[%s4967 + $0xc2] sm:$0xff]
        %v5681 = vld [vmem:[%s4967 + $0xca] sm:$0xff]
        %v5682 = vld [vmem:[%s4967 + $0xda] sm:$0xff]
        %v5683 = vld [vmem:[%s4967 + $0xe2] sm:$0xff]
        %v5684 = vld [vmem:[%s4967 + $0xf2] sm:$0xff]
        %v5685 = vld [vmem:[%s4967 + $0xfa] sm:$0xff]
        %v5686 = vld [vmem:[%s4967 + $0x10a] sm:$0xff]
        %v5687 = vld [vmem:[%s4967 + $0x112] sm:$0xff]
        %v5688 = vld [vmem:[%s4967 + $0x122] sm:$0xff]
        %v5689 = vld [vmem:[%s4967 + $0x12a] sm:$0xff]
        %v5690 = vld [vmem:[%s4967 + $0x13a] sm:$0xff]
        %v5691 = vld [vmem:[%s4967 + $0x142] sm:$0xff]
        %s5692 = scalar_lea.vmem %s3, 80
        %v5693 = vld [vmem:[%s5692] sm:$0xff]
        %v5694 = vld [vmem:[%s5692 + $0x8] sm:$0xff]
        %v5696 = vsel %vm3931, %v5664, 0
        %v5699 = vsel %vm3931, %v5665, 0
        %v5702 = vsel %vm3931, %v5666, 0
        %v5705 = vsel %vm3931, %v5667, 0
        %v5708 = vsel %vm3931, %v5668, 0
        %v5711 = vsel %vm3931, %v5669, 0
        %v5714 = vsel %vm3931, %v5670, 0
        %v5717 = vsel %vm3931, %v5671, 0
        %v5720 = vsel %vm3931, %v5672, 0
        %v5723 = vsel %vm3931, %v5673, 0
        %v5726 = vsel %vm3931, %v5674, 0
        %v5729 = vsel %vm3931, %v5675, 0
        %v5732 = vsel %vm3931, %v5676, 0
        %v5735 = vsel %vm3931, %v5677, 0
        %v5738 = vsel %vm3931, %v5678, 0
        %v5741 = vsel %vm3931, %v5679, 0
        %v5744 = vsel %vm3931, %v5680, 0
        %v5747 = vsel %vm3931, %v5681, 0
        %v5750 = vsel %vm3931, %v5682, 0
        %v5753 = vsel %vm3931, %v5683, 0
        %v5756 = vsel %vm3931, %v5684, 0
        %v5759 = vsel %vm3931, %v5685, 0
        %v5762 = vsel %vm3931, %v5686, 0
        %v5765 = vsel %vm3931, %v5687, 0
        %v5768 = vsel %vm3931, %v5688, 0
        %v5771 = vsel %vm3931, %v5689, 0
        %v5774 = vsel %vm3931, %v5690, 0
        %v5777 = vsel %vm3931, %v5691, 0
        %5779 = vmatprep.subr.mxu0 0.0
        %5780 = vmatpush1.msra.mxu0 %v5693
        %5781 = vmatprep.subr.mxu0 0.0
        %5782 = vmatpush1.msra.mxu0 %v5694
        %5783 = vmatprep.subr.mxu0 0.0
        %5784 = vmatpush1.msra.mxu0 0.0
        %5785 = vmatprep.subr.mxu0 0.0
        %5786 = vmatpush1.msra.mxu0 0.0
        %5787 = vmatprep.subr.mxu0 0.0
        %5788 = vmatpush1.msra.mxu0 0.0
        %5789 = vmatprep.subr.mxu0 0.0
        %5790 = vmatpush1.msra.mxu0 0.0
        %5791 = vmatprep.subr.mxu0 0.0
        %5792 = vmatpush1.msra.mxu0 0.0
        %5793 = vmatprep.subr.mxu0 0.0
        %5794 = vmatpush1.msra.mxu0 0.0
        %5795 = vmatprep.subr.mxu0 0.0
        %5796 = vmatpush1.msra.mxu0 0.0
        %5797 = vmatprep.subr.mxu0 0.0
        %5798 = vmatpush1.msra.mxu0 0.0
        %5799 = vmatprep.subr.mxu0 0.0
        %5800 = vmatpush1.msra.mxu0 0.0
        %5801 = vmatprep.subr.mxu0 0.0
        %5802 = vmatpush1.msra.mxu0 0.0
        %5803 = vmatprep.subr.mxu0 0.0
        %5804 = vmatpush1.msra.mxu0 0.0
        %5805 = vmatprep.subr.mxu0 0.0
        %5806 = vmatpush1.msra.mxu0 0.0
        %5807 = vmatprep.subr.mxu0 0.0
        %5808 = vmatpush1.msra.mxu0 0.0
        %5809 = vmatprep.subr.mxu0 0.0
        %5810 = vmatpush1.msra.mxu0 0.0
        %5811 = vmatprep.subr.mxu0 0.0
        %5812 = vmatpush1.msra.mxu0 0.0
        %5813 = vmatprep.subr.mxu0 0.0
        %5814 = vmatpush1.msra.mxu0 0.0
        %5815 = vmatprep.subr.mxu0 0.0
        %5816 = vmatpush1.msra.mxu0 0.0
        %5817 = vmatprep.subr.mxu0 0.0
        %5818 = vmatpush1.msra.mxu0 0.0
        %5819 = vmatprep.subr.mxu0 0.0
        %5820 = vmatpush1.msra.mxu0 0.0
        %5821 = vmatprep.subr.mxu0 0.0
        %5822 = vmatpush1.msra.mxu0 0.0
        %5823 = vmatprep.subr.mxu0 0.0
        %5824 = vmatpush1.msra.mxu0 0.0
        %5825 = vmatprep.subr.mxu0 0.0
        %5826 = vmatpush1.msra.mxu0 0.0
        %5827 = vmatprep.subr.mxu0 0.0
        %5828 = vmatpush1.msra.mxu0 0.0
        %5829 = vmatprep.subr.mxu0 0.0
        %5830 = vmatpush1.msra.mxu0 0.0
        %5831 = vmatprep.subr.mxu0 0.0
        %5832 = vmatpush1.msra.mxu0 0.0
        %5833 = vmatprep.subr.mxu0 0.0
        %5834 = vmatpush1.msra.mxu0 0.0
        %5835 = vmatprep.subr.mxu0 0.0
        %5836 = vmatpush1.msra.mxu0 0.0
        %5837 = vmatprep.subr.mxu0 0.0
        %5838 = vmatpush1.msra.mxu0 0.0
        %5839 = vmatprep.subr.mxu0 0.0
        %5840 = vmatpush1.msra.mxu0 0.0
        %5841 = vmatprep.subr.mxu0 0.0
        %5842 = vmatpush1.msra.mxu0 0.0
        %5843 = vmatprep.mubr.f32.mxu0 0.0
        %5844 = vmatmul.mubr.f32.gmra.mrb[0].mxu0 %v5696
        %v5845 = vpop.f32.mrb[0].mxu0
        %v5846 = vadd.f32 0.0, %v5845
        %v5847 = vpop.f32.mrb[0].mxu0
        %5848 = vmatprep.mubr.f32.mxu0 0.0
        %5849 = vmatmul.mubr.f32.gmra.mrb[0].mxu0 %v5699
        %v5850 = vpop.f32.mrb[0].mxu0
        %v5851 = vadd.f32 0.0, %v5850
        %v5852 = vpop.f32.mrb[0].mxu0
        %5853 = vmatprep.mubr.f32.mxu0 0.0
        %5854 = vmatmul.mubr.f32.gmra.mrb[0].mxu0 %v5702
        %v5855 = vpop.f32.mrb[0].mxu0
        %v5856 = vadd.f32 0.0, %v5855
        %v5857 = vpop.f32.mrb[0].mxu0
        %5858 = vmatprep.mubr.f32.mxu0 0.0
        %5859 = vmatmul.mubr.f32.gmra.mrb[0].mxu0 %v5705
        %v5860 = vpop.f32.mrb[0].mxu0
        %v5861 = vadd.f32 0.0, %v5860
        %v5862 = vpop.f32.mrb[0].mxu0
        %5863 = vmatprep.mubr.f32.mxu0 0.0
        %5864 = vmatmul.mubr.f32.gmra.mrb[0].mxu0 %v5708
        %v5865 = vpop.f32.mrb[0].mxu0
        %v5866 = vadd.f32 0.0, %v5865
        %v5867 = vpop.f32.mrb[0].mxu0
        %5868 = vmatprep.mubr.f32.mxu0 0.0
        %5869 = vmatmul.mubr.f32.gmra.mrb[0].mxu0 %v5711
        %v5870 = vpop.f32.mrb[0].mxu0
        %v5871 = vadd.f32 0.0, %v5870
        %v5872 = vpop.f32.mrb[0].mxu0
        %5873 = vmatprep.mubr.f32.mxu0 0.0
        %5874 = vmatmul.mubr.f32.gmra.mrb[0].mxu0 %v5714
        %v5875 = vpop.f32.mrb[0].mxu0
        %v5876 = vadd.f32 0.0, %v5875
        %v5877 = vpop.f32.mrb[0].mxu0
        %5878 = vmatprep.mubr.f32.mxu0 0.0
        %5879 = vmatmul.mubr.f32.gmra.mrb[0].mxu0 %v5717
        %v5880 = vpop.f32.mrb[0].mxu0
        %v5881 = vadd.f32 0.0, %v5880
        %v5882 = vpop.f32.mrb[0].mxu0
        %5883 = vmatprep.mubr.f32.mxu0 0.0
        %5884 = vmatmul.mubr.f32.gmra.mrb[0].mxu0 %v5720
        %v5885 = vpop.f32.mrb[0].mxu0
        %v5886 = vadd.f32 0.0, %v5885
        %v5887 = vpop.f32.mrb[0].mxu0
        %5888 = vmatprep.mubr.f32.mxu0 0.0
        %5889 = vmatmul.mubr.f32.gmra.mrb[0].mxu0 %v5723
        %v5890 = vpop.f32.mrb[0].mxu0
        %v5891 = vadd.f32 0.0, %v5890
        %v5892 = vpop.f32.mrb[0].mxu0
        %5893 = vmatprep.mubr.f32.mxu0 0.0
        %5894 = vmatmul.mubr.f32.gmra.mrb[0].mxu0 %v5726
        %v5895 = vpop.f32.mrb[0].mxu0
        %v5896 = vadd.f32 0.0, %v5895
        %v5897 = vpop.f32.mrb[0].mxu0
        %5898 = vmatprep.mubr.f32.mxu0 0.0
        %5899 = vmatmul.mubr.f32.gmra.mrb[0].mxu0 %v5729
        %v5900 = vpop.f32.mrb[0].mxu0
        %v5901 = vadd.f32 0.0, %v5900
        %v5902 = vpop.f32.mrb[0].mxu0
        %5903 = vmatprep.mubr.f32.mxu0 0.0
        %5904 = vmatmul.mubr.f32.gmra.mrb[0].mxu0 %v5732
        %v5905 = vpop.f32.mrb[0].mxu0
        %v5906 = vadd.f32 0.0, %v5905
        %v5907 = vpop.f32.mrb[0].mxu0
        %5908 = vmatprep.mubr.f32.mxu0 0.0
        %5909 = vmatmul.mubr.f32.gmra.mrb[0].mxu0 %v5735
        %v5910 = vpop.f32.mrb[0].mxu0
        %v5911 = vadd.f32 0.0, %v5910
        %v5912 = vpop.f32.mrb[0].mxu0
        %5913 = vmatprep.mubr.f32.mxu0 0.0
        %5914 = vmatmul.mubr.f32.gmra.mrb[0].mxu0 %v5738
        %v5915 = vpop.f32.mrb[0].mxu0
        %v5916 = vadd.f32 0.0, %v5915
        %v5917 = vpop.f32.mrb[0].mxu0
        %5918 = vmatprep.mubr.f32.mxu0 0.0
        %5919 = vmatmul.mubr.f32.gmra.mrb[0].mxu0 %v5741
        %v5920 = vpop.f32.mrb[0].mxu0
        %v5921 = vadd.f32 0.0, %v5920
        %v5922 = vpop.f32.mrb[0].mxu0
        %5923 = vmatprep.mubr.f32.mxu0 0.0
        %5924 = vmatmul.mubr.f32.gmra.mrb[0].mxu0 %v5744
        %v5925 = vpop.f32.mrb[0].mxu0
        %v5926 = vadd.f32 0.0, %v5925
        %v5927 = vpop.f32.mrb[0].mxu0
        %5928 = vmatprep.mubr.f32.mxu0 0.0
        %5929 = vmatmul.mubr.f32.gmra.mrb[0].mxu0 %v5747
        %v5930 = vpop.f32.mrb[0].mxu0
        %v5931 = vadd.f32 0.0, %v5930
        %v5932 = vpop.f32.mrb[0].mxu0
        %5933 = vmatprep.mubr.f32.mxu0 0.0
        %5934 = vmatmul.mubr.f32.gmra.mrb[0].mxu0 %v5750
        %v5935 = vpop.f32.mrb[0].mxu0
        %v5936 = vadd.f32 0.0, %v5935
        %v5937 = vpop.f32.mrb[0].mxu0
        %5938 = vmatprep.mubr.f32.mxu0 0.0
        %5939 = vmatmul.mubr.f32.gmra.mrb[0].mxu0 %v5753
        %v5940 = vpop.f32.mrb[0].mxu0
        %v5941 = vadd.f32 0.0, %v5940
        %v5942 = vpop.f32.mrb[0].mxu0
        %5943 = vmatprep.mubr.f32.mxu0 0.0
        %5944 = vmatmul.mubr.f32.gmra.mrb[0].mxu0 %v5756
        %v5945 = vpop.f32.mrb[0].mxu0
        %v5946 = vadd.f32 0.0, %v5945
        %v5947 = vpop.f32.mrb[0].mxu0
        %5948 = vmatprep.mubr.f32.mxu0 0.0
        %5949 = vmatmul.mubr.f32.gmra.mrb[0].mxu0 %v5759
        %v5950 = vpop.f32.mrb[0].mxu0
        %v5951 = vadd.f32 0.0, %v5950
        %v5952 = vpop.f32.mrb[0].mxu0
        %5953 = vmatprep.mubr.f32.mxu0 0.0
        %5954 = vmatmul.mubr.f32.gmra.mrb[0].mxu0 %v5762
        %v5955 = vpop.f32.mrb[0].mxu0
        %v5956 = vadd.f32 0.0, %v5955
        %v5957 = vpop.f32.mrb[0].mxu0
        %5958 = vmatprep.mubr.f32.mxu0 0.0
        %5959 = vmatmul.mubr.f32.gmra.mrb[0].mxu0 %v5765
        %v5960 = vpop.f32.mrb[0].mxu0
        %v5961 = vadd.f32 0.0, %v5960
        %v5962 = vpop.f32.mrb[0].mxu0
        %5963 = vmatprep.mubr.f32.mxu0 0.0
        %5964 = vmatmul.mubr.f32.gmra.mrb[0].mxu0 %v5768
        %v5965 = vpop.f32.mrb[0].mxu0
        %v5966 = vadd.f32 0.0, %v5965
        %v5967 = vpop.f32.mrb[0].mxu0
        %5968 = vmatprep.mubr.f32.mxu0 0.0
        %5969 = vmatmul.mubr.f32.gmra.mrb[0].mxu0 %v5771
        %v5970 = vpop.f32.mrb[0].mxu0
        %v5971 = vadd.f32 0.0, %v5970
        %v5972 = vpop.f32.mrb[0].mxu0
        %5973 = vmatprep.mubr.f32.mxu0 0.0
        %5974 = vmatmul.mubr.f32.gmra.mrb[0].mxu0 %v5774
        %v5975 = vpop.f32.mrb[0].mxu0
        %v5976 = vadd.f32 0.0, %v5975
        %v5977 = vpop.f32.mrb[0].mxu0
        %5978 = vmatprep.mubr.f32.mxu0 0.0
        %5979 = vmatmul.mubr.f32.gmra.mrb[0].mxu0 %v5777
        %v5980 = vpop.f32.mrb[0].mxu0
        %v5981 = vadd.f32 0.0, %v5980
        %v5982 = vpop.f32.mrb[0].mxu0
        %5983 = vdwg.mxu0
        %v5984 = vadd.f32 %v5636, %v5846
        %v5985 = vadd.f32 %v5637, %v5851
        %v5986 = vadd.f32 %v5638, %v5856
        %v5987 = vadd.f32 %v5639, %v5861
        %v5988 = vadd.f32 %v5640, %v5866
        %v5989 = vadd.f32 %v5641, %v5871
        %v5990 = vadd.f32 %v5642, %v5876
        %v5991 = vadd.f32 %v5643, %v5881
        %v5992 = vadd.f32 %v5644, %v5886
        %v5993 = vadd.f32 %v5645, %v5891
        %v5994 = vadd.f32 %v5646, %v5896
        %v5995 = vadd.f32 %v5647, %v5901
        %v5996 = vadd.f32 %v5648, %v5906
        %v5997 = vadd.f32 %v5649, %v5911
        %v5998 = vadd.f32 %v5650, %v5916
        %v5999 = vadd.f32 %v5651, %v5921
        %v6000 = vadd.f32 %v5652, %v5926
        %v6001 = vadd.f32 %v5653, %v5931
        %v6002 = vadd.f32 %v5654, %v5936
        %v6003 = vadd.f32 %v5655, %v5941
        %v6004 = vadd.f32 %v5656, %v5946
        %v6005 = vadd.f32 %v5657, %v5951
        %v6006 = vadd.f32 %v5658, %v5956
        %v6007 = vadd.f32 %v5659, %v5961
        %v6008 = vadd.f32 %v5660, %v5966
        %v6009 = vadd.f32 %v5661, %v5971
        %v6010 = vadd.f32 %v5662, %v5976
        %v6011 = vadd.f32 %v5663, %v5981
        %s6012 = scalar_lea.vmem [#allocation2], 48
        %v6013 = vld [vmem:[%s6012] sm:$0xff]
        %v6014 = vld [vmem:[%s6012 + $0x8] sm:$0xff]
        %v6015 = vld [vmem:[%s6012 + $0x18] sm:$0xff]
        %v6016 = vld [vmem:[%s6012 + $0x20] sm:$0xff]
        %v6017 = vld [vmem:[%s6012 + $0x30] sm:$0xff]
        %v6018 = vld [vmem:[%s6012 + $0x38] sm:$0xff]
        %v6019 = vld [vmem:[%s6012 + $0x48] sm:$0xff]
        %v6020 = vld [vmem:[%s6012 + $0x50] sm:$0xff]
        %v6021 = vld [vmem:[%s6012 + $0x60] sm:$0xff]
        %v6022 = vld [vmem:[%s6012 + $0x68] sm:$0xff]
        %v6023 = vld [vmem:[%s6012 + $0x78] sm:$0xff]
        %v6024 = vld [vmem:[%s6012 + $0x80] sm:$0xff]
        %v6025 = vld [vmem:[%s6012 + $0x90] sm:$0xff]
        %v6026 = vld [vmem:[%s6012 + $0x98] sm:$0xff]
        %v6027 = vld [vmem:[%s6012 + $0xa8] sm:$0xff]
        %v6028 = vld [vmem:[%s6012 + $0xb0] sm:$0xff]
        %v6029 = vld [vmem:[%s6012 + $0xc0] sm:$0xff]
        %v6030 = vld [vmem:[%s6012 + $0xc8] sm:$0xff]
        %v6031 = vld [vmem:[%s6012 + $0xd8] sm:$0xff]
        %v6032 = vld [vmem:[%s6012 + $0xe0] sm:$0xff]
        %v6033 = vld [vmem:[%s6012 + $0xf0] sm:$0xff]
        %v6034 = vld [vmem:[%s6012 + $0xf8] sm:$0xff]
        %v6035 = vld [vmem:[%s6012 + $0x108] sm:$0xff]
        %v6036 = vld [vmem:[%s6012 + $0x110] sm:$0xff]
        %v6037 = vld [vmem:[%s6012 + $0x120] sm:$0xff]
        %v6038 = vld [vmem:[%s6012 + $0x128] sm:$0xff]
        %v6039 = vld [vmem:[%s6012 + $0x138] sm:$0xff]
        %v6040 = vld [vmem:[%s6012 + $0x140] sm:$0xff]
        %s6041 = scalar_lea.vmem %s3, 96
        %v6042 = vld [vmem:[%s6041] sm:$0xff]
        %v6043 = vld [vmem:[%s6041 + $0x8] sm:$0xff]
        %v6045 = vsel %vm3931, %v6013, 0
        %v6048 = vsel %vm3931, %v6014, 0
        %v6051 = vsel %vm3931, %v6015, 0
        %v6054 = vsel %vm3931, %v6016, 0
        %v6057 = vsel %vm3931, %v6017, 0
        %v6060 = vsel %vm3931, %v6018, 0
        %v6063 = vsel %vm3931, %v6019, 0
        %v6066 = vsel %vm3931, %v6020, 0
        %v6069 = vsel %vm3931, %v6021, 0
        %v6072 = vsel %vm3931, %v6022, 0
        %v6075 = vsel %vm3931, %v6023, 0
        %v6078 = vsel %vm3931, %v6024, 0
        %v6081 = vsel %vm3931, %v6025, 0
        %v6084 = vsel %vm3931, %v6026, 0
        %v6087 = vsel %vm3931, %v6027, 0
        %v6090 = vsel %vm3931, %v6028, 0
        %v6093 = vsel %vm3931, %v6029, 0
        %v6096 = vsel %vm3931, %v6030, 0
        %v6099 = vsel %vm3931, %v6031, 0
        %v6102 = vsel %vm3931, %v6032, 0
        %v6105 = vsel %vm3931, %v6033, 0
        %v6108 = vsel %vm3931, %v6034, 0
        %v6111 = vsel %vm3931, %v6035, 0
        %v6114 = vsel %vm3931, %v6036, 0
        %v6117 = vsel %vm3931, %v6037, 0
        %v6120 = vsel %vm3931, %v6038, 0
        %v6123 = vsel %vm3931, %v6039, 0
        %v6126 = vsel %vm3931, %v6040, 0
        %6128 = vmatprep.subr.mxu0 0.0
        %6129 = vmatpush1.msra.mxu0 %v6042
        %6130 = vmatprep.subr.mxu0 0.0
        %6131 = vmatpush1.msra.mxu0 %v6043
        %6132 = vmatprep.subr.mxu0 0.0
        %6133 = vmatpush1.msra.mxu0 0.0
        %6134 = vmatprep.subr.mxu0 0.0
        %6135 = vmatpush1.msra.mxu0 0.0
        %6136 = vmatprep.subr.mxu0 0.0
        %6137 = vmatpush1.msra.mxu0 0.0
        %6138 = vmatprep.subr.mxu0 0.0
        %6139 = vmatpush1.msra.mxu0 0.0
        %6140 = vmatprep.subr.mxu0 0.0
        %6141 = vmatpush1.msra.mxu0 0.0
        %6142 = vmatprep.subr.mxu0 0.0
        %6143 = vmatpush1.msra.mxu0 0.0
        %6144 = vmatprep.subr.mxu0 0.0
        %6145 = vmatpush1.msra.mxu0 0.0
        %6146 = vmatprep.subr.mxu0 0.0
        %6147 = vmatpush1.msra.mxu0 0.0
        %6148 = vmatprep.subr.mxu0 0.0
        %6149 = vmatpush1.msra.mxu0 0.0
        %6150 = vmatprep.subr.mxu0 0.0
        %6151 = vmatpush1.msra.mxu0 0.0
        %6152 = vmatprep.subr.mxu0 0.0
        %6153 = vmatpush1.msra.mxu0 0.0
        %6154 = vmatprep.subr.mxu0 0.0
        %6155 = vmatpush1.msra.mxu0 0.0
        %6156 = vmatprep.subr.mxu0 0.0
        %6157 = vmatpush1.msra.mxu0 0.0
        %6158 = vmatprep.subr.mxu0 0.0
        %6159 = vmatpush1.msra.mxu0 0.0
        %6160 = vmatprep.subr.mxu0 0.0
        %6161 = vmatpush1.msra.mxu0 0.0
        %6162 = vmatprep.subr.mxu0 0.0
        %6163 = vmatpush1.msra.mxu0 0.0
        %6164 = vmatprep.subr.mxu0 0.0
        %6165 = vmatpush1.msra.mxu0 0.0
        %6166 = vmatprep.subr.mxu0 0.0
        %6167 = vmatpush1.msra.mxu0 0.0
        %6168 = vmatprep.subr.mxu0 0.0
        %6169 = vmatpush1.msra.mxu0 0.0
        %6170 = vmatprep.subr.mxu0 0.0
        %6171 = vmatpush1.msra.mxu0 0.0
        %6172 = vmatprep.subr.mxu0 0.0
        %6173 = vmatpush1.msra.mxu0 0.0
        %6174 = vmatprep.subr.mxu0 0.0
        %6175 = vmatpush1.msra.mxu0 0.0
        %6176 = vmatprep.subr.mxu0 0.0
        %6177 = vmatpush1.msra.mxu0 0.0
        %6178 = vmatprep.subr.mxu0 0.0
        %6179 = vmatpush1.msra.mxu0 0.0
        %6180 = vmatprep.subr.mxu0 0.0
        %6181 = vmatpush1.msra.mxu0 0.0
        %6182 = vmatprep.subr.mxu0 0.0
        %6183 = vmatpush1.msra.mxu0 0.0
        %6184 = vmatprep.subr.mxu0 0.0
        %6185 = vmatpush1.msra.mxu0 0.0
        %6186 = vmatprep.subr.mxu0 0.0
        %6187 = vmatpush1.msra.mxu0 0.0
        %6188 = vmatprep.subr.mxu0 0.0
        %6189 = vmatpush1.msra.mxu0 0.0
        %6190 = vmatprep.subr.mxu0 0.0
        %6191 = vmatpush1.msra.mxu0 0.0
        %6192 = vmatprep.mubr.f32.mxu0 0.0
        %6193 = vmatmul.mubr.f32.gmra.mrb[0].mxu0 %v6045
        %v6194 = vpop.f32.mrb[0].mxu0
        %v6195 = vadd.f32 0.0, %v6194
        %v6196 = vpop.f32.mrb[0].mxu0
        %6197 = vmatprep.mubr.f32.mxu0 0.0
        %6198 = vmatmul.mubr.f32.gmra.mrb[0].mxu0 %v6048
        %v6199 = vpop.f32.mrb[0].mxu0
        %v6200 = vadd.f32 0.0, %v6199
        %v6201 = vpop.f32.mrb[0].mxu0
        %6202 = vmatprep.mubr.f32.mxu0 0.0
        %6203 = vmatmul.mubr.f32.gmra.mrb[0].mxu0 %v6051
        %v6204 = vpop.f32.mrb[0].mxu0
        %v6205 = vadd.f32 0.0, %v6204
        %v6206 = vpop.f32.mrb[0].mxu0
        %6207 = vmatprep.mubr.f32.mxu0 0.0
        %6208 = vmatmul.mubr.f32.gmra.mrb[0].mxu0 %v6054
        %v6209 = vpop.f32.mrb[0].mxu0
        %v6210 = vadd.f32 0.0, %v6209
        %v6211 = vpop.f32.mrb[0].mxu0
        %6212 = vmatprep.mubr.f32.mxu0 0.0
        %6213 = vmatmul.mubr.f32.gmra.mrb[0].mxu0 %v6057
        %v6214 = vpop.f32.mrb[0].mxu0
        %v6215 = vadd.f32 0.0, %v6214
        %v6216 = vpop.f32.mrb[0].mxu0
        %6217 = vmatprep.mubr.f32.mxu0 0.0
        %6218 = vmatmul.mubr.f32.gmra.mrb[0].mxu0 %v6060
        %v6219 = vpop.f32.mrb[0].mxu0
        %v6220 = vadd.f32 0.0, %v6219
        %v6221 = vpop.f32.mrb[0].mxu0
        %6222 = vmatprep.mubr.f32.mxu0 0.0
        %6223 = vmatmul.mubr.f32.gmra.mrb[0].mxu0 %v6063
        %v6224 = vpop.f32.mrb[0].mxu0
        %v6225 = vadd.f32 0.0, %v6224
        %v6226 = vpop.f32.mrb[0].mxu0
        %6227 = vmatprep.mubr.f32.mxu0 0.0
        %6228 = vmatmul.mubr.f32.gmra.mrb[0].mxu0 %v6066
        %v6229 = vpop.f32.mrb[0].mxu0
        %v6230 = vadd.f32 0.0, %v6229
        %v6231 = vpop.f32.mrb[0].mxu0
        %6232 = vmatprep.mubr.f32.mxu0 0.0
        %6233 = vmatmul.mubr.f32.gmra.mrb[0].mxu0 %v6069
        %v6234 = vpop.f32.mrb[0].mxu0
        %v6235 = vadd.f32 0.0, %v6234
        %v6236 = vpop.f32.mrb[0].mxu0
        %6237 = vmatprep.mubr.f32.mxu0 0.0
        %6238 = vmatmul.mubr.f32.gmra.mrb[0].mxu0 %v6072
        %v6239 = vpop.f32.mrb[0].mxu0
        %v6240 = vadd.f32 0.0, %v6239
        %v6241 = vpop.f32.mrb[0].mxu0
        %6242 = vmatprep.mubr.f32.mxu0 0.0
        %6243 = vmatmul.mubr.f32.gmra.mrb[0].mxu0 %v6075
        %v6244 = vpop.f32.mrb[0].mxu0
        %v6245 = vadd.f32 0.0, %v6244
        %v6246 = vpop.f32.mrb[0].mxu0
        %6247 = vmatprep.mubr.f32.mxu0 0.0
        %6248 = vmatmul.mubr.f32.gmra.mrb[0].mxu0 %v6078
        %v6249 = vpop.f32.mrb[0].mxu0
        %v6250 = vadd.f32 0.0, %v6249
        %v6251 = vpop.f32.mrb[0].mxu0
        %6252 = vmatprep.mubr.f32.mxu0 0.0
        %6253 = vmatmul.mubr.f32.gmra.mrb[0].mxu0 %v6081
        %v6254 = vpop.f32.mrb[0].mxu0
        %v6255 = vadd.f32 0.0, %v6254
        %v6256 = vpop.f32.mrb[0].mxu0
        %6257 = vmatprep.mubr.f32.mxu0 0.0
        %6258 = vmatmul.mubr.f32.gmra.mrb[0].mxu0 %v6084
        %v6259 = vpop.f32.mrb[0].mxu0
        %v6260 = vadd.f32 0.0, %v6259
        %v6261 = vpop.f32.mrb[0].mxu0
        %6262 = vmatprep.mubr.f32.mxu0 0.0
        %6263 = vmatmul.mubr.f32.gmra.mrb[0].mxu0 %v6087
        %v6264 = vpop.f32.mrb[0].mxu0
        %v6265 = vadd.f32 0.0, %v6264
        %v6266 = vpop.f32.mrb[0].mxu0
        %6267 = vmatprep.mubr.f32.mxu0 0.0
        %6268 = vmatmul.mubr.f32.gmra.mrb[0].mxu0 %v6090
        %v6269 = vpop.f32.mrb[0].mxu0
        %v6270 = vadd.f32 0.0, %v6269
        %v6271 = vpop.f32.mrb[0].mxu0
        %6272 = vmatprep.mubr.f32.mxu0 0.0
        %6273 = vmatmul.mubr.f32.gmra.mrb[0].mxu0 %v6093
        %v6274 = vpop.f32.mrb[0].mxu0
        %v6275 = vadd.f32 0.0, %v6274
        %v6276 = vpop.f32.mrb[0].mxu0
        %6277 = vmatprep.mubr.f32.mxu0 0.0
        %6278 = vmatmul.mubr.f32.gmra.mrb[0].mxu0 %v6096
        %v6279 = vpop.f32.mrb[0].mxu0
        %v6280 = vadd.f32 0.0, %v6279
        %v6281 = vpop.f32.mrb[0].mxu0
        %6282 = vmatprep.mubr.f32.mxu0 0.0
        %6283 = vmatmul.mubr.f32.gmra.mrb[0].mxu0 %v6099
        %v6284 = vpop.f32.mrb[0].mxu0
        %v6285 = vadd.f32 0.0, %v6284
        %v6286 = vpop.f32.mrb[0].mxu0
        %6287 = vmatprep.mubr.f32.mxu0 0.0
        %6288 = vmatmul.mubr.f32.gmra.mrb[0].mxu0 %v6102
        %v6289 = vpop.f32.mrb[0].mxu0
        %v6290 = vadd.f32 0.0, %v6289
        %v6291 = vpop.f32.mrb[0].mxu0
        %6292 = vmatprep.mubr.f32.mxu0 0.0
        %6293 = vmatmul.mubr.f32.gmra.mrb[0].mxu0 %v6105
        %v6294 = vpop.f32.mrb[0].mxu0
        %v6295 = vadd.f32 0.0, %v6294
        %v6296 = vpop.f32.mrb[0].mxu0
        %6297 = vmatprep.mubr.f32.mxu0 0.0
        %6298 = vmatmul.mubr.f32.gmra.mrb[0].mxu0 %v6108
        %v6299 = vpop.f32.mrb[0].mxu0
        %v6300 = vadd.f32 0.0, %v6299
        %v6301 = vpop.f32.mrb[0].mxu0
        %6302 = vmatprep.mubr.f32.mxu0 0.0
        %6303 = vmatmul.mubr.f32.gmra.mrb[0].mxu0 %v6111
        %v6304 = vpop.f32.mrb[0].mxu0
        %v6305 = vadd.f32 0.0, %v6304
        %v6306 = vpop.f32.mrb[0].mxu0
        %6307 = vmatprep.mubr.f32.mxu0 0.0
        %6308 = vmatmul.mubr.f32.gmra.mrb[0].mxu0 %v6114
        %v6309 = vpop.f32.mrb[0].mxu0
        %v6310 = vadd.f32 0.0, %v6309
        %v6311 = vpop.f32.mrb[0].mxu0
        %6312 = vmatprep.mubr.f32.mxu0 0.0
        %6313 = vmatmul.mubr.f32.gmra.mrb[0].mxu0 %v6117
        %v6314 = vpop.f32.mrb[0].mxu0
        %v6315 = vadd.f32 0.0, %v6314
        %v6316 = vpop.f32.mrb[0].mxu0
        %6317 = vmatprep.mubr.f32.mxu0 0.0
        %6318 = vmatmul.mubr.f32.gmra.mrb[0].mxu0 %v6120
        %v6319 = vpop.f32.mrb[0].mxu0
        %v6320 = vadd.f32 0.0, %v6319
        %v6321 = vpop.f32.mrb[0].mxu0
        %6322 = vmatprep.mubr.f32.mxu0 0.0
        %6323 = vmatmul.mubr.f32.gmra.mrb[0].mxu0 %v6123
        %v6324 = vpop.f32.mrb[0].mxu0
        %v6325 = vadd.f32 0.0, %v6324
        %v6326 = vpop.f32.mrb[0].mxu0
        %6327 = vmatprep.mubr.f32.mxu0 0.0
        %6328 = vmatmul.mubr.f32.gmra.mrb[0].mxu0 %v6126
        %v6329 = vpop.f32.mrb[0].mxu0
        %v6330 = vadd.f32 0.0, %v6329
        %v6331 = vpop.f32.mrb[0].mxu0
        %6332 = vdwg.mxu0
        %v6333 = vadd.f32 %v5984, %v6195
        %v6334 = vadd.f32 %v5985, %v6200
        %v6335 = vadd.f32 %v5986, %v6205
        %v6336 = vadd.f32 %v5987, %v6210
        %v6337 = vadd.f32 %v5988, %v6215
        %v6338 = vadd.f32 %v5989, %v6220
        %v6339 = vadd.f32 %v5990, %v6225
        %v6340 = vadd.f32 %v5991, %v6230
        %v6341 = vadd.f32 %v5992, %v6235
        %v6342 = vadd.f32 %v5993, %v6240
        %v6343 = vadd.f32 %v5994, %v6245
        %v6344 = vadd.f32 %v5995, %v6250
        %v6345 = vadd.f32 %v5996, %v6255
        %v6346 = vadd.f32 %v5997, %v6260
        %v6347 = vadd.f32 %v5998, %v6265
        %v6348 = vadd.f32 %v5999, %v6270
        %v6349 = vadd.f32 %v6000, %v6275
        %v6350 = vadd.f32 %v6001, %v6280
        %v6351 = vadd.f32 %v6002, %v6285
        %v6352 = vadd.f32 %v6003, %v6290
        %v6353 = vadd.f32 %v6004, %v6295
        %v6354 = vadd.f32 %v6005, %v6300
        %v6355 = vadd.f32 %v6006, %v6305
        %v6356 = vadd.f32 %v6007, %v6310
        %v6357 = vadd.f32 %v6008, %v6315
        %v6358 = vadd.f32 %v6009, %v6320
        %v6359 = vadd.f32 %v6010, %v6325
        %v6360 = vadd.f32 %v6011, %v6330
        %v6361 = vld [vmem:[%s6012 + $0x1] sm:$0xff]
        %v6362 = vld [vmem:[%s6012 + $0x9] sm:$0xff]
        %v6363 = vld [vmem:[%s6012 + $0x19] sm:$0xff]
        %v6364 = vld [vmem:[%s6012 + $0x21] sm:$0xff]
        %v6365 = vld [vmem:[%s6012 + $0x31] sm:$0xff]
        %v6366 = vld [vmem:[%s6012 + $0x39] sm:$0xff]
        %v6367 = vld [vmem:[%s6012 + $0x49] sm:$0xff]
        %v6368 = vld [vmem:[%s6012 + $0x51] sm:$0xff]
        %v6369 = vld [vmem:[%s6012 + $0x61] sm:$0xff]
        %v6370 = vld [vmem:[%s6012 + $0x69] sm:$0xff]
        %v6371 = vld [vmem:[%s6012 + $0x79] sm:$0xff]
        %v6372 = vld [vmem:[%s6012 + $0x81] sm:$0xff]
        %v6373 = vld [vmem:[%s6012 + $0x91] sm:$0xff]
        %v6374 = vld [vmem:[%s6012 + $0x99] sm:$0xff]
        %v6375 = vld [vmem:[%s6012 + $0xa9] sm:$0xff]
        %v6376 = vld [vmem:[%s6012 + $0xb1] sm:$0xff]
        %v6377 = vld [vmem:[%s6012 + $0xc1] sm:$0xff]
        %v6378 = vld [vmem:[%s6012 + $0xc9] sm:$0xff]
        %v6379 = vld [vmem:[%s6012 + $0xd9] sm:$0xff]
        %v6380 = vld [vmem:[%s6012 + $0xe1] sm:$0xff]
        %v6381 = vld [vmem:[%s6012 + $0xf1] sm:$0xff]
        %v6382 = vld [vmem:[%s6012 + $0xf9] sm:$0xff]
        %v6383 = vld [vmem:[%s6012 + $0x109] sm:$0xff]
        %v6384 = vld [vmem:[%s6012 + $0x111] sm:$0xff]
        %v6385 = vld [vmem:[%s6012 + $0x121] sm:$0xff]
        %v6386 = vld [vmem:[%s6012 + $0x129] sm:$0xff]
        %v6387 = vld [vmem:[%s6012 + $0x139] sm:$0xff]
        %v6388 = vld [vmem:[%s6012 + $0x141] sm:$0xff]
        %s6389 = scalar_lea.vmem %s3, 112
        %v6390 = vld [vmem:[%s6389] sm:$0xff]
        %v6391 = vld [vmem:[%s6389 + $0x8] sm:$0xff]
        %v6393 = vsel %vm3931, %v6361, 0
        %v6396 = vsel %vm3931, %v6362, 0
        %v6399 = vsel %vm3931, %v6363, 0
        %v6402 = vsel %vm3931, %v6364, 0
        %v6405 = vsel %vm3931, %v6365, 0
        %v6408 = vsel %vm3931, %v6366, 0
        %v6411 = vsel %vm3931, %v6367, 0
        %v6414 = vsel %vm3931, %v6368, 0
        %v6417 = vsel %vm3931, %v6369, 0
        %v6420 = vsel %vm3931, %v6370, 0
        %v6423 = vsel %vm3931, %v6371, 0
        %v6426 = vsel %vm3931, %v6372, 0
        %v6429 = vsel %vm3931, %v6373, 0
        %v6432 = vsel %vm3931, %v6374, 0
        %v6435 = vsel %vm3931, %v6375, 0
        %v6438 = vsel %vm3931, %v6376, 0
        %v6441 = vsel %vm3931, %v6377, 0
        %v6444 = vsel %vm3931, %v6378, 0
        %v6447 = vsel %vm3931, %v6379, 0
        %v6450 = vsel %vm3931, %v6380, 0
        %v6453 = vsel %vm3931, %v6381, 0
        %v6456 = vsel %vm3931, %v6382, 0
        %v6459 = vsel %vm3931, %v6383, 0
        %v6462 = vsel %vm3931, %v6384, 0
        %v6465 = vsel %vm3931, %v6385, 0
        %v6468 = vsel %vm3931, %v6386, 0
        %v6471 = vsel %vm3931, %v6387, 0
        %v6474 = vsel %vm3931, %v6388, 0
        %6476 = vmatprep.subr.mxu0 0.0
        %6477 = vmatpush1.msra.mxu0 %v6390
        %6478 = vmatprep.subr.mxu0 0.0
        %6479 = vmatpush1.msra.mxu0 %v6391
        %6480 = vmatprep.subr.mxu0 0.0
        %6481 = vmatpush1.msra.mxu0 0.0
        %6482 = vmatprep.subr.mxu0 0.0
        %6483 = vmatpush1.msra.mxu0 0.0
        %6484 = vmatprep.subr.mxu0 0.0
        %6485 = vmatpush1.msra.mxu0 0.0
        %6486 = vmatprep.subr.mxu0 0.0
        %6487 = vmatpush1.msra.mxu0 0.0
        %6488 = vmatprep.subr.mxu0 0.0
        %6489 = vmatpush1.msra.mxu0 0.0
        %6490 = vmatprep.subr.mxu0 0.0
        %6491 = vmatpush1.msra.mxu0 0.0
        %6492 = vmatprep.subr.mxu0 0.0
        %6493 = vmatpush1.msra.mxu0 0.0
        %6494 = vmatprep.subr.mxu0 0.0
        %6495 = vmatpush1.msra.mxu0 0.0
        %6496 = vmatprep.subr.mxu0 0.0
        %6497 = vmatpush1.msra.mxu0 0.0
        %6498 = vmatprep.subr.mxu0 0.0
        %6499 = vmatpush1.msra.mxu0 0.0
        %6500 = vmatprep.subr.mxu0 0.0
        %6501 = vmatpush1.msra.mxu0 0.0
        %6502 = vmatprep.subr.mxu0 0.0
        %6503 = vmatpush1.msra.mxu0 0.0
        %6504 = vmatprep.subr.mxu0 0.0
        %6505 = vmatpush1.msra.mxu0 0.0
        %6506 = vmatprep.subr.mxu0 0.0
        %6507 = vmatpush1.msra.mxu0 0.0
        %6508 = vmatprep.subr.mxu0 0.0
        %6509 = vmatpush1.msra.mxu0 0.0
        %6510 = vmatprep.subr.mxu0 0.0
        %6511 = vmatpush1.msra.mxu0 0.0
        %6512 = vmatprep.subr.mxu0 0.0
        %6513 = vmatpush1.msra.mxu0 0.0
        %6514 = vmatprep.subr.mxu0 0.0
        %6515 = vmatpush1.msra.mxu0 0.0
        %6516 = vmatprep.subr.mxu0 0.0
        %6517 = vmatpush1.msra.mxu0 0.0
        %6518 = vmatprep.subr.mxu0 0.0
        %6519 = vmatpush1.msra.mxu0 0.0
        %6520 = vmatprep.subr.mxu0 0.0
        %6521 = vmatpush1.msra.mxu0 0.0
        %6522 = vmatprep.subr.mxu0 0.0
        %6523 = vmatpush1.msra.mxu0 0.0
        %6524 = vmatprep.subr.mxu0 0.0
        %6525 = vmatpush1.msra.mxu0 0.0
        %6526 = vmatprep.subr.mxu0 0.0
        %6527 = vmatpush1.msra.mxu0 0.0
        %6528 = vmatprep.subr.mxu0 0.0
        %6529 = vmatpush1.msra.mxu0 0.0
        %6530 = vmatprep.subr.mxu0 0.0
        %6531 = vmatpush1.msra.mxu0 0.0
        %6532 = vmatprep.subr.mxu0 0.0
        %6533 = vmatpush1.msra.mxu0 0.0
        %6534 = vmatprep.subr.mxu0 0.0
        %6535 = vmatpush1.msra.mxu0 0.0
        %6536 = vmatprep.subr.mxu0 0.0
        %6537 = vmatpush1.msra.mxu0 0.0
        %6538 = vmatprep.subr.mxu0 0.0
        %6539 = vmatpush1.msra.mxu0 0.0
        %6540 = vmatprep.mubr.f32.mxu0 0.0
        %6541 = vmatmul.mubr.f32.gmra.mrb[0].mxu0 %v6393
        %v6542 = vpop.f32.mrb[0].mxu0
        %v6543 = vadd.f32 0.0, %v6542
        %v6544 = vpop.f32.mrb[0].mxu0
        %6545 = vmatprep.mubr.f32.mxu0 0.0
        %6546 = vmatmul.mubr.f32.gmra.mrb[0].mxu0 %v6396
        %v6547 = vpop.f32.mrb[0].mxu0
        %v6548 = vadd.f32 0.0, %v6547
        %v6549 = vpop.f32.mrb[0].mxu0
        %6550 = vmatprep.mubr.f32.mxu0 0.0
        %6551 = vmatmul.mubr.f32.gmra.mrb[0].mxu0 %v6399
        %v6552 = vpop.f32.mrb[0].mxu0
        %v6553 = vadd.f32 0.0, %v6552
        %v6554 = vpop.f32.mrb[0].mxu0
        %6555 = vmatprep.mubr.f32.mxu0 0.0
        %6556 = vmatmul.mubr.f32.gmra.mrb[0].mxu0 %v6402
        %v6557 = vpop.f32.mrb[0].mxu0
        %v6558 = vadd.f32 0.0, %v6557
        %v6559 = vpop.f32.mrb[0].mxu0
        %6560 = vmatprep.mubr.f32.mxu0 0.0
        %6561 = vmatmul.mubr.f32.gmra.mrb[0].mxu0 %v6405
        %v6562 = vpop.f32.mrb[0].mxu0
        %v6563 = vadd.f32 0.0, %v6562
        %v6564 = vpop.f32.mrb[0].mxu0
        %6565 = vmatprep.mubr.f32.mxu0 0.0
        %6566 = vmatmul.mubr.f32.gmra.mrb[0].mxu0 %v6408
        %v6567 = vpop.f32.mrb[0].mxu0
        %v6568 = vadd.f32 0.0, %v6567
        %v6569 = vpop.f32.mrb[0].mxu0
        %6570 = vmatprep.mubr.f32.mxu0 0.0
        %6571 = vmatmul.mubr.f32.gmra.mrb[0].mxu0 %v6411
        %v6572 = vpop.f32.mrb[0].mxu0
        %v6573 = vadd.f32 0.0, %v6572
        %v6574 = vpop.f32.mrb[0].mxu0
        %6575 = vmatprep.mubr.f32.mxu0 0.0
        %6576 = vmatmul.mubr.f32.gmra.mrb[0].mxu0 %v6414
        %v6577 = vpop.f32.mrb[0].mxu0
        %v6578 = vadd.f32 0.0, %v6577
        %v6579 = vpop.f32.mrb[0].mxu0
        %6580 = vmatprep.mubr.f32.mxu0 0.0
        %6581 = vmatmul.mubr.f32.gmra.mrb[0].mxu0 %v6417
        %v6582 = vpop.f32.mrb[0].mxu0
        %v6583 = vadd.f32 0.0, %v6582
        %v6584 = vpop.f32.mrb[0].mxu0
        %6585 = vmatprep.mubr.f32.mxu0 0.0
        %6586 = vmatmul.mubr.f32.gmra.mrb[0].mxu0 %v6420
        %v6587 = vpop.f32.mrb[0].mxu0
        %v6588 = vadd.f32 0.0, %v6587
        %v6589 = vpop.f32.mrb[0].mxu0
        %6590 = vmatprep.mubr.f32.mxu0 0.0
        %6591 = vmatmul.mubr.f32.gmra.mrb[0].mxu0 %v6423
        %v6592 = vpop.f32.mrb[0].mxu0
        %v6593 = vadd.f32 0.0, %v6592
        %v6594 = vpop.f32.mrb[0].mxu0
        %6595 = vmatprep.mubr.f32.mxu0 0.0
        %6596 = vmatmul.mubr.f32.gmra.mrb[0].mxu0 %v6426
        %v6597 = vpop.f32.mrb[0].mxu0
        %v6598 = vadd.f32 0.0, %v6597
        %v6599 = vpop.f32.mrb[0].mxu0
        %6600 = vmatprep.mubr.f32.mxu0 0.0
        %6601 = vmatmul.mubr.f32.gmra.mrb[0].mxu0 %v6429
        %v6602 = vpop.f32.mrb[0].mxu0
        %v6603 = vadd.f32 0.0, %v6602
        %v6604 = vpop.f32.mrb[0].mxu0
        %6605 = vmatprep.mubr.f32.mxu0 0.0
        %6606 = vmatmul.mubr.f32.gmra.mrb[0].mxu0 %v6432
        %v6607 = vpop.f32.mrb[0].mxu0
        %v6608 = vadd.f32 0.0, %v6607
        %v6609 = vpop.f32.mrb[0].mxu0
        %6610 = vmatprep.mubr.f32.mxu0 0.0
        %6611 = vmatmul.mubr.f32.gmra.mrb[0].mxu0 %v6435
        %v6612 = vpop.f32.mrb[0].mxu0
        %v6613 = vadd.f32 0.0, %v6612
        %v6614 = vpop.f32.mrb[0].mxu0
        %6615 = vmatprep.mubr.f32.mxu0 0.0
        %6616 = vmatmul.mubr.f32.gmra.mrb[0].mxu0 %v6438
        %v6617 = vpop.f32.mrb[0].mxu0
        %v6618 = vadd.f32 0.0, %v6617
        %v6619 = vpop.f32.mrb[0].mxu0
        %6620 = vmatprep.mubr.f32.mxu0 0.0
        %6621 = vmatmul.mubr.f32.gmra.mrb[0].mxu0 %v6441
        %v6622 = vpop.f32.mrb[0].mxu0
        %v6623 = vadd.f32 0.0, %v6622
        %v6624 = vpop.f32.mrb[0].mxu0
        %6625 = vmatprep.mubr.f32.mxu0 0.0
        %6626 = vmatmul.mubr.f32.gmra.mrb[0].mxu0 %v6444
        %v6627 = vpop.f32.mrb[0].mxu0
        %v6628 = vadd.f32 0.0, %v6627
        %v6629 = vpop.f32.mrb[0].mxu0
        %6630 = vmatprep.mubr.f32.mxu0 0.0
        %6631 = vmatmul.mubr.f32.gmra.mrb[0].mxu0 %v6447
        %v6632 = vpop.f32.mrb[0].mxu0
        %v6633 = vadd.f32 0.0, %v6632
        %v6634 = vpop.f32.mrb[0].mxu0
        %6635 = vmatprep.mubr.f32.mxu0 0.0
        %6636 = vmatmul.mubr.f32.gmra.mrb[0].mxu0 %v6450
        %v6637 = vpop.f32.mrb[0].mxu0
        %v6638 = vadd.f32 0.0, %v6637
        %v6639 = vpop.f32.mrb[0].mxu0
        %6640 = vmatprep.mubr.f32.mxu0 0.0
        %6641 = vmatmul.mubr.f32.gmra.mrb[0].mxu0 %v6453
        %v6642 = vpop.f32.mrb[0].mxu0
        %v6643 = vadd.f32 0.0, %v6642
        %v6644 = vpop.f32.mrb[0].mxu0
        %6645 = vmatprep.mubr.f32.mxu0 0.0
        %6646 = vmatmul.mubr.f32.gmra.mrb[0].mxu0 %v6456
        %v6647 = vpop.f32.mrb[0].mxu0
        %v6648 = vadd.f32 0.0, %v6647
        %v6649 = vpop.f32.mrb[0].mxu0
        %6650 = vmatprep.mubr.f32.mxu0 0.0
        %6651 = vmatmul.mubr.f32.gmra.mrb[0].mxu0 %v6459
        %v6652 = vpop.f32.mrb[0].mxu0
        %v6653 = vadd.f32 0.0, %v6652
        %v6654 = vpop.f32.mrb[0].mxu0
        %6655 = vmatprep.mubr.f32.mxu0 0.0
        %6656 = vmatmul.mubr.f32.gmra.mrb[0].mxu0 %v6462
        %v6657 = vpop.f32.mrb[0].mxu0
        %v6658 = vadd.f32 0.0, %v6657
        %v6659 = vpop.f32.mrb[0].mxu0
        %6660 = vmatprep.mubr.f32.mxu0 0.0
        %6661 = vmatmul.mubr.f32.gmra.mrb[0].mxu0 %v6465
        %v6662 = vpop.f32.mrb[0].mxu0
        %v6663 = vadd.f32 0.0, %v6662
        %v6664 = vpop.f32.mrb[0].mxu0
        %6665 = vmatprep.mubr.f32.mxu0 0.0
        %6666 = vmatmul.mubr.f32.gmra.mrb[0].mxu0 %v6468
        %v6667 = vpop.f32.mrb[0].mxu0
        %v6668 = vadd.f32 0.0, %v6667
        %v6669 = vpop.f32.mrb[0].mxu0
        %6670 = vmatprep.mubr.f32.mxu0 0.0
        %6671 = vmatmul.mubr.f32.gmra.mrb[0].mxu0 %v6471
        %v6672 = vpop.f32.mrb[0].mxu0
        %v6673 = vadd.f32 0.0, %v6672
        %v6674 = vpop.f32.mrb[0].mxu0
        %6675 = vmatprep.mubr.f32.mxu0 0.0
        %6676 = vmatmul.mubr.f32.gmra.mrb[0].mxu0 %v6474
        %v6677 = vpop.f32.mrb[0].mxu0
        %v6678 = vadd.f32 0.0, %v6677
        %v6679 = vpop.f32.mrb[0].mxu0
        %6680 = vdwg.mxu0
        %v6681 = vadd.f32 %v6333, %v6543
        %v6682 = vadd.f32 %v6334, %v6548
        %v6683 = vadd.f32 %v6335, %v6553
        %v6684 = vadd.f32 %v6336, %v6558
        %v6685 = vadd.f32 %v6337, %v6563
        %v6686 = vadd.f32 %v6338, %v6568
        %v6687 = vadd.f32 %v6339, %v6573
        %v6688 = vadd.f32 %v6340, %v6578
        %v6689 = vadd.f32 %v6341, %v6583
        %v6690 = vadd.f32 %v6342, %v6588
        %v6691 = vadd.f32 %v6343, %v6593
        %v6692 = vadd.f32 %v6344, %v6598
        %v6693 = vadd.f32 %v6345, %v6603
        %v6694 = vadd.f32 %v6346, %v6608
        %v6695 = vadd.f32 %v6347, %v6613
        %v6696 = vadd.f32 %v6348, %v6618
        %v6697 = vadd.f32 %v6349, %v6623
        %v6698 = vadd.f32 %v6350, %v6628
        %v6699 = vadd.f32 %v6351, %v6633
        %v6700 = vadd.f32 %v6352, %v6638
        %v6701 = vadd.f32 %v6353, %v6643
        %v6702 = vadd.f32 %v6354, %v6648
        %v6703 = vadd.f32 %v6355, %v6653
        %v6704 = vadd.f32 %v6356, %v6658
        %v6705 = vadd.f32 %v6357, %v6663
        %v6706 = vadd.f32 %v6358, %v6668
        %v6707 = vadd.f32 %v6359, %v6673
        %v6708 = vadd.f32 %v6360, %v6678
        %v6709 = vld [vmem:[%s6012 + $0x2] sm:$0xff]
        %v6710 = vld [vmem:[%s6012 + $0xa] sm:$0xff]
        %v6711 = vld [vmem:[%s6012 + $0x1a] sm:$0xff]
        %v6712 = vld [vmem:[%s6012 + $0x22] sm:$0xff]
        %v6713 = vld [vmem:[%s6012 + $0x32] sm:$0xff]
        %v6714 = vld [vmem:[%s6012 + $0x3a] sm:$0xff]
        %v6715 = vld [vmem:[%s6012 + $0x4a] sm:$0xff]
        %v6716 = vld [vmem:[%s6012 + $0x52] sm:$0xff]
        %v6717 = vld [vmem:[%s6012 + $0x62] sm:$0xff]
        %v6718 = vld [vmem:[%s6012 + $0x6a] sm:$0xff]
        %v6719 = vld [vmem:[%s6012 + $0x7a] sm:$0xff]
        %v6720 = vld [vmem:[%s6012 + $0x82] sm:$0xff]
        %v6721 = vld [vmem:[%s6012 + $0x92] sm:$0xff]
        %v6722 = vld [vmem:[%s6012 + $0x9a] sm:$0xff]
        %v6723 = vld [vmem:[%s6012 + $0xaa] sm:$0xff]
        %v6724 = vld [vmem:[%s6012 + $0xb2] sm:$0xff]
        %v6725 = vld [vmem:[%s6012 + $0xc2] sm:$0xff]
        %v6726 = vld [vmem:[%s6012 + $0xca] sm:$0xff]
        %v6727 = vld [vmem:[%s6012 + $0xda] sm:$0xff]
        %v6728 = vld [vmem:[%s6012 + $0xe2] sm:$0xff]
        %v6729 = vld [vmem:[%s6012 + $0xf2] sm:$0xff]
        %v6730 = vld [vmem:[%s6012 + $0xfa] sm:$0xff]
        %v6731 = vld [vmem:[%s6012 + $0x10a] sm:$0xff]
        %v6732 = vld [vmem:[%s6012 + $0x112] sm:$0xff]
        %v6733 = vld [vmem:[%s6012 + $0x122] sm:$0xff]
        %v6734 = vld [vmem:[%s6012 + $0x12a] sm:$0xff]
        %v6735 = vld [vmem:[%s6012 + $0x13a] sm:$0xff]
        %v6736 = vld [vmem:[%s6012 + $0x142] sm:$0xff]
        %s6737 = scalar_lea.vmem %s3, 128
        %v6738 = vld [vmem:[%s6737] sm:$0xff]
        %v6739 = vld [vmem:[%s6737 + $0x8] sm:$0xff]
        %v6741 = vsel %vm3931, %v6709, 0
        %v6744 = vsel %vm3931, %v6710, 0
        %v6747 = vsel %vm3931, %v6711, 0
        %v6750 = vsel %vm3931, %v6712, 0
        %v6753 = vsel %vm3931, %v6713, 0
        %v6756 = vsel %vm3931, %v6714, 0
        %v6759 = vsel %vm3931, %v6715, 0
        %v6762 = vsel %vm3931, %v6716, 0
        %v6765 = vsel %vm3931, %v6717, 0
        %v6768 = vsel %vm3931, %v6718, 0
        %v6771 = vsel %vm3931, %v6719, 0
        %v6774 = vsel %vm3931, %v6720, 0
        %v6777 = vsel %vm3931, %v6721, 0
        %v6780 = vsel %vm3931, %v6722, 0
        %v6783 = vsel %vm3931, %v6723, 0
        %v6786 = vsel %vm3931, %v6724, 0
        %v6789 = vsel %vm3931, %v6725, 0
        %v6792 = vsel %vm3931, %v6726, 0
        %v6795 = vsel %vm3931, %v6727, 0
        %v6798 = vsel %vm3931, %v6728, 0
        %v6801 = vsel %vm3931, %v6729, 0
        %v6804 = vsel %vm3931, %v6730, 0
        %v6807 = vsel %vm3931, %v6731, 0
        %v6810 = vsel %vm3931, %v6732, 0
        %v6813 = vsel %vm3931, %v6733, 0
        %v6816 = vsel %vm3931, %v6734, 0
        %v6819 = vsel %vm3931, %v6735, 0
        %v6822 = vsel %vm3931, %v6736, 0
        %6824 = vmatprep.subr.mxu0 0.0
        %6825 = vmatpush1.msra.mxu0 %v6738
        %6826 = vmatprep.subr.mxu0 0.0
        %6827 = vmatpush1.msra.mxu0 %v6739
        %6828 = vmatprep.subr.mxu0 0.0
        %6829 = vmatpush1.msra.mxu0 0.0
        %6830 = vmatprep.subr.mxu0 0.0
        %6831 = vmatpush1.msra.mxu0 0.0
        %6832 = vmatprep.subr.mxu0 0.0
        %6833 = vmatpush1.msra.mxu0 0.0
        %6834 = vmatprep.subr.mxu0 0.0
        %6835 = vmatpush1.msra.mxu0 0.0
        %6836 = vmatprep.subr.mxu0 0.0
        %6837 = vmatpush1.msra.mxu0 0.0
        %6838 = vmatprep.subr.mxu0 0.0
        %6839 = vmatpush1.msra.mxu0 0.0
        %6840 = vmatprep.subr.mxu0 0.0
        %6841 = vmatpush1.msra.mxu0 0.0
        %6842 = vmatprep.subr.mxu0 0.0
        %6843 = vmatpush1.msra.mxu0 0.0
        %6844 = vmatprep.subr.mxu0 0.0
        %6845 = vmatpush1.msra.mxu0 0.0
        %6846 = vmatprep.subr.mxu0 0.0
        %6847 = vmatpush1.msra.mxu0 0.0
        %6848 = vmatprep.subr.mxu0 0.0
        %6849 = vmatpush1.msra.mxu0 0.0
        %6850 = vmatprep.subr.mxu0 0.0
        %6851 = vmatpush1.msra.mxu0 0.0
        %6852 = vmatprep.subr.mxu0 0.0
        %6853 = vmatpush1.msra.mxu0 0.0
        %6854 = vmatprep.subr.mxu0 0.0
        %6855 = vmatpush1.msra.mxu0 0.0
        %6856 = vmatprep.subr.mxu0 0.0
        %6857 = vmatpush1.msra.mxu0 0.0
        %6858 = vmatprep.subr.mxu0 0.0
        %6859 = vmatpush1.msra.mxu0 0.0
        %6860 = vmatprep.subr.mxu0 0.0
        %6861 = vmatpush1.msra.mxu0 0.0
        %6862 = vmatprep.subr.mxu0 0.0
        %6863 = vmatpush1.msra.mxu0 0.0
        %6864 = vmatprep.subr.mxu0 0.0
        %6865 = vmatpush1.msra.mxu0 0.0
        %6866 = vmatprep.subr.mxu0 0.0
        %6867 = vmatpush1.msra.mxu0 0.0
        %6868 = vmatprep.subr.mxu0 0.0
        %6869 = vmatpush1.msra.mxu0 0.0
        %6870 = vmatprep.subr.mxu0 0.0
        %6871 = vmatpush1.msra.mxu0 0.0
        %6872 = vmatprep.subr.mxu0 0.0
        %6873 = vmatpush1.msra.mxu0 0.0
        %6874 = vmatprep.subr.mxu0 0.0
        %6875 = vmatpush1.msra.mxu0 0.0
        %6876 = vmatprep.subr.mxu0 0.0
        %6877 = vmatpush1.msra.mxu0 0.0
        %6878 = vmatprep.subr.mxu0 0.0
        %6879 = vmatpush1.msra.mxu0 0.0
        %6880 = vmatprep.subr.mxu0 0.0
        %6881 = vmatpush1.msra.mxu0 0.0
        %6882 = vmatprep.subr.mxu0 0.0
        %6883 = vmatpush1.msra.mxu0 0.0
        %6884 = vmatprep.subr.mxu0 0.0
        %6885 = vmatpush1.msra.mxu0 0.0
        %6886 = vmatprep.subr.mxu0 0.0
        %6887 = vmatpush1.msra.mxu0 0.0
        %6888 = vmatprep.mubr.f32.mxu0 0.0
        %6889 = vmatmul.mubr.f32.gmra.mrb[0].mxu0 %v6741
        %v6890 = vpop.f32.mrb[0].mxu0
        %v6891 = vadd.f32 0.0, %v6890
        %v6892 = vpop.f32.mrb[0].mxu0
        %6893 = vmatprep.mubr.f32.mxu0 0.0
        %6894 = vmatmul.mubr.f32.gmra.mrb[0].mxu0 %v6744
        %v6895 = vpop.f32.mrb[0].mxu0
        %v6896 = vadd.f32 0.0, %v6895
        %v6897 = vpop.f32.mrb[0].mxu0
        %6898 = vmatprep.mubr.f32.mxu0 0.0
        %6899 = vmatmul.mubr.f32.gmra.mrb[0].mxu0 %v6747
        %v6900 = vpop.f32.mrb[0].mxu0
        %v6901 = vadd.f32 0.0, %v6900
        %v6902 = vpop.f32.mrb[0].mxu0
        %6903 = vmatprep.mubr.f32.mxu0 0.0
        %6904 = vmatmul.mubr.f32.gmra.mrb[0].mxu0 %v6750
        %v6905 = vpop.f32.mrb[0].mxu0
        %v6906 = vadd.f32 0.0, %v6905
        %v6907 = vpop.f32.mrb[0].mxu0
        %6908 = vmatprep.mubr.f32.mxu0 0.0
        %6909 = vmatmul.mubr.f32.gmra.mrb[0].mxu0 %v6753
        %v6910 = vpop.f32.mrb[0].mxu0
        %v6911 = vadd.f32 0.0, %v6910
        %v6912 = vpop.f32.mrb[0].mxu0
        %6913 = vmatprep.mubr.f32.mxu0 0.0
        %6914 = vmatmul.mubr.f32.gmra.mrb[0].mxu0 %v6756
        %v6915 = vpop.f32.mrb[0].mxu0
        %v6916 = vadd.f32 0.0, %v6915
        %v6917 = vpop.f32.mrb[0].mxu0
        %6918 = vmatprep.mubr.f32.mxu0 0.0
        %6919 = vmatmul.mubr.f32.gmra.mrb[0].mxu0 %v6759
        %v6920 = vpop.f32.mrb[0].mxu0
        %v6921 = vadd.f32 0.0, %v6920
        %v6922 = vpop.f32.mrb[0].mxu0
        %6923 = vmatprep.mubr.f32.mxu0 0.0
        %6924 = vmatmul.mubr.f32.gmra.mrb[0].mxu0 %v6762
        %v6925 = vpop.f32.mrb[0].mxu0
        %v6926 = vadd.f32 0.0, %v6925
        %v6927 = vpop.f32.mrb[0].mxu0
        %6928 = vmatprep.mubr.f32.mxu0 0.0
        %6929 = vmatmul.mubr.f32.gmra.mrb[0].mxu0 %v6765
        %v6930 = vpop.f32.mrb[0].mxu0
        %v6931 = vadd.f32 0.0, %v6930
        %v6932 = vpop.f32.mrb[0].mxu0
        %6933 = vmatprep.mubr.f32.mxu0 0.0
        %6934 = vmatmul.mubr.f32.gmra.mrb[0].mxu0 %v6768
        %v6935 = vpop.f32.mrb[0].mxu0
        %v6936 = vadd.f32 0.0, %v6935
        %v6937 = vpop.f32.mrb[0].mxu0
        %6938 = vmatprep.mubr.f32.mxu0 0.0
        %6939 = vmatmul.mubr.f32.gmra.mrb[0].mxu0 %v6771
        %v6940 = vpop.f32.mrb[0].mxu0
        %v6941 = vadd.f32 0.0, %v6940
        %v6942 = vpop.f32.mrb[0].mxu0
        %6943 = vmatprep.mubr.f32.mxu0 0.0
        %6944 = vmatmul.mubr.f32.gmra.mrb[0].mxu0 %v6774
        %v6945 = vpop.f32.mrb[0].mxu0
        %v6946 = vadd.f32 0.0, %v6945
        %v6947 = vpop.f32.mrb[0].mxu0
        %6948 = vmatprep.mubr.f32.mxu0 0.0
        %6949 = vmatmul.mubr.f32.gmra.mrb[0].mxu0 %v6777
        %v6950 = vpop.f32.mrb[0].mxu0
        %v6951 = vadd.f32 0.0, %v6950
        %v6952 = vpop.f32.mrb[0].mxu0
        %6953 = vmatprep.mubr.f32.mxu0 0.0
        %6954 = vmatmul.mubr.f32.gmra.mrb[0].mxu0 %v6780
        %v6955 = vpop.f32.mrb[0].mxu0
        %v6956 = vadd.f32 0.0, %v6955
        %v6957 = vpop.f32.mrb[0].mxu0
        %6958 = vmatprep.mubr.f32.mxu0 0.0
        %6959 = vmatmul.mubr.f32.gmra.mrb[0].mxu0 %v6783
        %v6960 = vpop.f32.mrb[0].mxu0
        %v6961 = vadd.f32 0.0, %v6960
        %v6962 = vpop.f32.mrb[0].mxu0
        %6963 = vmatprep.mubr.f32.mxu0 0.0
        %6964 = vmatmul.mubr.f32.gmra.mrb[0].mxu0 %v6786
        %v6965 = vpop.f32.mrb[0].mxu0
        %v6966 = vadd.f32 0.0, %v6965
        %v6967 = vpop.f32.mrb[0].mxu0
        %6968 = vmatprep.mubr.f32.mxu0 0.0
        %6969 = vmatmul.mubr.f32.gmra.mrb[0].mxu0 %v6789
        %v6970 = vpop.f32.mrb[0].mxu0
        %v6971 = vadd.f32 0.0, %v6970
        %v6972 = vpop.f32.mrb[0].mxu0
        %6973 = vmatprep.mubr.f32.mxu0 0.0
        %6974 = vmatmul.mubr.f32.gmra.mrb[0].mxu0 %v6792
        %v6975 = vpop.f32.mrb[0].mxu0
        %v6976 = vadd.f32 0.0, %v6975
        %v6977 = vpop.f32.mrb[0].mxu0
        %6978 = vmatprep.mubr.f32.mxu0 0.0
        %6979 = vmatmul.mubr.f32.gmra.mrb[0].mxu0 %v6795
        %v6980 = vpop.f32.mrb[0].mxu0
        %v6981 = vadd.f32 0.0, %v6980
        %v6982 = vpop.f32.mrb[0].mxu0
        %6983 = vmatprep.mubr.f32.mxu0 0.0
        %6984 = vmatmul.mubr.f32.gmra.mrb[0].mxu0 %v6798
        %v6985 = vpop.f32.mrb[0].mxu0
        %v6986 = vadd.f32 0.0, %v6985
        %v6987 = vpop.f32.mrb[0].mxu0
        %6988 = vmatprep.mubr.f32.mxu0 0.0
        %6989 = vmatmul.mubr.f32.gmra.mrb[0].mxu0 %v6801
        %v6990 = vpop.f32.mrb[0].mxu0
        %v6991 = vadd.f32 0.0, %v6990
        %v6992 = vpop.f32.mrb[0].mxu0
        %6993 = vmatprep.mubr.f32.mxu0 0.0
        %6994 = vmatmul.mubr.f32.gmra.mrb[0].mxu0 %v6804
        %v6995 = vpop.f32.mrb[0].mxu0
        %v6996 = vadd.f32 0.0, %v6995
        %v6997 = vpop.f32.mrb[0].mxu0
        %6998 = vmatprep.mubr.f32.mxu0 0.0
        %6999 = vmatmul.mubr.f32.gmra.mrb[0].mxu0 %v6807
        %v7000 = vpop.f32.mrb[0].mxu0
        %v7001 = vadd.f32 0.0, %v7000
        %v7002 = vpop.f32.mrb[0].mxu0
        %7003 = vmatprep.mubr.f32.mxu0 0.0
        %7004 = vmatmul.mubr.f32.gmra.mrb[0].mxu0 %v6810
        %v7005 = vpop.f32.mrb[0].mxu0
        %v7006 = vadd.f32 0.0, %v7005
        %v7007 = vpop.f32.mrb[0].mxu0
        %7008 = vmatprep.mubr.f32.mxu0 0.0
        %7009 = vmatmul.mubr.f32.gmra.mrb[0].mxu0 %v6813
        %v7010 = vpop.f32.mrb[0].mxu0
        %v7011 = vadd.f32 0.0, %v7010
        %v7012 = vpop.f32.mrb[0].mxu0
        %7013 = vmatprep.mubr.f32.mxu0 0.0
        %7014 = vmatmul.mubr.f32.gmra.mrb[0].mxu0 %v6816
        %v7015 = vpop.f32.mrb[0].mxu0
        %v7016 = vadd.f32 0.0, %v7015
        %v7017 = vpop.f32.mrb[0].mxu0
        %7018 = vmatprep.mubr.f32.mxu0 0.0
        %7019 = vmatmul.mubr.f32.gmra.mrb[0].mxu0 %v6819
        %v7020 = vpop.f32.mrb[0].mxu0
        %v7021 = vadd.f32 0.0, %v7020
        %v7022 = vpop.f32.mrb[0].mxu0
        %7023 = vmatprep.mubr.f32.mxu0 0.0
        %7024 = vmatmul.mubr.f32.gmra.mrb[0].mxu0 %v6822
        %v7025 = vpop.f32.mrb[0].mxu0
        %v7026 = vadd.f32 0.0, %v7025
        %v7027 = vpop.f32.mrb[0].mxu0
        %7028 = vdwg.mxu0
        %v7029 = vadd.f32 %v6681, %v6891
        %v7030 = vadd.f32 %v6682, %v6896
        %v7031 = vadd.f32 %v6683, %v6901
        %v7032 = vadd.f32 %v6684, %v6906
        %v7033 = vadd.f32 %v6685, %v6911
        %v7034 = vadd.f32 %v6686, %v6916
        %v7035 = vadd.f32 %v6687, %v6921
        %v7036 = vadd.f32 %v6688, %v6926
        %v7037 = vadd.f32 %v6689, %v6931
        %v7038 = vadd.f32 %v6690, %v6936
        %v7039 = vadd.f32 %v6691, %v6941
        %v7040 = vadd.f32 %v6692, %v6946
        %v7041 = vadd.f32 %v6693, %v6951
        %v7042 = vadd.f32 %v6694, %v6956
        %v7043 = vadd.f32 %v6695, %v6961
        %v7044 = vadd.f32 %v6696, %v6966
        %v7045 = vadd.f32 %v6697, %v6971
        %v7046 = vadd.f32 %v6698, %v6976
        %v7047 = vadd.f32 %v6699, %v6981
        %v7048 = vadd.f32 %v6700, %v6986
        %v7049 = vadd.f32 %v6701, %v6991
        %v7050 = vadd.f32 %v6702, %v6996
        %v7051 = vadd.f32 %v6703, %v7001
        %v7052 = vadd.f32 %v6704, %v7006
        %v7053 = vadd.f32 %v6705, %v7011
        %v7054 = vadd.f32 %v6706, %v7016
        %v7055 = vadd.f32 %v6707, %v7021
        %v7056 = vadd.f32 %v6708, %v7026
        %v7057 = vld [vmem:[%s4] sm:$0x1]
        %v7059 = vlaneseq
        %v7060 = vshrl.u32 %v7059, 7
        %v7061 = vsub.s32 0, %v7060
        %v7062 = vrot.slane %v7057, %v7061
        %v7064 = vadd.f32 %v7029, %v7062
        %v7065 = vadd.f32 %v7030, %v7062
        %v7066 = vadd.f32 %v7031, %v7062
        %v7067 = vadd.f32 %v7032, %v7062
        %v7068 = vadd.f32 %v7033, %v7062
        %v7069 = vadd.f32 %v7034, %v7062
        %v7070 = vadd.f32 %v7035, %v7062
        %v7071 = vadd.f32 %v7036, %v7062
        %v7072 = vadd.f32 %v7037, %v7062
        %v7073 = vadd.f32 %v7038, %v7062
        %v7074 = vadd.f32 %v7039, %v7062
        %v7075 = vadd.f32 %v7040, %v7062
        %v7076 = vadd.f32 %v7041, %v7062
        %v7077 = vadd.f32 %v7042, %v7062
        %v7078 = vadd.f32 %v7043, %v7062
        %v7079 = vadd.f32 %v7044, %v7062
        %v7080 = vadd.f32 %v7045, %v7062
        %v7081 = vadd.f32 %v7046, %v7062
        %v7082 = vadd.f32 %v7047, %v7062
        %v7083 = vadd.f32 %v7048, %v7062
        %v7084 = vadd.f32 %v7049, %v7062
        %v7085 = vadd.f32 %v7050, %v7062
        %v7086 = vadd.f32 %v7051, %v7062
        %v7087 = vadd.f32 %v7052, %v7062
        %v7088 = vadd.f32 %v7053, %v7062
        %v7089 = vadd.f32 %v7054, %v7062
        %v7090 = vadd.f32 %v7055, %v7062
        %v7091 = vadd.f32 %v7056, %v7062
        %v7092 = vmax.f32 %v7064, 0.0
        %v7093 = vmax.f32 %v7065, 0.0
        %v7094 = vmax.f32 %v7066, 0.0
        %v7095 = vmax.f32 %v7067, 0.0
        %v7096 = vmax.f32 %v7068, 0.0
        %v7097 = vmax.f32 %v7069, 0.0
        %v7098 = vmax.f32 %v7070, 0.0
        %v7099 = vmax.f32 %v7071, 0.0
        %v7100 = vmax.f32 %v7072, 0.0
        %v7101 = vmax.f32 %v7073, 0.0
        %v7102 = vmax.f32 %v7074, 0.0
        %v7103 = vmax.f32 %v7075, 0.0
        %v7104 = vmax.f32 %v7076, 0.0
        %v7105 = vmax.f32 %v7077, 0.0
        %v7106 = vmax.f32 %v7078, 0.0
        %v7107 = vmax.f32 %v7079, 0.0
        %v7108 = vmax.f32 %v7080, 0.0
        %v7109 = vmax.f32 %v7081, 0.0
        %v7110 = vmax.f32 %v7082, 0.0
        %v7111 = vmax.f32 %v7083, 0.0
        %v7112 = vmax.f32 %v7084, 0.0
        %v7113 = vmax.f32 %v7085, 0.0
        %v7114 = vmax.f32 %v7086, 0.0
        %v7115 = vmax.f32 %v7087, 0.0
        %v7116 = vmax.f32 %v7088, 0.0
        %v7117 = vmax.f32 %v7089, 0.0
        %v7118 = vmax.f32 %v7090, 0.0
        %v7119 = vmax.f32 %v7091, 0.0
        %vm7120 = vcmask 261120
        %7121 = vst.msk [vmem:[#allocation3] sm:$0xff] %vm7120, %v7092
        %7122 = vst.msk [vmem:[#allocation3 + $0x8] sm:$0xff] %vm7120, %v7093
        %7123 = vst.msk [vmem:[#allocation3 + $0x18] sm:$0xff] %vm7120, %v7094
        %7124 = vst.msk [vmem:[#allocation3 + $0x20] sm:$0xff] %vm7120, %v7095
        %7125 = vst.msk [vmem:[#allocation3 + $0x30] sm:$0xff] %vm7120, %v7096
        %7126 = vst.msk [vmem:[#allocation3 + $0x38] sm:$0xff] %vm7120, %v7097
        %7127 = vst.msk [vmem:[#allocation3 + $0x48] sm:$0xff] %vm7120, %v7098
        %7128 = vst.msk [vmem:[#allocation3 + $0x50] sm:$0xff] %vm7120, %v7099
        %7129 = vst.msk [vmem:[#allocation3 + $0x60] sm:$0xff] %vm7120, %v7100
        %7130 = vst.msk [vmem:[#allocation3 + $0x68] sm:$0xff] %vm7120, %v7101
        %7131 = vst.msk [vmem:[#allocation3 + $0x78] sm:$0xff] %vm7120, %v7102
        %7132 = vst.msk [vmem:[#allocation3 + $0x80] sm:$0xff] %vm7120, %v7103
        %7133 = vst.msk [vmem:[#allocation3 + $0x90] sm:$0xff] %vm7120, %v7104
        %7134 = vst.msk [vmem:[#allocation3 + $0x98] sm:$0xff] %vm7120, %v7105
        %7135 = vst.msk [vmem:[#allocation3 + $0xa8] sm:$0xff] %vm7120, %v7106
        %7136 = vst.msk [vmem:[#allocation3 + $0xb0] sm:$0xff] %vm7120, %v7107
        %7137 = vst.msk [vmem:[#allocation3 + $0xc0] sm:$0xff] %vm7120, %v7108
        %7138 = vst.msk [vmem:[#allocation3 + $0xc8] sm:$0xff] %vm7120, %v7109
        %7139 = vst.msk [vmem:[#allocation3 + $0xd8] sm:$0xff] %vm7120, %v7110
        %7140 = vst.msk [vmem:[#allocation3 + $0xe0] sm:$0xff] %vm7120, %v7111
        %7141 = vst.msk [vmem:[#allocation3 + $0xf0] sm:$0xff] %vm7120, %v7112
        %7142 = vst.msk [vmem:[#allocation3 + $0xf8] sm:$0xff] %vm7120, %v7113
        %7143 = vst.msk [vmem:[#allocation3 + $0x108] sm:$0xff] %vm7120, %v7114
        %7144 = vst.msk [vmem:[#allocation3 + $0x110] sm:$0xff] %vm7120, %v7115
        %7145 = vst.msk [vmem:[#allocation3 + $0x120] sm:$0xff] %vm7120, %v7116
        %7146 = vst.msk [vmem:[#allocation3 + $0x128] sm:$0xff] %vm7120, %v7117
        %7147 = vst.msk [vmem:[#allocation3 + $0x138] sm:$0xff] %vm7120, %v7118
        %7148 = vst.msk [vmem:[#allocation3 + $0x140] sm:$0xff] %vm7120, %v7119
        %7149 = vst.msk [vmem:[#allocation3 + $0x10] sm:$0xff] %vm7120, 0.0
        %7150 = vst.msk [vmem:[#allocation3 + $0x28] sm:$0xff] %vm7120, 0.0
        %7151 = vst.msk [vmem:[#allocation3 + $0x40] sm:$0xff] %vm7120, 0.0
        %7152 = vst.msk [vmem:[#allocation3 + $0x58] sm:$0xff] %vm7120, 0.0
        %7153 = vst.msk [vmem:[#allocation3 + $0x70] sm:$0xff] %vm7120, 0.0
        %7154 = vst.msk [vmem:[#allocation3 + $0x88] sm:$0xff] %vm7120, 0.0
        %7155 = vst.msk [vmem:[#allocation3 + $0xa0] sm:$0xff] %vm7120, 0.0
        %7156 = vst.msk [vmem:[#allocation3 + $0xb8] sm:$0xff] %vm7120, 0.0
        %7157 = vst.msk [vmem:[#allocation3 + $0xd0] sm:$0xff] %vm7120, 0.0
        %7158 = vst.msk [vmem:[#allocation3 + $0xe8] sm:$0xff] %vm7120, 0.0
        %7159 = vst.msk [vmem:[#allocation3 + $0x100] sm:$0xff] %vm7120, 0.0
        %7160 = vst.msk [vmem:[#allocation3 + $0x118] sm:$0xff] %vm7120, 0.0
        %7161 = vst.msk [vmem:[#allocation3 + $0x130] sm:$0xff] %vm7120, 0.0
        %7162 = vst.msk [vmem:[#allocation3 + $0x148] sm:$0xff] %vm7120, 0.0
        %v7163 = vld [vmem:[#allocation3] sm:$0xff]
        %v7164 = vld [vmem:[#allocation3 + $0x8] sm:$0xff]
        %v7165 = vld [vmem:[#allocation3 + $0x18] sm:$0xff]
        %v7166 = vld [vmem:[#allocation3 + $0x20] sm:$0xff]
        %v7167 = vld [vmem:[#allocation3 + $0x30] sm:$0xff]
        %v7168 = vld [vmem:[#allocation3 + $0x38] sm:$0xff]
        %v7169 = vld [vmem:[#allocation3 + $0x48] sm:$0xff]
        %v7170 = vld [vmem:[#allocation3 + $0x50] sm:$0xff]
        %v7171 = vld [vmem:[#allocation3 + $0x60] sm:$0xff]
        %v7172 = vld [vmem:[#allocation3 + $0x68] sm:$0xff]
        %v7173 = vld [vmem:[#allocation3 + $0x78] sm:$0xff]
        %v7174 = vld [vmem:[#allocation3 + $0x80] sm:$0xff]
        %v7175 = vld [vmem:[#allocation3 + $0x90] sm:$0xff]
        %v7176 = vld [vmem:[#allocation3 + $0x98] sm:$0xff]
        %v7177 = vld [vmem:[#allocation3 + $0xa8] sm:$0xff]
        %v7178 = vld [vmem:[#allocation3 + $0xb0] sm:$0xff]
        %v7179 = vld [vmem:[#allocation3 + $0xc0] sm:$0xff]
        %v7180 = vld [vmem:[#allocation3 + $0xc8] sm:$0xff]
        %v7181 = vld [vmem:[#allocation3 + $0xd8] sm:$0xff]
        %v7182 = vld [vmem:[#allocation3 + $0xe0] sm:$0xff]
        %v7183 = vld [vmem:[#allocation3 + $0xf0] sm:$0xff]
        %v7184 = vld [vmem:[#allocation3 + $0xf8] sm:$0xff]
        %v7185 = vld [vmem:[#allocation3 + $0x108] sm:$0xff]
        %v7186 = vld [vmem:[#allocation3 + $0x110] sm:$0xff]
        %v7187 = vld [vmem:[%s5] sm:$0xff]
        %v7188 = vld [vmem:[%s5 + $0x8] sm:$0xff]
        %v7189 = vld [vmem:[%s5 + $0x10] sm:$0xff]
        %v7190 = vld [vmem:[%s5 + $0x18] sm:$0xff]
        %v7191 = vld [vmem:[#allocation3 + $0x1] sm:$0xff]
        %v7192 = vld [vmem:[#allocation3 + $0x9] sm:$0xff]
        %v7193 = vld [vmem:[#allocation3 + $0x19] sm:$0xff]
        %v7194 = vld [vmem:[#allocation3 + $0x21] sm:$0xff]
        %v7195 = vld [vmem:[#allocation3 + $0x31] sm:$0xff]
        %v7196 = vld [vmem:[#allocation3 + $0x39] sm:$0xff]
        %v7197 = vld [vmem:[#allocation3 + $0x49] sm:$0xff]
        %v7198 = vld [vmem:[#allocation3 + $0x51] sm:$0xff]
        %v7199 = vld [vmem:[#allocation3 + $0x61] sm:$0xff]
        %v7200 = vld [vmem:[#allocation3 + $0x69] sm:$0xff]
        %v7201 = vld [vmem:[#allocation3 + $0x79] sm:$0xff]
        %v7202 = vld [vmem:[#allocation3 + $0x81] sm:$0xff]
        %v7203 = vld [vmem:[#allocation3 + $0x91] sm:$0xff]
        %v7204 = vld [vmem:[#allocation3 + $0x99] sm:$0xff]
        %v7205 = vld [vmem:[#allocation3 + $0xa9] sm:$0xff]
        %v7206 = vld [vmem:[#allocation3 + $0xb1] sm:$0xff]
        %v7207 = vld [vmem:[#allocation3 + $0xc1] sm:$0xff]
        %v7208 = vld [vmem:[#allocation3 + $0xc9] sm:$0xff]
        %v7209 = vld [vmem:[#allocation3 + $0xd9] sm:$0xff]
        %v7210 = vld [vmem:[#allocation3 + $0xe1] sm:$0xff]
        %v7211 = vld [vmem:[#allocation3 + $0xf1] sm:$0xff]
        %v7212 = vld [vmem:[#allocation3 + $0xf9] sm:$0xff]
        %v7213 = vld [vmem:[#allocation3 + $0x109] sm:$0xff]
        %v7214 = vld [vmem:[#allocation3 + $0x111] sm:$0xff]
        %s7215 = scalar_lea.vmem %s5, 32
        %v7216 = vld [vmem:[%s7215] sm:$0xff]
        %v7217 = vld [vmem:[%s7215 + $0x8] sm:$0xff]
        %v7218 = vld [vmem:[%s7215 + $0x10] sm:$0xff]
        %v7219 = vld [vmem:[%s7215 + $0x18] sm:$0xff]
        %v7221 = vsel %vm7120, %v7191, 0
        %v7224 = vsel %vm7120, %v7192, 0
        %v7227 = vsel %vm7120, %v7193, 0
        %v7230 = vsel %vm7120, %v7194, 0
        %v7233 = vsel %vm7120, %v7195, 0
        %v7236 = vsel %vm7120, %v7196, 0
        %v7239 = vsel %vm7120, %v7197, 0
        %v7242 = vsel %vm7120, %v7198, 0
        %v7245 = vsel %vm7120, %v7199, 0
        %v7248 = vsel %vm7120, %v7200, 0
        %v7251 = vsel %vm7120, %v7201, 0
        %v7254 = vsel %vm7120, %v7202, 0
        %v7257 = vsel %vm7120, %v7203, 0
        %v7260 = vsel %vm7120, %v7204, 0
        %v7263 = vsel %vm7120, %v7205, 0
        %v7266 = vsel %vm7120, %v7206, 0
        %v7269 = vsel %vm7120, %v7207, 0
        %v7272 = vsel %vm7120, %v7208, 0
        %v7275 = vsel %vm7120, %v7209, 0
        %v7278 = vsel %vm7120, %v7210, 0
        %v7281 = vsel %vm7120, %v7211, 0
        %v7284 = vsel %vm7120, %v7212, 0
        %v7287 = vsel %vm7120, %v7213, 0
        %v7290 = vsel %vm7120, %v7214, 0
        %7292 = vmatprep.subr.mxu0 0.0
        %7293 = vmatpush1.msra.mxu0 %v7216
        %7294 = vmatprep.subr.mxu0 0.0
        %7295 = vmatpush1.msra.mxu0 %v7217
        %7296 = vmatprep.subr.mxu0 0.0
        %7297 = vmatpush1.msra.mxu0 %v7218
        %7298 = vmatprep.subr.mxu0 0.0
        %7299 = vmatpush1.msra.mxu0 %v7219
        %7300 = vmatprep.subr.mxu0 0.0
        %7301 = vmatpush1.msra.mxu0 0.0
        %7302 = vmatprep.subr.mxu0 0.0
        %7303 = vmatpush1.msra.mxu0 0.0
        %7304 = vmatprep.subr.mxu0 0.0
        %7305 = vmatpush1.msra.mxu0 0.0
        %7306 = vmatprep.subr.mxu0 0.0
        %7307 = vmatpush1.msra.mxu0 0.0
        %7308 = vmatprep.subr.mxu0 0.0
        %7309 = vmatpush1.msra.mxu0 0.0
        %7310 = vmatprep.subr.mxu0 0.0
        %7311 = vmatpush1.msra.mxu0 0.0
        %7312 = vmatprep.subr.mxu0 0.0
        %7313 = vmatpush1.msra.mxu0 0.0
        %7314 = vmatprep.subr.mxu0 0.0
        %7315 = vmatpush1.msra.mxu0 0.0
        %7316 = vmatprep.subr.mxu0 0.0
        %7317 = vmatpush1.msra.mxu0 0.0
        %7318 = vmatprep.subr.mxu0 0.0
        %7319 = vmatpush1.msra.mxu0 0.0
        %7320 = vmatprep.subr.mxu0 0.0
        %7321 = vmatpush1.msra.mxu0 0.0
        %7322 = vmatprep.subr.mxu0 0.0
        %7323 = vmatpush1.msra.mxu0 0.0
        %7324 = vmatprep.subr.mxu0 0.0
        %7325 = vmatpush1.msra.mxu0 0.0
        %7326 = vmatprep.subr.mxu0 0.0
        %7327 = vmatpush1.msra.mxu0 0.0
        %7328 = vmatprep.subr.mxu0 0.0
        %7329 = vmatpush1.msra.mxu0 0.0
        %7330 = vmatprep.subr.mxu0 0.0
        %7331 = vmatpush1.msra.mxu0 0.0
        %7332 = vmatprep.subr.mxu0 0.0
        %7333 = vmatpush1.msra.mxu0 0.0
        %7334 = vmatprep.subr.mxu0 0.0
        %7335 = vmatpush1.msra.mxu0 0.0
        %7336 = vmatprep.subr.mxu0 0.0
        %7337 = vmatpush1.msra.mxu0 0.0
        %7338 = vmatprep.subr.mxu0 0.0
        %7339 = vmatpush1.msra.mxu0 0.0
        %7340 = vmatprep.subr.mxu0 0.0
        %7341 = vmatpush1.msra.mxu0 0.0
        %7342 = vmatprep.subr.mxu0 0.0
        %7343 = vmatpush1.msra.mxu0 0.0
        %7344 = vmatprep.subr.mxu0 0.0
        %7345 = vmatpush1.msra.mxu0 0.0
        %7346 = vmatprep.subr.mxu0 0.0
        %7347 = vmatpush1.msra.mxu0 0.0
        %7348 = vmatprep.subr.mxu0 0.0
        %7349 = vmatpush1.msra.mxu0 0.0
        %7350 = vmatprep.subr.mxu0 0.0
        %7351 = vmatpush1.msra.mxu0 0.0
        %7352 = vmatprep.subr.mxu0 0.0
        %7353 = vmatpush1.msra.mxu0 0.0
        %7354 = vmatprep.subr.mxu0 0.0
        %7355 = vmatpush1.msra.mxu0 0.0
        %7356 = vmatprep.mubr.f32.mxu0 0.0
        %7357 = vmatmul.mubr.f32.gmra.mrb[0].mxu0 %v7221
        %v7358 = vpop.f32.mrb[0].mxu0
        %v7359 = vadd.f32 0.0, %v7358
        %v7360 = vpop.f32.mrb[0].mxu0
        %7361 = vmatprep.mubr.f32.mxu0 0.0
        %7362 = vmatmul.mubr.f32.gmra.mrb[0].mxu0 %v7224
        %v7363 = vpop.f32.mrb[0].mxu0
        %v7364 = vadd.f32 0.0, %v7363
        %v7365 = vpop.f32.mrb[0].mxu0
        %7366 = vmatprep.mubr.f32.mxu0 0.0
        %7367 = vmatmul.mubr.f32.gmra.mrb[0].mxu0 %v7227
        %v7368 = vpop.f32.mrb[0].mxu0
        %v7369 = vadd.f32 0.0, %v7368
        %v7370 = vpop.f32.mrb[0].mxu0
        %7371 = vmatprep.mubr.f32.mxu0 0.0
        %7372 = vmatmul.mubr.f32.gmra.mrb[0].mxu0 %v7230
        %v7373 = vpop.f32.mrb[0].mxu0
        %v7374 = vadd.f32 0.0, %v7373
        %v7375 = vpop.f32.mrb[0].mxu0
        %7376 = vmatprep.mubr.f32.mxu0 0.0
        %7377 = vmatmul.mubr.f32.gmra.mrb[0].mxu0 %v7233
        %v7378 = vpop.f32.mrb[0].mxu0
        %v7379 = vadd.f32 0.0, %v7378
        %v7380 = vpop.f32.mrb[0].mxu0
        %7381 = vmatprep.mubr.f32.mxu0 0.0
        %7382 = vmatmul.mubr.f32.gmra.mrb[0].mxu0 %v7236
        %v7383 = vpop.f32.mrb[0].mxu0
        %v7384 = vadd.f32 0.0, %v7383
        %v7385 = vpop.f32.mrb[0].mxu0
        %7386 = vmatprep.mubr.f32.mxu0 0.0
        %7387 = vmatmul.mubr.f32.gmra.mrb[0].mxu0 %v7239
        %v7388 = vpop.f32.mrb[0].mxu0
        %v7389 = vadd.f32 0.0, %v7388
        %v7390 = vpop.f32.mrb[0].mxu0
        %7391 = vmatprep.mubr.f32.mxu0 0.0
        %7392 = vmatmul.mubr.f32.gmra.mrb[0].mxu0 %v7242
        %v7393 = vpop.f32.mrb[0].mxu0
        %v7394 = vadd.f32 0.0, %v7393
        %v7395 = vpop.f32.mrb[0].mxu0
        %7396 = vmatprep.mubr.f32.mxu0 0.0
        %7397 = vmatmul.mubr.f32.gmra.mrb[0].mxu0 %v7245
        %v7398 = vpop.f32.mrb[0].mxu0
        %v7399 = vadd.f32 0.0, %v7398
        %v7400 = vpop.f32.mrb[0].mxu0
        %7401 = vmatprep.mubr.f32.mxu0 0.0
        %7402 = vmatmul.mubr.f32.gmra.mrb[0].mxu0 %v7248
        %v7403 = vpop.f32.mrb[0].mxu0
        %v7404 = vadd.f32 0.0, %v7403
        %v7405 = vpop.f32.mrb[0].mxu0
        %7406 = vmatprep.mubr.f32.mxu0 0.0
        %7407 = vmatmul.mubr.f32.gmra.mrb[0].mxu0 %v7251
        %v7408 = vpop.f32.mrb[0].mxu0
        %v7409 = vadd.f32 0.0, %v7408
        %v7410 = vpop.f32.mrb[0].mxu0
        %7411 = vmatprep.mubr.f32.mxu0 0.0
        %7412 = vmatmul.mubr.f32.gmra.mrb[0].mxu0 %v7254
        %v7413 = vpop.f32.mrb[0].mxu0
        %v7414 = vadd.f32 0.0, %v7413
        %v7415 = vpop.f32.mrb[0].mxu0
        %7416 = vmatprep.mubr.f32.mxu0 0.0
        %7417 = vmatmul.mubr.f32.gmra.mrb[0].mxu0 %v7257
        %v7418 = vpop.f32.mrb[0].mxu0
        %v7419 = vadd.f32 0.0, %v7418
        %v7420 = vpop.f32.mrb[0].mxu0
        %7421 = vmatprep.mubr.f32.mxu0 0.0
        %7422 = vmatmul.mubr.f32.gmra.mrb[0].mxu0 %v7260
        %v7423 = vpop.f32.mrb[0].mxu0
        %v7424 = vadd.f32 0.0, %v7423
        %v7425 = vpop.f32.mrb[0].mxu0
        %7426 = vmatprep.mubr.f32.mxu0 0.0
        %7427 = vmatmul.mubr.f32.gmra.mrb[0].mxu0 %v7263
        %v7428 = vpop.f32.mrb[0].mxu0
        %v7429 = vadd.f32 0.0, %v7428
        %v7430 = vpop.f32.mrb[0].mxu0
        %7431 = vmatprep.mubr.f32.mxu0 0.0
        %7432 = vmatmul.mubr.f32.gmra.mrb[0].mxu0 %v7266
        %v7433 = vpop.f32.mrb[0].mxu0
        %v7434 = vadd.f32 0.0, %v7433
        %v7435 = vpop.f32.mrb[0].mxu0
        %7436 = vmatprep.mubr.f32.mxu0 0.0
        %7437 = vmatmul.mubr.f32.gmra.mrb[0].mxu0 %v7269
        %v7438 = vpop.f32.mrb[0].mxu0
        %v7439 = vadd.f32 0.0, %v7438
        %v7440 = vpop.f32.mrb[0].mxu0
        %7441 = vmatprep.mubr.f32.mxu0 0.0
        %7442 = vmatmul.mubr.f32.gmra.mrb[0].mxu0 %v7272
        %v7443 = vpop.f32.mrb[0].mxu0
        %v7444 = vadd.f32 0.0, %v7443
        %v7445 = vpop.f32.mrb[0].mxu0
        %7446 = vmatprep.mubr.f32.mxu0 0.0
        %7447 = vmatmul.mubr.f32.gmra.mrb[0].mxu0 %v7275
        %v7448 = vpop.f32.mrb[0].mxu0
        %v7449 = vadd.f32 0.0, %v7448
        %v7450 = vpop.f32.mrb[0].mxu0
        %7451 = vmatprep.mubr.f32.mxu0 0.0
        %7452 = vmatmul.mubr.f32.gmra.mrb[0].mxu0 %v7278
        %v7453 = vpop.f32.mrb[0].mxu0
        %v7454 = vadd.f32 0.0, %v7453
        %v7455 = vpop.f32.mrb[0].mxu0
        %7456 = vmatprep.mubr.f32.mxu0 0.0
        %7457 = vmatmul.mubr.f32.gmra.mrb[0].mxu0 %v7281
        %v7458 = vpop.f32.mrb[0].mxu0
        %v7459 = vadd.f32 0.0, %v7458
        %v7460 = vpop.f32.mrb[0].mxu0
        %7461 = vmatprep.mubr.f32.mxu0 0.0
        %7462 = vmatmul.mubr.f32.gmra.mrb[0].mxu0 %v7284
        %v7463 = vpop.f32.mrb[0].mxu0
        %v7464 = vadd.f32 0.0, %v7463
        %v7465 = vpop.f32.mrb[0].mxu0
        %7466 = vmatprep.mubr.f32.mxu0 0.0
        %7467 = vmatmul.mubr.f32.gmra.mrb[0].mxu0 %v7287
        %v7468 = vpop.f32.mrb[0].mxu0
        %v7469 = vadd.f32 0.0, %v7468
        %v7470 = vpop.f32.mrb[0].mxu0
        %7471 = vmatprep.mubr.f32.mxu0 0.0
        %7472 = vmatmul.mubr.f32.gmra.mrb[0].mxu0 %v7290
        %v7473 = vpop.f32.mrb[0].mxu0
        %v7474 = vadd.f32 0.0, %v7473
        %v7475 = vpop.f32.mrb[0].mxu0
        %7476 = vdwg.mxu0
        %v7478 = vsel %vm7120, %v7163, 0
        %v7481 = vsel %vm7120, %v7164, 0
        %v7484 = vsel %vm7120, %v7165, 0
        %v7487 = vsel %vm7120, %v7166, 0
        %v7490 = vsel %vm7120, %v7167, 0
        %v7493 = vsel %vm7120, %v7168, 0
        %v7496 = vsel %vm7120, %v7169, 0
        %v7499 = vsel %vm7120, %v7170, 0
        %v7502 = vsel %vm7120, %v7171, 0
        %v7505 = vsel %vm7120, %v7172, 0
        %v7508 = vsel %vm7120, %v7173, 0
        %v7511 = vsel %vm7120, %v7174, 0
        %v7514 = vsel %vm7120, %v7175, 0
        %v7517 = vsel %vm7120, %v7176, 0
        %v7520 = vsel %vm7120, %v7177, 0
        %v7523 = vsel %vm7120, %v7178, 0
        %v7526 = vsel %vm7120, %v7179, 0
        %v7529 = vsel %vm7120, %v7180, 0
        %v7532 = vsel %vm7120, %v7181, 0
        %v7535 = vsel %vm7120, %v7182, 0
        %v7538 = vsel %vm7120, %v7183, 0
        %v7541 = vsel %vm7120, %v7184, 0
        %v7544 = vsel %vm7120, %v7185, 0
        %v7547 = vsel %vm7120, %v7186, 0
        %7549 = vmatprep.subr.mxu0 0.0
        %7550 = vmatpush1.msra.mxu0 %v7187
        %7551 = vmatprep.subr.mxu0 0.0
        %7552 = vmatpush1.msra.mxu0 %v7188
        %7553 = vmatprep.subr.mxu0 0.0
        %7554 = vmatpush1.msra.mxu0 %v7189
        %7555 = vmatprep.subr.mxu0 0.0
        %7556 = vmatpush1.msra.mxu0 %v7190
        %7557 = vmatprep.subr.mxu0 0.0
        %7558 = vmatpush1.msra.mxu0 0.0
        %7559 = vmatprep.subr.mxu0 0.0
        %7560 = vmatpush1.msra.mxu0 0.0
        %7561 = vmatprep.subr.mxu0 0.0
        %7562 = vmatpush1.msra.mxu0 0.0
        %7563 = vmatprep.subr.mxu0 0.0
        %7564 = vmatpush1.msra.mxu0 0.0
        %7565 = vmatprep.subr.mxu0 0.0
        %7566 = vmatpush1.msra.mxu0 0.0
        %7567 = vmatprep.subr.mxu0 0.0
        %7568 = vmatpush1.msra.mxu0 0.0
        %7569 = vmatprep.subr.mxu0 0.0
        %7570 = vmatpush1.msra.mxu0 0.0
        %7571 = vmatprep.subr.mxu0 0.0
        %7572 = vmatpush1.msra.mxu0 0.0
        %7573 = vmatprep.subr.mxu0 0.0
        %7574 = vmatpush1.msra.mxu0 0.0
        %7575 = vmatprep.subr.mxu0 0.0
        %7576 = vmatpush1.msra.mxu0 0.0
        %7577 = vmatprep.subr.mxu0 0.0
        %7578 = vmatpush1.msra.mxu0 0.0
        %7579 = vmatprep.subr.mxu0 0.0
        %7580 = vmatpush1.msra.mxu0 0.0
        %7581 = vmatprep.subr.mxu0 0.0
        %7582 = vmatpush1.msra.mxu0 0.0
        %7583 = vmatprep.subr.mxu0 0.0
        %7584 = vmatpush1.msra.mxu0 0.0
        %7585 = vmatprep.subr.mxu0 0.0
        %7586 = vmatpush1.msra.mxu0 0.0
        %7587 = vmatprep.subr.mxu0 0.0
        %7588 = vmatpush1.msra.mxu0 0.0
        %7589 = vmatprep.subr.mxu0 0.0
        %7590 = vmatpush1.msra.mxu0 0.0
        %7591 = vmatprep.subr.mxu0 0.0
        %7592 = vmatpush1.msra.mxu0 0.0
        %7593 = vmatprep.subr.mxu0 0.0
        %7594 = vmatpush1.msra.mxu0 0.0
        %7595 = vmatprep.subr.mxu0 0.0
        %7596 = vmatpush1.msra.mxu0 0.0
        %7597 = vmatprep.subr.mxu0 0.0
        %7598 = vmatpush1.msra.mxu0 0.0
        %7599 = vmatprep.subr.mxu0 0.0
        %7600 = vmatpush1.msra.mxu0 0.0
        %7601 = vmatprep.subr.mxu0 0.0
        %7602 = vmatpush1.msra.mxu0 0.0
        %7603 = vmatprep.subr.mxu0 0.0
        %7604 = vmatpush1.msra.mxu0 0.0
        %7605 = vmatprep.subr.mxu0 0.0
        %7606 = vmatpush1.msra.mxu0 0.0
        %7607 = vmatprep.subr.mxu0 0.0
        %7608 = vmatpush1.msra.mxu0 0.0
        %7609 = vmatprep.subr.mxu0 0.0
        %7610 = vmatpush1.msra.mxu0 0.0
        %7611 = vmatprep.subr.mxu0 0.0
        %7612 = vmatpush1.msra.mxu0 0.0
        %7613 = vmatprep.mubr.f32.mxu0 0.0
        %7614 = vmatmul.mubr.f32.gmra.mrb[0].mxu0 %v7478
        %v7615 = vpop.f32.mrb[0].mxu0
        %v7616 = vadd.f32 %v7359, %v7615
        %v7617 = vpop.f32.mrb[0].mxu0
        %7618 = vmatprep.mubr.f32.mxu0 0.0
        %7619 = vmatmul.mubr.f32.gmra.mrb[0].mxu0 %v7481
        %v7620 = vpop.f32.mrb[0].mxu0
        %v7621 = vadd.f32 %v7364, %v7620
        %v7622 = vpop.f32.mrb[0].mxu0
        %7623 = vmatprep.mubr.f32.mxu0 0.0
        %7624 = vmatmul.mubr.f32.gmra.mrb[0].mxu0 %v7484
        %v7625 = vpop.f32.mrb[0].mxu0
        %v7626 = vadd.f32 %v7369, %v7625
        %v7627 = vpop.f32.mrb[0].mxu0
        %7628 = vmatprep.mubr.f32.mxu0 0.0
        %7629 = vmatmul.mubr.f32.gmra.mrb[0].mxu0 %v7487
        %v7630 = vpop.f32.mrb[0].mxu0
        %v7631 = vadd.f32 %v7374, %v7630
        %v7632 = vpop.f32.mrb[0].mxu0
        %7633 = vmatprep.mubr.f32.mxu0 0.0
        %7634 = vmatmul.mubr.f32.gmra.mrb[0].mxu0 %v7490
        %v7635 = vpop.f32.mrb[0].mxu0
        %v7636 = vadd.f32 %v7379, %v7635
        %v7637 = vpop.f32.mrb[0].mxu0
        %7638 = vmatprep.mubr.f32.mxu0 0.0
        %7639 = vmatmul.mubr.f32.gmra.mrb[0].mxu0 %v7493
        %v7640 = vpop.f32.mrb[0].mxu0
        %v7641 = vadd.f32 %v7384, %v7640
        %v7642 = vpop.f32.mrb[0].mxu0
        %7643 = vmatprep.mubr.f32.mxu0 0.0
        %7644 = vmatmul.mubr.f32.gmra.mrb[0].mxu0 %v7496
        %v7645 = vpop.f32.mrb[0].mxu0
        %v7646 = vadd.f32 %v7389, %v7645
        %v7647 = vpop.f32.mrb[0].mxu0
        %7648 = vmatprep.mubr.f32.mxu0 0.0
        %7649 = vmatmul.mubr.f32.gmra.mrb[0].mxu0 %v7499
        %v7650 = vpop.f32.mrb[0].mxu0
        %v7651 = vadd.f32 %v7394, %v7650
        %v7652 = vpop.f32.mrb[0].mxu0
        %7653 = vmatprep.mubr.f32.mxu0 0.0
        %7654 = vmatmul.mubr.f32.gmra.mrb[0].mxu0 %v7502
        %v7655 = vpop.f32.mrb[0].mxu0
        %v7656 = vadd.f32 %v7399, %v7655
        %v7657 = vpop.f32.mrb[0].mxu0
        %7658 = vmatprep.mubr.f32.mxu0 0.0
        %7659 = vmatmul.mubr.f32.gmra.mrb[0].mxu0 %v7505
        %v7660 = vpop.f32.mrb[0].mxu0
        %v7661 = vadd.f32 %v7404, %v7660
        %v7662 = vpop.f32.mrb[0].mxu0
        %7663 = vmatprep.mubr.f32.mxu0 0.0
        %7664 = vmatmul.mubr.f32.gmra.mrb[0].mxu0 %v7508
        %v7665 = vpop.f32.mrb[0].mxu0
        %v7666 = vadd.f32 %v7409, %v7665
        %v7667 = vpop.f32.mrb[0].mxu0
        %7668 = vmatprep.mubr.f32.mxu0 0.0
        %7669 = vmatmul.mubr.f32.gmra.mrb[0].mxu0 %v7511
        %v7670 = vpop.f32.mrb[0].mxu0
        %v7671 = vadd.f32 %v7414, %v7670
        %v7672 = vpop.f32.mrb[0].mxu0
        %7673 = vmatprep.mubr.f32.mxu0 0.0
        %7674 = vmatmul.mubr.f32.gmra.mrb[0].mxu0 %v7514
        %v7675 = vpop.f32.mrb[0].mxu0
        %v7676 = vadd.f32 %v7419, %v7675
        %v7677 = vpop.f32.mrb[0].mxu0
        %7678 = vmatprep.mubr.f32.mxu0 0.0
        %7679 = vmatmul.mubr.f32.gmra.mrb[0].mxu0 %v7517
        %v7680 = vpop.f32.mrb[0].mxu0
        %v7681 = vadd.f32 %v7424, %v7680
        %v7682 = vpop.f32.mrb[0].mxu0
        %7683 = vmatprep.mubr.f32.mxu0 0.0
        %7684 = vmatmul.mubr.f32.gmra.mrb[0].mxu0 %v7520
        %v7685 = vpop.f32.mrb[0].mxu0
        %v7686 = vadd.f32 %v7429, %v7685
        %v7687 = vpop.f32.mrb[0].mxu0
        %7688 = vmatprep.mubr.f32.mxu0 0.0
        %7689 = vmatmul.mubr.f32.gmra.mrb[0].mxu0 %v7523
        %v7690 = vpop.f32.mrb[0].mxu0
        %v7691 = vadd.f32 %v7434, %v7690
        %v7692 = vpop.f32.mrb[0].mxu0
        %7693 = vmatprep.mubr.f32.mxu0 0.0
        %7694 = vmatmul.mubr.f32.gmra.mrb[0].mxu0 %v7526
        %v7695 = vpop.f32.mrb[0].mxu0
        %v7696 = vadd.f32 %v7439, %v7695
        %v7697 = vpop.f32.mrb[0].mxu0
        %7698 = vmatprep.mubr.f32.mxu0 0.0
        %7699 = vmatmul.mubr.f32.gmra.mrb[0].mxu0 %v7529
        %v7700 = vpop.f32.mrb[0].mxu0
        %v7701 = vadd.f32 %v7444, %v7700
        %v7702 = vpop.f32.mrb[0].mxu0
        %7703 = vmatprep.mubr.f32.mxu0 0.0
        %7704 = vmatmul.mubr.f32.gmra.mrb[0].mxu0 %v7532
        %v7705 = vpop.f32.mrb[0].mxu0
        %v7706 = vadd.f32 %v7449, %v7705
        %v7707 = vpop.f32.mrb[0].mxu0
        %7708 = vmatprep.mubr.f32.mxu0 0.0
        %7709 = vmatmul.mubr.f32.gmra.mrb[0].mxu0 %v7535
        %v7710 = vpop.f32.mrb[0].mxu0
        %v7711 = vadd.f32 %v7454, %v7710
        %v7712 = vpop.f32.mrb[0].mxu0
        %7713 = vmatprep.mubr.f32.mxu0 0.0
        %7714 = vmatmul.mubr.f32.gmra.mrb[0].mxu0 %v7538
        %v7715 = vpop.f32.mrb[0].mxu0
        %v7716 = vadd.f32 %v7459, %v7715
        %v7717 = vpop.f32.mrb[0].mxu0
        %7718 = vmatprep.mubr.f32.mxu0 0.0
        %7719 = vmatmul.mubr.f32.gmra.mrb[0].mxu0 %v7541
        %v7720 = vpop.f32.mrb[0].mxu0
        %v7721 = vadd.f32 %v7464, %v7720
        %v7722 = vpop.f32.mrb[0].mxu0
        %7723 = vmatprep.mubr.f32.mxu0 0.0
        %7724 = vmatmul.mubr.f32.gmra.mrb[0].mxu0 %v7544
        %v7725 = vpop.f32.mrb[0].mxu0
        %v7726 = vadd.f32 %v7469, %v7725
        %v7727 = vpop.f32.mrb[0].mxu0
        %7728 = vmatprep.mubr.f32.mxu0 0.0
        %7729 = vmatmul.mubr.f32.gmra.mrb[0].mxu0 %v7547
        %v7730 = vpop.f32.mrb[0].mxu0
        %v7731 = vadd.f32 %v7474, %v7730
        %v7732 = vpop.f32.mrb[0].mxu0
        %7733 = vdwg.mxu0
        %v7734 = vld [vmem:[#allocation3 + $0x2] sm:$0xff]
        %v7735 = vld [vmem:[#allocation3 + $0xa] sm:$0xff]
        %v7736 = vld [vmem:[#allocation3 + $0x1a] sm:$0xff]
        %v7737 = vld [vmem:[#allocation3 + $0x22] sm:$0xff]
        %v7738 = vld [vmem:[#allocation3 + $0x32] sm:$0xff]
        %v7739 = vld [vmem:[#allocation3 + $0x3a] sm:$0xff]
        %v7740 = vld [vmem:[#allocation3 + $0x4a] sm:$0xff]
        %v7741 = vld [vmem:[#allocation3 + $0x52] sm:$0xff]
        %v7742 = vld [vmem:[#allocation3 + $0x62] sm:$0xff]
        %v7743 = vld [vmem:[#allocation3 + $0x6a] sm:$0xff]
        %v7744 = vld [vmem:[#allocation3 + $0x7a] sm:$0xff]
        %v7745 = vld [vmem:[#allocation3 + $0x82] sm:$0xff]
        %v7746 = vld [vmem:[#allocation3 + $0x92] sm:$0xff]
        %v7747 = vld [vmem:[#allocation3 + $0x9a] sm:$0xff]
        %v7748 = vld [vmem:[#allocation3 + $0xaa] sm:$0xff]
        %v7749 = vld [vmem:[#allocation3 + $0xb2] sm:$0xff]
        %v7750 = vld [vmem:[#allocation3 + $0xc2] sm:$0xff]
        %v7751 = vld [vmem:[#allocation3 + $0xca] sm:$0xff]
        %v7752 = vld [vmem:[#allocation3 + $0xda] sm:$0xff]
        %v7753 = vld [vmem:[#allocation3 + $0xe2] sm:$0xff]
        %v7754 = vld [vmem:[#allocation3 + $0xf2] sm:$0xff]
        %v7755 = vld [vmem:[#allocation3 + $0xfa] sm:$0xff]
        %v7756 = vld [vmem:[#allocation3 + $0x10a] sm:$0xff]
        %v7757 = vld [vmem:[#allocation3 + $0x112] sm:$0xff]
        %s7758 = scalar_lea.vmem %s5, 64
        %v7759 = vld [vmem:[%s7758] sm:$0xff]
        %v7760 = vld [vmem:[%s7758 + $0x8] sm:$0xff]
        %v7761 = vld [vmem:[%s7758 + $0x10] sm:$0xff]
        %v7762 = vld [vmem:[%s7758 + $0x18] sm:$0xff]
        %v7764 = vsel %vm7120, %v7734, 0
        %v7767 = vsel %vm7120, %v7735, 0
        %v7770 = vsel %vm7120, %v7736, 0
        %v7773 = vsel %vm7120, %v7737, 0
        %v7776 = vsel %vm7120, %v7738, 0
        %v7779 = vsel %vm7120, %v7739, 0
        %v7782 = vsel %vm7120, %v7740, 0
        %v7785 = vsel %vm7120, %v7741, 0
        %v7788 = vsel %vm7120, %v7742, 0
        %v7791 = vsel %vm7120, %v7743, 0
        %v7794 = vsel %vm7120, %v7744, 0
        %v7797 = vsel %vm7120, %v7745, 0
        %v7800 = vsel %vm7120, %v7746, 0
        %v7803 = vsel %vm7120, %v7747, 0
        %v7806 = vsel %vm7120, %v7748, 0
        %v7809 = vsel %vm7120, %v7749, 0
        %v7812 = vsel %vm7120, %v7750, 0
        %v7815 = vsel %vm7120, %v7751, 0
        %v7818 = vsel %vm7120, %v7752, 0
        %v7821 = vsel %vm7120, %v7753, 0
        %v7824 = vsel %vm7120, %v7754, 0
        %v7827 = vsel %vm7120, %v7755, 0
        %v7830 = vsel %vm7120, %v7756, 0
        %v7833 = vsel %vm7120, %v7757, 0
        %7835 = vmatprep.subr.mxu0 0.0
        %7836 = vmatpush1.msra.mxu0 %v7759
        %7837 = vmatprep.subr.mxu0 0.0
        %7838 = vmatpush1.msra.mxu0 %v7760
        %7839 = vmatprep.subr.mxu0 0.0
        %7840 = vmatpush1.msra.mxu0 %v7761
        %7841 = vmatprep.subr.mxu0 0.0
        %7842 = vmatpush1.msra.mxu0 %v7762
        %7843 = vmatprep.subr.mxu0 0.0
        %7844 = vmatpush1.msra.mxu0 0.0
        %7845 = vmatprep.subr.mxu0 0.0
        %7846 = vmatpush1.msra.mxu0 0.0
        %7847 = vmatprep.subr.mxu0 0.0
        %7848 = vmatpush1.msra.mxu0 0.0
        %7849 = vmatprep.subr.mxu0 0.0
        %7850 = vmatpush1.msra.mxu0 0.0
        %7851 = vmatprep.subr.mxu0 0.0
        %7852 = vmatpush1.msra.mxu0 0.0
        %7853 = vmatprep.subr.mxu0 0.0
        %7854 = vmatpush1.msra.mxu0 0.0
        %7855 = vmatprep.subr.mxu0 0.0
        %7856 = vmatpush1.msra.mxu0 0.0
        %7857 = vmatprep.subr.mxu0 0.0
        %7858 = vmatpush1.msra.mxu0 0.0
        %7859 = vmatprep.subr.mxu0 0.0
        %7860 = vmatpush1.msra.mxu0 0.0
        %7861 = vmatprep.subr.mxu0 0.0
        %7862 = vmatpush1.msra.mxu0 0.0
        %7863 = vmatprep.subr.mxu0 0.0
        %7864 = vmatpush1.msra.mxu0 0.0
        %7865 = vmatprep.subr.mxu0 0.0
        %7866 = vmatpush1.msra.mxu0 0.0
        %7867 = vmatprep.subr.mxu0 0.0
        %7868 = vmatpush1.msra.mxu0 0.0
        %7869 = vmatprep.subr.mxu0 0.0
        %7870 = vmatpush1.msra.mxu0 0.0
        %7871 = vmatprep.subr.mxu0 0.0
        %7872 = vmatpush1.msra.mxu0 0.0
        %7873 = vmatprep.subr.mxu0 0.0
        %7874 = vmatpush1.msra.mxu0 0.0
        %7875 = vmatprep.subr.mxu0 0.0
        %7876 = vmatpush1.msra.mxu0 0.0
        %7877 = vmatprep.subr.mxu0 0.0
        %7878 = vmatpush1.msra.mxu0 0.0
        %7879 = vmatprep.subr.mxu0 0.0
        %7880 = vmatpush1.msra.mxu0 0.0
        %7881 = vmatprep.subr.mxu0 0.0
        %7882 = vmatpush1.msra.mxu0 0.0
        %7883 = vmatprep.subr.mxu0 0.0
        %7884 = vmatpush1.msra.mxu0 0.0
        %7885 = vmatprep.subr.mxu0 0.0
        %7886 = vmatpush1.msra.mxu0 0.0
        %7887 = vmatprep.subr.mxu0 0.0
        %7888 = vmatpush1.msra.mxu0 0.0
        %7889 = vmatprep.subr.mxu0 0.0
        %7890 = vmatpush1.msra.mxu0 0.0
        %7891 = vmatprep.subr.mxu0 0.0
        %7892 = vmatpush1.msra.mxu0 0.0
        %7893 = vmatprep.subr.mxu0 0.0
        %7894 = vmatpush1.msra.mxu0 0.0
        %7895 = vmatprep.subr.mxu0 0.0
        %7896 = vmatpush1.msra.mxu0 0.0
        %7897 = vmatprep.subr.mxu0 0.0
        %7898 = vmatpush1.msra.mxu0 0.0
        %7899 = vmatprep.mubr.f32.mxu0 0.0
        %7900 = vmatmul.mubr.f32.gmra.mrb[0].mxu0 %v7764
        %v7901 = vpop.f32.mrb[0].mxu0
        %v7902 = vadd.f32 0.0, %v7901
        %v7903 = vpop.f32.mrb[0].mxu0
        %7904 = vmatprep.mubr.f32.mxu0 0.0
        %7905 = vmatmul.mubr.f32.gmra.mrb[0].mxu0 %v7767
        %v7906 = vpop.f32.mrb[0].mxu0
        %v7907 = vadd.f32 0.0, %v7906
        %v7908 = vpop.f32.mrb[0].mxu0
        %7909 = vmatprep.mubr.f32.mxu0 0.0
        %7910 = vmatmul.mubr.f32.gmra.mrb[0].mxu0 %v7770
        %v7911 = vpop.f32.mrb[0].mxu0
        %v7912 = vadd.f32 0.0, %v7911
        %v7913 = vpop.f32.mrb[0].mxu0
        %7914 = vmatprep.mubr.f32.mxu0 0.0
        %7915 = vmatmul.mubr.f32.gmra.mrb[0].mxu0 %v7773
        %v7916 = vpop.f32.mrb[0].mxu0
        %v7917 = vadd.f32 0.0, %v7916
        %v7918 = vpop.f32.mrb[0].mxu0
        %7919 = vmatprep.mubr.f32.mxu0 0.0
        %7920 = vmatmul.mubr.f32.gmra.mrb[0].mxu0 %v7776
        %v7921 = vpop.f32.mrb[0].mxu0
        %v7922 = vadd.f32 0.0, %v7921
        %v7923 = vpop.f32.mrb[0].mxu0
        %7924 = vmatprep.mubr.f32.mxu0 0.0
        %7925 = vmatmul.mubr.f32.gmra.mrb[0].mxu0 %v7779
        %v7926 = vpop.f32.mrb[0].mxu0
        %v7927 = vadd.f32 0.0, %v7926
        %v7928 = vpop.f32.mrb[0].mxu0
        %7929 = vmatprep.mubr.f32.mxu0 0.0
        %7930 = vmatmul.mubr.f32.gmra.mrb[0].mxu0 %v7782
        %v7931 = vpop.f32.mrb[0].mxu0
        %v7932 = vadd.f32 0.0, %v7931
        %v7933 = vpop.f32.mrb[0].mxu0
        %7934 = vmatprep.mubr.f32.mxu0 0.0
        %7935 = vmatmul.mubr.f32.gmra.mrb[0].mxu0 %v7785
        %v7936 = vpop.f32.mrb[0].mxu0
        %v7937 = vadd.f32 0.0, %v7936
        %v7938 = vpop.f32.mrb[0].mxu0
        %7939 = vmatprep.mubr.f32.mxu0 0.0
        %7940 = vmatmul.mubr.f32.gmra.mrb[0].mxu0 %v7788
        %v7941 = vpop.f32.mrb[0].mxu0
        %v7942 = vadd.f32 0.0, %v7941
        %v7943 = vpop.f32.mrb[0].mxu0
        %7944 = vmatprep.mubr.f32.mxu0 0.0
        %7945 = vmatmul.mubr.f32.gmra.mrb[0].mxu0 %v7791
        %v7946 = vpop.f32.mrb[0].mxu0
        %v7947 = vadd.f32 0.0, %v7946
        %v7948 = vpop.f32.mrb[0].mxu0
        %7949 = vmatprep.mubr.f32.mxu0 0.0
        %7950 = vmatmul.mubr.f32.gmra.mrb[0].mxu0 %v7794
        %v7951 = vpop.f32.mrb[0].mxu0
        %v7952 = vadd.f32 0.0, %v7951
        %v7953 = vpop.f32.mrb[0].mxu0
        %7954 = vmatprep.mubr.f32.mxu0 0.0
        %7955 = vmatmul.mubr.f32.gmra.mrb[0].mxu0 %v7797
        %v7956 = vpop.f32.mrb[0].mxu0
        %v7957 = vadd.f32 0.0, %v7956
        %v7958 = vpop.f32.mrb[0].mxu0
        %7959 = vmatprep.mubr.f32.mxu0 0.0
        %7960 = vmatmul.mubr.f32.gmra.mrb[0].mxu0 %v7800
        %v7961 = vpop.f32.mrb[0].mxu0
        %v7962 = vadd.f32 0.0, %v7961
        %v7963 = vpop.f32.mrb[0].mxu0
        %7964 = vmatprep.mubr.f32.mxu0 0.0
        %7965 = vmatmul.mubr.f32.gmra.mrb[0].mxu0 %v7803
        %v7966 = vpop.f32.mrb[0].mxu0
        %v7967 = vadd.f32 0.0, %v7966
        %v7968 = vpop.f32.mrb[0].mxu0
        %7969 = vmatprep.mubr.f32.mxu0 0.0
        %7970 = vmatmul.mubr.f32.gmra.mrb[0].mxu0 %v7806
        %v7971 = vpop.f32.mrb[0].mxu0
        %v7972 = vadd.f32 0.0, %v7971
        %v7973 = vpop.f32.mrb[0].mxu0
        %7974 = vmatprep.mubr.f32.mxu0 0.0
        %7975 = vmatmul.mubr.f32.gmra.mrb[0].mxu0 %v7809
        %v7976 = vpop.f32.mrb[0].mxu0
        %v7977 = vadd.f32 0.0, %v7976
        %v7978 = vpop.f32.mrb[0].mxu0
        %7979 = vmatprep.mubr.f32.mxu0 0.0
        %7980 = vmatmul.mubr.f32.gmra.mrb[0].mxu0 %v7812
        %v7981 = vpop.f32.mrb[0].mxu0
        %v7982 = vadd.f32 0.0, %v7981
        %v7983 = vpop.f32.mrb[0].mxu0
        %7984 = vmatprep.mubr.f32.mxu0 0.0
        %7985 = vmatmul.mubr.f32.gmra.mrb[0].mxu0 %v7815
        %v7986 = vpop.f32.mrb[0].mxu0
        %v7987 = vadd.f32 0.0, %v7986
        %v7988 = vpop.f32.mrb[0].mxu0
        %7989 = vmatprep.mubr.f32.mxu0 0.0
        %7990 = vmatmul.mubr.f32.gmra.mrb[0].mxu0 %v7818
        %v7991 = vpop.f32.mrb[0].mxu0
        %v7992 = vadd.f32 0.0, %v7991
        %v7993 = vpop.f32.mrb[0].mxu0
        %7994 = vmatprep.mubr.f32.mxu0 0.0
        %7995 = vmatmul.mubr.f32.gmra.mrb[0].mxu0 %v7821
        %v7996 = vpop.f32.mrb[0].mxu0
        %v7997 = vadd.f32 0.0, %v7996
        %v7998 = vpop.f32.mrb[0].mxu0
        %7999 = vmatprep.mubr.f32.mxu0 0.0
        %8000 = vmatmul.mubr.f32.gmra.mrb[0].mxu0 %v7824
        %v8001 = vpop.f32.mrb[0].mxu0
        %v8002 = vadd.f32 0.0, %v8001
        %v8003 = vpop.f32.mrb[0].mxu0
        %8004 = vmatprep.mubr.f32.mxu0 0.0
        %8005 = vmatmul.mubr.f32.gmra.mrb[0].mxu0 %v7827
        %v8006 = vpop.f32.mrb[0].mxu0
        %v8007 = vadd.f32 0.0, %v8006
        %v8008 = vpop.f32.mrb[0].mxu0
        %8009 = vmatprep.mubr.f32.mxu0 0.0
        %8010 = vmatmul.mubr.f32.gmra.mrb[0].mxu0 %v7830
        %v8011 = vpop.f32.mrb[0].mxu0
        %v8012 = vadd.f32 0.0, %v8011
        %v8013 = vpop.f32.mrb[0].mxu0
        %8014 = vmatprep.mubr.f32.mxu0 0.0
        %8015 = vmatmul.mubr.f32.gmra.mrb[0].mxu0 %v7833
        %v8016 = vpop.f32.mrb[0].mxu0
        %v8017 = vadd.f32 0.0, %v8016
        %v8018 = vpop.f32.mrb[0].mxu0
        %8019 = vdwg.mxu0
        %v8020 = vadd.f32 %v7616, %v7902
        %v8021 = vadd.f32 %v7621, %v7907
        %v8022 = vadd.f32 %v7626, %v7912
        %v8023 = vadd.f32 %v7631, %v7917
        %v8024 = vadd.f32 %v7636, %v7922
        %v8025 = vadd.f32 %v7641, %v7927
        %v8026 = vadd.f32 %v7646, %v7932
        %v8027 = vadd.f32 %v7651, %v7937
        %v8028 = vadd.f32 %v7656, %v7942
        %v8029 = vadd.f32 %v7661, %v7947
        %v8030 = vadd.f32 %v7666, %v7952
        %v8031 = vadd.f32 %v7671, %v7957
        %v8032 = vadd.f32 %v7676, %v7962
        %v8033 = vadd.f32 %v7681, %v7967
        %v8034 = vadd.f32 %v7686, %v7972
        %v8035 = vadd.f32 %v7691, %v7977
        %v8036 = vadd.f32 %v7696, %v7982
        %v8037 = vadd.f32 %v7701, %v7987
        %v8038 = vadd.f32 %v7706, %v7992
        %v8039 = vadd.f32 %v7711, %v7997
        %v8040 = vadd.f32 %v7716, %v8002
        %v8041 = vadd.f32 %v7721, %v8007
        %v8042 = vadd.f32 %v7726, %v8012
        %v8043 = vadd.f32 %v7731, %v8017
        %s8044 = scalar_lea.vmem [#allocation3], 24
        %v8045 = vld [vmem:[%s8044] sm:$0xff]
        %v8046 = vld [vmem:[%s8044 + $0x8] sm:$0xff]
        %v8047 = vld [vmem:[%s8044 + $0x18] sm:$0xff]
        %v8048 = vld [vmem:[%s8044 + $0x20] sm:$0xff]
        %v8049 = vld [vmem:[%s8044 + $0x30] sm:$0xff]
        %v8050 = vld [vmem:[%s8044 + $0x38] sm:$0xff]
        %v8051 = vld [vmem:[%s8044 + $0x48] sm:$0xff]
        %v8052 = vld [vmem:[%s8044 + $0x50] sm:$0xff]
        %v8053 = vld [vmem:[%s8044 + $0x60] sm:$0xff]
        %v8054 = vld [vmem:[%s8044 + $0x68] sm:$0xff]
        %v8055 = vld [vmem:[%s8044 + $0x78] sm:$0xff]
        %v8056 = vld [vmem:[%s8044 + $0x80] sm:$0xff]
        %v8057 = vld [vmem:[%s8044 + $0x90] sm:$0xff]
        %v8058 = vld [vmem:[%s8044 + $0x98] sm:$0xff]
        %v8059 = vld [vmem:[%s8044 + $0xa8] sm:$0xff]
        %v8060 = vld [vmem:[%s8044 + $0xb0] sm:$0xff]
        %v8061 = vld [vmem:[%s8044 + $0xc0] sm:$0xff]
        %v8062 = vld [vmem:[%s8044 + $0xc8] sm:$0xff]
        %v8063 = vld [vmem:[%s8044 + $0xd8] sm:$0xff]
        %v8064 = vld [vmem:[%s8044 + $0xe0] sm:$0xff]
        %v8065 = vld [vmem:[%s8044 + $0xf0] sm:$0xff]
        %v8066 = vld [vmem:[%s8044 + $0xf8] sm:$0xff]
        %v8067 = vld [vmem:[%s8044 + $0x108] sm:$0xff]
        %v8068 = vld [vmem:[%s8044 + $0x110] sm:$0xff]
        %s8069 = scalar_lea.vmem %s5, 96
        %v8070 = vld [vmem:[%s8069] sm:$0xff]
        %v8071 = vld [vmem:[%s8069 + $0x8] sm:$0xff]
        %v8072 = vld [vmem:[%s8069 + $0x10] sm:$0xff]
        %v8073 = vld [vmem:[%s8069 + $0x18] sm:$0xff]
        %v8075 = vsel %vm7120, %v8045, 0
        %v8078 = vsel %vm7120, %v8046, 0
        %v8081 = vsel %vm7120, %v8047, 0
        %v8084 = vsel %vm7120, %v8048, 0
        %v8087 = vsel %vm7120, %v8049, 0
        %v8090 = vsel %vm7120, %v8050, 0
        %v8093 = vsel %vm7120, %v8051, 0
        %v8096 = vsel %vm7120, %v8052, 0
        %v8099 = vsel %vm7120, %v8053, 0
        %v8102 = vsel %vm7120, %v8054, 0
        %v8105 = vsel %vm7120, %v8055, 0
        %v8108 = vsel %vm7120, %v8056, 0
        %v8111 = vsel %vm7120, %v8057, 0
        %v8114 = vsel %vm7120, %v8058, 0
        %v8117 = vsel %vm7120, %v8059, 0
        %v8120 = vsel %vm7120, %v8060, 0
        %v8123 = vsel %vm7120, %v8061, 0
        %v8126 = vsel %vm7120, %v8062, 0
        %v8129 = vsel %vm7120, %v8063, 0
        %v8132 = vsel %vm7120, %v8064, 0
        %v8135 = vsel %vm7120, %v8065, 0
        %v8138 = vsel %vm7120, %v8066, 0
        %v8141 = vsel %vm7120, %v8067, 0
        %v8144 = vsel %vm7120, %v8068, 0
        %8146 = vmatprep.subr.mxu0 0.0
        %8147 = vmatpush1.msra.mxu0 %v8070
        %8148 = vmatprep.subr.mxu0 0.0
        %8149 = vmatpush1.msra.mxu0 %v8071
        %8150 = vmatprep.subr.mxu0 0.0
        %8151 = vmatpush1.msra.mxu0 %v8072
        %8152 = vmatprep.subr.mxu0 0.0
        %8153 = vmatpush1.msra.mxu0 %v8073
        %8154 = vmatprep.subr.mxu0 0.0
        %8155 = vmatpush1.msra.mxu0 0.0
        %8156 = vmatprep.subr.mxu0 0.0
        %8157 = vmatpush1.msra.mxu0 0.0
        %8158 = vmatprep.subr.mxu0 0.0
        %8159 = vmatpush1.msra.mxu0 0.0
        %8160 = vmatprep.subr.mxu0 0.0
        %8161 = vmatpush1.msra.mxu0 0.0
        %8162 = vmatprep.subr.mxu0 0.0
        %8163 = vmatpush1.msra.mxu0 0.0
        %8164 = vmatprep.subr.mxu0 0.0
        %8165 = vmatpush1.msra.mxu0 0.0
        %8166 = vmatprep.subr.mxu0 0.0
        %8167 = vmatpush1.msra.mxu0 0.0
        %8168 = vmatprep.subr.mxu0 0.0
        %8169 = vmatpush1.msra.mxu0 0.0
        %8170 = vmatprep.subr.mxu0 0.0
        %8171 = vmatpush1.msra.mxu0 0.0
        %8172 = vmatprep.subr.mxu0 0.0
        %8173 = vmatpush1.msra.mxu0 0.0
        %8174 = vmatprep.subr.mxu0 0.0
        %8175 = vmatpush1.msra.mxu0 0.0
        %8176 = vmatprep.subr.mxu0 0.0
        %8177 = vmatpush1.msra.mxu0 0.0
        %8178 = vmatprep.subr.mxu0 0.0
        %8179 = vmatpush1.msra.mxu0 0.0
        %8180 = vmatprep.subr.mxu0 0.0
        %8181 = vmatpush1.msra.mxu0 0.0
        %8182 = vmatprep.subr.mxu0 0.0
        %8183 = vmatpush1.msra.mxu0 0.0
        %8184 = vmatprep.subr.mxu0 0.0
        %8185 = vmatpush1.msra.mxu0 0.0
        %8186 = vmatprep.subr.mxu0 0.0
        %8187 = vmatpush1.msra.mxu0 0.0
        %8188 = vmatprep.subr.mxu0 0.0
        %8189 = vmatpush1.msra.mxu0 0.0
        %8190 = vmatprep.subr.mxu0 0.0
        %8191 = vmatpush1.msra.mxu0 0.0
        %8192 = vmatprep.subr.mxu0 0.0
        %8193 = vmatpush1.msra.mxu0 0.0
        %8194 = vmatprep.subr.mxu0 0.0
        %8195 = vmatpush1.msra.mxu0 0.0
        %8196 = vmatprep.subr.mxu0 0.0
        %8197 = vmatpush1.msra.mxu0 0.0
        %8198 = vmatprep.subr.mxu0 0.0
        %8199 = vmatpush1.msra.mxu0 0.0
        %8200 = vmatprep.subr.mxu0 0.0
        %8201 = vmatpush1.msra.mxu0 0.0
        %8202 = vmatprep.subr.mxu0 0.0
        %8203 = vmatpush1.msra.mxu0 0.0
        %8204 = vmatprep.subr.mxu0 0.0
        %8205 = vmatpush1.msra.mxu0 0.0
        %8206 = vmatprep.subr.mxu0 0.0
        %8207 = vmatpush1.msra.mxu0 0.0
        %8208 = vmatprep.subr.mxu0 0.0
        %8209 = vmatpush1.msra.mxu0 0.0
        %8210 = vmatprep.mubr.f32.mxu0 0.0
        %8211 = vmatmul.mubr.f32.gmra.mrb[0].mxu0 %v8075
        %v8212 = vpop.f32.mrb[0].mxu0
        %v8213 = vadd.f32 0.0, %v8212
        %v8214 = vpop.f32.mrb[0].mxu0
        %8215 = vmatprep.mubr.f32.mxu0 0.0
        %8216 = vmatmul.mubr.f32.gmra.mrb[0].mxu0 %v8078
        %v8217 = vpop.f32.mrb[0].mxu0
        %v8218 = vadd.f32 0.0, %v8217
        %v8219 = vpop.f32.mrb[0].mxu0
        %8220 = vmatprep.mubr.f32.mxu0 0.0
        %8221 = vmatmul.mubr.f32.gmra.mrb[0].mxu0 %v8081
        %v8222 = vpop.f32.mrb[0].mxu0
        %v8223 = vadd.f32 0.0, %v8222
        %v8224 = vpop.f32.mrb[0].mxu0
        %8225 = vmatprep.mubr.f32.mxu0 0.0
        %8226 = vmatmul.mubr.f32.gmra.mrb[0].mxu0 %v8084
        %v8227 = vpop.f32.mrb[0].mxu0
        %v8228 = vadd.f32 0.0, %v8227
        %v8229 = vpop.f32.mrb[0].mxu0
        %8230 = vmatprep.mubr.f32.mxu0 0.0
        %8231 = vmatmul.mubr.f32.gmra.mrb[0].mxu0 %v8087
        %v8232 = vpop.f32.mrb[0].mxu0
        %v8233 = vadd.f32 0.0, %v8232
        %v8234 = vpop.f32.mrb[0].mxu0
        %8235 = vmatprep.mubr.f32.mxu0 0.0
        %8236 = vmatmul.mubr.f32.gmra.mrb[0].mxu0 %v8090
        %v8237 = vpop.f32.mrb[0].mxu0
        %v8238 = vadd.f32 0.0, %v8237
        %v8239 = vpop.f32.mrb[0].mxu0
        %8240 = vmatprep.mubr.f32.mxu0 0.0
        %8241 = vmatmul.mubr.f32.gmra.mrb[0].mxu0 %v8093
        %v8242 = vpop.f32.mrb[0].mxu0
        %v8243 = vadd.f32 0.0, %v8242
        %v8244 = vpop.f32.mrb[0].mxu0
        %8245 = vmatprep.mubr.f32.mxu0 0.0
        %8246 = vmatmul.mubr.f32.gmra.mrb[0].mxu0 %v8096
        %v8247 = vpop.f32.mrb[0].mxu0
        %v8248 = vadd.f32 0.0, %v8247
        %v8249 = vpop.f32.mrb[0].mxu0
        %8250 = vmatprep.mubr.f32.mxu0 0.0
        %8251 = vmatmul.mubr.f32.gmra.mrb[0].mxu0 %v8099
        %v8252 = vpop.f32.mrb[0].mxu0
        %v8253 = vadd.f32 0.0, %v8252
        %v8254 = vpop.f32.mrb[0].mxu0
        %8255 = vmatprep.mubr.f32.mxu0 0.0
        %8256 = vmatmul.mubr.f32.gmra.mrb[0].mxu0 %v8102
        %v8257 = vpop.f32.mrb[0].mxu0
        %v8258 = vadd.f32 0.0, %v8257
        %v8259 = vpop.f32.mrb[0].mxu0
        %8260 = vmatprep.mubr.f32.mxu0 0.0
        %8261 = vmatmul.mubr.f32.gmra.mrb[0].mxu0 %v8105
        %v8262 = vpop.f32.mrb[0].mxu0
        %v8263 = vadd.f32 0.0, %v8262
        %v8264 = vpop.f32.mrb[0].mxu0
        %8265 = vmatprep.mubr.f32.mxu0 0.0
        %8266 = vmatmul.mubr.f32.gmra.mrb[0].mxu0 %v8108
        %v8267 = vpop.f32.mrb[0].mxu0
        %v8268 = vadd.f32 0.0, %v8267
        %v8269 = vpop.f32.mrb[0].mxu0
        %8270 = vmatprep.mubr.f32.mxu0 0.0
        %8271 = vmatmul.mubr.f32.gmra.mrb[0].mxu0 %v8111
        %v8272 = vpop.f32.mrb[0].mxu0
        %v8273 = vadd.f32 0.0, %v8272
        %v8274 = vpop.f32.mrb[0].mxu0
        %8275 = vmatprep.mubr.f32.mxu0 0.0
        %8276 = vmatmul.mubr.f32.gmra.mrb[0].mxu0 %v8114
        %v8277 = vpop.f32.mrb[0].mxu0
        %v8278 = vadd.f32 0.0, %v8277
        %v8279 = vpop.f32.mrb[0].mxu0
        %8280 = vmatprep.mubr.f32.mxu0 0.0
        %8281 = vmatmul.mubr.f32.gmra.mrb[0].mxu0 %v8117
        %v8282 = vpop.f32.mrb[0].mxu0
        %v8283 = vadd.f32 0.0, %v8282
        %v8284 = vpop.f32.mrb[0].mxu0
        %8285 = vmatprep.mubr.f32.mxu0 0.0
        %8286 = vmatmul.mubr.f32.gmra.mrb[0].mxu0 %v8120
        %v8287 = vpop.f32.mrb[0].mxu0
        %v8288 = vadd.f32 0.0, %v8287
        %v8289 = vpop.f32.mrb[0].mxu0
        %8290 = vmatprep.mubr.f32.mxu0 0.0
        %8291 = vmatmul.mubr.f32.gmra.mrb[0].mxu0 %v8123
        %v8292 = vpop.f32.mrb[0].mxu0
        %v8293 = vadd.f32 0.0, %v8292
        %v8294 = vpop.f32.mrb[0].mxu0
        %8295 = vmatprep.mubr.f32.mxu0 0.0
        %8296 = vmatmul.mubr.f32.gmra.mrb[0].mxu0 %v8126
        %v8297 = vpop.f32.mrb[0].mxu0
        %v8298 = vadd.f32 0.0, %v8297
        %v8299 = vpop.f32.mrb[0].mxu0
        %8300 = vmatprep.mubr.f32.mxu0 0.0
        %8301 = vmatmul.mubr.f32.gmra.mrb[0].mxu0 %v8129
        %v8302 = vpop.f32.mrb[0].mxu0
        %v8303 = vadd.f32 0.0, %v8302
        %v8304 = vpop.f32.mrb[0].mxu0
        %8305 = vmatprep.mubr.f32.mxu0 0.0
        %8306 = vmatmul.mubr.f32.gmra.mrb[0].mxu0 %v8132
        %v8307 = vpop.f32.mrb[0].mxu0
        %v8308 = vadd.f32 0.0, %v8307
        %v8309 = vpop.f32.mrb[0].mxu0
        %8310 = vmatprep.mubr.f32.mxu0 0.0
        %8311 = vmatmul.mubr.f32.gmra.mrb[0].mxu0 %v8135
        %v8312 = vpop.f32.mrb[0].mxu0
        %v8313 = vadd.f32 0.0, %v8312
        %v8314 = vpop.f32.mrb[0].mxu0
        %8315 = vmatprep.mubr.f32.mxu0 0.0
        %8316 = vmatmul.mubr.f32.gmra.mrb[0].mxu0 %v8138
        %v8317 = vpop.f32.mrb[0].mxu0
        %v8318 = vadd.f32 0.0, %v8317
        %v8319 = vpop.f32.mrb[0].mxu0
        %8320 = vmatprep.mubr.f32.mxu0 0.0
        %8321 = vmatmul.mubr.f32.gmra.mrb[0].mxu0 %v8141
        %v8322 = vpop.f32.mrb[0].mxu0
        %v8323 = vadd.f32 0.0, %v8322
        %v8324 = vpop.f32.mrb[0].mxu0
        %8325 = vmatprep.mubr.f32.mxu0 0.0
        %8326 = vmatmul.mubr.f32.gmra.mrb[0].mxu0 %v8144
        %v8327 = vpop.f32.mrb[0].mxu0
        %v8328 = vadd.f32 0.0, %v8327
        %v8329 = vpop.f32.mrb[0].mxu0
        %8330 = vdwg.mxu0
        %v8331 = vadd.f32 %v8020, %v8213
        %v8332 = vadd.f32 %v8021, %v8218
        %v8333 = vadd.f32 %v8022, %v8223
        %v8334 = vadd.f32 %v8023, %v8228
        %v8335 = vadd.f32 %v8024, %v8233
        %v8336 = vadd.f32 %v8025, %v8238
        %v8337 = vadd.f32 %v8026, %v8243
        %v8338 = vadd.f32 %v8027, %v8248
        %v8339 = vadd.f32 %v8028, %v8253
        %v8340 = vadd.f32 %v8029, %v8258
        %v8341 = vadd.f32 %v8030, %v8263
        %v8342 = vadd.f32 %v8031, %v8268
        %v8343 = vadd.f32 %v8032, %v8273
        %v8344 = vadd.f32 %v8033, %v8278
        %v8345 = vadd.f32 %v8034, %v8283
        %v8346 = vadd.f32 %v8035, %v8288
        %v8347 = vadd.f32 %v8036, %v8293
        %v8348 = vadd.f32 %v8037, %v8298
        %v8349 = vadd.f32 %v8038, %v8303
        %v8350 = vadd.f32 %v8039, %v8308
        %v8351 = vadd.f32 %v8040, %v8313
        %v8352 = vadd.f32 %v8041, %v8318
        %v8353 = vadd.f32 %v8042, %v8323
        %v8354 = vadd.f32 %v8043, %v8328
        %v8355 = vld [vmem:[%s8044 + $0x1] sm:$0xff]
        %v8356 = vld [vmem:[%s8044 + $0x9] sm:$0xff]
        %v8357 = vld [vmem:[%s8044 + $0x19] sm:$0xff]
        %v8358 = vld [vmem:[%s8044 + $0x21] sm:$0xff]
        %v8359 = vld [vmem:[%s8044 + $0x31] sm:$0xff]
        %v8360 = vld [vmem:[%s8044 + $0x39] sm:$0xff]
        %v8361 = vld [vmem:[%s8044 + $0x49] sm:$0xff]
        %v8362 = vld [vmem:[%s8044 + $0x51] sm:$0xff]
        %v8363 = vld [vmem:[%s8044 + $0x61] sm:$0xff]
        %v8364 = vld [vmem:[%s8044 + $0x69] sm:$0xff]
        %v8365 = vld [vmem:[%s8044 + $0x79] sm:$0xff]
        %v8366 = vld [vmem:[%s8044 + $0x81] sm:$0xff]
        %v8367 = vld [vmem:[%s8044 + $0x91] sm:$0xff]
        %v8368 = vld [vmem:[%s8044 + $0x99] sm:$0xff]
        %v8369 = vld [vmem:[%s8044 + $0xa9] sm:$0xff]
        %v8370 = vld [vmem:[%s8044 + $0xb1] sm:$0xff]
        %v8371 = vld [vmem:[%s8044 + $0xc1] sm:$0xff]
        %v8372 = vld [vmem:[%s8044 + $0xc9] sm:$0xff]
        %v8373 = vld [vmem:[%s8044 + $0xd9] sm:$0xff]
        %v8374 = vld [vmem:[%s8044 + $0xe1] sm:$0xff]
        %v8375 = vld [vmem:[%s8044 + $0xf1] sm:$0xff]
        %v8376 = vld [vmem:[%s8044 + $0xf9] sm:$0xff]
        %v8377 = vld [vmem:[%s8044 + $0x109] sm:$0xff]
        %v8378 = vld [vmem:[%s8044 + $0x111] sm:$0xff]
        %s8379 = scalar_lea.vmem %s5, 128
        %v8380 = vld [vmem:[%s8379] sm:$0xff]
        %v8381 = vld [vmem:[%s8379 + $0x8] sm:$0xff]
        %v8382 = vld [vmem:[%s8379 + $0x10] sm:$0xff]
        %v8383 = vld [vmem:[%s8379 + $0x18] sm:$0xff]
        %v8385 = vsel %vm7120, %v8355, 0
        %v8388 = vsel %vm7120, %v8356, 0
        %v8391 = vsel %vm7120, %v8357, 0
        %v8394 = vsel %vm7120, %v8358, 0
        %v8397 = vsel %vm7120, %v8359, 0
        %v8400 = vsel %vm7120, %v8360, 0
        %v8403 = vsel %vm7120, %v8361, 0
        %v8406 = vsel %vm7120, %v8362, 0
        %v8409 = vsel %vm7120, %v8363, 0
        %v8412 = vsel %vm7120, %v8364, 0
        %v8415 = vsel %vm7120, %v8365, 0
        %v8418 = vsel %vm7120, %v8366, 0
        %v8421 = vsel %vm7120, %v8367, 0
        %v8424 = vsel %vm7120, %v8368, 0
        %v8427 = vsel %vm7120, %v8369, 0
        %v8430 = vsel %vm7120, %v8370, 0
        %v8433 = vsel %vm7120, %v8371, 0
        %v8436 = vsel %vm7120, %v8372, 0
        %v8439 = vsel %vm7120, %v8373, 0
        %v8442 = vsel %vm7120, %v8374, 0
        %v8445 = vsel %vm7120, %v8375, 0
        %v8448 = vsel %vm7120, %v8376, 0
        %v8451 = vsel %vm7120, %v8377, 0
        %v8454 = vsel %vm7120, %v8378, 0
        %8456 = vmatprep.subr.mxu0 0.0
        %8457 = vmatpush1.msra.mxu0 %v8380
        %8458 = vmatprep.subr.mxu0 0.0
        %8459 = vmatpush1.msra.mxu0 %v8381
        %8460 = vmatprep.subr.mxu0 0.0
        %8461 = vmatpush1.msra.mxu0 %v8382
        %8462 = vmatprep.subr.mxu0 0.0
        %8463 = vmatpush1.msra.mxu0 %v8383
        %8464 = vmatprep.subr.mxu0 0.0
        %8465 = vmatpush1.msra.mxu0 0.0
        %8466 = vmatprep.subr.mxu0 0.0
        %8467 = vmatpush1.msra.mxu0 0.0
        %8468 = vmatprep.subr.mxu0 0.0
        %8469 = vmatpush1.msra.mxu0 0.0
        %8470 = vmatprep.subr.mxu0 0.0
        %8471 = vmatpush1.msra.mxu0 0.0
        %8472 = vmatprep.subr.mxu0 0.0
        %8473 = vmatpush1.msra.mxu0 0.0
        %8474 = vmatprep.subr.mxu0 0.0
        %8475 = vmatpush1.msra.mxu0 0.0
        %8476 = vmatprep.subr.mxu0 0.0
        %8477 = vmatpush1.msra.mxu0 0.0
        %8478 = vmatprep.subr.mxu0 0.0
        %8479 = vmatpush1.msra.mxu0 0.0
        %8480 = vmatprep.subr.mxu0 0.0
        %8481 = vmatpush1.msra.mxu0 0.0
        %8482 = vmatprep.subr.mxu0 0.0
        %8483 = vmatpush1.msra.mxu0 0.0
        %8484 = vmatprep.subr.mxu0 0.0
        %8485 = vmatpush1.msra.mxu0 0.0
        %8486 = vmatprep.subr.mxu0 0.0
        %8487 = vmatpush1.msra.mxu0 0.0
        %8488 = vmatprep.subr.mxu0 0.0
        %8489 = vmatpush1.msra.mxu0 0.0
        %8490 = vmatprep.subr.mxu0 0.0
        %8491 = vmatpush1.msra.mxu0 0.0
        %8492 = vmatprep.subr.mxu0 0.0
        %8493 = vmatpush1.msra.mxu0 0.0
        %8494 = vmatprep.subr.mxu0 0.0
        %8495 = vmatpush1.msra.mxu0 0.0
        %8496 = vmatprep.subr.mxu0 0.0
        %8497 = vmatpush1.msra.mxu0 0.0
        %8498 = vmatprep.subr.mxu0 0.0
        %8499 = vmatpush1.msra.mxu0 0.0
        %8500 = vmatprep.subr.mxu0 0.0
        %8501 = vmatpush1.msra.mxu0 0.0
        %8502 = vmatprep.subr.mxu0 0.0
        %8503 = vmatpush1.msra.mxu0 0.0
        %8504 = vmatprep.subr.mxu0 0.0
        %8505 = vmatpush1.msra.mxu0 0.0
        %8506 = vmatprep.subr.mxu0 0.0
        %8507 = vmatpush1.msra.mxu0 0.0
        %8508 = vmatprep.subr.mxu0 0.0
        %8509 = vmatpush1.msra.mxu0 0.0
        %8510 = vmatprep.subr.mxu0 0.0
        %8511 = vmatpush1.msra.mxu0 0.0
        %8512 = vmatprep.subr.mxu0 0.0
        %8513 = vmatpush1.msra.mxu0 0.0
        %8514 = vmatprep.subr.mxu0 0.0
        %8515 = vmatpush1.msra.mxu0 0.0
        %8516 = vmatprep.subr.mxu0 0.0
        %8517 = vmatpush1.msra.mxu0 0.0
        %8518 = vmatprep.subr.mxu0 0.0
        %8519 = vmatpush1.msra.mxu0 0.0
        %8520 = vmatprep.mubr.f32.mxu0 0.0
        %8521 = vmatmul.mubr.f32.gmra.mrb[0].mxu0 %v8385
        %v8522 = vpop.f32.mrb[0].mxu0
        %v8523 = vadd.f32 0.0, %v8522
        %v8524 = vpop.f32.mrb[0].mxu0
        %8525 = vmatprep.mubr.f32.mxu0 0.0
        %8526 = vmatmul.mubr.f32.gmra.mrb[0].mxu0 %v8388
        %v8527 = vpop.f32.mrb[0].mxu0
        %v8528 = vadd.f32 0.0, %v8527
        %v8529 = vpop.f32.mrb[0].mxu0
        %8530 = vmatprep.mubr.f32.mxu0 0.0
        %8531 = vmatmul.mubr.f32.gmra.mrb[0].mxu0 %v8391
        %v8532 = vpop.f32.mrb[0].mxu0
        %v8533 = vadd.f32 0.0, %v8532
        %v8534 = vpop.f32.mrb[0].mxu0
        %8535 = vmatprep.mubr.f32.mxu0 0.0
        %8536 = vmatmul.mubr.f32.gmra.mrb[0].mxu0 %v8394
        %v8537 = vpop.f32.mrb[0].mxu0
        %v8538 = vadd.f32 0.0, %v8537
        %v8539 = vpop.f32.mrb[0].mxu0
        %8540 = vmatprep.mubr.f32.mxu0 0.0
        %8541 = vmatmul.mubr.f32.gmra.mrb[0].mxu0 %v8397
        %v8542 = vpop.f32.mrb[0].mxu0
        %v8543 = vadd.f32 0.0, %v8542
        %v8544 = vpop.f32.mrb[0].mxu0
        %8545 = vmatprep.mubr.f32.mxu0 0.0
        %8546 = vmatmul.mubr.f32.gmra.mrb[0].mxu0 %v8400
        %v8547 = vpop.f32.mrb[0].mxu0
        %v8548 = vadd.f32 0.0, %v8547
        %v8549 = vpop.f32.mrb[0].mxu0
        %8550 = vmatprep.mubr.f32.mxu0 0.0
        %8551 = vmatmul.mubr.f32.gmra.mrb[0].mxu0 %v8403
        %v8552 = vpop.f32.mrb[0].mxu0
        %v8553 = vadd.f32 0.0, %v8552
        %v8554 = vpop.f32.mrb[0].mxu0
        %8555 = vmatprep.mubr.f32.mxu0 0.0
        %8556 = vmatmul.mubr.f32.gmra.mrb[0].mxu0 %v8406
        %v8557 = vpop.f32.mrb[0].mxu0
        %v8558 = vadd.f32 0.0, %v8557
        %v8559 = vpop.f32.mrb[0].mxu0
        %8560 = vmatprep.mubr.f32.mxu0 0.0
        %8561 = vmatmul.mubr.f32.gmra.mrb[0].mxu0 %v8409
        %v8562 = vpop.f32.mrb[0].mxu0
        %v8563 = vadd.f32 0.0, %v8562
        %v8564 = vpop.f32.mrb[0].mxu0
        %8565 = vmatprep.mubr.f32.mxu0 0.0
        %8566 = vmatmul.mubr.f32.gmra.mrb[0].mxu0 %v8412
        %v8567 = vpop.f32.mrb[0].mxu0
        %v8568 = vadd.f32 0.0, %v8567
        %v8569 = vpop.f32.mrb[0].mxu0
        %8570 = vmatprep.mubr.f32.mxu0 0.0
        %8571 = vmatmul.mubr.f32.gmra.mrb[0].mxu0 %v8415
        %v8572 = vpop.f32.mrb[0].mxu0
        %v8573 = vadd.f32 0.0, %v8572
        %v8574 = vpop.f32.mrb[0].mxu0
        %8575 = vmatprep.mubr.f32.mxu0 0.0
        %8576 = vmatmul.mubr.f32.gmra.mrb[0].mxu0 %v8418
        %v8577 = vpop.f32.mrb[0].mxu0
        %v8578 = vadd.f32 0.0, %v8577
        %v8579 = vpop.f32.mrb[0].mxu0
        %8580 = vmatprep.mubr.f32.mxu0 0.0
        %8581 = vmatmul.mubr.f32.gmra.mrb[0].mxu0 %v8421
        %v8582 = vpop.f32.mrb[0].mxu0
        %v8583 = vadd.f32 0.0, %v8582
        %v8584 = vpop.f32.mrb[0].mxu0
        %8585 = vmatprep.mubr.f32.mxu0 0.0
        %8586 = vmatmul.mubr.f32.gmra.mrb[0].mxu0 %v8424
        %v8587 = vpop.f32.mrb[0].mxu0
        %v8588 = vadd.f32 0.0, %v8587
        %v8589 = vpop.f32.mrb[0].mxu0
        %8590 = vmatprep.mubr.f32.mxu0 0.0
        %8591 = vmatmul.mubr.f32.gmra.mrb[0].mxu0 %v8427
        %v8592 = vpop.f32.mrb[0].mxu0
        %v8593 = vadd.f32 0.0, %v8592
        %v8594 = vpop.f32.mrb[0].mxu0
        %8595 = vmatprep.mubr.f32.mxu0 0.0
        %8596 = vmatmul.mubr.f32.gmra.mrb[0].mxu0 %v8430
        %v8597 = vpop.f32.mrb[0].mxu0
        %v8598 = vadd.f32 0.0, %v8597
        %v8599 = vpop.f32.mrb[0].mxu0
        %8600 = vmatprep.mubr.f32.mxu0 0.0
        %8601 = vmatmul.mubr.f32.gmra.mrb[0].mxu0 %v8433
        %v8602 = vpop.f32.mrb[0].mxu0
        %v8603 = vadd.f32 0.0, %v8602
        %v8604 = vpop.f32.mrb[0].mxu0
        %8605 = vmatprep.mubr.f32.mxu0 0.0
        %8606 = vmatmul.mubr.f32.gmra.mrb[0].mxu0 %v8436
        %v8607 = vpop.f32.mrb[0].mxu0
        %v8608 = vadd.f32 0.0, %v8607
        %v8609 = vpop.f32.mrb[0].mxu0
        %8610 = vmatprep.mubr.f32.mxu0 0.0
        %8611 = vmatmul.mubr.f32.gmra.mrb[0].mxu0 %v8439
        %v8612 = vpop.f32.mrb[0].mxu0
        %v8613 = vadd.f32 0.0, %v8612
        %v8614 = vpop.f32.mrb[0].mxu0
        %8615 = vmatprep.mubr.f32.mxu0 0.0
        %8616 = vmatmul.mubr.f32.gmra.mrb[0].mxu0 %v8442
        %v8617 = vpop.f32.mrb[0].mxu0
        %v8618 = vadd.f32 0.0, %v8617
        %v8619 = vpop.f32.mrb[0].mxu0
        %8620 = vmatprep.mubr.f32.mxu0 0.0
        %8621 = vmatmul.mubr.f32.gmra.mrb[0].mxu0 %v8445
        %v8622 = vpop.f32.mrb[0].mxu0
        %v8623 = vadd.f32 0.0, %v8622
        %v8624 = vpop.f32.mrb[0].mxu0
        %8625 = vmatprep.mubr.f32.mxu0 0.0
        %8626 = vmatmul.mubr.f32.gmra.mrb[0].mxu0 %v8448
        %v8627 = vpop.f32.mrb[0].mxu0
        %v8628 = vadd.f32 0.0, %v8627
        %v8629 = vpop.f32.mrb[0].mxu0
        %8630 = vmatprep.mubr.f32.mxu0 0.0
        %8631 = vmatmul.mubr.f32.gmra.mrb[0].mxu0 %v8451
        %v8632 = vpop.f32.mrb[0].mxu0
        %v8633 = vadd.f32 0.0, %v8632
        %v8634 = vpop.f32.mrb[0].mxu0
        %8635 = vmatprep.mubr.f32.mxu0 0.0
        %8636 = vmatmul.mubr.f32.gmra.mrb[0].mxu0 %v8454
        %v8637 = vpop.f32.mrb[0].mxu0
        %v8638 = vadd.f32 0.0, %v8637
        %v8639 = vpop.f32.mrb[0].mxu0
        %8640 = vdwg.mxu0
        %v8641 = vadd.f32 %v8331, %v8523
        %v8642 = vadd.f32 %v8332, %v8528
        %v8643 = vadd.f32 %v8333, %v8533
        %v8644 = vadd.f32 %v8334, %v8538
        %v8645 = vadd.f32 %v8335, %v8543
        %v8646 = vadd.f32 %v8336, %v8548
        %v8647 = vadd.f32 %v8337, %v8553
        %v8648 = vadd.f32 %v8338, %v8558
        %v8649 = vadd.f32 %v8339, %v8563
        %v8650 = vadd.f32 %v8340, %v8568
        %v8651 = vadd.f32 %v8341, %v8573
        %v8652 = vadd.f32 %v8342, %v8578
        %v8653 = vadd.f32 %v8343, %v8583
        %v8654 = vadd.f32 %v8344, %v8588
        %v8655 = vadd.f32 %v8345, %v8593
        %v8656 = vadd.f32 %v8346, %v8598
        %v8657 = vadd.f32 %v8347, %v8603
        %v8658 = vadd.f32 %v8348, %v8608
        %v8659 = vadd.f32 %v8349, %v8613
        %v8660 = vadd.f32 %v8350, %v8618
        %v8661 = vadd.f32 %v8351, %v8623
        %v8662 = vadd.f32 %v8352, %v8628
        %v8663 = vadd.f32 %v8353, %v8633
        %v8664 = vadd.f32 %v8354, %v8638
        %v8665 = vld [vmem:[%s8044 + $0x2] sm:$0xff]
        %v8666 = vld [vmem:[%s8044 + $0xa] sm:$0xff]
        %v8667 = vld [vmem:[%s8044 + $0x1a] sm:$0xff]
        %v8668 = vld [vmem:[%s8044 + $0x22] sm:$0xff]
        %v8669 = vld [vmem:[%s8044 + $0x32] sm:$0xff]
        %v8670 = vld [vmem:[%s8044 + $0x3a] sm:$0xff]
        %v8671 = vld [vmem:[%s8044 + $0x4a] sm:$0xff]
        %v8672 = vld [vmem:[%s8044 + $0x52] sm:$0xff]
        %v8673 = vld [vmem:[%s8044 + $0x62] sm:$0xff]
        %v8674 = vld [vmem:[%s8044 + $0x6a] sm:$0xff]
        %v8675 = vld [vmem:[%s8044 + $0x7a] sm:$0xff]
        %v8676 = vld [vmem:[%s8044 + $0x82] sm:$0xff]
        %v8677 = vld [vmem:[%s8044 + $0x92] sm:$0xff]
        %v8678 = vld [vmem:[%s8044 + $0x9a] sm:$0xff]
        %v8679 = vld [vmem:[%s8044 + $0xaa] sm:$0xff]
        %v8680 = vld [vmem:[%s8044 + $0xb2] sm:$0xff]
        %v8681 = vld [vmem:[%s8044 + $0xc2] sm:$0xff]
        %v8682 = vld [vmem:[%s8044 + $0xca] sm:$0xff]
        %v8683 = vld [vmem:[%s8044 + $0xda] sm:$0xff]
        %v8684 = vld [vmem:[%s8044 + $0xe2] sm:$0xff]
        %v8685 = vld [vmem:[%s8044 + $0xf2] sm:$0xff]
        %v8686 = vld [vmem:[%s8044 + $0xfa] sm:$0xff]
        %v8687 = vld [vmem:[%s8044 + $0x10a] sm:$0xff]
        %v8688 = vld [vmem:[%s8044 + $0x112] sm:$0xff]
        %s8689 = scalar_lea.vmem %s5, 160
        %v8690 = vld [vmem:[%s8689] sm:$0xff]
        %v8691 = vld [vmem:[%s8689 + $0x8] sm:$0xff]
        %v8692 = vld [vmem:[%s8689 + $0x10] sm:$0xff]
        %v8693 = vld [vmem:[%s8689 + $0x18] sm:$0xff]
        %v8695 = vsel %vm7120, %v8665, 0
        %v8698 = vsel %vm7120, %v8666, 0
        %v8701 = vsel %vm7120, %v8667, 0
        %v8704 = vsel %vm7120, %v8668, 0
        %v8707 = vsel %vm7120, %v8669, 0
        %v8710 = vsel %vm7120, %v8670, 0
        %v8713 = vsel %vm7120, %v8671, 0
        %v8716 = vsel %vm7120, %v8672, 0
        %v8719 = vsel %vm7120, %v8673, 0
        %v8722 = vsel %vm7120, %v8674, 0
        %v8725 = vsel %vm7120, %v8675, 0
        %v8728 = vsel %vm7120, %v8676, 0
        %v8731 = vsel %vm7120, %v8677, 0
        %v8734 = vsel %vm7120, %v8678, 0
        %v8737 = vsel %vm7120, %v8679, 0
        %v8740 = vsel %vm7120, %v8680, 0
        %v8743 = vsel %vm7120, %v8681, 0
        %v8746 = vsel %vm7120, %v8682, 0
        %v8749 = vsel %vm7120, %v8683, 0
        %v8752 = vsel %vm7120, %v8684, 0
        %v8755 = vsel %vm7120, %v8685, 0
        %v8758 = vsel %vm7120, %v8686, 0
        %v8761 = vsel %vm7120, %v8687, 0
        %v8764 = vsel %vm7120, %v8688, 0
        %8766 = vmatprep.subr.mxu0 0.0
        %8767 = vmatpush1.msra.mxu0 %v8690
        %8768 = vmatprep.subr.mxu0 0.0
        %8769 = vmatpush1.msra.mxu0 %v8691
        %8770 = vmatprep.subr.mxu0 0.0
        %8771 = vmatpush1.msra.mxu0 %v8692
        %8772 = vmatprep.subr.mxu0 0.0
        %8773 = vmatpush1.msra.mxu0 %v8693
        %8774 = vmatprep.subr.mxu0 0.0
        %8775 = vmatpush1.msra.mxu0 0.0
        %8776 = vmatprep.subr.mxu0 0.0
        %8777 = vmatpush1.msra.mxu0 0.0
        %8778 = vmatprep.subr.mxu0 0.0
        %8779 = vmatpush1.msra.mxu0 0.0
        %8780 = vmatprep.subr.mxu0 0.0
        %8781 = vmatpush1.msra.mxu0 0.0
        %8782 = vmatprep.subr.mxu0 0.0
        %8783 = vmatpush1.msra.mxu0 0.0
        %8784 = vmatprep.subr.mxu0 0.0
        %8785 = vmatpush1.msra.mxu0 0.0
        %8786 = vmatprep.subr.mxu0 0.0
        %8787 = vmatpush1.msra.mxu0 0.0
        %8788 = vmatprep.subr.mxu0 0.0
        %8789 = vmatpush1.msra.mxu0 0.0
        %8790 = vmatprep.subr.mxu0 0.0
        %8791 = vmatpush1.msra.mxu0 0.0
        %8792 = vmatprep.subr.mxu0 0.0
        %8793 = vmatpush1.msra.mxu0 0.0
        %8794 = vmatprep.subr.mxu0 0.0
        %8795 = vmatpush1.msra.mxu0 0.0
        %8796 = vmatprep.subr.mxu0 0.0
        %8797 = vmatpush1.msra.mxu0 0.0
        %8798 = vmatprep.subr.mxu0 0.0
        %8799 = vmatpush1.msra.mxu0 0.0
        %8800 = vmatprep.subr.mxu0 0.0
        %8801 = vmatpush1.msra.mxu0 0.0
        %8802 = vmatprep.subr.mxu0 0.0
        %8803 = vmatpush1.msra.mxu0 0.0
        %8804 = vmatprep.subr.mxu0 0.0
        %8805 = vmatpush1.msra.mxu0 0.0
        %8806 = vmatprep.subr.mxu0 0.0
        %8807 = vmatpush1.msra.mxu0 0.0
        %8808 = vmatprep.subr.mxu0 0.0
        %8809 = vmatpush1.msra.mxu0 0.0
        %8810 = vmatprep.subr.mxu0 0.0
        %8811 = vmatpush1.msra.mxu0 0.0
        %8812 = vmatprep.subr.mxu0 0.0
        %8813 = vmatpush1.msra.mxu0 0.0
        %8814 = vmatprep.subr.mxu0 0.0
        %8815 = vmatpush1.msra.mxu0 0.0
        %8816 = vmatprep.subr.mxu0 0.0
        %8817 = vmatpush1.msra.mxu0 0.0
        %8818 = vmatprep.subr.mxu0 0.0
        %8819 = vmatpush1.msra.mxu0 0.0
        %8820 = vmatprep.subr.mxu0 0.0
        %8821 = vmatpush1.msra.mxu0 0.0
        %8822 = vmatprep.subr.mxu0 0.0
        %8823 = vmatpush1.msra.mxu0 0.0
        %8824 = vmatprep.subr.mxu0 0.0
        %8825 = vmatpush1.msra.mxu0 0.0
        %8826 = vmatprep.subr.mxu0 0.0
        %8827 = vmatpush1.msra.mxu0 0.0
        %8828 = vmatprep.subr.mxu0 0.0
        %8829 = vmatpush1.msra.mxu0 0.0
        %8830 = vmatprep.mubr.f32.mxu0 0.0
        %8831 = vmatmul.mubr.f32.gmra.mrb[0].mxu0 %v8695
        %v8832 = vpop.f32.mrb[0].mxu0
        %v8833 = vadd.f32 0.0, %v8832
        %v8834 = vpop.f32.mrb[0].mxu0
        %8835 = vmatprep.mubr.f32.mxu0 0.0
        %8836 = vmatmul.mubr.f32.gmra.mrb[0].mxu0 %v8698
        %v8837 = vpop.f32.mrb[0].mxu0
        %v8838 = vadd.f32 0.0, %v8837
        %v8839 = vpop.f32.mrb[0].mxu0
        %8840 = vmatprep.mubr.f32.mxu0 0.0
        %8841 = vmatmul.mubr.f32.gmra.mrb[0].mxu0 %v8701
        %v8842 = vpop.f32.mrb[0].mxu0
        %v8843 = vadd.f32 0.0, %v8842
        %v8844 = vpop.f32.mrb[0].mxu0
        %8845 = vmatprep.mubr.f32.mxu0 0.0
        %8846 = vmatmul.mubr.f32.gmra.mrb[0].mxu0 %v8704
        %v8847 = vpop.f32.mrb[0].mxu0
        %v8848 = vadd.f32 0.0, %v8847
        %v8849 = vpop.f32.mrb[0].mxu0
        %8850 = vmatprep.mubr.f32.mxu0 0.0
        %8851 = vmatmul.mubr.f32.gmra.mrb[0].mxu0 %v8707
        %v8852 = vpop.f32.mrb[0].mxu0
        %v8853 = vadd.f32 0.0, %v8852
        %v8854 = vpop.f32.mrb[0].mxu0
        %8855 = vmatprep.mubr.f32.mxu0 0.0
        %8856 = vmatmul.mubr.f32.gmra.mrb[0].mxu0 %v8710
        %v8857 = vpop.f32.mrb[0].mxu0
        %v8858 = vadd.f32 0.0, %v8857
        %v8859 = vpop.f32.mrb[0].mxu0
        %8860 = vmatprep.mubr.f32.mxu0 0.0
        %8861 = vmatmul.mubr.f32.gmra.mrb[0].mxu0 %v8713
        %v8862 = vpop.f32.mrb[0].mxu0
        %v8863 = vadd.f32 0.0, %v8862
        %v8864 = vpop.f32.mrb[0].mxu0
        %8865 = vmatprep.mubr.f32.mxu0 0.0
        %8866 = vmatmul.mubr.f32.gmra.mrb[0].mxu0 %v8716
        %v8867 = vpop.f32.mrb[0].mxu0
        %v8868 = vadd.f32 0.0, %v8867
        %v8869 = vpop.f32.mrb[0].mxu0
        %8870 = vmatprep.mubr.f32.mxu0 0.0
        %8871 = vmatmul.mubr.f32.gmra.mrb[0].mxu0 %v8719
        %v8872 = vpop.f32.mrb[0].mxu0
        %v8873 = vadd.f32 0.0, %v8872
        %v8874 = vpop.f32.mrb[0].mxu0
        %8875 = vmatprep.mubr.f32.mxu0 0.0
        %8876 = vmatmul.mubr.f32.gmra.mrb[0].mxu0 %v8722
        %v8877 = vpop.f32.mrb[0].mxu0
        %v8878 = vadd.f32 0.0, %v8877
        %v8879 = vpop.f32.mrb[0].mxu0
        %8880 = vmatprep.mubr.f32.mxu0 0.0
        %8881 = vmatmul.mubr.f32.gmra.mrb[0].mxu0 %v8725
        %v8882 = vpop.f32.mrb[0].mxu0
        %v8883 = vadd.f32 0.0, %v8882
        %v8884 = vpop.f32.mrb[0].mxu0
        %8885 = vmatprep.mubr.f32.mxu0 0.0
        %8886 = vmatmul.mubr.f32.gmra.mrb[0].mxu0 %v8728
        %v8887 = vpop.f32.mrb[0].mxu0
        %v8888 = vadd.f32 0.0, %v8887
        %v8889 = vpop.f32.mrb[0].mxu0
        %8890 = vmatprep.mubr.f32.mxu0 0.0
        %8891 = vmatmul.mubr.f32.gmra.mrb[0].mxu0 %v8731
        %v8892 = vpop.f32.mrb[0].mxu0
        %v8893 = vadd.f32 0.0, %v8892
        %v8894 = vpop.f32.mrb[0].mxu0
        %8895 = vmatprep.mubr.f32.mxu0 0.0
        %8896 = vmatmul.mubr.f32.gmra.mrb[0].mxu0 %v8734
        %v8897 = vpop.f32.mrb[0].mxu0
        %v8898 = vadd.f32 0.0, %v8897
        %v8899 = vpop.f32.mrb[0].mxu0
        %8900 = vmatprep.mubr.f32.mxu0 0.0
        %8901 = vmatmul.mubr.f32.gmra.mrb[0].mxu0 %v8737
        %v8902 = vpop.f32.mrb[0].mxu0
        %v8903 = vadd.f32 0.0, %v8902
        %v8904 = vpop.f32.mrb[0].mxu0
        %8905 = vmatprep.mubr.f32.mxu0 0.0
        %8906 = vmatmul.mubr.f32.gmra.mrb[0].mxu0 %v8740
        %v8907 = vpop.f32.mrb[0].mxu0
        %v8908 = vadd.f32 0.0, %v8907
        %v8909 = vpop.f32.mrb[0].mxu0
        %8910 = vmatprep.mubr.f32.mxu0 0.0
        %8911 = vmatmul.mubr.f32.gmra.mrb[0].mxu0 %v8743
        %v8912 = vpop.f32.mrb[0].mxu0
        %v8913 = vadd.f32 0.0, %v8912
        %v8914 = vpop.f32.mrb[0].mxu0
        %8915 = vmatprep.mubr.f32.mxu0 0.0
        %8916 = vmatmul.mubr.f32.gmra.mrb[0].mxu0 %v8746
        %v8917 = vpop.f32.mrb[0].mxu0
        %v8918 = vadd.f32 0.0, %v8917
        %v8919 = vpop.f32.mrb[0].mxu0
        %8920 = vmatprep.mubr.f32.mxu0 0.0
        %8921 = vmatmul.mubr.f32.gmra.mrb[0].mxu0 %v8749
        %v8922 = vpop.f32.mrb[0].mxu0
        %v8923 = vadd.f32 0.0, %v8922
        %v8924 = vpop.f32.mrb[0].mxu0
        %8925 = vmatprep.mubr.f32.mxu0 0.0
        %8926 = vmatmul.mubr.f32.gmra.mrb[0].mxu0 %v8752
        %v8927 = vpop.f32.mrb[0].mxu0
        %v8928 = vadd.f32 0.0, %v8927
        %v8929 = vpop.f32.mrb[0].mxu0
        %8930 = vmatprep.mubr.f32.mxu0 0.0
        %8931 = vmatmul.mubr.f32.gmra.mrb[0].mxu0 %v8755
        %v8932 = vpop.f32.mrb[0].mxu0
        %v8933 = vadd.f32 0.0, %v8932
        %v8934 = vpop.f32.mrb[0].mxu0
        %8935 = vmatprep.mubr.f32.mxu0 0.0
        %8936 = vmatmul.mubr.f32.gmra.mrb[0].mxu0 %v8758
        %v8937 = vpop.f32.mrb[0].mxu0
        %v8938 = vadd.f32 0.0, %v8937
        %v8939 = vpop.f32.mrb[0].mxu0
        %8940 = vmatprep.mubr.f32.mxu0 0.0
        %8941 = vmatmul.mubr.f32.gmra.mrb[0].mxu0 %v8761
        %v8942 = vpop.f32.mrb[0].mxu0
        %v8943 = vadd.f32 0.0, %v8942
        %v8944 = vpop.f32.mrb[0].mxu0
        %8945 = vmatprep.mubr.f32.mxu0 0.0
        %8946 = vmatmul.mubr.f32.gmra.mrb[0].mxu0 %v8764
        %v8947 = vpop.f32.mrb[0].mxu0
        %v8948 = vadd.f32 0.0, %v8947
        %v8949 = vpop.f32.mrb[0].mxu0
        %8950 = vdwg.mxu0
        %v8951 = vadd.f32 %v8641, %v8833
        %v8952 = vadd.f32 %v8642, %v8838
        %v8953 = vadd.f32 %v8643, %v8843
        %v8954 = vadd.f32 %v8644, %v8848
        %v8955 = vadd.f32 %v8645, %v8853
        %v8956 = vadd.f32 %v8646, %v8858
        %v8957 = vadd.f32 %v8647, %v8863
        %v8958 = vadd.f32 %v8648, %v8868
        %v8959 = vadd.f32 %v8649, %v8873
        %v8960 = vadd.f32 %v8650, %v8878
        %v8961 = vadd.f32 %v8651, %v8883
        %v8962 = vadd.f32 %v8652, %v8888
        %v8963 = vadd.f32 %v8653, %v8893
        %v8964 = vadd.f32 %v8654, %v8898
        %v8965 = vadd.f32 %v8655, %v8903
        %v8966 = vadd.f32 %v8656, %v8908
        %v8967 = vadd.f32 %v8657, %v8913
        %v8968 = vadd.f32 %v8658, %v8918
        %v8969 = vadd.f32 %v8659, %v8923
        %v8970 = vadd.f32 %v8660, %v8928
        %v8971 = vadd.f32 %v8661, %v8933
        %v8972 = vadd.f32 %v8662, %v8938
        %v8973 = vadd.f32 %v8663, %v8943
        %v8974 = vadd.f32 %v8664, %v8948
        %s8975 = scalar_lea.vmem [#allocation3], 48
        %v8976 = vld [vmem:[%s8975] sm:$0xff]
        %v8977 = vld [vmem:[%s8975 + $0x8] sm:$0xff]
        %v8978 = vld [vmem:[%s8975 + $0x18] sm:$0xff]
        %v8979 = vld [vmem:[%s8975 + $0x20] sm:$0xff]
        %v8980 = vld [vmem:[%s8975 + $0x30] sm:$0xff]
        %v8981 = vld [vmem:[%s8975 + $0x38] sm:$0xff]
        %v8982 = vld [vmem:[%s8975 + $0x48] sm:$0xff]
        %v8983 = vld [vmem:[%s8975 + $0x50] sm:$0xff]
        %v8984 = vld [vmem:[%s8975 + $0x60] sm:$0xff]
        %v8985 = vld [vmem:[%s8975 + $0x68] sm:$0xff]
        %v8986 = vld [vmem:[%s8975 + $0x78] sm:$0xff]
        %v8987 = vld [vmem:[%s8975 + $0x80] sm:$0xff]
        %v8988 = vld [vmem:[%s8975 + $0x90] sm:$0xff]
        %v8989 = vld [vmem:[%s8975 + $0x98] sm:$0xff]
        %v8990 = vld [vmem:[%s8975 + $0xa8] sm:$0xff]
        %v8991 = vld [vmem:[%s8975 + $0xb0] sm:$0xff]
        %v8992 = vld [vmem:[%s8975 + $0xc0] sm:$0xff]
        %v8993 = vld [vmem:[%s8975 + $0xc8] sm:$0xff]
        %v8994 = vld [vmem:[%s8975 + $0xd8] sm:$0xff]
        %v8995 = vld [vmem:[%s8975 + $0xe0] sm:$0xff]
        %v8996 = vld [vmem:[%s8975 + $0xf0] sm:$0xff]
        %v8997 = vld [vmem:[%s8975 + $0xf8] sm:$0xff]
        %v8998 = vld [vmem:[%s8975 + $0x108] sm:$0xff]
        %v8999 = vld [vmem:[%s8975 + $0x110] sm:$0xff]
        %s9000 = scalar_lea.vmem %s5, 192
        %v9001 = vld [vmem:[%s9000] sm:$0xff]
        %v9002 = vld [vmem:[%s9000 + $0x8] sm:$0xff]
        %v9003 = vld [vmem:[%s9000 + $0x10] sm:$0xff]
        %v9004 = vld [vmem:[%s9000 + $0x18] sm:$0xff]
        %v9006 = vsel %vm7120, %v8976, 0
        %v9009 = vsel %vm7120, %v8977, 0
        %v9012 = vsel %vm7120, %v8978, 0
        %v9015 = vsel %vm7120, %v8979, 0
        %v9018 = vsel %vm7120, %v8980, 0
        %v9021 = vsel %vm7120, %v8981, 0
        %v9024 = vsel %vm7120, %v8982, 0
        %v9027 = vsel %vm7120, %v8983, 0
        %v9030 = vsel %vm7120, %v8984, 0
        %v9033 = vsel %vm7120, %v8985, 0
        %v9036 = vsel %vm7120, %v8986, 0
        %v9039 = vsel %vm7120, %v8987, 0
        %v9042 = vsel %vm7120, %v8988, 0
        %v9045 = vsel %vm7120, %v8989, 0
        %v9048 = vsel %vm7120, %v8990, 0
        %v9051 = vsel %vm7120, %v8991, 0
        %v9054 = vsel %vm7120, %v8992, 0
        %v9057 = vsel %vm7120, %v8993, 0
        %v9060 = vsel %vm7120, %v8994, 0
        %v9063 = vsel %vm7120, %v8995, 0
        %v9066 = vsel %vm7120, %v8996, 0
        %v9069 = vsel %vm7120, %v8997, 0
        %v9072 = vsel %vm7120, %v8998, 0
        %v9075 = vsel %vm7120, %v8999, 0
        %9077 = vmatprep.subr.mxu0 0.0
        %9078 = vmatpush1.msra.mxu0 %v9001
        %9079 = vmatprep.subr.mxu0 0.0
        %9080 = vmatpush1.msra.mxu0 %v9002
        %9081 = vmatprep.subr.mxu0 0.0
        %9082 = vmatpush1.msra.mxu0 %v9003
        %9083 = vmatprep.subr.mxu0 0.0
        %9084 = vmatpush1.msra.mxu0 %v9004
        %9085 = vmatprep.subr.mxu0 0.0
        %9086 = vmatpush1.msra.mxu0 0.0
        %9087 = vmatprep.subr.mxu0 0.0
        %9088 = vmatpush1.msra.mxu0 0.0
        %9089 = vmatprep.subr.mxu0 0.0
        %9090 = vmatpush1.msra.mxu0 0.0
        %9091 = vmatprep.subr.mxu0 0.0
        %9092 = vmatpush1.msra.mxu0 0.0
        %9093 = vmatprep.subr.mxu0 0.0
        %9094 = vmatpush1.msra.mxu0 0.0
        %9095 = vmatprep.subr.mxu0 0.0
        %9096 = vmatpush1.msra.mxu0 0.0
        %9097 = vmatprep.subr.mxu0 0.0
        %9098 = vmatpush1.msra.mxu0 0.0
        %9099 = vmatprep.subr.mxu0 0.0
        %9100 = vmatpush1.msra.mxu0 0.0
        %9101 = vmatprep.subr.mxu0 0.0
        %9102 = vmatpush1.msra.mxu0 0.0
        %9103 = vmatprep.subr.mxu0 0.0
        %9104 = vmatpush1.msra.mxu0 0.0
        %9105 = vmatprep.subr.mxu0 0.0
        %9106 = vmatpush1.msra.mxu0 0.0
        %9107 = vmatprep.subr.mxu0 0.0
        %9108 = vmatpush1.msra.mxu0 0.0
        %9109 = vmatprep.subr.mxu0 0.0
        %9110 = vmatpush1.msra.mxu0 0.0
        %9111 = vmatprep.subr.mxu0 0.0
        %9112 = vmatpush1.msra.mxu0 0.0
        %9113 = vmatprep.subr.mxu0 0.0
        %9114 = vmatpush1.msra.mxu0 0.0
        %9115 = vmatprep.subr.mxu0 0.0
        %9116 = vmatpush1.msra.mxu0 0.0
        %9117 = vmatprep.subr.mxu0 0.0
        %9118 = vmatpush1.msra.mxu0 0.0
        %9119 = vmatprep.subr.mxu0 0.0
        %9120 = vmatpush1.msra.mxu0 0.0
        %9121 = vmatprep.subr.mxu0 0.0
        %9122 = vmatpush1.msra.mxu0 0.0
        %9123 = vmatprep.subr.mxu0 0.0
        %9124 = vmatpush1.msra.mxu0 0.0
        %9125 = vmatprep.subr.mxu0 0.0
        %9126 = vmatpush1.msra.mxu0 0.0
        %9127 = vmatprep.subr.mxu0 0.0
        %9128 = vmatpush1.msra.mxu0 0.0
        %9129 = vmatprep.subr.mxu0 0.0
        %9130 = vmatpush1.msra.mxu0 0.0
        %9131 = vmatprep.subr.mxu0 0.0
        %9132 = vmatpush1.msra.mxu0 0.0
        %9133 = vmatprep.subr.mxu0 0.0
        %9134 = vmatpush1.msra.mxu0 0.0
        %9135 = vmatprep.subr.mxu0 0.0
        %9136 = vmatpush1.msra.mxu0 0.0
        %9137 = vmatprep.subr.mxu0 0.0
        %9138 = vmatpush1.msra.mxu0 0.0
        %9139 = vmatprep.subr.mxu0 0.0
        %9140 = vmatpush1.msra.mxu0 0.0
        %9141 = vmatprep.mubr.f32.mxu0 0.0
        %9142 = vmatmul.mubr.f32.gmra.mrb[0].mxu0 %v9006
        %v9143 = vpop.f32.mrb[0].mxu0
        %v9144 = vadd.f32 0.0, %v9143
        %v9145 = vpop.f32.mrb[0].mxu0
        %9146 = vmatprep.mubr.f32.mxu0 0.0
        %9147 = vmatmul.mubr.f32.gmra.mrb[0].mxu0 %v9009
        %v9148 = vpop.f32.mrb[0].mxu0
        %v9149 = vadd.f32 0.0, %v9148
        %v9150 = vpop.f32.mrb[0].mxu0
        %9151 = vmatprep.mubr.f32.mxu0 0.0
        %9152 = vmatmul.mubr.f32.gmra.mrb[0].mxu0 %v9012
        %v9153 = vpop.f32.mrb[0].mxu0
        %v9154 = vadd.f32 0.0, %v9153
        %v9155 = vpop.f32.mrb[0].mxu0
        %9156 = vmatprep.mubr.f32.mxu0 0.0
        %9157 = vmatmul.mubr.f32.gmra.mrb[0].mxu0 %v9015
        %v9158 = vpop.f32.mrb[0].mxu0
        %v9159 = vadd.f32 0.0, %v9158
        %v9160 = vpop.f32.mrb[0].mxu0
        %9161 = vmatprep.mubr.f32.mxu0 0.0
        %9162 = vmatmul.mubr.f32.gmra.mrb[0].mxu0 %v9018
        %v9163 = vpop.f32.mrb[0].mxu0
        %v9164 = vadd.f32 0.0, %v9163
        %v9165 = vpop.f32.mrb[0].mxu0
        %9166 = vmatprep.mubr.f32.mxu0 0.0
        %9167 = vmatmul.mubr.f32.gmra.mrb[0].mxu0 %v9021
        %v9168 = vpop.f32.mrb[0].mxu0
        %v9169 = vadd.f32 0.0, %v9168
        %v9170 = vpop.f32.mrb[0].mxu0
        %9171 = vmatprep.mubr.f32.mxu0 0.0
        %9172 = vmatmul.mubr.f32.gmra.mrb[0].mxu0 %v9024
        %v9173 = vpop.f32.mrb[0].mxu0
        %v9174 = vadd.f32 0.0, %v9173
        %v9175 = vpop.f32.mrb[0].mxu0
        %9176 = vmatprep.mubr.f32.mxu0 0.0
        %9177 = vmatmul.mubr.f32.gmra.mrb[0].mxu0 %v9027
        %v9178 = vpop.f32.mrb[0].mxu0
        %v9179 = vadd.f32 0.0, %v9178
        %v9180 = vpop.f32.mrb[0].mxu0
        %9181 = vmatprep.mubr.f32.mxu0 0.0
        %9182 = vmatmul.mubr.f32.gmra.mrb[0].mxu0 %v9030
        %v9183 = vpop.f32.mrb[0].mxu0
        %v9184 = vadd.f32 0.0, %v9183
        %v9185 = vpop.f32.mrb[0].mxu0
        %9186 = vmatprep.mubr.f32.mxu0 0.0
        %9187 = vmatmul.mubr.f32.gmra.mrb[0].mxu0 %v9033
        %v9188 = vpop.f32.mrb[0].mxu0
        %v9189 = vadd.f32 0.0, %v9188
        %v9190 = vpop.f32.mrb[0].mxu0
        %9191 = vmatprep.mubr.f32.mxu0 0.0
        %9192 = vmatmul.mubr.f32.gmra.mrb[0].mxu0 %v9036
        %v9193 = vpop.f32.mrb[0].mxu0
        %v9194 = vadd.f32 0.0, %v9193
        %v9195 = vpop.f32.mrb[0].mxu0
        %9196 = vmatprep.mubr.f32.mxu0 0.0
        %9197 = vmatmul.mubr.f32.gmra.mrb[0].mxu0 %v9039
        %v9198 = vpop.f32.mrb[0].mxu0
        %v9199 = vadd.f32 0.0, %v9198
        %v9200 = vpop.f32.mrb[0].mxu0
        %9201 = vmatprep.mubr.f32.mxu0 0.0
        %9202 = vmatmul.mubr.f32.gmra.mrb[0].mxu0 %v9042
        %v9203 = vpop.f32.mrb[0].mxu0
        %v9204 = vadd.f32 0.0, %v9203
        %v9205 = vpop.f32.mrb[0].mxu0
        %9206 = vmatprep.mubr.f32.mxu0 0.0
        %9207 = vmatmul.mubr.f32.gmra.mrb[0].mxu0 %v9045
        %v9208 = vpop.f32.mrb[0].mxu0
        %v9209 = vadd.f32 0.0, %v9208
        %v9210 = vpop.f32.mrb[0].mxu0
        %9211 = vmatprep.mubr.f32.mxu0 0.0
        %9212 = vmatmul.mubr.f32.gmra.mrb[0].mxu0 %v9048
        %v9213 = vpop.f32.mrb[0].mxu0
        %v9214 = vadd.f32 0.0, %v9213
        %v9215 = vpop.f32.mrb[0].mxu0
        %9216 = vmatprep.mubr.f32.mxu0 0.0
        %9217 = vmatmul.mubr.f32.gmra.mrb[0].mxu0 %v9051
        %v9218 = vpop.f32.mrb[0].mxu0
        %v9219 = vadd.f32 0.0, %v9218
        %v9220 = vpop.f32.mrb[0].mxu0
        %9221 = vmatprep.mubr.f32.mxu0 0.0
        %9222 = vmatmul.mubr.f32.gmra.mrb[0].mxu0 %v9054
        %v9223 = vpop.f32.mrb[0].mxu0
        %v9224 = vadd.f32 0.0, %v9223
        %v9225 = vpop.f32.mrb[0].mxu0
        %9226 = vmatprep.mubr.f32.mxu0 0.0
        %9227 = vmatmul.mubr.f32.gmra.mrb[0].mxu0 %v9057
        %v9228 = vpop.f32.mrb[0].mxu0
        %v9229 = vadd.f32 0.0, %v9228
        %v9230 = vpop.f32.mrb[0].mxu0
        %9231 = vmatprep.mubr.f32.mxu0 0.0
        %9232 = vmatmul.mubr.f32.gmra.mrb[0].mxu0 %v9060
        %v9233 = vpop.f32.mrb[0].mxu0
        %v9234 = vadd.f32 0.0, %v9233
        %v9235 = vpop.f32.mrb[0].mxu0
        %9236 = vmatprep.mubr.f32.mxu0 0.0
        %9237 = vmatmul.mubr.f32.gmra.mrb[0].mxu0 %v9063
        %v9238 = vpop.f32.mrb[0].mxu0
        %v9239 = vadd.f32 0.0, %v9238
        %v9240 = vpop.f32.mrb[0].mxu0
        %9241 = vmatprep.mubr.f32.mxu0 0.0
        %9242 = vmatmul.mubr.f32.gmra.mrb[0].mxu0 %v9066
        %v9243 = vpop.f32.mrb[0].mxu0
        %v9244 = vadd.f32 0.0, %v9243
        %v9245 = vpop.f32.mrb[0].mxu0
        %9246 = vmatprep.mubr.f32.mxu0 0.0
        %9247 = vmatmul.mubr.f32.gmra.mrb[0].mxu0 %v9069
        %v9248 = vpop.f32.mrb[0].mxu0
        %v9249 = vadd.f32 0.0, %v9248
        %v9250 = vpop.f32.mrb[0].mxu0
        %9251 = vmatprep.mubr.f32.mxu0 0.0
        %9252 = vmatmul.mubr.f32.gmra.mrb[0].mxu0 %v9072
        %v9253 = vpop.f32.mrb[0].mxu0
        %v9254 = vadd.f32 0.0, %v9253
        %v9255 = vpop.f32.mrb[0].mxu0
        %9256 = vmatprep.mubr.f32.mxu0 0.0
        %9257 = vmatmul.mubr.f32.gmra.mrb[0].mxu0 %v9075
        %v9258 = vpop.f32.mrb[0].mxu0
        %v9259 = vadd.f32 0.0, %v9258
        %v9260 = vpop.f32.mrb[0].mxu0
        %9261 = vdwg.mxu0
        %v9262 = vadd.f32 %v8951, %v9144
        %v9263 = vadd.f32 %v8952, %v9149
        %v9264 = vadd.f32 %v8953, %v9154
        %v9265 = vadd.f32 %v8954, %v9159
        %v9266 = vadd.f32 %v8955, %v9164
        %v9267 = vadd.f32 %v8956, %v9169
        %v9268 = vadd.f32 %v8957, %v9174
        %v9269 = vadd.f32 %v8958, %v9179
        %v9270 = vadd.f32 %v8959, %v9184
        %v9271 = vadd.f32 %v8960, %v9189
        %v9272 = vadd.f32 %v8961, %v9194
        %v9273 = vadd.f32 %v8962, %v9199
        %v9274 = vadd.f32 %v8963, %v9204
        %v9275 = vadd.f32 %v8964, %v9209
        %v9276 = vadd.f32 %v8965, %v9214
        %v9277 = vadd.f32 %v8966, %v9219
        %v9278 = vadd.f32 %v8967, %v9224
        %v9279 = vadd.f32 %v8968, %v9229
        %v9280 = vadd.f32 %v8969, %v9234
        %v9281 = vadd.f32 %v8970, %v9239
        %v9282 = vadd.f32 %v8971, %v9244
        %v9283 = vadd.f32 %v8972, %v9249
        %v9284 = vadd.f32 %v8973, %v9254
        %v9285 = vadd.f32 %v8974, %v9259
        %v9286 = vld [vmem:[%s8975 + $0x1] sm:$0xff]
        %v9287 = vld [vmem:[%s8975 + $0x9] sm:$0xff]
        %v9288 = vld [vmem:[%s8975 + $0x19] sm:$0xff]
        %v9289 = vld [vmem:[%s8975 + $0x21] sm:$0xff]
        %v9290 = vld [vmem:[%s8975 + $0x31] sm:$0xff]
        %v9291 = vld [vmem:[%s8975 + $0x39] sm:$0xff]
        %v9292 = vld [vmem:[%s8975 + $0x49] sm:$0xff]
        %v9293 = vld [vmem:[%s8975 + $0x51] sm:$0xff]
        %v9294 = vld [vmem:[%s8975 + $0x61] sm:$0xff]
        %v9295 = vld [vmem:[%s8975 + $0x69] sm:$0xff]
        %v9296 = vld [vmem:[%s8975 + $0x79] sm:$0xff]
        %v9297 = vld [vmem:[%s8975 + $0x81] sm:$0xff]
        %v9298 = vld [vmem:[%s8975 + $0x91] sm:$0xff]
        %v9299 = vld [vmem:[%s8975 + $0x99] sm:$0xff]
        %v9300 = vld [vmem:[%s8975 + $0xa9] sm:$0xff]
        %v9301 = vld [vmem:[%s8975 + $0xb1] sm:$0xff]
        %v9302 = vld [vmem:[%s8975 + $0xc1] sm:$0xff]
        %v9303 = vld [vmem:[%s8975 + $0xc9] sm:$0xff]
        %v9304 = vld [vmem:[%s8975 + $0xd9] sm:$0xff]
        %v9305 = vld [vmem:[%s8975 + $0xe1] sm:$0xff]
        %v9306 = vld [vmem:[%s8975 + $0xf1] sm:$0xff]
        %v9307 = vld [vmem:[%s8975 + $0xf9] sm:$0xff]
        %v9308 = vld [vmem:[%s8975 + $0x109] sm:$0xff]
        %v9309 = vld [vmem:[%s8975 + $0x111] sm:$0xff]
        %s9310 = scalar_lea.vmem %s5, 224
        %v9311 = vld [vmem:[%s9310] sm:$0xff]
        %v9312 = vld [vmem:[%s9310 + $0x8] sm:$0xff]
        %v9313 = vld [vmem:[%s9310 + $0x10] sm:$0xff]
        %v9314 = vld [vmem:[%s9310 + $0x18] sm:$0xff]
        %v9316 = vsel %vm7120, %v9286, 0
        %v9319 = vsel %vm7120, %v9287, 0
        %v9322 = vsel %vm7120, %v9288, 0
        %v9325 = vsel %vm7120, %v9289, 0
        %v9328 = vsel %vm7120, %v9290, 0
        %v9331 = vsel %vm7120, %v9291, 0
        %v9334 = vsel %vm7120, %v9292, 0
        %v9337 = vsel %vm7120, %v9293, 0
        %v9340 = vsel %vm7120, %v9294, 0
        %v9343 = vsel %vm7120, %v9295, 0
        %v9346 = vsel %vm7120, %v9296, 0
        %v9349 = vsel %vm7120, %v9297, 0
        %v9352 = vsel %vm7120, %v9298, 0
        %v9355 = vsel %vm7120, %v9299, 0
        %v9358 = vsel %vm7120, %v9300, 0
        %v9361 = vsel %vm7120, %v9301, 0
        %v9364 = vsel %vm7120, %v9302, 0
        %v9367 = vsel %vm7120, %v9303, 0
        %v9370 = vsel %vm7120, %v9304, 0
        %v9373 = vsel %vm7120, %v9305, 0
        %v9376 = vsel %vm7120, %v9306, 0
        %v9379 = vsel %vm7120, %v9307, 0
        %v9382 = vsel %vm7120, %v9308, 0
        %v9385 = vsel %vm7120, %v9309, 0
        %9387 = vmatprep.subr.mxu0 0.0
        %9388 = vmatpush1.msra.mxu0 %v9311
        %9389 = vmatprep.subr.mxu0 0.0
        %9390 = vmatpush1.msra.mxu0 %v9312
        %9391 = vmatprep.subr.mxu0 0.0
        %9392 = vmatpush1.msra.mxu0 %v9313
        %9393 = vmatprep.subr.mxu0 0.0
        %9394 = vmatpush1.msra.mxu0 %v9314
        %9395 = vmatprep.subr.mxu0 0.0
        %9396 = vmatpush1.msra.mxu0 0.0
        %9397 = vmatprep.subr.mxu0 0.0
        %9398 = vmatpush1.msra.mxu0 0.0
        %9399 = vmatprep.subr.mxu0 0.0
        %9400 = vmatpush1.msra.mxu0 0.0
        %9401 = vmatprep.subr.mxu0 0.0
        %9402 = vmatpush1.msra.mxu0 0.0
        %9403 = vmatprep.subr.mxu0 0.0
        %9404 = vmatpush1.msra.mxu0 0.0
        %9405 = vmatprep.subr.mxu0 0.0
        %9406 = vmatpush1.msra.mxu0 0.0
        %9407 = vmatprep.subr.mxu0 0.0
        %9408 = vmatpush1.msra.mxu0 0.0
        %9409 = vmatprep.subr.mxu0 0.0
        %9410 = vmatpush1.msra.mxu0 0.0
        %9411 = vmatprep.subr.mxu0 0.0
        %9412 = vmatpush1.msra.mxu0 0.0
        %9413 = vmatprep.subr.mxu0 0.0
        %9414 = vmatpush1.msra.mxu0 0.0
        %9415 = vmatprep.subr.mxu0 0.0
        %9416 = vmatpush1.msra.mxu0 0.0
        %9417 = vmatprep.subr.mxu0 0.0
        %9418 = vmatpush1.msra.mxu0 0.0
        %9419 = vmatprep.subr.mxu0 0.0
        %9420 = vmatpush1.msra.mxu0 0.0
        %9421 = vmatprep.subr.mxu0 0.0
        %9422 = vmatpush1.msra.mxu0 0.0
        %9423 = vmatprep.subr.mxu0 0.0
        %9424 = vmatpush1.msra.mxu0 0.0
        %9425 = vmatprep.subr.mxu0 0.0
        %9426 = vmatpush1.msra.mxu0 0.0
        %9427 = vmatprep.subr.mxu0 0.0
        %9428 = vmatpush1.msra.mxu0 0.0
        %9429 = vmatprep.subr.mxu0 0.0
        %9430 = vmatpush1.msra.mxu0 0.0
        %9431 = vmatprep.subr.mxu0 0.0
        %9432 = vmatpush1.msra.mxu0 0.0
        %9433 = vmatprep.subr.mxu0 0.0
        %9434 = vmatpush1.msra.mxu0 0.0
        %9435 = vmatprep.subr.mxu0 0.0
        %9436 = vmatpush1.msra.mxu0 0.0
        %9437 = vmatprep.subr.mxu0 0.0
        %9438 = vmatpush1.msra.mxu0 0.0
        %9439 = vmatprep.subr.mxu0 0.0
        %9440 = vmatpush1.msra.mxu0 0.0
        %9441 = vmatprep.subr.mxu0 0.0
        %9442 = vmatpush1.msra.mxu0 0.0
        %9443 = vmatprep.subr.mxu0 0.0
        %9444 = vmatpush1.msra.mxu0 0.0
        %9445 = vmatprep.subr.mxu0 0.0
        %9446 = vmatpush1.msra.mxu0 0.0
        %9447 = vmatprep.subr.mxu0 0.0
        %9448 = vmatpush1.msra.mxu0 0.0
        %9449 = vmatprep.subr.mxu0 0.0
        %9450 = vmatpush1.msra.mxu0 0.0
        %9451 = vmatprep.mubr.f32.mxu0 0.0
        %9452 = vmatmul.mubr.f32.gmra.mrb[0].mxu0 %v9316
        %v9453 = vpop.f32.mrb[0].mxu0
        %v9454 = vadd.f32 0.0, %v9453
        %v9455 = vpop.f32.mrb[0].mxu0
        %9456 = vmatprep.mubr.f32.mxu0 0.0
        %9457 = vmatmul.mubr.f32.gmra.mrb[0].mxu0 %v9319
        %v9458 = vpop.f32.mrb[0].mxu0
        %v9459 = vadd.f32 0.0, %v9458
        %v9460 = vpop.f32.mrb[0].mxu0
        %9461 = vmatprep.mubr.f32.mxu0 0.0
        %9462 = vmatmul.mubr.f32.gmra.mrb[0].mxu0 %v9322
        %v9463 = vpop.f32.mrb[0].mxu0
        %v9464 = vadd.f32 0.0, %v9463
        %v9465 = vpop.f32.mrb[0].mxu0
        %9466 = vmatprep.mubr.f32.mxu0 0.0
        %9467 = vmatmul.mubr.f32.gmra.mrb[0].mxu0 %v9325
        %v9468 = vpop.f32.mrb[0].mxu0
        %v9469 = vadd.f32 0.0, %v9468
        %v9470 = vpop.f32.mrb[0].mxu0
        %9471 = vmatprep.mubr.f32.mxu0 0.0
        %9472 = vmatmul.mubr.f32.gmra.mrb[0].mxu0 %v9328
        %v9473 = vpop.f32.mrb[0].mxu0
        %v9474 = vadd.f32 0.0, %v9473
        %v9475 = vpop.f32.mrb[0].mxu0
        %9476 = vmatprep.mubr.f32.mxu0 0.0
        %9477 = vmatmul.mubr.f32.gmra.mrb[0].mxu0 %v9331
        %v9478 = vpop.f32.mrb[0].mxu0
        %v9479 = vadd.f32 0.0, %v9478
        %v9480 = vpop.f32.mrb[0].mxu0
        %9481 = vmatprep.mubr.f32.mxu0 0.0
        %9482 = vmatmul.mubr.f32.gmra.mrb[0].mxu0 %v9334
        %v9483 = vpop.f32.mrb[0].mxu0
        %v9484 = vadd.f32 0.0, %v9483
        %v9485 = vpop.f32.mrb[0].mxu0
        %9486 = vmatprep.mubr.f32.mxu0 0.0
        %9487 = vmatmul.mubr.f32.gmra.mrb[0].mxu0 %v9337
        %v9488 = vpop.f32.mrb[0].mxu0
        %v9489 = vadd.f32 0.0, %v9488
        %v9490 = vpop.f32.mrb[0].mxu0
        %9491 = vmatprep.mubr.f32.mxu0 0.0
        %9492 = vmatmul.mubr.f32.gmra.mrb[0].mxu0 %v9340
        %v9493 = vpop.f32.mrb[0].mxu0
        %v9494 = vadd.f32 0.0, %v9493
        %v9495 = vpop.f32.mrb[0].mxu0
        %9496 = vmatprep.mubr.f32.mxu0 0.0
        %9497 = vmatmul.mubr.f32.gmra.mrb[0].mxu0 %v9343
        %v9498 = vpop.f32.mrb[0].mxu0
        %v9499 = vadd.f32 0.0, %v9498
        %v9500 = vpop.f32.mrb[0].mxu0
        %9501 = vmatprep.mubr.f32.mxu0 0.0
        %9502 = vmatmul.mubr.f32.gmra.mrb[0].mxu0 %v9346
        %v9503 = vpop.f32.mrb[0].mxu0
        %v9504 = vadd.f32 0.0, %v9503
        %v9505 = vpop.f32.mrb[0].mxu0
        %9506 = vmatprep.mubr.f32.mxu0 0.0
        %9507 = vmatmul.mubr.f32.gmra.mrb[0].mxu0 %v9349
        %v9508 = vpop.f32.mrb[0].mxu0
        %v9509 = vadd.f32 0.0, %v9508
        %v9510 = vpop.f32.mrb[0].mxu0
        %9511 = vmatprep.mubr.f32.mxu0 0.0
        %9512 = vmatmul.mubr.f32.gmra.mrb[0].mxu0 %v9352
        %v9513 = vpop.f32.mrb[0].mxu0
        %v9514 = vadd.f32 0.0, %v9513
        %v9515 = vpop.f32.mrb[0].mxu0
        %9516 = vmatprep.mubr.f32.mxu0 0.0
        %9517 = vmatmul.mubr.f32.gmra.mrb[0].mxu0 %v9355
        %v9518 = vpop.f32.mrb[0].mxu0
        %v9519 = vadd.f32 0.0, %v9518
        %v9520 = vpop.f32.mrb[0].mxu0
        %9521 = vmatprep.mubr.f32.mxu0 0.0
        %9522 = vmatmul.mubr.f32.gmra.mrb[0].mxu0 %v9358
        %v9523 = vpop.f32.mrb[0].mxu0
        %v9524 = vadd.f32 0.0, %v9523
        %v9525 = vpop.f32.mrb[0].mxu0
        %9526 = vmatprep.mubr.f32.mxu0 0.0
        %9527 = vmatmul.mubr.f32.gmra.mrb[0].mxu0 %v9361
        %v9528 = vpop.f32.mrb[0].mxu0
        %v9529 = vadd.f32 0.0, %v9528
        %v9530 = vpop.f32.mrb[0].mxu0
        %9531 = vmatprep.mubr.f32.mxu0 0.0
        %9532 = vmatmul.mubr.f32.gmra.mrb[0].mxu0 %v9364
        %v9533 = vpop.f32.mrb[0].mxu0
        %v9534 = vadd.f32 0.0, %v9533
        %v9535 = vpop.f32.mrb[0].mxu0
        %9536 = vmatprep.mubr.f32.mxu0 0.0
        %9537 = vmatmul.mubr.f32.gmra.mrb[0].mxu0 %v9367
        %v9538 = vpop.f32.mrb[0].mxu0
        %v9539 = vadd.f32 0.0, %v9538
        %v9540 = vpop.f32.mrb[0].mxu0
        %9541 = vmatprep.mubr.f32.mxu0 0.0
        %9542 = vmatmul.mubr.f32.gmra.mrb[0].mxu0 %v9370
        %v9543 = vpop.f32.mrb[0].mxu0
        %v9544 = vadd.f32 0.0, %v9543
        %v9545 = vpop.f32.mrb[0].mxu0
        %9546 = vmatprep.mubr.f32.mxu0 0.0
        %9547 = vmatmul.mubr.f32.gmra.mrb[0].mxu0 %v9373
        %v9548 = vpop.f32.mrb[0].mxu0
        %v9549 = vadd.f32 0.0, %v9548
        %v9550 = vpop.f32.mrb[0].mxu0
        %9551 = vmatprep.mubr.f32.mxu0 0.0
        %9552 = vmatmul.mubr.f32.gmra.mrb[0].mxu0 %v9376
        %v9553 = vpop.f32.mrb[0].mxu0
        %v9554 = vadd.f32 0.0, %v9553
        %v9555 = vpop.f32.mrb[0].mxu0
        %9556 = vmatprep.mubr.f32.mxu0 0.0
        %9557 = vmatmul.mubr.f32.gmra.mrb[0].mxu0 %v9379
        %v9558 = vpop.f32.mrb[0].mxu0
        %v9559 = vadd.f32 0.0, %v9558
        %v9560 = vpop.f32.mrb[0].mxu0
        %9561 = vmatprep.mubr.f32.mxu0 0.0
        %9562 = vmatmul.mubr.f32.gmra.mrb[0].mxu0 %v9382
        %v9563 = vpop.f32.mrb[0].mxu0
        %v9564 = vadd.f32 0.0, %v9563
        %v9565 = vpop.f32.mrb[0].mxu0
        %9566 = vmatprep.mubr.f32.mxu0 0.0
        %9567 = vmatmul.mubr.f32.gmra.mrb[0].mxu0 %v9385
        %v9568 = vpop.f32.mrb[0].mxu0
        %v9569 = vadd.f32 0.0, %v9568
        %v9570 = vpop.f32.mrb[0].mxu0
        %9571 = vdwg.mxu0
        %v9572 = vadd.f32 %v9262, %v9454
        %v9573 = vadd.f32 %v9263, %v9459
        %v9574 = vadd.f32 %v9264, %v9464
        %v9575 = vadd.f32 %v9265, %v9469
        %v9576 = vadd.f32 %v9266, %v9474
        %v9577 = vadd.f32 %v9267, %v9479
        %v9578 = vadd.f32 %v9268, %v9484
        %v9579 = vadd.f32 %v9269, %v9489
        %v9580 = vadd.f32 %v9270, %v9494
        %v9581 = vadd.f32 %v9271, %v9499
        %v9582 = vadd.f32 %v9272, %v9504
        %v9583 = vadd.f32 %v9273, %v9509
        %v9584 = vadd.f32 %v9274, %v9514
        %v9585 = vadd.f32 %v9275, %v9519
        %v9586 = vadd.f32 %v9276, %v9524
        %v9587 = vadd.f32 %v9277, %v9529
        %v9588 = vadd.f32 %v9278, %v9534
        %v9589 = vadd.f32 %v9279, %v9539
        %v9590 = vadd.f32 %v9280, %v9544
        %v9591 = vadd.f32 %v9281, %v9549
        %v9592 = vadd.f32 %v9282, %v9554
        %v9593 = vadd.f32 %v9283, %v9559
        %v9594 = vadd.f32 %v9284, %v9564
        %v9595 = vadd.f32 %v9285, %v9569
        %v9596 = vld [vmem:[%s8975 + $0x2] sm:$0xff]
        %v9597 = vld [vmem:[%s8975 + $0xa] sm:$0xff]
        %v9598 = vld [vmem:[%s8975 + $0x1a] sm:$0xff]
        %v9599 = vld [vmem:[%s8975 + $0x22] sm:$0xff]
        %v9600 = vld [vmem:[%s8975 + $0x32] sm:$0xff]
        %v9601 = vld [vmem:[%s8975 + $0x3a] sm:$0xff]
        %v9602 = vld [vmem:[%s8975 + $0x4a] sm:$0xff]
        %v9603 = vld [vmem:[%s8975 + $0x52] sm:$0xff]
        %v9604 = vld [vmem:[%s8975 + $0x62] sm:$0xff]
        %v9605 = vld [vmem:[%s8975 + $0x6a] sm:$0xff]
        %v9606 = vld [vmem:[%s8975 + $0x7a] sm:$0xff]
        %v9607 = vld [vmem:[%s8975 + $0x82] sm:$0xff]
        %v9608 = vld [vmem:[%s8975 + $0x92] sm:$0xff]
        %v9609 = vld [vmem:[%s8975 + $0x9a] sm:$0xff]
        %v9610 = vld [vmem:[%s8975 + $0xaa] sm:$0xff]
        %v9611 = vld [vmem:[%s8975 + $0xb2] sm:$0xff]
        %v9612 = vld [vmem:[%s8975 + $0xc2] sm:$0xff]
        %v9613 = vld [vmem:[%s8975 + $0xca] sm:$0xff]
        %v9614 = vld [vmem:[%s8975 + $0xda] sm:$0xff]
        %v9615 = vld [vmem:[%s8975 + $0xe2] sm:$0xff]
        %v9616 = vld [vmem:[%s8975 + $0xf2] sm:$0xff]
        %v9617 = vld [vmem:[%s8975 + $0xfa] sm:$0xff]
        %v9618 = vld [vmem:[%s8975 + $0x10a] sm:$0xff]
        %v9619 = vld [vmem:[%s8975 + $0x112] sm:$0xff]
        %s9620 = scalar_lea.vmem %s5, 256
        %v9621 = vld [vmem:[%s9620] sm:$0xff]
        %v9622 = vld [vmem:[%s9620 + $0x8] sm:$0xff]
        %v9623 = vld [vmem:[%s9620 + $0x10] sm:$0xff]
        %v9624 = vld [vmem:[%s9620 + $0x18] sm:$0xff]
        %v9626 = vsel %vm7120, %v9596, 0
        %v9629 = vsel %vm7120, %v9597, 0
        %v9632 = vsel %vm7120, %v9598, 0
        %v9635 = vsel %vm7120, %v9599, 0
        %v9638 = vsel %vm7120, %v9600, 0
        %v9641 = vsel %vm7120, %v9601, 0
        %v9644 = vsel %vm7120, %v9602, 0
        %v9647 = vsel %vm7120, %v9603, 0
        %v9650 = vsel %vm7120, %v9604, 0
        %v9653 = vsel %vm7120, %v9605, 0
        %v9656 = vsel %vm7120, %v9606, 0
        %v9659 = vsel %vm7120, %v9607, 0
        %v9662 = vsel %vm7120, %v9608, 0
        %v9665 = vsel %vm7120, %v9609, 0
        %v9668 = vsel %vm7120, %v9610, 0
        %v9671 = vsel %vm7120, %v9611, 0
        %v9674 = vsel %vm7120, %v9612, 0
        %v9677 = vsel %vm7120, %v9613, 0
        %v9680 = vsel %vm7120, %v9614, 0
        %v9683 = vsel %vm7120, %v9615, 0
        %v9686 = vsel %vm7120, %v9616, 0
        %v9689 = vsel %vm7120, %v9617, 0
        %v9692 = vsel %vm7120, %v9618, 0
        %v9695 = vsel %vm7120, %v9619, 0
        %9697 = vmatprep.subr.mxu0 0.0
        %9698 = vmatpush1.msra.mxu0 %v9621
        %9699 = vmatprep.subr.mxu0 0.0
        %9700 = vmatpush1.msra.mxu0 %v9622
        %9701 = vmatprep.subr.mxu0 0.0
        %9702 = vmatpush1.msra.mxu0 %v9623
        %9703 = vmatprep.subr.mxu0 0.0
        %9704 = vmatpush1.msra.mxu0 %v9624
        %9705 = vmatprep.subr.mxu0 0.0
        %9706 = vmatpush1.msra.mxu0 0.0
        %9707 = vmatprep.subr.mxu0 0.0
        %9708 = vmatpush1.msra.mxu0 0.0
        %9709 = vmatprep.subr.mxu0 0.0
        %9710 = vmatpush1.msra.mxu0 0.0
        %9711 = vmatprep.subr.mxu0 0.0
        %9712 = vmatpush1.msra.mxu0 0.0
        %9713 = vmatprep.subr.mxu0 0.0
        %9714 = vmatpush1.msra.mxu0 0.0
        %9715 = vmatprep.subr.mxu0 0.0
        %9716 = vmatpush1.msra.mxu0 0.0
        %9717 = vmatprep.subr.mxu0 0.0
        %9718 = vmatpush1.msra.mxu0 0.0
        %9719 = vmatprep.subr.mxu0 0.0
        %9720 = vmatpush1.msra.mxu0 0.0
        %9721 = vmatprep.subr.mxu0 0.0
        %9722 = vmatpush1.msra.mxu0 0.0
        %9723 = vmatprep.subr.mxu0 0.0
        %9724 = vmatpush1.msra.mxu0 0.0
        %9725 = vmatprep.subr.mxu0 0.0
        %9726 = vmatpush1.msra.mxu0 0.0
        %9727 = vmatprep.subr.mxu0 0.0
        %9728 = vmatpush1.msra.mxu0 0.0
        %9729 = vmatprep.subr.mxu0 0.0
        %9730 = vmatpush1.msra.mxu0 0.0
        %9731 = vmatprep.subr.mxu0 0.0
        %9732 = vmatpush1.msra.mxu0 0.0
        %9733 = vmatprep.subr.mxu0 0.0
        %9734 = vmatpush1.msra.mxu0 0.0
        %9735 = vmatprep.subr.mxu0 0.0
        %9736 = vmatpush1.msra.mxu0 0.0
        %9737 = vmatprep.subr.mxu0 0.0
        %9738 = vmatpush1.msra.mxu0 0.0
        %9739 = vmatprep.subr.mxu0 0.0
        %9740 = vmatpush1.msra.mxu0 0.0
        %9741 = vmatprep.subr.mxu0 0.0
        %9742 = vmatpush1.msra.mxu0 0.0
        %9743 = vmatprep.subr.mxu0 0.0
        %9744 = vmatpush1.msra.mxu0 0.0
        %9745 = vmatprep.subr.mxu0 0.0
        %9746 = vmatpush1.msra.mxu0 0.0
        %9747 = vmatprep.subr.mxu0 0.0
        %9748 = vmatpush1.msra.mxu0 0.0
        %9749 = vmatprep.subr.mxu0 0.0
        %9750 = vmatpush1.msra.mxu0 0.0
        %9751 = vmatprep.subr.mxu0 0.0
        %9752 = vmatpush1.msra.mxu0 0.0
        %9753 = vmatprep.subr.mxu0 0.0
        %9754 = vmatpush1.msra.mxu0 0.0
        %9755 = vmatprep.subr.mxu0 0.0
        %9756 = vmatpush1.msra.mxu0 0.0
        %9757 = vmatprep.subr.mxu0 0.0
        %9758 = vmatpush1.msra.mxu0 0.0
        %9759 = vmatprep.subr.mxu0 0.0
        %9760 = vmatpush1.msra.mxu0 0.0
        %9761 = vmatprep.mubr.f32.mxu0 0.0
        %9762 = vmatmul.mubr.f32.gmra.mrb[0].mxu0 %v9626
        %v9763 = vpop.f32.mrb[0].mxu0
        %v9764 = vadd.f32 0.0, %v9763
        %v9765 = vpop.f32.mrb[0].mxu0
        %9766 = vmatprep.mubr.f32.mxu0 0.0
        %9767 = vmatmul.mubr.f32.gmra.mrb[0].mxu0 %v9629
        %v9768 = vpop.f32.mrb[0].mxu0
        %v9769 = vadd.f32 0.0, %v9768
        %v9770 = vpop.f32.mrb[0].mxu0
        %9771 = vmatprep.mubr.f32.mxu0 0.0
        %9772 = vmatmul.mubr.f32.gmra.mrb[0].mxu0 %v9632
        %v9773 = vpop.f32.mrb[0].mxu0
        %v9774 = vadd.f32 0.0, %v9773
        %v9775 = vpop.f32.mrb[0].mxu0
        %9776 = vmatprep.mubr.f32.mxu0 0.0
        %9777 = vmatmul.mubr.f32.gmra.mrb[0].mxu0 %v9635
        %v9778 = vpop.f32.mrb[0].mxu0
        %v9779 = vadd.f32 0.0, %v9778
        %v9780 = vpop.f32.mrb[0].mxu0
        %9781 = vmatprep.mubr.f32.mxu0 0.0
        %9782 = vmatmul.mubr.f32.gmra.mrb[0].mxu0 %v9638
        %v9783 = vpop.f32.mrb[0].mxu0
        %v9784 = vadd.f32 0.0, %v9783
        %v9785 = vpop.f32.mrb[0].mxu0
        %9786 = vmatprep.mubr.f32.mxu0 0.0
        %9787 = vmatmul.mubr.f32.gmra.mrb[0].mxu0 %v9641
        %v9788 = vpop.f32.mrb[0].mxu0
        %v9789 = vadd.f32 0.0, %v9788
        %v9790 = vpop.f32.mrb[0].mxu0
        %9791 = vmatprep.mubr.f32.mxu0 0.0
        %9792 = vmatmul.mubr.f32.gmra.mrb[0].mxu0 %v9644
        %v9793 = vpop.f32.mrb[0].mxu0
        %v9794 = vadd.f32 0.0, %v9793
        %v9795 = vpop.f32.mrb[0].mxu0
        %9796 = vmatprep.mubr.f32.mxu0 0.0
        %9797 = vmatmul.mubr.f32.gmra.mrb[0].mxu0 %v9647
        %v9798 = vpop.f32.mrb[0].mxu0
        %v9799 = vadd.f32 0.0, %v9798
        %v9800 = vpop.f32.mrb[0].mxu0
        %9801 = vmatprep.mubr.f32.mxu0 0.0
        %9802 = vmatmul.mubr.f32.gmra.mrb[0].mxu0 %v9650
        %v9803 = vpop.f32.mrb[0].mxu0
        %v9804 = vadd.f32 0.0, %v9803
        %v9805 = vpop.f32.mrb[0].mxu0
        %9806 = vmatprep.mubr.f32.mxu0 0.0
        %9807 = vmatmul.mubr.f32.gmra.mrb[0].mxu0 %v9653
        %v9808 = vpop.f32.mrb[0].mxu0
        %v9809 = vadd.f32 0.0, %v9808
        %v9810 = vpop.f32.mrb[0].mxu0
        %9811 = vmatprep.mubr.f32.mxu0 0.0
        %9812 = vmatmul.mubr.f32.gmra.mrb[0].mxu0 %v9656
        %v9813 = vpop.f32.mrb[0].mxu0
        %v9814 = vadd.f32 0.0, %v9813
        %v9815 = vpop.f32.mrb[0].mxu0
        %9816 = vmatprep.mubr.f32.mxu0 0.0
        %9817 = vmatmul.mubr.f32.gmra.mrb[0].mxu0 %v9659
        %v9818 = vpop.f32.mrb[0].mxu0
        %v9819 = vadd.f32 0.0, %v9818
        %v9820 = vpop.f32.mrb[0].mxu0
        %9821 = vmatprep.mubr.f32.mxu0 0.0
        %9822 = vmatmul.mubr.f32.gmra.mrb[0].mxu0 %v9662
        %v9823 = vpop.f32.mrb[0].mxu0
        %v9824 = vadd.f32 0.0, %v9823
        %v9825 = vpop.f32.mrb[0].mxu0
        %9826 = vmatprep.mubr.f32.mxu0 0.0
        %9827 = vmatmul.mubr.f32.gmra.mrb[0].mxu0 %v9665
        %v9828 = vpop.f32.mrb[0].mxu0
        %v9829 = vadd.f32 0.0, %v9828
        %v9830 = vpop.f32.mrb[0].mxu0
        %9831 = vmatprep.mubr.f32.mxu0 0.0
        %9832 = vmatmul.mubr.f32.gmra.mrb[0].mxu0 %v9668
        %v9833 = vpop.f32.mrb[0].mxu0
        %v9834 = vadd.f32 0.0, %v9833
        %v9835 = vpop.f32.mrb[0].mxu0
        %9836 = vmatprep.mubr.f32.mxu0 0.0
        %9837 = vmatmul.mubr.f32.gmra.mrb[0].mxu0 %v9671
        %v9838 = vpop.f32.mrb[0].mxu0
        %v9839 = vadd.f32 0.0, %v9838
        %v9840 = vpop.f32.mrb[0].mxu0
        %9841 = vmatprep.mubr.f32.mxu0 0.0
        %9842 = vmatmul.mubr.f32.gmra.mrb[0].mxu0 %v9674
        %v9843 = vpop.f32.mrb[0].mxu0
        %v9844 = vadd.f32 0.0, %v9843
        %v9845 = vpop.f32.mrb[0].mxu0
        %9846 = vmatprep.mubr.f32.mxu0 0.0
        %9847 = vmatmul.mubr.f32.gmra.mrb[0].mxu0 %v9677
        %v9848 = vpop.f32.mrb[0].mxu0
        %v9849 = vadd.f32 0.0, %v9848
        %v9850 = vpop.f32.mrb[0].mxu0
        %9851 = vmatprep.mubr.f32.mxu0 0.0
        %9852 = vmatmul.mubr.f32.gmra.mrb[0].mxu0 %v9680
        %v9853 = vpop.f32.mrb[0].mxu0
        %v9854 = vadd.f32 0.0, %v9853
        %v9855 = vpop.f32.mrb[0].mxu0
        %9856 = vmatprep.mubr.f32.mxu0 0.0
        %9857 = vmatmul.mubr.f32.gmra.mrb[0].mxu0 %v9683
        %v9858 = vpop.f32.mrb[0].mxu0
        %v9859 = vadd.f32 0.0, %v9858
        %v9860 = vpop.f32.mrb[0].mxu0
        %9861 = vmatprep.mubr.f32.mxu0 0.0
        %9862 = vmatmul.mubr.f32.gmra.mrb[0].mxu0 %v9686
        %v9863 = vpop.f32.mrb[0].mxu0
        %v9864 = vadd.f32 0.0, %v9863
        %v9865 = vpop.f32.mrb[0].mxu0
        %9866 = vmatprep.mubr.f32.mxu0 0.0
        %9867 = vmatmul.mubr.f32.gmra.mrb[0].mxu0 %v9689
        %v9868 = vpop.f32.mrb[0].mxu0
        %v9869 = vadd.f32 0.0, %v9868
        %v9870 = vpop.f32.mrb[0].mxu0
        %9871 = vmatprep.mubr.f32.mxu0 0.0
        %9872 = vmatmul.mubr.f32.gmra.mrb[0].mxu0 %v9692
        %v9873 = vpop.f32.mrb[0].mxu0
        %v9874 = vadd.f32 0.0, %v9873
        %v9875 = vpop.f32.mrb[0].mxu0
        %9876 = vmatprep.mubr.f32.mxu0 0.0
        %9877 = vmatmul.mubr.f32.gmra.mrb[0].mxu0 %v9695
        %v9878 = vpop.f32.mrb[0].mxu0
        %v9879 = vadd.f32 0.0, %v9878
        %v9880 = vpop.f32.mrb[0].mxu0
        %9881 = vdwg.mxu0
        %v9882 = vadd.f32 %v9572, %v9764
        %v9883 = vadd.f32 %v9573, %v9769
        %v9884 = vadd.f32 %v9574, %v9774
        %v9885 = vadd.f32 %v9575, %v9779
        %v9886 = vadd.f32 %v9576, %v9784
        %v9887 = vadd.f32 %v9577, %v9789
        %v9888 = vadd.f32 %v9578, %v9794
        %v9889 = vadd.f32 %v9579, %v9799
        %v9890 = vadd.f32 %v9580, %v9804
        %v9891 = vadd.f32 %v9581, %v9809
        %v9892 = vadd.f32 %v9582, %v9814
        %v9893 = vadd.f32 %v9583, %v9819
        %v9894 = vadd.f32 %v9584, %v9824
        %v9895 = vadd.f32 %v9585, %v9829
        %v9896 = vadd.f32 %v9586, %v9834
        %v9897 = vadd.f32 %v9587, %v9839
        %v9898 = vadd.f32 %v9588, %v9844
        %v9899 = vadd.f32 %v9589, %v9849
        %v9900 = vadd.f32 %v9590, %v9854
        %v9901 = vadd.f32 %v9591, %v9859
        %v9902 = vadd.f32 %v9592, %v9864
        %v9903 = vadd.f32 %v9593, %v9869
        %v9904 = vadd.f32 %v9594, %v9874
        %v9905 = vadd.f32 %v9595, %v9879
        %v9906 = vld [vmem:[%s6] sm:$0x1]
        %v9908 = vlaneseq
        %v9909 = vshrl.u32 %v9908, 7
        %v9910 = vsub.s32 0, %v9909
        %v9911 = vrot.slane %v9906, %v9910
        %v9913 = vadd.f32 %v9882, %v9911
        %v9914 = vadd.f32 %v9883, %v9911
        %v9915 = vadd.f32 %v9884, %v9911
        %v9916 = vadd.f32 %v9885, %v9911
        %v9917 = vadd.f32 %v9886, %v9911
        %v9918 = vadd.f32 %v9887, %v9911
        %v9919 = vadd.f32 %v9888, %v9911
        %v9920 = vadd.f32 %v9889, %v9911
        %v9921 = vadd.f32 %v9890, %v9911
        %v9922 = vadd.f32 %v9891, %v9911
        %v9923 = vadd.f32 %v9892, %v9911
        %v9924 = vadd.f32 %v9893, %v9911
        %v9925 = vadd.f32 %v9894, %v9911
        %v9926 = vadd.f32 %v9895, %v9911
        %v9927 = vadd.f32 %v9896, %v9911
        %v9928 = vadd.f32 %v9897, %v9911
        %v9929 = vadd.f32 %v9898, %v9911
        %v9930 = vadd.f32 %v9899, %v9911
        %v9931 = vadd.f32 %v9900, %v9911
        %v9932 = vadd.f32 %v9901, %v9911
        %v9933 = vadd.f32 %v9902, %v9911
        %v9934 = vadd.f32 %v9903, %v9911
        %v9935 = vadd.f32 %v9904, %v9911
        %v9936 = vadd.f32 %v9905, %v9911
        %v9937 = vmax.f32 %v9913, 0.0
        %v9938 = vmax.f32 %v9914, 0.0
        %v9939 = vmax.f32 %v9915, 0.0
        %v9940 = vmax.f32 %v9916, 0.0
        %v9941 = vmax.f32 %v9917, 0.0
        %v9942 = vmax.f32 %v9918, 0.0
        %v9943 = vmax.f32 %v9919, 0.0
        %v9944 = vmax.f32 %v9920, 0.0
        %v9945 = vmax.f32 %v9921, 0.0
        %v9946 = vmax.f32 %v9922, 0.0
        %v9947 = vmax.f32 %v9923, 0.0
        %v9948 = vmax.f32 %v9924, 0.0
        %v9949 = vmax.f32 %v9925, 0.0
        %v9950 = vmax.f32 %v9926, 0.0
        %v9951 = vmax.f32 %v9927, 0.0
        %v9952 = vmax.f32 %v9928, 0.0
        %v9953 = vmax.f32 %v9929, 0.0
        %v9954 = vmax.f32 %v9930, 0.0
        %v9955 = vmax.f32 %v9931, 0.0
        %v9956 = vmax.f32 %v9932, 0.0
        %v9957 = vmax.f32 %v9933, 0.0
        %v9958 = vmax.f32 %v9934, 0.0
        %v9959 = vmax.f32 %v9935, 0.0
        %v9960 = vmax.f32 %v9936, 0.0
        %v9961 = vld [vmem:[%s7] sm:$0x3]
        %v9963 = vlaneseq
        %v9964 = vshrl.u32 %v9963, 7
        %v9965 = vsub.s32 0, %v9964
        %v9966 = vrot.slane %v9961, %v9965
        %v9967 = vlaneseq
        %v9968 = vshrl.u32 %v9967, 7
        %v9969 = vsub.s32 1, %v9968
        %v9970 = vrot.slane %v9961, %v9969
        %vm9972 = vcmask 523264
        %v9973 = vsel %vm9972, %v9970, 0
        %9975 = vmatprep.subr.mxu0 0.0
        %9976 = vmatpush1.msra.mxu0 %v9937
        %9977 = vmatprep.subr.mxu0 0.0
        %9978 = vmatpush1.msra.mxu0 %v9938
        %9979 = vmatprep.subr.mxu0 0.0
        %9980 = vmatpush1.msra.mxu0 %v9939
        %9981 = vmatprep.subr.mxu0 0.0
        %9982 = vmatpush1.msra.mxu0 %v9940
        %9983 = vmatprep.subr.mxu0 0.0
        %9984 = vmatpush1.msra.mxu0 %v9941
        %9985 = vmatprep.subr.mxu0 0.0
        %9986 = vmatpush1.msra.mxu0 %v9942
        %9987 = vmatprep.subr.mxu0 0.0
        %9988 = vmatpush1.msra.mxu0 %v9943
        %9989 = vmatprep.subr.mxu0 0.0
        %9990 = vmatpush1.msra.mxu0 %v9944
        %9991 = vmatprep.subr.mxu0 0.0
        %9992 = vmatpush1.msra.mxu0 %v9945
        %9993 = vmatprep.subr.mxu0 0.0
        %9994 = vmatpush1.msra.mxu0 %v9946
        %9995 = vmatprep.subr.mxu0 0.0
        %9996 = vmatpush1.msra.mxu0 %v9947
        %9997 = vmatprep.subr.mxu0 0.0
        %9998 = vmatpush1.msra.mxu0 %v9948
        %9999 = vmatprep.subr.mxu0 0.0
        %10000 = vmatpush1.msra.mxu0 %v9949
        %10001 = vmatprep.subr.mxu0 0.0
        %10002 = vmatpush1.msra.mxu0 %v9950
        %10003 = vmatprep.subr.mxu0 0.0
        %10004 = vmatpush1.msra.mxu0 %v9951
        %10005 = vmatprep.subr.mxu0 0.0
        %10006 = vmatpush1.msra.mxu0 %v9952
        %10007 = vmatprep.subr.mxu0 0.0
        %10008 = vmatpush1.msra.mxu0 %v9953
        %10009 = vmatprep.subr.mxu0 0.0
        %10010 = vmatpush1.msra.mxu0 %v9954
        %10011 = vmatprep.subr.mxu0 0.0
        %10012 = vmatpush1.msra.mxu0 %v9955
        %10013 = vmatprep.subr.mxu0 0.0
        %10014 = vmatpush1.msra.mxu0 %v9956
        %10015 = vmatprep.subr.mxu0 0.0
        %10016 = vmatpush1.msra.mxu0 %v9957
        %10017 = vmatprep.subr.mxu0 0.0
        %10018 = vmatpush1.msra.mxu0 %v9958
        %10019 = vmatprep.subr.mxu0 0.0
        %10020 = vmatpush1.msra.mxu0 %v9959
        %10021 = vmatprep.subr.mxu0 0.0
        %10022 = vmatpush1.msra.mxu0 %v9960
        %10023 = vmatprep.subr.mxu0 0.0
        %10024 = vmatpush1.msra.mxu0 0.0
        %10025 = vmatprep.subr.mxu0 0.0
        %10026 = vmatpush1.msra.mxu0 0.0
        %10027 = vmatprep.subr.mxu0 0.0
        %10028 = vmatpush1.msra.mxu0 0.0
        %10029 = vmatprep.subr.mxu0 0.0
        %10030 = vmatpush1.msra.mxu0 0.0
        %10031 = vmatprep.subr.mxu0 0.0
        %10032 = vmatpush1.msra.mxu0 0.0
        %10033 = vmatprep.subr.mxu0 0.0
        %10034 = vmatpush1.msra.mxu0 0.0
        %10035 = vmatprep.subr.mxu0 0.0
        %10036 = vmatpush1.msra.mxu0 0.0
        %10037 = vmatprep.subr.mxu0 0.0
        %10038 = vmatpush1.msra.mxu0 0.0
        %10039 = vmatprep.mubr.f32.mxu0 %v9973
        %10040 = vmatmul.mubr.f32.gmra.mrb[0].mxu0 %v9966
        %v10041 = vpop.f32.mrb[0].mxu0
        %v10042 = vadd.f32 0.0, %v10041
        %v10043 = vpop.f32.mrb[0].mxu0
        %10044 = vdwg.mxu0
        %v10045 = vld [vmem:[%s8] sm:$0xff]
        %v10046 = vld [vmem:[%s8 + $0x8] sm:$0xff]
        %v10047 = vld [vmem:[%s8 + $0x10] sm:$0xff]
        %v10048 = vld [vmem:[%s8 + $0x18] sm:$0xff]
        %v10049 = vld [vmem:[%s8 + $0x20] sm:$0xff]
        %v10050 = vld [vmem:[%s8 + $0x28] sm:$0xff]
        %v10051 = vld [vmem:[%s8 + $0x30] sm:$0xff]
        %v10052 = vld [vmem:[%s8 + $0x38] sm:$0xff]
        %v10053 = vld [vmem:[%s9] sm:$0x1]
        %v10055 = vsel %vm9972, %v10042, 0
        %10057 = vmatprep.subr.mxu0 0.0
        %10058 = vmatpush1.msra.mxu0 %v10045
        %10059 = vmatprep.subr.mxu0 0.0
        %10060 = vmatpush1.msra.mxu0 %v10046
        %10061 = vmatprep.subr.mxu0 0.0
        %10062 = vmatpush1.msra.mxu0 %v10047
        %10063 = vmatprep.subr.mxu0 0.0
        %10064 = vmatpush1.msra.mxu0 %v10048
        %10065 = vmatprep.subr.mxu0 0.0
        %10066 = vmatpush1.msra.mxu0 %v10049
        %10067 = vmatprep.subr.mxu0 0.0
        %10068 = vmatpush1.msra.mxu0 %v10050
        %10069 = vmatprep.subr.mxu0 0.0
        %10070 = vmatpush1.msra.mxu0 %v10051
        %10071 = vmatprep.subr.mxu0 0.0
        %10072 = vmatpush1.msra.mxu0 %v10052
        %10073 = vmatprep.subr.mxu0 0.0
        %10074 = vmatpush1.msra.mxu0 0.0
        %10075 = vmatprep.subr.mxu0 0.0
        %10076 = vmatpush1.msra.mxu0 0.0
        %10077 = vmatprep.subr.mxu0 0.0
        %10078 = vmatpush1.msra.mxu0 0.0
        %10079 = vmatprep.subr.mxu0 0.0
        %10080 = vmatpush1.msra.mxu0 0.0
        %10081 = vmatprep.subr.mxu0 0.0
        %10082 = vmatpush1.msra.mxu0 0.0
        %10083 = vmatprep.subr.mxu0 0.0
        %10084 = vmatpush1.msra.mxu0 0.0
        %10085 = vmatprep.subr.mxu0 0.0
        %10086 = vmatpush1.msra.mxu0 0.0
        %10087 = vmatprep.subr.mxu0 0.0
        %10088 = vmatpush1.msra.mxu0 0.0
        %10089 = vmatprep.subr.mxu0 0.0
        %10090 = vmatpush1.msra.mxu0 0.0
        %10091 = vmatprep.subr.mxu0 0.0
        %10092 = vmatpush1.msra.mxu0 0.0
        %10093 = vmatprep.subr.mxu0 0.0
        %10094 = vmatpush1.msra.mxu0 0.0
        %10095 = vmatprep.subr.mxu0 0.0
        %10096 = vmatpush1.msra.mxu0 0.0
        %10097 = vmatprep.subr.mxu0 0.0
        %10098 = vmatpush1.msra.mxu0 0.0
        %10099 = vmatprep.subr.mxu0 0.0
        %10100 = vmatpush1.msra.mxu0 0.0
        %10101 = vmatprep.subr.mxu0 0.0
        %10102 = vmatpush1.msra.mxu0 0.0
        %10103 = vmatprep.subr.mxu0 0.0
        %10104 = vmatpush1.msra.mxu0 0.0
        %10105 = vmatprep.subr.mxu0 0.0
        %10106 = vmatpush1.msra.mxu0 0.0
        %10107 = vmatprep.subr.mxu0 0.0
        %10108 = vmatpush1.msra.mxu0 0.0
        %10109 = vmatprep.subr.mxu0 0.0
        %10110 = vmatpush1.msra.mxu0 0.0
        %10111 = vmatprep.subr.mxu0 0.0
        %10112 = vmatpush1.msra.mxu0 0.0
        %10113 = vmatprep.subr.mxu0 0.0
        %10114 = vmatpush1.msra.mxu0 0.0
        %10115 = vmatprep.subr.mxu0 0.0
        %10116 = vmatpush1.msra.mxu0 0.0
        %10117 = vmatprep.subr.mxu0 0.0
        %10118 = vmatpush1.msra.mxu0 0.0
        %10119 = vmatprep.subr.mxu0 0.0
        %10120 = vmatpush1.msra.mxu0 0.0
        %10121 = vmatprep.mubr.f32.mxu0 0.0
        %10122 = vmatmul.mubr.f32.gmra.mrb[0].mxu0 %v10055
        %v10123 = vpop.f32.mrb[0].mxu0
        %v10124 = vadd.f32 %v10053, %v10123
        %v10125 = vpop.f32.mrb[0].mxu0
        %10126 = vdwg.mxu0
        %v10127 = vmax.f32 %v10124, 0.0
        %v10128 = vld [vmem:[%s10] sm:$0xff]
        %v10129 = vld [vmem:[%s10 + $0x8] sm:$0xff]
        %v10130 = vld [vmem:[%s10 + $0x10] sm:$0xff]
        %v10131 = vld [vmem:[%s10 + $0x18] sm:$0xff]
        %v10132 = vld [vmem:[%s10 + $0x20] sm:$0xff]
        %v10133 = vld [vmem:[%s10 + $0x28] sm:$0xff]
        %v10134 = vld [vmem:[%s10 + $0x30] sm:$0xff]
        %v10135 = vld [vmem:[%s10 + $0x38] sm:$0xff]
        %v10136 = vld [vmem:[%s10 + $0x40] sm:$0xff]
        %v10137 = vld [vmem:[%s10 + $0x48] sm:$0xff]
        %v10138 = vld [vmem:[%s10 + $0x50] sm:$0xff]
        %v10139 = vld [vmem:[%s10 + $0x58] sm:$0xff]
        %v10140 = vld [vmem:[%s10 + $0x60] sm:$0xff]
        %v10141 = vld [vmem:[%s10 + $0x68] sm:$0xff]
        %v10142 = vld [vmem:[%s10 + $0x70] sm:$0xff]
        %v10143 = vld [vmem:[%s10 + $0x78] sm:$0xff]
        %v10144 = vld [vmem:[%s11] sm:$0x1]
        %10145 = vmatprep.subr.mxu0 0.0
        %10146 = vmatpush1.msra.mxu0 %v10128
        %10147 = vmatprep.subr.mxu0 0.0
        %10148 = vmatpush1.msra.mxu0 %v10129
        %10149 = vmatprep.subr.mxu0 0.0
        %10150 = vmatpush1.msra.mxu0 %v10130
        %10151 = vmatprep.subr.mxu0 0.0
        %10152 = vmatpush1.msra.mxu0 %v10131
        %10153 = vmatprep.subr.mxu0 0.0
        %10154 = vmatpush1.msra.mxu0 %v10132
        %10155 = vmatprep.subr.mxu0 0.0
        %10156 = vmatpush1.msra.mxu0 %v10133
        %10157 = vmatprep.subr.mxu0 0.0
        %10158 = vmatpush1.msra.mxu0 %v10134
        %10159 = vmatprep.subr.mxu0 0.0
        %10160 = vmatpush1.msra.mxu0 %v10135
        %10161 = vmatprep.subr.mxu0 0.0
        %10162 = vmatpush1.msra.mxu0 %v10136
        %10163 = vmatprep.subr.mxu0 0.0
        %10164 = vmatpush1.msra.mxu0 %v10137
        %10165 = vmatprep.subr.mxu0 0.0
        %10166 = vmatpush1.msra.mxu0 %v10138
        %10167 = vmatprep.subr.mxu0 0.0
        %10168 = vmatpush1.msra.mxu0 %v10139
        %10169 = vmatprep.subr.mxu0 0.0
        %10170 = vmatpush1.msra.mxu0 %v10140
        %10171 = vmatprep.subr.mxu0 0.0
        %10172 = vmatpush1.msra.mxu0 %v10141
        %10173 = vmatprep.subr.mxu0 0.0
        %10174 = vmatpush1.msra.mxu0 %v10142
        %10175 = vmatprep.subr.mxu0 0.0
        %10176 = vmatpush1.msra.mxu0 %v10143
        %10177 = vmatprep.subr.mxu0 0.0
        %10178 = vmatpush1.msra.mxu0 0.0
        %10179 = vmatprep.subr.mxu0 0.0
        %10180 = vmatpush1.msra.mxu0 0.0
        %10181 = vmatprep.subr.mxu0 0.0
        %10182 = vmatpush1.msra.mxu0 0.0
        %10183 = vmatprep.subr.mxu0 0.0
        %10184 = vmatpush1.msra.mxu0 0.0
        %10185 = vmatprep.subr.mxu0 0.0
        %10186 = vmatpush1.msra.mxu0 0.0
        %10187 = vmatprep.subr.mxu0 0.0
        %10188 = vmatpush1.msra.mxu0 0.0
        %10189 = vmatprep.subr.mxu0 0.0
        %10190 = vmatpush1.msra.mxu0 0.0
        %10191 = vmatprep.subr.mxu0 0.0
        %10192 = vmatpush1.msra.mxu0 0.0
        %10193 = vmatprep.subr.mxu0 0.0
        %10194 = vmatpush1.msra.mxu0 0.0
        %10195 = vmatprep.subr.mxu0 0.0
        %10196 = vmatpush1.msra.mxu0 0.0
        %10197 = vmatprep.subr.mxu0 0.0
        %10198 = vmatpush1.msra.mxu0 0.0
        %10199 = vmatprep.subr.mxu0 0.0
        %10200 = vmatpush1.msra.mxu0 0.0
        %10201 = vmatprep.subr.mxu0 0.0
        %10202 = vmatpush1.msra.mxu0 0.0
        %10203 = vmatprep.subr.mxu0 0.0
        %10204 = vmatpush1.msra.mxu0 0.0
        %10205 = vmatprep.subr.mxu0 0.0
        %10206 = vmatpush1.msra.mxu0 0.0
        %10207 = vmatprep.subr.mxu0 0.0
        %10208 = vmatpush1.msra.mxu0 0.0
        %10209 = vmatprep.mubr.f32.mxu0 0.0
        %10210 = vmatmul.mubr.f32.gmra.mrb[0].mxu0 %v10127
        %v10211 = vpop.f32.mrb[0].mxu0
        %v10212 = vadd.f32 %v10144, %v10211
        %v10213 = vpop.f32.mrb[0].mxu0
        %10214 = vdwg.mxu0
        %10215 = vst [vmem:[%s405] sm:$0x1] %v10212
        %s10216 = sand.u32 %s291, 1
        %s10217 = scalar_lea.sflag [#allocation5], %s10216
        %s10218 = sand.u32 %s291, 1
        %s10219 = scalar_lea.vmem [#allocation4], %s10218
        // Predicated region
        $region69: #{cnn_qnet_forward.1} parent=67 // pred_check
          %p10220 = pneg %p301
        $region70: #{cnn_qnet_forward.1} parent=67 // pred_check_branch
          %10222 = sbr.rel (%p10220) target = $region72
        $region71: #{cnn_qnet_forward.1} parent=67 // pred_region
          %s10224 = ssub.s32 16, 16
          %10225 = vsyncadd %s10217, %s10224
          %s10226 = smul.addr %s26, 16
          %s10227 = scalar_lea.hbm %s12, %s10226
          %s10229 = sshll.u32 %s10219, 4
          %s10230 = int_to_ptr.vmem [resolvable:$true] %s10229
          %10232 = dma.vmem_to_hbm [thread:$0]  %s10230, 16, %s10227, %s10217
        $region72: #{cnn_qnet_forward.1} parent=67 // pred_fallthru
          _
      $region68: #{cnn_qnet_forward.1} parent=5 // pred_fallthru
        _
      %p10233 = scmp.le.s32.totalorder 2, %s21
      // Predicated region
      $region73: #{cnn_qnet_forward.1} parent=5 // pred_check
        %p10234 = pneg %p10233
      $region74: #{cnn_qnet_forward.1} parent=5 // pred_check_branch
        %10236 = sbr.rel (%p10234) target = $region76
      $region75: #{cnn_qnet_forward.1} parent=5 // pred_region
        %s10237 = ssub.s32 %s21, 2
        // Predicated region
        $region77: #{cnn_qnet_forward.1} parent=75 // pred_check
          %p10238 = pneg %p307
        $region78: #{cnn_qnet_forward.1} parent=75 // pred_check_branch
          %10240 = sbr.rel (%p10238) target = $region80
        $region79: #{cnn_qnet_forward.1} parent=75 // pred_region
          %s10241 = sand.u32 %s292, 1
          %s10242 = scalar_lea.sflag [#allocation5], %s10241
          %s10243 = sand.u32 %s292, 1
          %s10244 = scalar_lea.vmem [#allocation4], %s10243
          %10245 = dma.done %s10242, 16
        $region80: #{cnn_qnet_forward.1} parent=75 // pred_fallthru
          _
      $region76: #{cnn_qnet_forward.1} parent=5 // pred_fallthru
        _
    $region6: #{cnn_qnet_forward.1} parent=1 // loop_footer
      %s25 = sadd.s32 1, %s21
    $region7: #{cnn_qnet_forward.1} parent=1 // loop_footer_branch
      %20 = sbr.rel target = $region3
    $region8: #{cnn_qnet_forward.1} parent=1 // loop_exit
      _
    %10246 = vsyncpa [#allocation5], 1
    %s10247 = scalar_lea.sflag [#allocation5], 1
    %10248 = vsyncpa %s10247, 1

</llo_original>
